<compile_context>
chip_gen: v6e
topology: v6e:2x2x1
jax: 0.10.0
libtpu: 0.0.40
codegen_flags: <defaults>
</compile_context>

<pallas_src>
import math

import jax
import jax.numpy as jnp
from jax.experimental import pallas as pl
from jax.experimental.pallas import tpu as pltpu


# ----------------------------------------------------------------------------
# Fused kernel: [weight-DMA start] -> [input-proj prologue] -> [packed recurrence]
#               -> [weight-DMA wait] -> [MLP]
# ----------------------------------------------------------------------------
def _make_fused_kernel(T_max, off_w, off_m, B, H, CONST, n_mlp):
    def kernel(*refs):
        (x_ref, wih_ref, whh_ref, b_ref, h0_ref, c0_ref, const_ref) = refs[:7]
        w_hbm = refs[7:7 + n_mlp]                       # classifier weights (HBM)
        b_mlp = refs[7 + n_mlp:7 + 2 * n_mlp]           # classifier biases (VMEM)
        h_out, c_out, preds_out = refs[7 + 2 * n_mlp:10 + 2 * n_mlp]
        gx_s = refs[10 + 2 * n_mlp]                     # (T_max*B, 8H) scratch
        w_vmem = refs[11 + 2 * n_mlp:11 + 3 * n_mlp]    # classifier weight scratch
        sem = refs[11 + 3 * n_mlp]                      # DMA semaphores (n_mlp,)

        # ---- start classifier-weight DMAs; they overlap the whole recurrence ------
        copies = []
        for li in range(n_mlp):
            cp = pltpu.make_async_copy(w_hbm[li], w_vmem[li], sem.at[li])
            cp.start()
            copies.append(cp)

        # ---- prologue: input projections for all steps of both LSTMs (one dot) ----
        # x packed lane-dense as (T_max*B, IN_W+IN_M); wih packed block-diag (.., 8H).
        gx_s[...] = (jnp.dot(x_ref[...], wih_ref[...],
                             preferred_element_type=jnp.float32) + b_ref[...])

        # ---- fused, fully unrolled dual-LSTM recurrence ----------------------------
        # gate column layout: [i_w|i_m | f_w|f_m | o_w|o_m | g_w|g_m], blocks of H.
        whh = whh_ref[...]                  # (2H, 8H) block-diagonal, resident
        h = h0_ref[...]                     # (B, 2H) = [h_w | h_m]   (8,128) slab
        c = c0_ref[...]                     # (B, 2H) = [c_w | c_m]

        if off_w > 0 or off_m > 0:          # static lane masks, hoisted out of loop
            lane = jax.lax.broadcasted_iota(jnp.int32, (B, 2 * H), 1)
            weekly_lanes = lane < H
            monthly_lanes = lane >= H

        for t in range(T_max):
            gx = gx_s[pl.ds(t * B, B), :]                        # (B, 8H)
            gates = gx + jnp.dot(h, whh, preferred_element_type=jnp.float32)
            sig = jax.nn.sigmoid(gates[:, 0:6 * H])              # 3 full vregs: i|f|o
            i = sig[:, 0:2 * H]
            f = sig[:, 2 * H:4 * H]
            o = sig[:, 4 * H:6 * H]
            g = jnp.tanh(gates[:, 6 * H:8 * H])
            c_new = f * c + i * g
            h_new = o * jnp.tanh(c_new)
            if t < off_w:                   # weekly LSTM has not started: keep state
                h_new = jnp.where(weekly_lanes, h, h_new)
                c_new = jnp.where(weekly_lanes, c, c_new)
            if t < off_m:                   # monthly LSTM has not started: keep state
                h_new = jnp.where(monthly_lanes, h, h_new)
                c_new = jnp.where(monthly_lanes, c, c_new)
            h, c = h_new, c_new

        h_out[...] = h                      # lane-dense slabs, split in the wrapper
        c_out[...] = c

        # ---- classifier MLP (BN(eval) folded into W/b; Dropout = identity) --------
        for cp in copies:                   # weights landed while the recurrence ran
            cp.wait()

        # layer 1 consumes [h_w | h_m | const] without materializing the concat: the
        # packed h slab covers rows 0:2H of W1, the constants cover rows 2H:2H+CONST.
        w1 = w_vmem[0]
        a = (jnp.dot(h, w1[0:2 * H, :], preferred_element_type=jnp.float32)
             + jnp.dot(const_ref[...], w1[2 * H:2 * H + CONST, :],
                       preferred_element_type=jnp.float32)
             + b_mlp[0][...])
        a = jnp.maximum(a, 0.0)
        for li in range(1, n_mlp):
            a = (jnp.dot(a, w_vmem[li][...], preferred_element_type=jnp.float32)
                 + b_mlp[li][...])
            a = jnp.maximum(a, 0.0)         # ReLU after every Linear (incl. the last)
        preds_out[...] = a

    return kernel


# ----------------------------------------------------------------------------
# Parameter preparation (PyTorch layout -> packed kernel layout), done once.
# ----------------------------------------------------------------------------
def _scatter_gates(mat, H, which):
    """mat: (rows, 4H) with PyTorch gate column order [i, f, g, o].
    Returns (rows, 8H) with columns [i_w|i_m|f_w|f_m|o_w|o_m|g_w|g_m]; the half that
    does not belong to `which` is zero (block-diagonal packing)."""
    i, f, g, o = (mat[:, 0:H], mat[:, H:2 * H], mat[:, 2 * H:3 * H], mat[:, 3 * H:4 * H])
    z = jnp.zeros_like(i)
    if which == "weekly":
        blocks = [i, z, f, z, o, z, g, z]
    else:
        blocks = [z, i, z, f, z, o, z, g]
    return jnp.concatenate(blocks, axis=1)


def prepare_params(raw, eps=1e-5):
    H = raw["hidden_size"]
    w_ih_w, w_hh_w, b_ih_w, b_hh_w = raw["weekly"]
    w_ih_m, w_hh_m, b_ih_m, b_hh_m = raw["monthly"]

    wih = jnp.concatenate([_scatter_gates(jnp.transpose(w_ih_w), H, "weekly"),
                           _scatter_gates(jnp.transpose(w_ih_m), H, "monthly")], axis=0)
    whh = jnp.concatenate([_scatter_gates(jnp.transpose(w_hh_w), H, "weekly"),
                           _scatter_gates(jnp.transpose(w_hh_m), H, "monthly")], axis=0)
    b = (_scatter_gates((b_ih_w + b_hh_w)[None, :], H, "weekly")
         + _scatter_gates((b_ih_m + b_hh_m)[None, :], H, "monthly"))

    folded = []
    for (w, b_l, bn) in raw["classifier"]:
        if bn is None:
            w_f, b_f = w, b_l
        else:                               # fold BatchNorm1d (eval) into the Linear
            gamma, beta, mean, var = bn
            scale = gamma / jnp.sqrt(var + eps)
            w_f = w * scale[:, None]
            b_f = (b_l - mean) * scale + beta
        folded.append((jnp.transpose(w_f), b_f.reshape(1, -1)))   # (in, out), (1, out)

    return {"H": H, "wih": wih, "whh": whh, "b": b, "classifier": folded}


# ----------------------------------------------------------------------------
# Full forward (mirrors LSTM.forward), one pallas_call total.
# ----------------------------------------------------------------------------
def forward(weekly_seq, monthly_seq, constants,
            prev_week_state, prev_month_state, prepared):
    T_W, B, IN_W = weekly_seq.shape
    T_M, _, IN_M = monthly_seq.shape
    H = prepared["H"]
    CONST = constants.shape[1]
    mlp = prepared["classifier"]
    n_mlp = len(mlp)
    OUT = mlp[-1][0].shape[1]

    T_max = max(T_W, T_M)
    off_w, off_m = T_max - T_W, T_max - T_M

    # Time-align both sequences so they END on the same step; zero-pad the missing
    # head (those steps are masked out of the packed state inside the kernel).
    xw = jnp.zeros((T_max, B, IN_W), jnp.float32).at[off_w:].set(weekly_seq)
    xm = jnp.zeros((T_max, B, IN_M), jnp.float32).at[off_m:].set(monthly_seq)
    x_packed = jnp.concatenate([xw, xm], axis=-1).reshape(T_max * B, IN_W + IN_M)

    h0 = jnp.concatenate([prev_week_state[0][0], prev_month_state[0][0]], axis=1)
    c0 = jnp.concatenate([prev_week_state[1][0], prev_month_state[1][0]], axis=1)

    flat_w = [w for (w, _) in mlp]
    flat_b = [b for (_, b) in mlp]

    kernel = _make_fused_kernel(T_max, off_w, off_m, B, H, CONST, n_mlp)

    in_specs = ([pl.BlockSpec(memory_space=pltpu.MemorySpace.VMEM) for _ in range(7)]
                + [pl.BlockSpec(memory_space=pl.ANY) for _ in range(n_mlp)]
                + [pl.BlockSpec(memory_space=pltpu.MemorySpace.VMEM) for _ in range(n_mlp)])

    h_pk, c_pk, preds = pl.pallas_call(
        kernel,
        out_shape=(jax.ShapeDtypeStruct((B, 2 * H), jnp.float32),
                   jax.ShapeDtypeStruct((B, 2 * H), jnp.float32),
                   jax.ShapeDtypeStruct((B, OUT), jnp.float32)),
        in_specs=in_specs,
        out_specs=(pl.BlockSpec(memory_space=pltpu.MemorySpace.VMEM),
                   pl.BlockSpec(memory_space=pltpu.MemorySpace.VMEM),
                   pl.BlockSpec(memory_space=pltpu.MemorySpace.VMEM)),
        scratch_shapes=([pltpu.VMEM((T_max * B, 8 * H), jnp.float32)]
                        + [pltpu.VMEM(w.shape, jnp.float32) for w in flat_w]
                        + [pltpu.SemaphoreType.DMA((n_mlp,))]),
    )(x_packed, prepared["wih"], prepared["whh"], prepared["b"],
      h0, c0, constants, *flat_w, *flat_b)

    hw, hm = h_pk[:, :H], h_pk[:, H:]
    cw, cm = c_pk[:, :H], c_pk[:, H:]
    return preds, (hw[None], cw[None]), (hm[None], cm[None])


# ----------------------------------------------------------------------------
# Deterministic init (PyTorch layout / ranges)
# ----------------------------------------------------------------------------
def init_lstm_params(key, in_size, hidden):
    k1, k2, k3, k4 = jax.random.split(key, 4)
    s = 1.0 / math.sqrt(hidden)
    w_ih = jax.random.uniform(k1, (4 * hidden, in_size), jnp.float32, -s, s)
    w_hh = jax.random.uniform(k2, (4 * hidden, hidden), jnp.float32, -s, s)
    b_ih = jax.random.uniform(k3, (4 * hidden,), jnp.float32, -s, s)
    b_hh = jax.random.uniform(k4, (4 * hidden,), jnp.float32, -s, s)
    return (w_ih, w_hh, b_ih, b_hh)


def init_classifier_params(key, dims):
    """dims: list of (fan_in, fan_out). BatchNorm1d after every layer but the last."""
    layers = []
    keys = jax.random.split(key, len(dims))
    for idx, ((fi, fo), k) in enumerate(zip(dims, keys)):
        k1, k2, k3, k4, k5, k6 = jax.random.split(k, 6)
        s = 1.0 / math.sqrt(fi)
        w = jax.random.uniform(k1, (fo, fi), jnp.float32, -s, s)
        b = jax.random.uniform(k2, (fo,), jnp.float32, -s, s)
        if idx < len(dims) - 1:
            bn = (jax.random.uniform(k3, (fo,), jnp.float32, 0.5, 1.5),    # gamma
                  jax.random.uniform(k4, (fo,), jnp.float32, -0.1, 0.1),   # beta
                  jax.random.uniform(k5, (fo,), jnp.float32, -0.1, 0.1),   # running_mean
                  jax.random.uniform(k6, (fo,), jnp.float32, 0.5, 1.5))    # running_var
        else:
            bn = None
        layers.append((w, b, bn))
    return layers


# ----------------------------------------------------------------------------
# Pure-JAX reference (PyTorch semantics: gate order i,f,g,o; BN eval; Dropout=id)
# ----------------------------------------------------------------------------
def lstm_ref(x, w_ih, w_hh, b_ih, b_hh, h0, c0):
    def step(carry, xt):
        h, c = carry
        gates = xt @ w_ih.T + b_ih + h @ w_hh.T + b_hh
        i, f, g, o = jnp.split(gates, 4, axis=-1)
        c = jax.nn.sigmoid(f) * c + jax.nn.sigmoid(i) * jnp.tanh(g)
        h = jax.nn.sigmoid(o) * jnp.tanh(c)
        return (h, c), h
    (h, c), _ = jax.lax.scan(step, (h0, c0), x)
    return h, c


def forward_ref(weekly_seq, monthly_seq, constants,
                prev_week_state, prev_month_state, raw, eps=1e-5):
    hw, cw = lstm_ref(weekly_seq, *raw["weekly"],
                      prev_week_state[0][0], prev_week_state[1][0])
    hm, cm = lstm_ref(monthly_seq, *raw["monthly"],
                      prev_month_state[0][0], prev_month_state[1][0])
    h = jnp.concatenate([hw, hm, constants], axis=1)
    for (w, b, bn) in raw["classifier"]:
        h = h @ w.T + b
        if bn is not None:
            gamma, beta, mean, var = bn
            h = (h - mean) / jnp.sqrt(var + eps) * gamma + beta
        h = jnp.maximum(h, 0.0)            # Dropout(eval) = identity; final nn.ReLU kept
    return h, (hw[None], cw[None]), (hm[None], cm[None])


if __name__ == "__main__":
    B = 8                   # batch
    H = 64                  # hidden_size (module default) -> packed state is (8,128)
    CONST = 8               # const_size
    OUT = 6                 # output_size
    WEEKLY_IN, MONTHLY_IN = 1, 1
    T_W, T_M = 12, 6        # sequence lengths

    key = jax.random.PRNGKey(0)
    k_wl, k_ml, k_cls, k_w, k_m, k_c, k_s = jax.random.split(key, 7)

    raw_params = {
        "hidden_size": H,
        "weekly": init_lstm_params(k_wl, WEEKLY_IN, H),
        "monthly": init_lstm_params(k_ml, MONTHLY_IN, H),
        "classifier": init_classifier_params(
            k_cls,
            [(2 * H + CONST, 1024), (1024, 512), (512, 256), (256, 128),
             (128, 64), (64, 32), (32, 16), (16, 8), (8, 4), (4, OUT)]),
    }
    prepared = prepare_params(raw_params)   # gate interleave + block-diag pack + BN fold

    weekly_seq = jax.random.normal(k_w, (T_W, B, WEEKLY_IN), jnp.float32)
    monthly_seq = jax.random.normal(k_m, (T_M, B, MONTHLY_IN), jnp.float32)
    constants = jax.random.normal(k_c, (B, CONST), jnp.float32)

    ks1, ks2, ks3, ks4 = jax.random.split(k_s, 4)
    week_state = (0.1 * jax.random.normal(ks1, (1, B, H), jnp.float32),
                  0.1 * jax.random.normal(ks2, (1, B, H), jnp.float32))
    month_state = (0.1 * jax.random.normal(ks3, (1, B, H), jnp.float32),
                   0.1 * jax.random.normal(ks4, (1, B, H), jnp.float32))

    preds, wstate, mstate = forward(
        weekly_seq, monthly_seq, constants, week_state, month_state, prepared)
    jax.block_until_ready((preds, wstate, mstate))

    # validate against the pure-JAX PyTorch-semantics reference
    preds_r, wstate_r, mstate_r = forward_ref(
        weekly_seq, monthly_seq, constants, week_state, month_state, raw_params)

    assert jnp.allclose(preds, preds_r, atol=2e-3, rtol=2e-3), \
        float(jnp.max(jnp.abs(preds - preds_r)))
    for got, ref in zip(wstate + mstate, wstate_r + mstate_r):
        assert jnp.allclose(got, ref, atol=2e-3, rtol=2e-3), \
            float(jnp.max(jnp.abs(got - ref)))

    # TODO(synk): training-mode BatchNorm (batch statistics) and Dropout sampling are
    # not implemented; this kernel is the inference/eval forward pass.
    print("KERNEL_OK")
</pallas_src>

<mosaic_0001>
module attributes {stable_mosaic.version = 11 : i64} {
  func.func @kernel(%arg0: memref<96x2xf32, #tpu.memory_space<vmem>>, %arg1: memref<2x512xf32, #tpu.memory_space<vmem>>, %arg2: memref<128x512xf32, #tpu.memory_space<vmem>>, %arg3: memref<1x512xf32, #tpu.memory_space<vmem>>, %arg4: memref<8x128xf32, #tpu.memory_space<vmem>>, %arg5: memref<8x128xf32, #tpu.memory_space<vmem>>, %arg6: memref<8x8xf32, #tpu.memory_space<vmem>>, %arg7: memref<136x1024xf32, #tpu.memory_space<any>>, %arg8: memref<1024x512xf32, #tpu.memory_space<any>>, %arg9: memref<512x256xf32, #tpu.memory_space<any>>, %arg10: memref<256x128xf32, #tpu.memory_space<any>>, %arg11: memref<128x64xf32, #tpu.memory_space<any>>, %arg12: memref<64x32xf32, #tpu.memory_space<any>>, %arg13: memref<32x16xf32, #tpu.memory_space<any>>, %arg14: memref<16x8xf32, #tpu.memory_space<any>>, %arg15: memref<8x4xf32, #tpu.memory_space<any>>, %arg16: memref<4x6xf32, #tpu.memory_space<any>>, %arg17: memref<1x1024xf32, #tpu.memory_space<vmem>>, %arg18: memref<1x512xf32, #tpu.memory_space<vmem>>, %arg19: memref<1x256xf32, #tpu.memory_space<vmem>>, %arg20: memref<1x128xf32, #tpu.memory_space<vmem>>, %arg21: memref<1x64xf32, #tpu.memory_space<vmem>>, %arg22: memref<1x32xf32, #tpu.memory_space<vmem>>, %arg23: memref<1x16xf32, #tpu.memory_space<vmem>>, %arg24: memref<1x8xf32, #tpu.memory_space<vmem>>, %arg25: memref<1x4xf32, #tpu.memory_space<vmem>>, %arg26: memref<1x6xf32, #tpu.memory_space<vmem>>, %arg27: memref<8x128xf32, #tpu.memory_space<vmem>>, %arg28: memref<8x128xf32, #tpu.memory_space<vmem>>, %arg29: memref<8x6xf32, #tpu.memory_space<vmem>>, %arg30: memref<96x512xf32, #tpu.memory_space<vmem>>, %arg31: memref<136x1024xf32, #tpu.memory_space<vmem>>, %arg32: memref<1024x512xf32, #tpu.memory_space<vmem>>, %arg33: memref<512x256xf32, #tpu.memory_space<vmem>>, %arg34: memref<256x128xf32, #tpu.memory_space<vmem>>, %arg35: memref<128x64xf32, #tpu.memory_space<vmem>>, %arg36: memref<64x32xf32, #tpu.memory_space<vmem>>, %arg37: memref<32x16xf32, #tpu.memory_space<vmem>>, %arg38: memref<16x8xf32, #tpu.memory_space<vmem>>, %arg39: memref<8x4xf32, #tpu.memory_space<vmem>>, %arg40: memref<4x6xf32, #tpu.memory_space<vmem>>, %arg41: memref<10x!tpu.dma_semaphore, #tpu.memory_space<semaphore_mem>>) attributes {dimension_semantics = [], scalar_prefetch = 0 : i64, scratch_operands = 12 : i64, tpu.core_type = #tpu.core_type<tc>} {
    %c0_i32 = arith.constant 0 : i32
    %0 = tpu.memref_slice %arg41[%c0_i32] : memref<10x!tpu.dma_semaphore, #tpu.memory_space<semaphore_mem>> -> memref<1x!tpu.dma_semaphore, #tpu.memory_space<semaphore_mem>>
    %1 = tpu.memref_squeeze %0 : memref<1x!tpu.dma_semaphore, #tpu.memory_space<semaphore_mem>> -> memref<!tpu.dma_semaphore, #tpu.memory_space<semaphore_mem>>
    tpu.enqueue_dma source(%arg7 : memref<136x1024xf32, #tpu.memory_space<any>>) target(%arg31 : memref<136x1024xf32, #tpu.memory_space<vmem>>) target_semaphore(%1 : memref<!tpu.dma_semaphore, #tpu.memory_space<semaphore_mem>>)
    %c1_i32 = arith.constant 1 : i32
    %2 = tpu.memref_slice %arg41[%c1_i32] : memref<10x!tpu.dma_semaphore, #tpu.memory_space<semaphore_mem>> -> memref<1x!tpu.dma_semaphore, #tpu.memory_space<semaphore_mem>>
    %3 = tpu.memref_squeeze %2 : memref<1x!tpu.dma_semaphore, #tpu.memory_space<semaphore_mem>> -> memref<!tpu.dma_semaphore, #tpu.memory_space<semaphore_mem>>
    tpu.enqueue_dma source(%arg8 : memref<1024x512xf32, #tpu.memory_space<any>>) target(%arg32 : memref<1024x512xf32, #tpu.memory_space<vmem>>) target_semaphore(%3 : memref<!tpu.dma_semaphore, #tpu.memory_space<semaphore_mem>>)
    %c2_i32 = arith.constant 2 : i32
    %4 = tpu.memref_slice %arg41[%c2_i32] : memref<10x!tpu.dma_semaphore, #tpu.memory_space<semaphore_mem>> -> memref<1x!tpu.dma_semaphore, #tpu.memory_space<semaphore_mem>>
    %5 = tpu.memref_squeeze %4 : memref<1x!tpu.dma_semaphore, #tpu.memory_space<semaphore_mem>> -> memref<!tpu.dma_semaphore, #tpu.memory_space<semaphore_mem>>
    tpu.enqueue_dma source(%arg9 : memref<512x256xf32, #tpu.memory_space<any>>) target(%arg33 : memref<512x256xf32, #tpu.memory_space<vmem>>) target_semaphore(%5 : memref<!tpu.dma_semaphore, #tpu.memory_space<semaphore_mem>>)
    %c3_i32 = arith.constant 3 : i32
    %6 = tpu.memref_slice %arg41[%c3_i32] : memref<10x!tpu.dma_semaphore, #tpu.memory_space<semaphore_mem>> -> memref<1x!tpu.dma_semaphore, #tpu.memory_space<semaphore_mem>>
    %7 = tpu.memref_squeeze %6 : memref<1x!tpu.dma_semaphore, #tpu.memory_space<semaphore_mem>> -> memref<!tpu.dma_semaphore, #tpu.memory_space<semaphore_mem>>
    tpu.enqueue_dma source(%arg10 : memref<256x128xf32, #tpu.memory_space<any>>) target(%arg34 : memref<256x128xf32, #tpu.memory_space<vmem>>) target_semaphore(%7 : memref<!tpu.dma_semaphore, #tpu.memory_space<semaphore_mem>>)
    %c4_i32 = arith.constant 4 : i32
    %8 = tpu.memref_slice %arg41[%c4_i32] : memref<10x!tpu.dma_semaphore, #tpu.memory_space<semaphore_mem>> -> memref<1x!tpu.dma_semaphore, #tpu.memory_space<semaphore_mem>>
    %9 = tpu.memref_squeeze %8 : memref<1x!tpu.dma_semaphore, #tpu.memory_space<semaphore_mem>> -> memref<!tpu.dma_semaphore, #tpu.memory_space<semaphore_mem>>
    tpu.enqueue_dma source(%arg11 : memref<128x64xf32, #tpu.memory_space<any>>) target(%arg35 : memref<128x64xf32, #tpu.memory_space<vmem>>) target_semaphore(%9 : memref<!tpu.dma_semaphore, #tpu.memory_space<semaphore_mem>>)
    %c5_i32 = arith.constant 5 : i32
    %10 = tpu.memref_slice %arg41[%c5_i32] : memref<10x!tpu.dma_semaphore, #tpu.memory_space<semaphore_mem>> -> memref<1x!tpu.dma_semaphore, #tpu.memory_space<semaphore_mem>>
    %11 = tpu.memref_squeeze %10 : memref<1x!tpu.dma_semaphore, #tpu.memory_space<semaphore_mem>> -> memref<!tpu.dma_semaphore, #tpu.memory_space<semaphore_mem>>
    tpu.enqueue_dma source(%arg12 : memref<64x32xf32, #tpu.memory_space<any>>) target(%arg36 : memref<64x32xf32, #tpu.memory_space<vmem>>) target_semaphore(%11 : memref<!tpu.dma_semaphore, #tpu.memory_space<semaphore_mem>>)
    %c6_i32 = arith.constant 6 : i32
    %12 = tpu.memref_slice %arg41[%c6_i32] : memref<10x!tpu.dma_semaphore, #tpu.memory_space<semaphore_mem>> -> memref<1x!tpu.dma_semaphore, #tpu.memory_space<semaphore_mem>>
    %13 = tpu.memref_squeeze %12 : memref<1x!tpu.dma_semaphore, #tpu.memory_space<semaphore_mem>> -> memref<!tpu.dma_semaphore, #tpu.memory_space<semaphore_mem>>
    tpu.enqueue_dma source(%arg13 : memref<32x16xf32, #tpu.memory_space<any>>) target(%arg37 : memref<32x16xf32, #tpu.memory_space<vmem>>) target_semaphore(%13 : memref<!tpu.dma_semaphore, #tpu.memory_space<semaphore_mem>>)
    %c7_i32 = arith.constant 7 : i32
    %14 = tpu.memref_slice %arg41[%c7_i32] : memref<10x!tpu.dma_semaphore, #tpu.memory_space<semaphore_mem>> -> memref<1x!tpu.dma_semaphore, #tpu.memory_space<semaphore_mem>>
    %15 = tpu.memref_squeeze %14 : memref<1x!tpu.dma_semaphore, #tpu.memory_space<semaphore_mem>> -> memref<!tpu.dma_semaphore, #tpu.memory_space<semaphore_mem>>
    tpu.enqueue_dma source(%arg14 : memref<16x8xf32, #tpu.memory_space<any>>) target(%arg38 : memref<16x8xf32, #tpu.memory_space<vmem>>) target_semaphore(%15 : memref<!tpu.dma_semaphore, #tpu.memory_space<semaphore_mem>>)
    %c8_i32 = arith.constant 8 : i32
    %16 = tpu.memref_slice %arg41[%c8_i32] : memref<10x!tpu.dma_semaphore, #tpu.memory_space<semaphore_mem>> -> memref<1x!tpu.dma_semaphore, #tpu.memory_space<semaphore_mem>>
    %17 = tpu.memref_squeeze %16 : memref<1x!tpu.dma_semaphore, #tpu.memory_space<semaphore_mem>> -> memref<!tpu.dma_semaphore, #tpu.memory_space<semaphore_mem>>
    tpu.enqueue_dma source(%arg15 : memref<8x4xf32, #tpu.memory_space<any>>) target(%arg39 : memref<8x4xf32, #tpu.memory_space<vmem>>) target_semaphore(%17 : memref<!tpu.dma_semaphore, #tpu.memory_space<semaphore_mem>>)
    %c9_i32 = arith.constant 9 : i32
    %18 = tpu.memref_slice %arg41[%c9_i32] : memref<10x!tpu.dma_semaphore, #tpu.memory_space<semaphore_mem>> -> memref<1x!tpu.dma_semaphore, #tpu.memory_space<semaphore_mem>>
    %19 = tpu.memref_squeeze %18 : memref<1x!tpu.dma_semaphore, #tpu.memory_space<semaphore_mem>> -> memref<!tpu.dma_semaphore, #tpu.memory_space<semaphore_mem>>
    tpu.enqueue_dma source(%arg16 : memref<4x6xf32, #tpu.memory_space<any>>) target(%arg40 : memref<4x6xf32, #tpu.memory_space<vmem>>) target_semaphore(%19 : memref<!tpu.dma_semaphore, #tpu.memory_space<semaphore_mem>>)
    %c0 = arith.constant 0 : index
    %c0_0 = arith.constant 0 : index
    %20 = vector.load %arg0[%c0, %c0_0] : memref<96x2xf32, #tpu.memory_space<vmem>>, vector<96x2xf32>
    %c0_1 = arith.constant 0 : index
    %c0_2 = arith.constant 0 : index
    %21 = vector.load %arg1[%c0_1, %c0_2] : memref<2x512xf32, #tpu.memory_space<vmem>>, vector<2x512xf32>
    %cst = arith.constant dense<0.000000e+00> : vector<96x512xf32>
    %22 = tpu.matmul %20, %21, %cst {dimension_numbers = #tpu.dot_dimension_numbers<[1], [0], [0], [1], [0, 0, 1, 1], [], []>} : vector<96x2xf32>, vector<2x512xf32>, vector<96x512xf32> -> vector<96x512xf32>
    %c0_3 = arith.constant 0 : index
    %c0_4 = arith.constant 0 : index
    %23 = vector.load %arg3[%c0_3, %c0_4] : memref<1x512xf32, #tpu.memory_space<vmem>>, vector<1x512xf32>
    %24 = vector.broadcast %23 : vector<1x512xf32> to vector<96x512xf32>
    %25 = arith.addf %22, %24 : vector<96x512xf32>
    %c0_5 = arith.constant 0 : index
    %c0_6 = arith.constant 0 : index
    %26 = vector.load %arg30[%c0_5, %c0_6] : memref<96x512xf32, #tpu.memory_space<vmem>>, vector<96x512xf32>
    tpu.vector_store %arg30[%c0_5, %c0_6], %25 {strides = array<i32>} : memref<96x512xf32, #tpu.memory_space<vmem>>, vector<96x512xf32>,
    %c0_7 = arith.constant 0 : index
    %c0_8 = arith.constant 0 : index
    %27 = vector.load %arg2[%c0_7, %c0_8] : memref<128x512xf32, #tpu.memory_space<vmem>>, vector<128x512xf32>
    %c0_9 = arith.constant 0 : index
    %c0_10 = arith.constant 0 : index
    %28 = vector.load %arg4[%c0_9, %c0_10] : memref<8x128xf32, #tpu.memory_space<vmem>>, vector<8x128xf32>
    %c0_11 = arith.constant 0 : index
    %c0_12 = arith.constant 0 : index
    %29 = vector.load %arg5[%c0_11, %c0_12] : memref<8x128xf32, #tpu.memory_space<vmem>>, vector<8x128xf32>
    %30 = tpu.iota {dimensions = array<i32: 1>} : vector<8x128xi32>
    %c64_i32 = arith.constant 64 : i32
    %31 = vector.broadcast %c64_i32 : i32 to vector<8x128xi32>
    %32 = arith.cmpi sge, %30, %31 : vector<8x128xi32>
    %c0_13 = arith.constant 0 : index
    %c0_14 = arith.constant 0 : index
    %33 = vector.load %arg30[%c0_13, %c0_14] : memref<96x512xf32, #tpu.memory_space<vmem>>, vector<8x512xf32>
    %cst_15 = arith.constant dense<0.000000e+00> : vector<8x512xf32>
    %34 = tpu.matmul %28, %27, %cst_15 {dimension_numbers = #tpu.dot_dimension_numbers<[1], [0], [0], [1], [0, 0, 1, 1], [], []>} : vector<8x128xf32>, vector<128x512xf32>, vector<8x512xf32> -> vector<8x512xf32>
    %35 = arith.addf %33, %34 : vector<8x512xf32>
    %36 = vector.extract_strided_slice %35 {offsets = [0, 0], sizes = [8, 384], strides = [1, 1]} : vector<8x512xf32> to vector<8x384xf32>
    %37 = arith.negf %36 : vector<8x384xf32>
    %38 = math.exp %37 : vector<8x384xf32>
    %cst_16 = arith.constant 1.000000e+00 : f32
    %39 = vector.broadcast %cst_16 : f32 to vector<8x384xf32>
    %40 = arith.addf %39, %38 : vector<8x384xf32>
    %41 = arith.divf %39, %40 : vector<8x384xf32>
    %42 = vector.extract_strided_slice %41 {offsets = [0, 0], sizes = [8, 128], strides = [1, 1]} : vector<8x384xf32> to vector<8x128xf32>
    %43 = vector.extract_strided_slice %41 {offsets = [0, 128], sizes = [8, 128], strides = [1, 1]} : vector<8x384xf32> to vector<8x128xf32>
    %44 = vector.extract_strided_slice %41 {offsets = [0, 256], sizes = [8, 128], strides = [1, 1]} : vector<8x384xf32> to vector<8x128xf32>
    %45 = vector.extract_strided_slice %35 {offsets = [0, 384], sizes = [8, 128], strides = [1, 1]} : vector<8x512xf32> to vector<8x128xf32>
    %46 = math.tanh %45 : vector<8x128xf32>
    %47 = arith.mulf %43, %29 : vector<8x128xf32>
    %48 = arith.mulf %42, %46 : vector<8x128xf32>
    %49 = arith.addf %47, %48 : vector<8x128xf32>
    %50 = math.tanh %49 : vector<8x128xf32>
    %51 = arith.mulf %44, %50 : vector<8x128xf32>
    %52 = arith.select %32, %28, %51 : vector<8x128xi1>, vector<8x128xf32>
    %53 = arith.select %32, %29, %49 : vector<8x128xi1>, vector<8x128xf32>
    %c8 = arith.constant 8 : index
    %c0_17 = arith.constant 0 : index
    %54 = vector.load %arg30[%c8, %c0_17] : memref<96x512xf32, #tpu.memory_space<vmem>>, vector<8x512xf32>
    %cst_18 = arith.constant dense<0.000000e+00> : vector<8x512xf32>
    %55 = tpu.matmul %52, %27, %cst_18 {dimension_numbers = #tpu.dot_dimension_numbers<[1], [0], [0], [1], [0, 0, 1, 1], [], []>} : vector<8x128xf32>, vector<128x512xf32>, vector<8x512xf32> -> vector<8x512xf32>
    %56 = arith.addf %54, %55 : vector<8x512xf32>
    %57 = vector.extract_strided_slice %56 {offsets = [0, 0], sizes = [8, 384], strides = [1, 1]} : vector<8x512xf32> to vector<8x384xf32>
    %58 = arith.negf %57 : vector<8x384xf32>
    %59 = math.exp %58 : vector<8x384xf32>
    %cst_19 = arith.constant 1.000000e+00 : f32
    %60 = vector.broadcast %cst_19 : f32 to vector<8x384xf32>
    %61 = arith.addf %60, %59 : vector<8x384xf32>
    %62 = arith.divf %60, %61 : vector<8x384xf32>
    %63 = vector.extract_strided_slice %62 {offsets = [0, 0], sizes = [8, 128], strides = [1, 1]} : vector<8x384xf32> to vector<8x128xf32>
    %64 = vector.extract_strided_slice %62 {offsets = [0, 128], sizes = [8, 128], strides = [1, 1]} : vector<8x384xf32> to vector<8x128xf32>
    %65 = vector.extract_strided_slice %62 {offsets = [0, 256], sizes = [8, 128], strides = [1, 1]} : vector<8x384xf32> to vector<8x128xf32>
    %66 = vector.extract_strided_slice %56 {offsets = [0, 384], sizes = [8, 128], strides = [1, 1]} : vector<8x512xf32> to vector<8x128xf32>
    %67 = math.tanh %66 : vector<8x128xf32>
    %68 = arith.mulf %64, %53 : vector<8x128xf32>
    %69 = arith.mulf %63, %67 : vector<8x128xf32>
    %70 = arith.addf %68, %69 : vector<8x128xf32>
    %71 = math.tanh %70 : vector<8x128xf32>
    %72 = arith.mulf %65, %71 : vector<8x128xf32>
    %73 = arith.select %32, %52, %72 : vector<8x128xi1>, vector<8x128xf32>
    %74 = arith.select %32, %53, %70 : vector<8x128xi1>, vector<8x128xf32>
    %c16 = arith.constant 16 : index
    %c0_20 = arith.constant 0 : index
    %75 = vector.load %arg30[%c16, %c0_20] : memref<96x512xf32, #tpu.memory_space<vmem>>, vector<8x512xf32>
    %cst_21 = arith.constant dense<0.000000e+00> : vector<8x512xf32>
    %76 = tpu.matmul %73, %27, %cst_21 {dimension_numbers = #tpu.dot_dimension_numbers<[1], [0], [0], [1], [0, 0, 1, 1], [], []>} : vector<8x128xf32>, vector<128x512xf32>, vector<8x512xf32> -> vector<8x512xf32>
    %77 = arith.addf %75, %76 : vector<8x512xf32>
    %78 = vector.extract_strided_slice %77 {offsets = [0, 0], sizes = [8, 384], strides = [1, 1]} : vector<8x512xf32> to vector<8x384xf32>
    %79 = arith.negf %78 : vector<8x384xf32>
    %80 = math.exp %79 : vector<8x384xf32>
    %cst_22 = arith.constant 1.000000e+00 : f32
    %81 = vector.broadcast %cst_22 : f32 to vector<8x384xf32>
    %82 = arith.addf %81, %80 : vector<8x384xf32>
    %83 = arith.divf %81, %82 : vector<8x384xf32>
    %84 = vector.extract_strided_slice %83 {offsets = [0, 0], sizes = [8, 128], strides = [1, 1]} : vector<8x384xf32> to vector<8x128xf32>
    %85 = vector.extract_strided_slice %83 {offsets = [0, 128], sizes = [8, 128], strides = [1, 1]} : vector<8x384xf32> to vector<8x128xf32>
    %86 = vector.extract_strided_slice %83 {offsets = [0, 256], sizes = [8, 128], strides = [1, 1]} : vector<8x384xf32> to vector<8x128xf32>
    %87 = vector.extract_strided_slice %77 {offsets = [0, 384], sizes = [8, 128], strides = [1, 1]} : vector<8x512xf32> to vector<8x128xf32>
    %88 = math.tanh %87 : vector<8x128xf32>
    %89 = arith.mulf %85, %74 : vector<8x128xf32>
    %90 = arith.mulf %84, %88 : vector<8x128xf32>
    %91 = arith.addf %89, %90 : vector<8x128xf32>
    %92 = math.tanh %91 : vector<8x128xf32>
    %93 = arith.mulf %86, %92 : vector<8x128xf32>
    %94 = arith.select %32, %73, %93 : vector<8x128xi1>, vector<8x128xf32>
    %95 = arith.select %32, %74, %91 : vector<8x128xi1>, vector<8x128xf32>
    %c24 = arith.constant 24 : index
    %c0_23 = arith.constant 0 : index
    %96 = vector.load %arg30[%c24, %c0_23] : memref<96x512xf32, #tpu.memory_space<vmem>>, vector<8x512xf32>
    %cst_24 = arith.constant dense<0.000000e+00> : vector<8x512xf32>
    %97 = tpu.matmul %94, %27, %cst_24 {dimension_numbers = #tpu.dot_dimension_numbers<[1], [0], [0], [1], [0, 0, 1, 1], [], []>} : vector<8x128xf32>, vector<128x512xf32>, vector<8x512xf32> -> vector<8x512xf32>
    %98 = arith.addf %96, %97 : vector<8x512xf32>
    %99 = vector.extract_strided_slice %98 {offsets = [0, 0], sizes = [8, 384], strides = [1, 1]} : vector<8x512xf32> to vector<8x384xf32>
    %100 = arith.negf %99 : vector<8x384xf32>
    %101 = math.exp %100 : vector<8x384xf32>
    %cst_25 = arith.constant 1.000000e+00 : f32
    %102 = vector.broadcast %cst_25 : f32 to vector<8x384xf32>
    %103 = arith.addf %102, %101 : vector<8x384xf32>
    %104 = arith.divf %102, %103 : vector<8x384xf32>
    %105 = vector.extract_strided_slice %104 {offsets = [0, 0], sizes = [8, 128], strides = [1, 1]} : vector<8x384xf32> to vector<8x128xf32>
    %106 = vector.extract_strided_slice %104 {offsets = [0, 128], sizes = [8, 128], strides = [1, 1]} : vector<8x384xf32> to vector<8x128xf32>
    %107 = vector.extract_strided_slice %104 {offsets = [0, 256], sizes = [8, 128], strides = [1, 1]} : vector<8x384xf32> to vector<8x128xf32>
    %108 = vector.extract_strided_slice %98 {offsets = [0, 384], sizes = [8, 128], strides = [1, 1]} : vector<8x512xf32> to vector<8x128xf32>
    %109 = math.tanh %108 : vector<8x128xf32>
    %110 = arith.mulf %106, %95 : vector<8x128xf32>
    %111 = arith.mulf %105, %109 : vector<8x128xf32>
    %112 = arith.addf %110, %111 : vector<8x128xf32>
    %113 = math.tanh %112 : vector<8x128xf32>
    %114 = arith.mulf %107, %113 : vector<8x128xf32>
    %115 = arith.select %32, %94, %114 : vector<8x128xi1>, vector<8x128xf32>
    %116 = arith.select %32, %95, %112 : vector<8x128xi1>, vector<8x128xf32>
    %c32 = arith.constant 32 : index
    %c0_26 = arith.constant 0 : index
    %117 = vector.load %arg30[%c32, %c0_26] : memref<96x512xf32, #tpu.memory_space<vmem>>, vector<8x512xf32>
    %cst_27 = arith.constant dense<0.000000e+00> : vector<8x512xf32>
    %118 = tpu.matmul %115, %27, %cst_27 {dimension_numbers = #tpu.dot_dimension_numbers<[1], [0], [0], [1], [0, 0, 1, 1], [], []>} : vector<8x128xf32>, vector<128x512xf32>, vector<8x512xf32> -> vector<8x512xf32>
    %119 = arith.addf %117, %118 : vector<8x512xf32>
    %120 = vector.extract_strided_slice %119 {offsets = [0, 0], sizes = [8, 384], strides = [1, 1]} : vector<8x512xf32> to vector<8x384xf32>
    %121 = arith.negf %120 : vector<8x384xf32>
    %122 = math.exp %121 : vector<8x384xf32>
    %cst_28 = arith.constant 1.000000e+00 : f32
    %123 = vector.broadcast %cst_28 : f32 to vector<8x384xf32>
    %124 = arith.addf %123, %122 : vector<8x384xf32>
    %125 = arith.divf %123, %124 : vector<8x384xf32>
    %126 = vector.extract_strided_slice %125 {offsets = [0, 0], sizes = [8, 128], strides = [1, 1]} : vector<8x384xf32> to vector<8x128xf32>
    %127 = vector.extract_strided_slice %125 {offsets = [0, 128], sizes = [8, 128], strides = [1, 1]} : vector<8x384xf32> to vector<8x128xf32>
    %128 = vector.extract_strided_slice %125 {offsets = [0, 256], sizes = [8, 128], strides = [1, 1]} : vector<8x384xf32> to vector<8x128xf32>
    %129 = vector.extract_strided_slice %119 {offsets = [0, 384], sizes = [8, 128], strides = [1, 1]} : vector<8x512xf32> to vector<8x128xf32>
    %130 = math.tanh %129 : vector<8x128xf32>
    %131 = arith.mulf %127, %116 : vector<8x128xf32>
    %132 = arith.mulf %126, %130 : vector<8x128xf32>
    %133 = arith.addf %131, %132 : vector<8x128xf32>
    %134 = math.tanh %133 : vector<8x128xf32>
    %135 = arith.mulf %128, %134 : vector<8x128xf32>
    %136 = arith.select %32, %115, %135 : vector<8x128xi1>, vector<8x128xf32>
    %137 = arith.select %32, %116, %133 : vector<8x128xi1>, vector<8x128xf32>
    %c40 = arith.constant 40 : index
    %c0_29 = arith.constant 0 : index
    %138 = vector.load %arg30[%c40, %c0_29] : memref<96x512xf32, #tpu.memory_space<vmem>>, vector<8x512xf32>
    %cst_30 = arith.constant dense<0.000000e+00> : vector<8x512xf32>
    %139 = tpu.matmul %136, %27, %cst_30 {dimension_numbers = #tpu.dot_dimension_numbers<[1], [0], [0], [1], [0, 0, 1, 1], [], []>} : vector<8x128xf32>, vector<128x512xf32>, vector<8x512xf32> -> vector<8x512xf32>
    %140 = arith.addf %138, %139 : vector<8x512xf32>
    %141 = vector.extract_strided_slice %140 {offsets = [0, 0], sizes = [8, 384], strides = [1, 1]} : vector<8x512xf32> to vector<8x384xf32>
    %142 = arith.negf %141 : vector<8x384xf32>
    %143 = math.exp %142 : vector<8x384xf32>
    %cst_31 = arith.constant 1.000000e+00 : f32
    %144 = vector.broadcast %cst_31 : f32 to vector<8x384xf32>
    %145 = arith.addf %144, %143 : vector<8x384xf32>
    %146 = arith.divf %144, %145 : vector<8x384xf32>
    %147 = vector.extract_strided_slice %146 {offsets = [0, 0], sizes = [8, 128], strides = [1, 1]} : vector<8x384xf32> to vector<8x128xf32>
    %148 = vector.extract_strided_slice %146 {offsets = [0, 128], sizes = [8, 128], strides = [1, 1]} : vector<8x384xf32> to vector<8x128xf32>
    %149 = vector.extract_strided_slice %146 {offsets = [0, 256], sizes = [8, 128], strides = [1, 1]} : vector<8x384xf32> to vector<8x128xf32>
    %150 = vector.extract_strided_slice %140 {offsets = [0, 384], sizes = [8, 128], strides = [1, 1]} : vector<8x512xf32> to vector<8x128xf32>
    %151 = math.tanh %150 : vector<8x128xf32>
    %152 = arith.mulf %148, %137 : vector<8x128xf32>
    %153 = arith.mulf %147, %151 : vector<8x128xf32>
    %154 = arith.addf %152, %153 : vector<8x128xf32>
    %155 = math.tanh %154 : vector<8x128xf32>
    %156 = arith.mulf %149, %155 : vector<8x128xf32>
    %157 = arith.select %32, %136, %156 : vector<8x128xi1>, vector<8x128xf32>
    %158 = arith.select %32, %137, %154 : vector<8x128xi1>, vector<8x128xf32>
    %c48 = arith.constant 48 : index
    %c0_32 = arith.constant 0 : index
    %159 = vector.load %arg30[%c48, %c0_32] : memref<96x512xf32, #tpu.memory_space<vmem>>, vector<8x512xf32>
    %cst_33 = arith.constant dense<0.000000e+00> : vector<8x512xf32>
    %160 = tpu.matmul %157, %27, %cst_33 {dimension_numbers = #tpu.dot_dimension_numbers<[1], [0], [0], [1], [0, 0, 1, 1], [], []>} : vector<8x128xf32>, vector<128x512xf32>, vector<8x512xf32> -> vector<8x512xf32>
    %161 = arith.addf %159, %160 : vector<8x512xf32>
    %162 = vector.extract_strided_slice %161 {offsets = [0, 0], sizes = [8, 384], strides = [1, 1]} : vector<8x512xf32> to vector<8x384xf32>
    %163 = arith.negf %162 : vector<8x384xf32>
    %164 = math.exp %163 : vector<8x384xf32>
    %cst_34 = arith.constant 1.000000e+00 : f32
    %165 = vector.broadcast %cst_34 : f32 to vector<8x384xf32>
    %166 = arith.addf %165, %164 : vector<8x384xf32>
    %167 = arith.divf %165, %166 : vector<8x384xf32>
    %168 = vector.extract_strided_slice %167 {offsets = [0, 0], sizes = [8, 128], strides = [1, 1]} : vector<8x384xf32> to vector<8x128xf32>
    %169 = vector.extract_strided_slice %167 {offsets = [0, 128], sizes = [8, 128], strides = [1, 1]} : vector<8x384xf32> to vector<8x128xf32>
    %170 = vector.extract_strided_slice %167 {offsets = [0, 256], sizes = [8, 128], strides = [1, 1]} : vector<8x384xf32> to vector<8x128xf32>
    %171 = vector.extract_strided_slice %161 {offsets = [0, 384], sizes = [8, 128], strides = [1, 1]} : vector<8x512xf32> to vector<8x128xf32>
    %172 = math.tanh %171 : vector<8x128xf32>
    %173 = arith.mulf %169, %158 : vector<8x128xf32>
    %174 = arith.mulf %168, %172 : vector<8x128xf32>
    %175 = arith.addf %173, %174 : vector<8x128xf32>
    %176 = math.tanh %175 : vector<8x128xf32>
    %177 = arith.mulf %170, %176 : vector<8x128xf32>
    %c56 = arith.constant 56 : index
    %c0_35 = arith.constant 0 : index
    %178 = vector.load %arg30[%c56, %c0_35] : memref<96x512xf32, #tpu.memory_space<vmem>>, vector<8x512xf32>
    %cst_36 = arith.constant dense<0.000000e+00> : vector<8x512xf32>
    %179 = tpu.matmul %177, %27, %cst_36 {dimension_numbers = #tpu.dot_dimension_numbers<[1], [0], [0], [1], [0, 0, 1, 1], [], []>} : vector<8x128xf32>, vector<128x512xf32>, vector<8x512xf32> -> vector<8x512xf32>
    %180 = arith.addf %178, %179 : vector<8x512xf32>
    %181 = vector.extract_strided_slice %180 {offsets = [0, 0], sizes = [8, 384], strides = [1, 1]} : vector<8x512xf32> to vector<8x384xf32>
    %182 = arith.negf %181 : vector<8x384xf32>
    %183 = math.exp %182 : vector<8x384xf32>
    %cst_37 = arith.constant 1.000000e+00 : f32
    %184 = vector.broadcast %cst_37 : f32 to vector<8x384xf32>
    %185 = arith.addf %184, %183 : vector<8x384xf32>
    %186 = arith.divf %184, %185 : vector<8x384xf32>
    %187 = vector.extract_strided_slice %186 {offsets = [0, 0], sizes = [8, 128], strides = [1, 1]} : vector<8x384xf32> to vector<8x128xf32>
    %188 = vector.extract_strided_slice %186 {offsets = [0, 128], sizes = [8, 128], strides = [1, 1]} : vector<8x384xf32> to vector<8x128xf32>
    %189 = vector.extract_strided_slice %186 {offsets = [0, 256], sizes = [8, 128], strides = [1, 1]} : vector<8x384xf32> to vector<8x128xf32>
    %190 = vector.extract_strided_slice %180 {offsets = [0, 384], sizes = [8, 128], strides = [1, 1]} : vector<8x512xf32> to vector<8x128xf32>
    %191 = math.tanh %190 : vector<8x128xf32>
    %192 = arith.mulf %188, %175 : vector<8x128xf32>
    %193 = arith.mulf %187, %191 : vector<8x128xf32>
    %194 = arith.addf %192, %193 : vector<8x128xf32>
    %195 = math.tanh %194 : vector<8x128xf32>
    %196 = arith.mulf %189, %195 : vector<8x128xf32>
    %c64 = arith.constant 64 : index
    %c0_38 = arith.constant 0 : index
    %197 = vector.load %arg30[%c64, %c0_38] : memref<96x512xf32, #tpu.memory_space<vmem>>, vector<8x512xf32>
    %cst_39 = arith.constant dense<0.000000e+00> : vector<8x512xf32>
    %198 = tpu.matmul %196, %27, %cst_39 {dimension_numbers = #tpu.dot_dimension_numbers<[1], [0], [0], [1], [0, 0, 1, 1], [], []>} : vector<8x128xf32>, vector<128x512xf32>, vector<8x512xf32> -> vector<8x512xf32>
    %199 = arith.addf %197, %198 : vector<8x512xf32>
    %200 = vector.extract_strided_slice %199 {offsets = [0, 0], sizes = [8, 384], strides = [1, 1]} : vector<8x512xf32> to vector<8x384xf32>
    %201 = arith.negf %200 : vector<8x384xf32>
    %202 = math.exp %201 : vector<8x384xf32>
    %cst_40 = arith.constant 1.000000e+00 : f32
    %203 = vector.broadcast %cst_40 : f32 to vector<8x384xf32>
    %204 = arith.addf %203, %202 : vector<8x384xf32>
    %205 = arith.divf %203, %204 : vector<8x384xf32>
    %206 = vector.extract_strided_slice %205 {offsets = [0, 0], sizes = [8, 128], strides = [1, 1]} : vector<8x384xf32> to vector<8x128xf32>
    %207 = vector.extract_strided_slice %205 {offsets = [0, 128], sizes = [8, 128], strides = [1, 1]} : vector<8x384xf32> to vector<8x128xf32>
    %208 = vector.extract_strided_slice %205 {offsets = [0, 256], sizes = [8, 128], strides = [1, 1]} : vector<8x384xf32> to vector<8x128xf32>
    %209 = vector.extract_strided_slice %199 {offsets = [0, 384], sizes = [8, 128], strides = [1, 1]} : vector<8x512xf32> to vector<8x128xf32>
    %210 = math.tanh %209 : vector<8x128xf32>
    %211 = arith.mulf %207, %194 : vector<8x128xf32>
    %212 = arith.mulf %206, %210 : vector<8x128xf32>
    %213 = arith.addf %211, %212 : vector<8x128xf32>
    %214 = math.tanh %213 : vector<8x128xf32>
    %215 = arith.mulf %208, %214 : vector<8x128xf32>
    %c72 = arith.constant 72 : index
    %c0_41 = arith.constant 0 : index
    %216 = vector.load %arg30[%c72, %c0_41] : memref<96x512xf32, #tpu.memory_space<vmem>>, vector<8x512xf32>
    %cst_42 = arith.constant dense<0.000000e+00> : vector<8x512xf32>
    %217 = tpu.matmul %215, %27, %cst_42 {dimension_numbers = #tpu.dot_dimension_numbers<[1], [0], [0], [1], [0, 0, 1, 1], [], []>} : vector<8x128xf32>, vector<128x512xf32>, vector<8x512xf32> -> vector<8x512xf32>
    %218 = arith.addf %216, %217 : vector<8x512xf32>
    %219 = vector.extract_strided_slice %218 {offsets = [0, 0], sizes = [8, 384], strides = [1, 1]} : vector<8x512xf32> to vector<8x384xf32>
    %220 = arith.negf %219 : vector<8x384xf32>
    %221 = math.exp %220 : vector<8x384xf32>
    %cst_43 = arith.constant 1.000000e+00 : f32
    %222 = vector.broadcast %cst_43 : f32 to vector<8x384xf32>
    %223 = arith.addf %222, %221 : vector<8x384xf32>
    %224 = arith.divf %222, %223 : vector<8x384xf32>
    %225 = vector.extract_strided_slice %224 {offsets = [0, 0], sizes = [8, 128], strides = [1, 1]} : vector<8x384xf32> to vector<8x128xf32>
    %226 = vector.extract_strided_slice %224 {offsets = [0, 128], sizes = [8, 128], strides = [1, 1]} : vector<8x384xf32> to vector<8x128xf32>
    %227 = vector.extract_strided_slice %224 {offsets = [0, 256], sizes = [8, 128], strides = [1, 1]} : vector<8x384xf32> to vector<8x128xf32>
    %228 = vector.extract_strided_slice %218 {offsets = [0, 384], sizes = [8, 128], strides = [1, 1]} : vector<8x512xf32> to vector<8x128xf32>
    %229 = math.tanh %228 : vector<8x128xf32>
    %230 = arith.mulf %226, %213 : vector<8x128xf32>
    %231 = arith.mulf %225, %229 : vector<8x128xf32>
    %232 = arith.addf %230, %231 : vector<8x128xf32>
    %233 = math.tanh %232 : vector<8x128xf32>
    %234 = arith.mulf %227, %233 : vector<8x128xf32>
    %c80 = arith.constant 80 : index
    %c0_44 = arith.constant 0 : index
    %235 = vector.load %arg30[%c80, %c0_44] : memref<96x512xf32, #tpu.memory_space<vmem>>, vector<8x512xf32>
    %cst_45 = arith.constant dense<0.000000e+00> : vector<8x512xf32>
    %236 = tpu.matmul %234, %27, %cst_45 {dimension_numbers = #tpu.dot_dimension_numbers<[1], [0], [0], [1], [0, 0, 1, 1], [], []>} : vector<8x128xf32>, vector<128x512xf32>, vector<8x512xf32> -> vector<8x512xf32>
    %237 = arith.addf %235, %236 : vector<8x512xf32>
    %238 = vector.extract_strided_slice %237 {offsets = [0, 0], sizes = [8, 384], strides = [1, 1]} : vector<8x512xf32> to vector<8x384xf32>
    %239 = arith.negf %238 : vector<8x384xf32>
    %240 = math.exp %239 : vector<8x384xf32>
    %cst_46 = arith.constant 1.000000e+00 : f32
    %241 = vector.broadcast %cst_46 : f32 to vector<8x384xf32>
    %242 = arith.addf %241, %240 : vector<8x384xf32>
    %243 = arith.divf %241, %242 : vector<8x384xf32>
    %244 = vector.extract_strided_slice %243 {offsets = [0, 0], sizes = [8, 128], strides = [1, 1]} : vector<8x384xf32> to vector<8x128xf32>
    %245 = vector.extract_strided_slice %243 {offsets = [0, 128], sizes = [8, 128], strides = [1, 1]} : vector<8x384xf32> to vector<8x128xf32>
    %246 = vector.extract_strided_slice %243 {offsets = [0, 256], sizes = [8, 128], strides = [1, 1]} : vector<8x384xf32> to vector<8x128xf32>
    %247 = vector.extract_strided_slice %237 {offsets = [0, 384], sizes = [8, 128], strides = [1, 1]} : vector<8x512xf32> to vector<8x128xf32>
    %248 = math.tanh %247 : vector<8x128xf32>
    %249 = arith.mulf %245, %232 : vector<8x128xf32>
    %250 = arith.mulf %244, %248 : vector<8x128xf32>
    %251 = arith.addf %249, %250 : vector<8x128xf32>
    %252 = math.tanh %251 : vector<8x128xf32>
    %253 = arith.mulf %246, %252 : vector<8x128xf32>
    %c88 = arith.constant 88 : index
    %c0_47 = arith.constant 0 : index
    %254 = vector.load %arg30[%c88, %c0_47] : memref<96x512xf32, #tpu.memory_space<vmem>>, vector<8x512xf32>
    %cst_48 = arith.constant dense<0.000000e+00> : vector<8x512xf32>
    %255 = tpu.matmul %253, %27, %cst_48 {dimension_numbers = #tpu.dot_dimension_numbers<[1], [0], [0], [1], [0, 0, 1, 1], [], []>} : vector<8x128xf32>, vector<128x512xf32>, vector<8x512xf32> -> vector<8x512xf32>
    %256 = arith.addf %254, %255 : vector<8x512xf32>
    %257 = vector.extract_strided_slice %256 {offsets = [0, 0], sizes = [8, 384], strides = [1, 1]} : vector<8x512xf32> to vector<8x384xf32>
    %258 = arith.negf %257 : vector<8x384xf32>
    %259 = math.exp %258 : vector<8x384xf32>
    %cst_49 = arith.constant 1.000000e+00 : f32
    %260 = vector.broadcast %cst_49 : f32 to vector<8x384xf32>
    %261 = arith.addf %260, %259 : vector<8x384xf32>
    %262 = arith.divf %260, %261 : vector<8x384xf32>
    %263 = vector.extract_strided_slice %262 {offsets = [0, 0], sizes = [8, 128], strides = [1, 1]} : vector<8x384xf32> to vector<8x128xf32>
    %264 = vector.extract_strided_slice %262 {offsets = [0, 128], sizes = [8, 128], strides = [1, 1]} : vector<8x384xf32> to vector<8x128xf32>
    %265 = vector.extract_strided_slice %262 {offsets = [0, 256], sizes = [8, 128], strides = [1, 1]} : vector<8x384xf32> to vector<8x128xf32>
    %266 = vector.extract_strided_slice %256 {offsets = [0, 384], sizes = [8, 128], strides = [1, 1]} : vector<8x512xf32> to vector<8x128xf32>
    %267 = math.tanh %266 : vector<8x128xf32>
    %268 = arith.mulf %264, %251 : vector<8x128xf32>
    %269 = arith.mulf %263, %267 : vector<8x128xf32>
    %270 = arith.addf %268, %269 : vector<8x128xf32>
    %271 = math.tanh %270 : vector<8x128xf32>
    %272 = arith.mulf %265, %271 : vector<8x128xf32>
    %c0_50 = arith.constant 0 : index
    %c0_51 = arith.constant 0 : index
    %273 = vector.load %arg27[%c0_50, %c0_51] : memref<8x128xf32, #tpu.memory_space<vmem>>, vector<8x128xf32>
    tpu.vector_store %arg27[%c0_50, %c0_51], %272 {strides = array<i32>} : memref<8x128xf32, #tpu.memory_space<vmem>>, vector<8x128xf32>,
    %c0_52 = arith.constant 0 : index
    %c0_53 = arith.constant 0 : index
    %274 = vector.load %arg28[%c0_52, %c0_53] : memref<8x128xf32, #tpu.memory_space<vmem>>, vector<8x128xf32>
    tpu.vector_store %arg28[%c0_52, %c0_53], %270 {strides = array<i32>} : memref<8x128xf32, #tpu.memory_space<vmem>>, vector<8x128xf32>,
    %c0_i32_54 = arith.constant 0 : i32
    %275 = tpu.memref_slice %arg41[%c0_i32_54] : memref<10x!tpu.dma_semaphore, #tpu.memory_space<semaphore_mem>> -> memref<1x!tpu.dma_semaphore, #tpu.memory_space<semaphore_mem>>
    %276 = tpu.memref_squeeze %275 : memref<1x!tpu.dma_semaphore, #tpu.memory_space<semaphore_mem>> -> memref<!tpu.dma_semaphore, #tpu.memory_space<semaphore_mem>>
    tpu.wait_dma2 semaphore(%276 : memref<!tpu.dma_semaphore, #tpu.memory_space<semaphore_mem>>) src(%arg7 : memref<136x1024xf32, #tpu.memory_space<any>>) dst(%arg31 : memref<136x1024xf32, #tpu.memory_space<vmem>>)
    %c1_i32_55 = arith.constant 1 : i32
    %277 = tpu.memref_slice %arg41[%c1_i32_55] : memref<10x!tpu.dma_semaphore, #tpu.memory_space<semaphore_mem>> -> memref<1x!tpu.dma_semaphore, #tpu.memory_space<semaphore_mem>>
    %278 = tpu.memref_squeeze %277 : memref<1x!tpu.dma_semaphore, #tpu.memory_space<semaphore_mem>> -> memref<!tpu.dma_semaphore, #tpu.memory_space<semaphore_mem>>
    tpu.wait_dma2 semaphore(%278 : memref<!tpu.dma_semaphore, #tpu.memory_space<semaphore_mem>>) src(%arg8 : memref<1024x512xf32, #tpu.memory_space<any>>) dst(%arg32 : memref<1024x512xf32, #tpu.memory_space<vmem>>)
    %c2_i32_56 = arith.constant 2 : i32
    %279 = tpu.memref_slice %arg41[%c2_i32_56] : memref<10x!tpu.dma_semaphore, #tpu.memory_space<semaphore_mem>> -> memref<1x!tpu.dma_semaphore, #tpu.memory_space<semaphore_mem>>
    %280 = tpu.memref_squeeze %279 : memref<1x!tpu.dma_semaphore, #tpu.memory_space<semaphore_mem>> -> memref<!tpu.dma_semaphore, #tpu.memory_space<semaphore_mem>>
    tpu.wait_dma2 semaphore(%280 : memref<!tpu.dma_semaphore, #tpu.memory_space<semaphore_mem>>) src(%arg9 : memref<512x256xf32, #tpu.memory_space<any>>) dst(%arg33 : memref<512x256xf32, #tpu.memory_space<vmem>>)
    %c3_i32_57 = arith.constant 3 : i32
    %281 = tpu.memref_slice %arg41[%c3_i32_57] : memref<10x!tpu.dma_semaphore, #tpu.memory_space<semaphore_mem>> -> memref<1x!tpu.dma_semaphore, #tpu.memory_space<semaphore_mem>>
    %282 = tpu.memref_squeeze %281 : memref<1x!tpu.dma_semaphore, #tpu.memory_space<semaphore_mem>> -> memref<!tpu.dma_semaphore, #tpu.memory_space<semaphore_mem>>
    tpu.wait_dma2 semaphore(%282 : memref<!tpu.dma_semaphore, #tpu.memory_space<semaphore_mem>>) src(%arg10 : memref<256x128xf32, #tpu.memory_space<any>>) dst(%arg34 : memref<256x128xf32, #tpu.memory_space<vmem>>)
    %c4_i32_58 = arith.constant 4 : i32
    %283 = tpu.memref_slice %arg41[%c4_i32_58] : memref<10x!tpu.dma_semaphore, #tpu.memory_space<semaphore_mem>> -> memref<1x!tpu.dma_semaphore, #tpu.memory_space<semaphore_mem>>
    %284 = tpu.memref_squeeze %283 : memref<1x!tpu.dma_semaphore, #tpu.memory_space<semaphore_mem>> -> memref<!tpu.dma_semaphore, #tpu.memory_space<semaphore_mem>>
    tpu.wait_dma2 semaphore(%284 : memref<!tpu.dma_semaphore, #tpu.memory_space<semaphore_mem>>) src(%arg11 : memref<128x64xf32, #tpu.memory_space<any>>) dst(%arg35 : memref<128x64xf32, #tpu.memory_space<vmem>>)
    %c5_i32_59 = arith.constant 5 : i32
    %285 = tpu.memref_slice %arg41[%c5_i32_59] : memref<10x!tpu.dma_semaphore, #tpu.memory_space<semaphore_mem>> -> memref<1x!tpu.dma_semaphore, #tpu.memory_space<semaphore_mem>>
    %286 = tpu.memref_squeeze %285 : memref<1x!tpu.dma_semaphore, #tpu.memory_space<semaphore_mem>> -> memref<!tpu.dma_semaphore, #tpu.memory_space<semaphore_mem>>
    tpu.wait_dma2 semaphore(%286 : memref<!tpu.dma_semaphore, #tpu.memory_space<semaphore_mem>>) src(%arg12 : memref<64x32xf32, #tpu.memory_space<any>>) dst(%arg36 : memref<64x32xf32, #tpu.memory_space<vmem>>)
    %c6_i32_60 = arith.constant 6 : i32
    %287 = tpu.memref_slice %arg41[%c6_i32_60] : memref<10x!tpu.dma_semaphore, #tpu.memory_space<semaphore_mem>> -> memref<1x!tpu.dma_semaphore, #tpu.memory_space<semaphore_mem>>
    %288 = tpu.memref_squeeze %287 : memref<1x!tpu.dma_semaphore, #tpu.memory_space<semaphore_mem>> -> memref<!tpu.dma_semaphore, #tpu.memory_space<semaphore_mem>>
    tpu.wait_dma2 semaphore(%288 : memref<!tpu.dma_semaphore, #tpu.memory_space<semaphore_mem>>) src(%arg13 : memref<32x16xf32, #tpu.memory_space<any>>) dst(%arg37 : memref<32x16xf32, #tpu.memory_space<vmem>>)
    %c7_i32_61 = arith.constant 7 : i32
    %289 = tpu.memref_slice %arg41[%c7_i32_61] : memref<10x!tpu.dma_semaphore, #tpu.memory_space<semaphore_mem>> -> memref<1x!tpu.dma_semaphore, #tpu.memory_space<semaphore_mem>>
    %290 = tpu.memref_squeeze %289 : memref<1x!tpu.dma_semaphore, #tpu.memory_space<semaphore_mem>> -> memref<!tpu.dma_semaphore, #tpu.memory_space<semaphore_mem>>
    tpu.wait_dma2 semaphore(%290 : memref<!tpu.dma_semaphore, #tpu.memory_space<semaphore_mem>>) src(%arg14 : memref<16x8xf32, #tpu.memory_space<any>>) dst(%arg38 : memref<16x8xf32, #tpu.memory_space<vmem>>)
    %c8_i32_62 = arith.constant 8 : i32
    %291 = tpu.memref_slice %arg41[%c8_i32_62] : memref<10x!tpu.dma_semaphore, #tpu.memory_space<semaphore_mem>> -> memref<1x!tpu.dma_semaphore, #tpu.memory_space<semaphore_mem>>
    %292 = tpu.memref_squeeze %291 : memref<1x!tpu.dma_semaphore, #tpu.memory_space<semaphore_mem>> -> memref<!tpu.dma_semaphore, #tpu.memory_space<semaphore_mem>>
    tpu.wait_dma2 semaphore(%292 : memref<!tpu.dma_semaphore, #tpu.memory_space<semaphore_mem>>) src(%arg15 : memref<8x4xf32, #tpu.memory_space<any>>) dst(%arg39 : memref<8x4xf32, #tpu.memory_space<vmem>>)
    %c9_i32_63 = arith.constant 9 : i32
    %293 = tpu.memref_slice %arg41[%c9_i32_63] : memref<10x!tpu.dma_semaphore, #tpu.memory_space<semaphore_mem>> -> memref<1x!tpu.dma_semaphore, #tpu.memory_space<semaphore_mem>>
    %294 = tpu.memref_squeeze %293 : memref<1x!tpu.dma_semaphore, #tpu.memory_space<semaphore_mem>> -> memref<!tpu.dma_semaphore, #tpu.memory_space<semaphore_mem>>
    tpu.wait_dma2 semaphore(%294 : memref<!tpu.dma_semaphore, #tpu.memory_space<semaphore_mem>>) src(%arg16 : memref<4x6xf32, #tpu.memory_space<any>>) dst(%arg40 : memref<4x6xf32, #tpu.memory_space<vmem>>)
    %c0_64 = arith.constant 0 : index
    %c0_65 = arith.constant 0 : index
    %295 = vector.load %arg31[%c0_64, %c0_65] : memref<136x1024xf32, #tpu.memory_space<vmem>>, vector<128x1024xf32>
    %cst_66 = arith.constant dense<0.000000e+00> : vector<8x1024xf32>
    %296 = tpu.matmul %272, %295, %cst_66 {dimension_numbers = #tpu.dot_dimension_numbers<[1], [0], [0], [1], [0, 0, 1, 1], [], []>} : vector<8x128xf32>, vector<128x1024xf32>, vector<8x1024xf32> -> vector<8x1024xf32>
    %c0_67 = arith.constant 0 : index
    %c0_68 = arith.constant 0 : index
    %297 = vector.load %arg6[%c0_67, %c0_68] : memref<8x8xf32, #tpu.memory_space<vmem>>, vector<8x8xf32>
    %c128 = arith.constant 128 : index
    %c0_69 = arith.constant 0 : index
    %298 = vector.load %arg31[%c128, %c0_69] : memref<136x1024xf32, #tpu.memory_space<vmem>>, vector<8x1024xf32>
    %cst_70 = arith.constant dense<0.000000e+00> : vector<8x1024xf32>
    %299 = tpu.matmul %297, %298, %cst_70 {dimension_numbers = #tpu.dot_dimension_numbers<[1], [0], [0], [1], [0, 0, 1, 1], [], []>} : vector<8x8xf32>, vector<8x1024xf32>, vector<8x1024xf32> -> vector<8x1024xf32>
    %300 = arith.addf %296, %299 : vector<8x1024xf32>
    %c0_71 = arith.constant 0 : index
    %c0_72 = arith.constant 0 : index
    %301 = vector.load %arg17[%c0_71, %c0_72] : memref<1x1024xf32, #tpu.memory_space<vmem>>, vector<1x1024xf32>
    %302 = vector.broadcast %301 : vector<1x1024xf32> to vector<8x1024xf32>
    %303 = arith.addf %300, %302 : vector<8x1024xf32>
    %cst_73 = arith.constant 0.000000e+00 : f32
    %304 = vector.broadcast %cst_73 : f32 to vector<8x1024xf32>
    %305 = arith.maximumf %303, %304 : vector<8x1024xf32>
    %c0_74 = arith.constant 0 : index
    %c0_75 = arith.constant 0 : index
    %306 = vector.load %arg32[%c0_74, %c0_75] : memref<1024x512xf32, #tpu.memory_space<vmem>>, vector<1024x512xf32>
    %cst_76 = arith.constant dense<0.000000e+00> : vector<8x512xf32>
    %307 = tpu.matmul %305, %306, %cst_76 {dimension_numbers = #tpu.dot_dimension_numbers<[1], [0], [0], [1], [0, 0, 1, 1], [], []>} : vector<8x1024xf32>, vector<1024x512xf32>, vector<8x512xf32> -> vector<8x512xf32>
    %c0_77 = arith.constant 0 : index
    %c0_78 = arith.constant 0 : index
    %308 = vector.load %arg18[%c0_77, %c0_78] : memref<1x512xf32, #tpu.memory_space<vmem>>, vector<1x512xf32>
    %309 = vector.broadcast %308 : vector<1x512xf32> to vector<8x512xf32>
    %310 = arith.addf %307, %309 : vector<8x512xf32>
    %cst_79 = arith.constant 0.000000e+00 : f32
    %311 = vector.broadcast %cst_79 : f32 to vector<8x512xf32>
    %312 = arith.maximumf %310, %311 : vector<8x512xf32>
    %c0_80 = arith.constant 0 : index
    %c0_81 = arith.constant 0 : index
    %313 = vector.load %arg33[%c0_80, %c0_81] : memref<512x256xf32, #tpu.memory_space<vmem>>, vector<512x256xf32>
    %cst_82 = arith.constant dense<0.000000e+00> : vector<8x256xf32>
    %314 = tpu.matmul %312, %313, %cst_82 {dimension_numbers = #tpu.dot_dimension_numbers<[1], [0], [0], [1], [0, 0, 1, 1], [], []>} : vector<8x512xf32>, vector<512x256xf32>, vector<8x256xf32> -> vector<8x256xf32>
    %c0_83 = arith.constant 0 : index
    %c0_84 = arith.constant 0 : index
    %315 = vector.load %arg19[%c0_83, %c0_84] : memref<1x256xf32, #tpu.memory_space<vmem>>, vector<1x256xf32>
    %316 = vector.broadcast %315 : vector<1x256xf32> to vector<8x256xf32>
    %317 = arith.addf %314, %316 : vector<8x256xf32>
    %cst_85 = arith.constant 0.000000e+00 : f32
    %318 = vector.broadcast %cst_85 : f32 to vector<8x256xf32>
    %319 = arith.maximumf %317, %318 : vector<8x256xf32>
    %c0_86 = arith.constant 0 : index
    %c0_87 = arith.constant 0 : index
    %320 = vector.load %arg34[%c0_86, %c0_87] : memref<256x128xf32, #tpu.memory_space<vmem>>, vector<256x128xf32>
    %cst_88 = arith.constant dense<0.000000e+00> : vector<8x128xf32>
    %321 = tpu.matmul %319, %320, %cst_88 {dimension_numbers = #tpu.dot_dimension_numbers<[1], [0], [0], [1], [0, 0, 1, 1], [], []>} : vector<8x256xf32>, vector<256x128xf32>, vector<8x128xf32> -> vector<8x128xf32>
    %c0_89 = arith.constant 0 : index
    %c0_90 = arith.constant 0 : index
    %322 = vector.load %arg20[%c0_89, %c0_90] : memref<1x128xf32, #tpu.memory_space<vmem>>, vector<1x128xf32>
    %323 = vector.broadcast %322 : vector<1x128xf32> to vector<8x128xf32>
    %324 = arith.addf %321, %323 : vector<8x128xf32>
    %cst_91 = arith.constant 0.000000e+00 : f32
    %325 = vector.broadcast %cst_91 : f32 to vector<8x128xf32>
    %326 = arith.maximumf %324, %325 : vector<8x128xf32>
    %c0_92 = arith.constant 0 : index
    %c0_93 = arith.constant 0 : index
    %327 = vector.load %arg35[%c0_92, %c0_93] : memref<128x64xf32, #tpu.memory_space<vmem>>, vector<128x64xf32>
    %cst_94 = arith.constant dense<0.000000e+00> : vector<8x64xf32>
    %328 = tpu.matmul %326, %327, %cst_94 {dimension_numbers = #tpu.dot_dimension_numbers<[1], [0], [0], [1], [0, 0, 1, 1], [], []>} : vector<8x128xf32>, vector<128x64xf32>, vector<8x64xf32> -> vector<8x64xf32>
    %c0_95 = arith.constant 0 : index
    %c0_96 = arith.constant 0 : index
    %329 = vector.load %arg21[%c0_95, %c0_96] : memref<1x64xf32, #tpu.memory_space<vmem>>, vector<1x64xf32>
    %330 = vector.broadcast %329 : vector<1x64xf32> to vector<8x64xf32>
    %331 = arith.addf %328, %330 : vector<8x64xf32>
    %cst_97 = arith.constant 0.000000e+00 : f32
    %332 = vector.broadcast %cst_97 : f32 to vector<8x64xf32>
    %333 = arith.maximumf %331, %332 : vector<8x64xf32>
    %c0_98 = arith.constant 0 : index
    %c0_99 = arith.constant 0 : index
    %334 = vector.load %arg36[%c0_98, %c0_99] : memref<64x32xf32, #tpu.memory_space<vmem>>, vector<64x32xf32>
    %cst_100 = arith.constant dense<0.000000e+00> : vector<8x32xf32>
    %335 = tpu.matmul %333, %334, %cst_100 {dimension_numbers = #tpu.dot_dimension_numbers<[1], [0], [0], [1], [0, 0, 1, 1], [], []>} : vector<8x64xf32>, vector<64x32xf32>, vector<8x32xf32> -> vector<8x32xf32>
    %c0_101 = arith.constant 0 : index
    %c0_102 = arith.constant 0 : index
    %336 = vector.load %arg22[%c0_101, %c0_102] : memref<1x32xf32, #tpu.memory_space<vmem>>, vector<1x32xf32>
    %337 = vector.broadcast %336 : vector<1x32xf32> to vector<8x32xf32>
    %338 = arith.addf %335, %337 : vector<8x32xf32>
    %cst_103 = arith.constant 0.000000e+00 : f32
    %339 = vector.broadcast %cst_103 : f32 to vector<8x32xf32>
    %340 = arith.maximumf %338, %339 : vector<8x32xf32>
    %c0_104 = arith.constant 0 : index
    %c0_105 = arith.constant 0 : index
    %341 = vector.load %arg37[%c0_104, %c0_105] : memref<32x16xf32, #tpu.memory_space<vmem>>, vector<32x16xf32>
    %cst_106 = arith.constant dense<0.000000e+00> : vector<8x16xf32>
    %342 = tpu.matmul %340, %341, %cst_106 {dimension_numbers = #tpu.dot_dimension_numbers<[1], [0], [0], [1], [0, 0, 1, 1], [], []>} : vector<8x32xf32>, vector<32x16xf32>, vector<8x16xf32> -> vector<8x16xf32>
    %c0_107 = arith.constant 0 : index
    %c0_108 = arith.constant 0 : index
    %343 = vector.load %arg23[%c0_107, %c0_108] : memref<1x16xf32, #tpu.memory_space<vmem>>, vector<1x16xf32>
    %344 = vector.broadcast %343 : vector<1x16xf32> to vector<8x16xf32>
    %345 = arith.addf %342, %344 : vector<8x16xf32>
    %cst_109 = arith.constant 0.000000e+00 : f32
    %346 = vector.broadcast %cst_109 : f32 to vector<8x16xf32>
    %347 = arith.maximumf %345, %346 : vector<8x16xf32>
    %c0_110 = arith.constant 0 : index
    %c0_111 = arith.constant 0 : index
    %348 = vector.load %arg38[%c0_110, %c0_111] : memref<16x8xf32, #tpu.memory_space<vmem>>, vector<16x8xf32>
    %cst_112 = arith.constant dense<0.000000e+00> : vector<8x8xf32>
    %349 = tpu.matmul %347, %348, %cst_112 {dimension_numbers = #tpu.dot_dimension_numbers<[1], [0], [0], [1], [0, 0, 1, 1], [], []>} : vector<8x16xf32>, vector<16x8xf32>, vector<8x8xf32> -> vector<8x8xf32>
    %c0_113 = arith.constant 0 : index
    %c0_114 = arith.constant 0 : index
    %350 = vector.load %arg24[%c0_113, %c0_114] : memref<1x8xf32, #tpu.memory_space<vmem>>, vector<1x8xf32>
    %351 = vector.broadcast %350 : vector<1x8xf32> to vector<8x8xf32>
    %352 = arith.addf %349, %351 : vector<8x8xf32>
    %cst_115 = arith.constant 0.000000e+00 : f32
    %353 = vector.broadcast %cst_115 : f32 to vector<8x8xf32>
    %354 = arith.maximumf %352, %353 : vector<8x8xf32>
    %c0_116 = arith.constant 0 : index
    %c0_117 = arith.constant 0 : index
    %355 = vector.load %arg39[%c0_116, %c0_117] : memref<8x4xf32, #tpu.memory_space<vmem>>, vector<8x4xf32>
    %cst_118 = arith.constant dense<0.000000e+00> : vector<8x4xf32>
    %356 = tpu.matmul %354, %355, %cst_118 {dimension_numbers = #tpu.dot_dimension_numbers<[1], [0], [0], [1], [0, 0, 1, 1], [], []>} : vector<8x8xf32>, vector<8x4xf32>, vector<8x4xf32> -> vector<8x4xf32>
    %c0_119 = arith.constant 0 : index
    %c0_120 = arith.constant 0 : index
    %357 = vector.load %arg25[%c0_119, %c0_120] : memref<1x4xf32, #tpu.memory_space<vmem>>, vector<1x4xf32>
    %358 = vector.broadcast %357 : vector<1x4xf32> to vector<8x4xf32>
    %359 = arith.addf %356, %358 : vector<8x4xf32>
    %cst_121 = arith.constant 0.000000e+00 : f32
    %360 = vector.broadcast %cst_121 : f32 to vector<8x4xf32>
    %361 = arith.maximumf %359, %360 : vector<8x4xf32>
    %c0_122 = arith.constant 0 : index
    %c0_123 = arith.constant 0 : index
    %362 = vector.load %arg40[%c0_122, %c0_123] : memref<4x6xf32, #tpu.memory_space<vmem>>, vector<4x6xf32>
    %cst_124 = arith.constant dense<0.000000e+00> : vector<8x6xf32>
    %363 = tpu.matmul %361, %362, %cst_124 {dimension_numbers = #tpu.dot_dimension_numbers<[1], [0], [0], [1], [0, 0, 1, 1], [], []>} : vector<8x4xf32>, vector<4x6xf32>, vector<8x6xf32> -> vector<8x6xf32>
    %c0_125 = arith.constant 0 : index
    %c0_126 = arith.constant 0 : index
    %364 = vector.load %arg26[%c0_125, %c0_126] : memref<1x6xf32, #tpu.memory_space<vmem>>, vector<1x6xf32>
    %365 = vector.broadcast %364 : vector<1x6xf32> to vector<8x6xf32>
    %366 = arith.addf %363, %365 : vector<8x6xf32>
    %cst_127 = arith.constant 0.000000e+00 : f32
    %367 = vector.broadcast %cst_127 : f32 to vector<8x6xf32>
    %368 = arith.maximumf %366, %367 : vector<8x6xf32>
    %c0_128 = arith.constant 0 : index
    %c0_129 = arith.constant 0 : index
    %369 = vector.load %arg29[%c0_128, %c0_129] : memref<8x6xf32, #tpu.memory_space<vmem>>, vector<8x6xf32>
    tpu.vector_store %arg29[%c0_128, %c0_129], %368 {strides = array<i32>} : memref<8x6xf32, #tpu.memory_space<vmem>>, vector<8x6xf32>,
    return
  }
}

</mosaic_0001>

<llo_original>
// kernel: tpu_custom_call.1
$region0: #{tpu_custom_call.1}
  #allocation0 [shape = 'u32[]', space=smem, size = 0x4, offset = 0x4, fixed_abs, tag = 'smem constant byte address 0x4 - core index']
  #allocation1 [shape = 'u32[144,128]{1,0:T(1,128)}', space=vmem, size = 0x12000, scoped, tag = 'internal scratch']
  #allocation2 [shape = 'f32[96,512]{1,0:T(8,128)}', space=vmem, size = 0x30000, scoped, tag = 'scratch operand']
  #allocation3 [shape = 'f32[136,1024]{1,0:T(8,128)}', space=vmem, size = 0x88000, scoped, tag = 'scratch operand']
  #allocation4 [shape = 'f32[1024,512]{1,0:T(8,128)}', space=vmem, size = 0x200000, scoped, tag = 'scratch operand']
  #allocation5 [shape = 'f32[512,256]{1,0:T(8,128)}', space=vmem, size = 0x80000, scoped, tag = 'scratch operand']
  #allocation6 [shape = 'f32[256,128]{1,0:T(8,128)}', space=vmem, size = 0x20000, scoped, tag = 'scratch operand']
  #allocation7 [shape = 'f32[128,64]{1,0:T(8,128)}', space=vmem, size = 0x10000, scoped, tag = 'scratch operand']
  #allocation8 [shape = 'f32[64,32]{1,0:T(8,128)}', space=vmem, size = 0x8000, scoped, tag = 'scratch operand']
  #allocation9 [shape = 'f32[32,16]{1,0:T(8,128)}', space=vmem, size = 0x4000, scoped, tag = 'scratch operand']
  #allocation10 [shape = 'f32[16,8]{1,0:T(8,128)}', space=vmem, size = 0x2000, scoped, tag = 'scratch operand']
  #allocation11 [shape = 'f32[8,4]{1,0:T(8,128)}', space=vmem, size = 0x1000, scoped, tag = 'scratch operand']
  #allocation12 [shape = 'f32[4,6]{1,0:T(4,128)}', space=vmem, size = 0x800, scoped, tag = 'scratch operand']
  #allocation13 [shape = 's32[10]{0}', space=sflag, size = 0x28, scoped, tag = 'scratch operand']
  #allocation44 [shape = 's32[]', space=sflag, size = 0x4, offset = 0, fixed_abs, tag = 'sflag constant byte address 0x0 - dummy sync flag']
  #allocation45 [shape = 's32[]', space=sflag, size = 0x4, offset = 0, fixed_abs, tag = 'sflag constant byte address 0x0 - dummy sync flag']
  #allocation46 [shape = 'u32[]', space=smem, size = 0x4, offset = 0x44, fixed_abs, tag = 'smem constant byte address 0x44 - assertion arg 0']
  #allocation47 [shape = 'u32[]', space=smem, size = 0x4, offset = 0x48, fixed_abs, tag = 'smem constant byte address 0x48 - assertion arg 1']
  #allocation48 [shape = 's32[]', space=sflag, size = 0x4, offset = 0, fixed_abs, tag = 'sflag constant byte address 0x0 - dummy sync flag']
  #allocation49 [shape = 's32[]', space=sflag, size = 0x4, offset = 0, fixed_abs, tag = 'sflag constant byte address 0x0 - dummy sync flag']
  #allocation50 [shape = 's32[]', space=sflag, size = 0x4, offset = 0, fixed_abs, tag = 'sflag constant byte address 0x0 - dummy sync flag']
  #allocation51 [shape = 's32[]', space=sflag, size = 0x4, offset = 0, fixed_abs, tag = 'sflag constant byte address 0x0 - dummy sync flag']
  #allocation52 [shape = 's32[]', space=sflag, size = 0x4, offset = 0, fixed_abs, tag = 'sflag constant byte address 0x0 - dummy sync flag']
  #allocation53 [shape = 's32[]', space=sflag, size = 0x4, offset = 0, fixed_abs, tag = 'sflag constant byte address 0x0 - dummy sync flag']
  #allocation54 [shape = 's32[]', space=sflag, size = 0x4, offset = 0, fixed_abs, tag = 'sflag constant byte address 0x0 - dummy sync flag']
  #allocation55 [shape = 's32[]', space=sflag, size = 0x4, offset = 0, fixed_abs, tag = 'sflag constant byte address 0x0 - dummy sync flag']
  #allocation56 [shape = 's32[]', space=sflag, size = 0x4, offset = 0, fixed_abs, tag = 'sflag constant byte address 0x0 - dummy sync flag']
  #allocation57 [shape = 's32[]', space=sflag, size = 0x4, offset = 0, fixed_abs, tag = 'sflag constant byte address 0x0 - dummy sync flag']
  #allocation58 [shape = 's32[]', space=sflag, size = 0x4, offset = 0, fixed_abs, tag = 'sflag constant byte address 0x0 - dummy sync flag']
  #allocation59 [shape = 's32[]', space=sflag, size = 0x4, offset = 0, fixed_abs, tag = 'sflag constant byte address 0x0 - dummy sync flag']
  #allocation60 [shape = 's32[]', space=sflag, size = 0x4, offset = 0, fixed_abs, tag = 'sflag constant byte address 0x0 - dummy sync flag']
  %s0 = inlined_call_operand.smem [shape: u32[30], index: -1, kind: input, shape index: {}]
  %s1 = sld [smem:[%s0]]
  %s2 = scalar_lea.smem %s0, 1
  %s3 = sld [smem:[%s2]]
  %s4 = scalar_lea.smem %s0, 2
  %s5 = sld [smem:[%s4]]
  %s6 = scalar_lea.smem %s0, 3
  %s7 = sld [smem:[%s6]]
  %s8 = scalar_lea.smem %s0, 4
  %s9 = sld [smem:[%s8]]
  %s10 = scalar_lea.smem %s0, 5
  %s11 = sld [smem:[%s10]]
  %s12 = scalar_lea.smem %s0, 6
  %s13 = sld [smem:[%s12]]
  %s14 = scalar_lea.smem %s0, 7
  %s15 = sld [smem:[%s14]]
  %s16 = scalar_lea.smem %s0, 8
  %s17 = sld [smem:[%s16]]
  %s18 = scalar_lea.smem %s0, 9
  %s19 = sld [smem:[%s18]]
  %s20 = scalar_lea.smem %s0, 10
  %s21 = sld [smem:[%s20]]
  %s22 = scalar_lea.smem %s0, 11
  %s23 = sld [smem:[%s22]]
  %s24 = scalar_lea.smem %s0, 12
  %s25 = sld [smem:[%s24]]
  %s26 = scalar_lea.smem %s0, 13
  %s27 = sld [smem:[%s26]]
  %s28 = scalar_lea.smem %s0, 14
  %s29 = sld [smem:[%s28]]
  %s30 = scalar_lea.smem %s0, 15
  %s31 = sld [smem:[%s30]]
  %s32 = scalar_lea.smem %s0, 16
  %s33 = sld [smem:[%s32]]
  %s34 = scalar_lea.smem %s0, 17
  %s35 = sld [smem:[%s34]]
  %s36 = scalar_lea.smem %s0, 18
  %s37 = sld [smem:[%s36]]
  %s38 = scalar_lea.smem %s0, 19
  %s39 = sld [smem:[%s38]]
  %s40 = scalar_lea.smem %s0, 20
  %s41 = sld [smem:[%s40]]
  %s42 = scalar_lea.smem %s0, 21
  %s43 = sld [smem:[%s42]]
  %s44 = scalar_lea.smem %s0, 22
  %s45 = sld [smem:[%s44]]
  %s46 = scalar_lea.smem %s0, 23
  %s47 = sld [smem:[%s46]]
  %s48 = scalar_lea.smem %s0, 24
  %s49 = sld [smem:[%s48]]
  %s50 = scalar_lea.smem %s0, 25
  %s51 = sld [smem:[%s50]]
  %s52 = scalar_lea.smem %s0, 26
  %s53 = sld [smem:[%s52]]
  %s54 = scalar_lea.smem %s0, 27
  %s55 = sld [smem:[%s54]]
  %s56 = scalar_lea.smem %s0, 28
  %s57 = sld [smem:[%s56]]
  %s58 = scalar_lea.smem %s0, 29
  %s59 = sld [smem:[%s58]]
  %60 = xla_tuple %s55, %s57, %s59
  %s61 = sld [smem:[#allocation0]]
  $region348: #{tpu_custom_call.1} parent=0
    _
  %s63 = ssub.s32 1, %s61
  %s64 = scalar_select 0, %s63, %s61
  $region1: #{tpu_custom_call.1} parent=0
    #allocation14 [shape = 'u8[4096]{0}', space=vmem, size = 0x1000, scoped, tag = 'input window, operand 1, single buffered']
    #allocation15 [shape = 's32[1]{0}', space=sflag, size = 0x4, scoped, tag = 'scoped memory for tpu_custom_call.1']
    #allocation16 [shape = 's32[1]{0}', space=sflag, size = 0x4, scoped, tag = 'scoped memory for tpu_custom_call.1']
    #allocation17 [shape = 'u8[262144]{0}', space=vmem, size = 0x40000, scoped, tag = 'input window, operand 2, single buffered']
    #allocation18 [shape = 's32[1]{0}', space=sflag, size = 0x4, scoped, tag = 'scoped memory for tpu_custom_call.1']
    #allocation19 [shape = 'u8[2048]{0}', space=vmem, size = 0x800, scoped, tag = 'input window, operand 3, single buffered']
    #allocation20 [shape = 'u8[4096]{0}', space=vmem, size = 0x1000, scoped, tag = 'input window, operand 4, single buffered']
    #allocation21 [shape = 's32[1]{0}', space=sflag, size = 0x4, scoped, tag = 'scoped memory for tpu_custom_call.1']
    #allocation22 [shape = 'u8[4096]{0}', space=vmem, size = 0x1000, scoped, tag = 'input window, operand 5, single buffered']
    #allocation23 [shape = 'u8[4096]{0}', space=vmem, size = 0x1000, scoped, tag = 'input window, operand 6, single buffered']
    #allocation24 [shape = 's32[1]{0}', space=sflag, size = 0x4, scoped, tag = 'scoped memory for tpu_custom_call.1']
    #allocation25 [shape = 'u8[4096]{0}', space=vmem, size = 0x1000, scoped, tag = 'input window, operand 17, single buffered']
    #allocation26 [shape = 'u8[2048]{0}', space=vmem, size = 0x800, scoped, tag = 'input window, operand 18, single buffered']
    #allocation27 [shape = 's32[1]{0}', space=sflag, size = 0x4, scoped, tag = 'scoped memory for tpu_custom_call.1']
    #allocation28 [shape = 'u8[1024]{0}', space=vmem, size = 0x400, scoped, tag = 'input window, operand 19, single buffered']
    #allocation29 [shape = 'u8[512]{0}', space=vmem, size = 0x400, scoped, tag = 'input window, operand 20, single buffered']
    #allocation30 [shape = 's32[1]{0}', space=sflag, size = 0x4, scoped, tag = 'scoped memory for tpu_custom_call.1']
    #allocation31 [shape = 'u8[512]{0}', space=vmem, size = 0x400, scoped, tag = 'input window, operand 21, single buffered']
    #allocation32 [shape = 'u8[512]{0}', space=vmem, size = 0x400, scoped, tag = 'input window, operand 22, single buffered']
    #allocation33 [shape = 's32[1]{0}', space=sflag, size = 0x4, scoped, tag = 'scoped memory for tpu_custom_call.1']
    #allocation34 [shape = 'u8[512]{0}', space=vmem, size = 0x400, scoped, tag = 'input window, operand 23, single buffered']
    #allocation35 [shape = 'u8[512]{0}', space=vmem, size = 0x400, scoped, tag = 'input window, operand 24, single buffered']
    #allocation36 [shape = 's32[1]{0}', space=sflag, size = 0x4, scoped, tag = 'scoped memory for tpu_custom_call.1']
    #allocation37 [shape = 'u8[512]{0}', space=vmem, size = 0x400, scoped, tag = 'input window, operand 25, single buffered']
    #allocation38 [shape = 'u8[512]{0}', space=vmem, size = 0x400, scoped, tag = 'input window, operand 26, single buffered']
    #allocation39 [shape = 's32[1]{0}', space=sflag, size = 0x4, scoped, tag = 'scoped memory for tpu_custom_call.1']
    #allocation40 [shape = 'u8[4096]{0}', space=vmem, size = 0x1000, scoped, tag = 'output window, operand 0, single buffered']
    #allocation41 [shape = 'u8[4096]{0}', space=vmem, size = 0x1000, scoped, tag = 'output window, operand 1, single buffered']
    #allocation42 [shape = 's32[1]{0}', space=sflag, size = 0x4, scoped, tag = 'scoped memory for tpu_custom_call.1']
    #allocation43 [shape = 'u8[4096]{0}', space=vmem, size = 0x1000, scoped, tag = 'output window, operand 2, single buffered']
    %65 = vsyncpa [#allocation15], 0
    %66 = vsyncpa [#allocation18], 0
    %67 = vsyncpa [#allocation21], 0
    %68 = vsyncpa [#allocation24], 0
    %69 = vsyncpa [#allocation27], 0
    %70 = vsyncpa [#allocation30], 0
    %71 = vsyncpa [#allocation33], 0
    %72 = vsyncpa [#allocation36], 0
    %73 = vsyncpa [#allocation39], 0
    %74 = vsyncpa [#allocation16], 0
    %75 = vsyncpa [#allocation42], 0
    // Predicated region
    $region2: #{tpu_custom_call.1} parent=1 // pred_check
      _
    $region3: #{tpu_custom_call.1} parent=1 // pred_check_branch
      %77 = sbr.rel (0) target = $region5
    $region4: #{tpu_custom_call.1} parent=1 // pred_region
      _
    $region5: #{tpu_custom_call.1} parent=1 // pred_fallthru
      _
    // Predicated region
    $region6: #{tpu_custom_call.1} parent=1 // pred_check
      _
    $region7: #{tpu_custom_call.1} parent=1 // pred_check_branch
      %79 = sbr.rel (0) target = $region9
    $region8: #{tpu_custom_call.1} parent=1 // pred_region
      %s81 = ssub.s32 128, 128
      %82 = vsyncadd [#allocation15], %s81
      %s84 = sshll.u32 [#allocation14], 4
      %s85 = int_to_ptr.vmem [resolvable:$true] %s84
      %87 = dma.hbm_to_vmem [thread:$0]  %s3, 128, %s85, [#allocation15]
    $region9: #{tpu_custom_call.1} parent=1 // pred_fallthru
      _
    // Predicated region
    $region10: #{tpu_custom_call.1} parent=1 // pred_check
      _
    $region11: #{tpu_custom_call.1} parent=1 // pred_check_branch
      %89 = sbr.rel (0) target = $region13
    $region12: #{tpu_custom_call.1} parent=1 // pred_region
      %s91 = ssub.s32 8192, 8192
      %92 = vsyncadd [#allocation18], %s91
      %s93 = sshll.u32 [#allocation17], 4
      %s94 = int_to_ptr.vmem [resolvable:$true] %s93
      %99 = dma.hbm_to_vmem [thread:$0]  %s5, 8192, %s94, [#allocation18], 512, 512, 32
    $region13: #{tpu_custom_call.1} parent=1 // pred_fallthru
      _
    // Predicated region
    $region14: #{tpu_custom_call.1} parent=1 // pred_check
      _
    $region15: #{tpu_custom_call.1} parent=1 // pred_check_branch
      %101 = sbr.rel (0) target = $region17
    $region16: #{tpu_custom_call.1} parent=1 // pred_region
      %s103 = ssub.s32 64, 64
      %104 = vsyncadd [#allocation18], %s103
      %s106 = sshll.u32 [#allocation19], 4
      %s107 = int_to_ptr.vmem [resolvable:$true] %s106
      %109 = dma.hbm_to_vmem [thread:$0]  %s7, 64, %s107, [#allocation18]
    $region17: #{tpu_custom_call.1} parent=1 // pred_fallthru
      _
    // Predicated region
    $region18: #{tpu_custom_call.1} parent=1 // pred_check
      _
    $region19: #{tpu_custom_call.1} parent=1 // pred_check_branch
      %111 = sbr.rel (0) target = $region21
    $region20: #{tpu_custom_call.1} parent=1 // pred_region
      %s113 = ssub.s32 128, 128
      %114 = vsyncadd [#allocation21], %s113
      %s116 = sshll.u32 [#allocation20], 4
      %s117 = int_to_ptr.vmem [resolvable:$true] %s116
      %119 = dma.hbm_to_vmem [thread:$0]  %s9, 128, %s117, [#allocation21]
    $region21: #{tpu_custom_call.1} parent=1 // pred_fallthru
      _
    // Predicated region
    $region22: #{tpu_custom_call.1} parent=1 // pred_check
      _
    $region23: #{tpu_custom_call.1} parent=1 // pred_check_branch
      %121 = sbr.rel (0) target = $region25
    $region24: #{tpu_custom_call.1} parent=1 // pred_region
      %s123 = ssub.s32 128, 128
      %124 = vsyncadd [#allocation21], %s123
      %s126 = sshll.u32 [#allocation22], 4
      %s127 = int_to_ptr.vmem [resolvable:$true] %s126
      %129 = dma.hbm_to_vmem [thread:$0]  %s11, 128, %s127, [#allocation21]
    $region25: #{tpu_custom_call.1} parent=1 // pred_fallthru
      _
    // Predicated region
    $region26: #{tpu_custom_call.1} parent=1 // pred_check
      _
    $region27: #{tpu_custom_call.1} parent=1 // pred_check_branch
      %131 = sbr.rel (0) target = $region29
    $region28: #{tpu_custom_call.1} parent=1 // pred_region
      %s133 = ssub.s32 128, 128
      %134 = vsyncadd [#allocation24], %s133
      %s136 = sshll.u32 [#allocation23], 4
      %s137 = int_to_ptr.vmem [resolvable:$true] %s136
      %139 = dma.hbm_to_vmem [thread:$0]  %s13, 128, %s137, [#allocation24]
    $region29: #{tpu_custom_call.1} parent=1 // pred_fallthru
      _
    // Predicated region
    $region30: #{tpu_custom_call.1} parent=1 // pred_check
      _
    $region31: #{tpu_custom_call.1} parent=1 // pred_check_branch
      %141 = sbr.rel (0) target = $region33
    $region32: #{tpu_custom_call.1} parent=1 // pred_region
      %s143 = ssub.s32 128, 128
      %144 = vsyncadd [#allocation24], %s143
      %s146 = sshll.u32 [#allocation25], 4
      %s147 = int_to_ptr.vmem [resolvable:$true] %s146
      %149 = dma.hbm_to_vmem [thread:$0]  %s35, 128, %s147, [#allocation24]
    $region33: #{tpu_custom_call.1} parent=1 // pred_fallthru
      _
    // Predicated region
    $region34: #{tpu_custom_call.1} parent=1 // pred_check
      _
    $region35: #{tpu_custom_call.1} parent=1 // pred_check_branch
      %151 = sbr.rel (0) target = $region37
    $region36: #{tpu_custom_call.1} parent=1 // pred_region
      %s153 = ssub.s32 64, 64
      %154 = vsyncadd [#allocation27], %s153
      %s156 = sshll.u32 [#allocation26], 4
      %s157 = int_to_ptr.vmem [resolvable:$true] %s156
      %159 = dma.hbm_to_vmem [thread:$0]  %s37, 64, %s157, [#allocation27]
    $region37: #{tpu_custom_call.1} parent=1 // pred_fallthru
      _
    // Predicated region
    $region38: #{tpu_custom_call.1} parent=1 // pred_check
      _
    $region39: #{tpu_custom_call.1} parent=1 // pred_check_branch
      %161 = sbr.rel (0) target = $region41
    $region40: #{tpu_custom_call.1} parent=1 // pred_region
      %s163 = ssub.s32 32, 32
      %164 = vsyncadd [#allocation27], %s163
      %s166 = sshll.u32 [#allocation28], 4
      %s167 = int_to_ptr.vmem [resolvable:$true] %s166
      %169 = dma.hbm_to_vmem [thread:$0]  %s39, 32, %s167, [#allocation27]
    $region41: #{tpu_custom_call.1} parent=1 // pred_fallthru
      _
    // Predicated region
    $region42: #{tpu_custom_call.1} parent=1 // pred_check
      _
    $region43: #{tpu_custom_call.1} parent=1 // pred_check_branch
      %171 = sbr.rel (0) target = $region45
    $region44: #{tpu_custom_call.1} parent=1 // pred_region
      %s173 = ssub.s32 16, 16
      %174 = vsyncadd [#allocation30], %s173
      %s176 = sshll.u32 [#allocation29], 4
      %s177 = int_to_ptr.vmem [resolvable:$true] %s176
      %179 = dma.hbm_to_vmem [thread:$0]  %s41, 16, %s177, [#allocation30]
    $region45: #{tpu_custom_call.1} parent=1 // pred_fallthru
      _
    // Predicated region
    $region46: #{tpu_custom_call.1} parent=1 // pred_check
      _
    $region47: #{tpu_custom_call.1} parent=1 // pred_check_branch
      %181 = sbr.rel (0) target = $region49
    $region48: #{tpu_custom_call.1} parent=1 // pred_region
      %s183 = ssub.s32 16, 16
      %184 = vsyncadd [#allocation30], %s183
      %s186 = sshll.u32 [#allocation31], 4
      %s187 = int_to_ptr.vmem [resolvable:$true] %s186
      %189 = dma.hbm_to_vmem [thread:$0]  %s43, 16, %s187, [#allocation30]
    $region49: #{tpu_custom_call.1} parent=1 // pred_fallthru
      _
    // Predicated region
    $region50: #{tpu_custom_call.1} parent=1 // pred_check
      _
    $region51: #{tpu_custom_call.1} parent=1 // pred_check_branch
      %191 = sbr.rel (0) target = $region53
    $region52: #{tpu_custom_call.1} parent=1 // pred_region
      %s193 = ssub.s32 16, 16
      %194 = vsyncadd [#allocation33], %s193
      %s196 = sshll.u32 [#allocation32], 4
      %s197 = int_to_ptr.vmem [resolvable:$true] %s196
      %199 = dma.hbm_to_vmem [thread:$0]  %s45, 16, %s197, [#allocation33]
    $region53: #{tpu_custom_call.1} parent=1 // pred_fallthru
      _
    // Predicated region
    $region54: #{tpu_custom_call.1} parent=1 // pred_check
      _
    $region55: #{tpu_custom_call.1} parent=1 // pred_check_branch
      %201 = sbr.rel (0) target = $region57
    $region56: #{tpu_custom_call.1} parent=1 // pred_region
      %s203 = ssub.s32 16, 16
      %204 = vsyncadd [#allocation33], %s203
      %s206 = sshll.u32 [#allocation34], 4
      %s207 = int_to_ptr.vmem [resolvable:$true] %s206
      %209 = dma.hbm_to_vmem [thread:$0]  %s47, 16, %s207, [#allocation33]
    $region57: #{tpu_custom_call.1} parent=1 // pred_fallthru
      _
    // Predicated region
    $region58: #{tpu_custom_call.1} parent=1 // pred_check
      _
    $region59: #{tpu_custom_call.1} parent=1 // pred_check_branch
      %211 = sbr.rel (0) target = $region61
    $region60: #{tpu_custom_call.1} parent=1 // pred_region
      %s213 = ssub.s32 16, 16
      %214 = vsyncadd [#allocation36], %s213
      %s216 = sshll.u32 [#allocation35], 4
      %s217 = int_to_ptr.vmem [resolvable:$true] %s216
      %219 = dma.hbm_to_vmem [thread:$0]  %s49, 16, %s217, [#allocation36]
    $region61: #{tpu_custom_call.1} parent=1 // pred_fallthru
      _
    // Predicated region
    $region62: #{tpu_custom_call.1} parent=1 // pred_check
      _
    $region63: #{tpu_custom_call.1} parent=1 // pred_check_branch
      %221 = sbr.rel (0) target = $region65
    $region64: #{tpu_custom_call.1} parent=1 // pred_region
      %s223 = ssub.s32 16, 16
      %224 = vsyncadd [#allocation36], %s223
      %s226 = sshll.u32 [#allocation37], 4
      %s227 = int_to_ptr.vmem [resolvable:$true] %s226
      %229 = dma.hbm_to_vmem [thread:$0]  %s51, 16, %s227, [#allocation36]
    $region65: #{tpu_custom_call.1} parent=1 // pred_fallthru
      _
    // Predicated region
    $region66: #{tpu_custom_call.1} parent=1 // pred_check
      _
    $region67: #{tpu_custom_call.1} parent=1 // pred_check_branch
      %231 = sbr.rel (0) target = $region69
    $region68: #{tpu_custom_call.1} parent=1 // pred_region
      %s233 = ssub.s32 16, 16
      %234 = vsyncadd [#allocation39], %s233
      %s236 = sshll.u32 [#allocation38], 4
      %s237 = int_to_ptr.vmem [resolvable:$true] %s236
      %239 = dma.hbm_to_vmem [thread:$0]  %s53, 16, %s237, [#allocation39]
    $region69: #{tpu_custom_call.1} parent=1 // pred_fallthru
      _
    // Predicated region
    $region70: #{tpu_custom_call.1} parent=1 // pred_check
      _
    $region71: #{tpu_custom_call.1} parent=1 // pred_check_branch
      %241 = sbr.rel (0) target = $region73
    $region72: #{tpu_custom_call.1} parent=1 // pred_region
      %242 = dma.done [#allocation15], 128
    $region73: #{tpu_custom_call.1} parent=1 // pred_fallthru
      _
    // Predicated region
    $region74: #{tpu_custom_call.1} parent=1 // pred_check
      _
    $region75: #{tpu_custom_call.1} parent=1 // pred_check_branch
      %244 = sbr.rel (0) target = $region77
    $region76: #{tpu_custom_call.1} parent=1 // pred_region
      %245 = dma.done [#allocation18], 8192
    $region77: #{tpu_custom_call.1} parent=1 // pred_fallthru
      _
    // Predicated region
    $region78: #{tpu_custom_call.1} parent=1 // pred_check
      _
    $region79: #{tpu_custom_call.1} parent=1 // pred_check_branch
      %247 = sbr.rel (0) target = $region81
    $region80: #{tpu_custom_call.1} parent=1 // pred_region
      %248 = dma.done [#allocation18], 64
    $region81: #{tpu_custom_call.1} parent=1 // pred_fallthru
      _
    // Predicated region
    $region82: #{tpu_custom_call.1} parent=1 // pred_check
      _
    $region83: #{tpu_custom_call.1} parent=1 // pred_check_branch
      %250 = sbr.rel (0) target = $region85
    $region84: #{tpu_custom_call.1} parent=1 // pred_region
      %251 = dma.done [#allocation21], 128
    $region85: #{tpu_custom_call.1} parent=1 // pred_fallthru
      _
    // Predicated region
    $region86: #{tpu_custom_call.1} parent=1 // pred_check
      _
    $region87: #{tpu_custom_call.1} parent=1 // pred_check_branch
      %253 = sbr.rel (0) target = $region89
    $region88: #{tpu_custom_call.1} parent=1 // pred_region
      %254 = dma.done [#allocation21], 128
    $region89: #{tpu_custom_call.1} parent=1 // pred_fallthru
      _
    // Predicated region
    $region90: #{tpu_custom_call.1} parent=1 // pred_check
      _
    $region91: #{tpu_custom_call.1} parent=1 // pred_check_branch
      %256 = sbr.rel (0) target = $region93
    $region92: #{tpu_custom_call.1} parent=1 // pred_region
      %257 = dma.done [#allocation24], 128
    $region93: #{tpu_custom_call.1} parent=1 // pred_fallthru
      _
    // Predicated region
    $region94: #{tpu_custom_call.1} parent=1 // pred_check
      _
    $region95: #{tpu_custom_call.1} parent=1 // pred_check_branch
      %259 = sbr.rel (0) target = $region97
    $region96: #{tpu_custom_call.1} parent=1 // pred_region
      %260 = dma.done [#allocation24], 128
    $region97: #{tpu_custom_call.1} parent=1 // pred_fallthru
      _
    // Predicated region
    $region98: #{tpu_custom_call.1} parent=1 // pred_check
      _
    $region99: #{tpu_custom_call.1} parent=1 // pred_check_branch
      %262 = sbr.rel (0) target = $region101
    $region100: #{tpu_custom_call.1} parent=1 // pred_region
      %263 = dma.done [#allocation27], 64
    $region101: #{tpu_custom_call.1} parent=1 // pred_fallthru
      _
    // Predicated region
    $region102: #{tpu_custom_call.1} parent=1 // pred_check
      _
    $region103: #{tpu_custom_call.1} parent=1 // pred_check_branch
      %265 = sbr.rel (0) target = $region105
    $region104: #{tpu_custom_call.1} parent=1 // pred_region
      %266 = dma.done [#allocation27], 32
    $region105: #{tpu_custom_call.1} parent=1 // pred_fallthru
      _
    // Predicated region
    $region106: #{tpu_custom_call.1} parent=1 // pred_check
      _
    $region107: #{tpu_custom_call.1} parent=1 // pred_check_branch
      %268 = sbr.rel (0) target = $region109
    $region108: #{tpu_custom_call.1} parent=1 // pred_region
      %269 = dma.done [#allocation30], 16
    $region109: #{tpu_custom_call.1} parent=1 // pred_fallthru
      _
    // Predicated region
    $region110: #{tpu_custom_call.1} parent=1 // pred_check
      _
    $region111: #{tpu_custom_call.1} parent=1 // pred_check_branch
      %271 = sbr.rel (0) target = $region113
    $region112: #{tpu_custom_call.1} parent=1 // pred_region
      %272 = dma.done [#allocation30], 16
    $region113: #{tpu_custom_call.1} parent=1 // pred_fallthru
      _
    // Predicated region
    $region114: #{tpu_custom_call.1} parent=1 // pred_check
      _
    $region115: #{tpu_custom_call.1} parent=1 // pred_check_branch
      %274 = sbr.rel (0) target = $region117
    $region116: #{tpu_custom_call.1} parent=1 // pred_region
      %275 = dma.done [#allocation33], 16
    $region117: #{tpu_custom_call.1} parent=1 // pred_fallthru
      _
    // Predicated region
    $region118: #{tpu_custom_call.1} parent=1 // pred_check
      _
    $region119: #{tpu_custom_call.1} parent=1 // pred_check_branch
      %277 = sbr.rel (0) target = $region121
    $region120: #{tpu_custom_call.1} parent=1 // pred_region
      %278 = dma.done [#allocation33], 16
    $region121: #{tpu_custom_call.1} parent=1 // pred_fallthru
      _
    // Predicated region
    $region122: #{tpu_custom_call.1} parent=1 // pred_check
      _
    $region123: #{tpu_custom_call.1} parent=1 // pred_check_branch
      %280 = sbr.rel (0) target = $region125
    $region124: #{tpu_custom_call.1} parent=1 // pred_region
      %281 = dma.done [#allocation36], 16
    $region125: #{tpu_custom_call.1} parent=1 // pred_fallthru
      _
    // Predicated region
    $region126: #{tpu_custom_call.1} parent=1 // pred_check
      _
    $region127: #{tpu_custom_call.1} parent=1 // pred_check_branch
      %283 = sbr.rel (0) target = $region129
    $region128: #{tpu_custom_call.1} parent=1 // pred_region
      %284 = dma.done [#allocation36], 16
    $region129: #{tpu_custom_call.1} parent=1 // pred_fallthru
      _
    // Predicated region
    $region130: #{tpu_custom_call.1} parent=1 // pred_check
      _
    $region131: #{tpu_custom_call.1} parent=1 // pred_check_branch
      %286 = sbr.rel (0) target = $region133
    $region132: #{tpu_custom_call.1} parent=1 // pred_region
      %287 = dma.done [#allocation39], 16
    $region133: #{tpu_custom_call.1} parent=1 // pred_fallthru
      _
    // Predicated region
    $region134: #{tpu_custom_call.1} parent=1 // pred_check
      _
    $region135: #{tpu_custom_call.1} parent=1 // pred_check_branch
      %289 = sbr.rel target = $region137
    $region136: #{tpu_custom_call.1} parent=1 // pred_region
      %290 = sst [smem:[#allocation46]] [#allocation45]
      %291 = sst [smem:[#allocation47]] [#allocation44]
    $region137: #{tpu_custom_call.1} parent=1 // pred_fallthru
      _
    %293 = shalt.err (0)
    %s295 = sshll.u32 [#allocation3], 4
    %s296 = int_to_ptr.vmem [resolvable:$true] %s295
    %298 = dma.hbm_to_vmem [thread:$0]  %s15, 17408, %s296, [#allocation13]
    %s299 = scalar_lea.sflag [#allocation13], 1
    // Predicated region
    $region138: #{tpu_custom_call.1} parent=1 // pred_check
      _
    $region139: #{tpu_custom_call.1} parent=1 // pred_check_branch
      %301 = sbr.rel target = $region141
    $region140: #{tpu_custom_call.1} parent=1 // pred_region
      %302 = sst [smem:[#allocation46]] [#allocation49]
      %303 = sst [smem:[#allocation47]] [#allocation48]
    $region141: #{tpu_custom_call.1} parent=1 // pred_fallthru
      _
    %305 = shalt.err (0)
    %s307 = sshll.u32 [#allocation4], 4
    %s308 = int_to_ptr.vmem [resolvable:$true] %s307
    %310 = dma.hbm_to_vmem [thread:$0]  %s17, 65536, %s308, %s299
    %s311 = scalar_lea.sflag [#allocation13], 2
    // Predicated region
    $region142: #{tpu_custom_call.1} parent=1 // pred_check
      _
    $region143: #{tpu_custom_call.1} parent=1 // pred_check_branch
      %313 = sbr.rel target = $region145
    $region144: #{tpu_custom_call.1} parent=1 // pred_region
      %314 = sst [smem:[#allocation46]] [#allocation51]
      %315 = sst [smem:[#allocation47]] [#allocation50]
    $region145: #{tpu_custom_call.1} parent=1 // pred_fallthru
      _
    %317 = shalt.err (0)
    %s319 = sshll.u32 [#allocation5], 4
    %s320 = int_to_ptr.vmem [resolvable:$true] %s319
    %322 = dma.hbm_to_vmem [thread:$0]  %s19, 16384, %s320, %s311
    %s323 = scalar_lea.sflag [#allocation13], 3
    // Predicated region
    $region146: #{tpu_custom_call.1} parent=1 // pred_check
      _
    $region147: #{tpu_custom_call.1} parent=1 // pred_check_branch
      %325 = sbr.rel target = $region149
    $region148: #{tpu_custom_call.1} parent=1 // pred_region
      %326 = sst [smem:[#allocation46]] [#allocation53]
      %327 = sst [smem:[#allocation47]] [#allocation52]
    $region149: #{tpu_custom_call.1} parent=1 // pred_fallthru
      _
    %329 = shalt.err (0)
    %s331 = sshll.u32 [#allocation6], 4
    %s332 = int_to_ptr.vmem [resolvable:$true] %s331
    %334 = dma.hbm_to_vmem [thread:$0]  %s21, 4096, %s332, %s323
    %s335 = scalar_lea.sflag [#allocation13], 4
    %p337 = scmp.lt.u32.totalorder 128, 8
    %p338 = pneg %p337
    // Predicated region
    $region150: #{tpu_custom_call.1} parent=1 // pred_check
      _
    $region151: #{tpu_custom_call.1} parent=1 // pred_check_branch
      %340 = sbr.rel (%p337) target = $region153
    $region152: #{tpu_custom_call.1} parent=1 // pred_region
      %s356 = sand.u32 128, 7
      %p357 = scmp.eq.s32.totalorder %s356, 0
      // Predicated region
      $region165: #{tpu_custom_call.1} parent=152 // pred_check
        %p358 = pneg %p357
      $region166: #{tpu_custom_call.1} parent=152 // pred_check_branch
        %360 = sbr.rel (%p358) target = $region168
      $region167: #{tpu_custom_call.1} parent=152 // pred_region
        loop: start=0, step=1, limit=1
        $region169: #{tpu_custom_call.1} parent=167 // loop_pre_header
          _
        $region170: #{tpu_custom_call.1} parent=167 // loop_header
          %s362 = sphi 0, %s366
          %p363 = scmp.ge.s32.totalorder %s362, 1
          %s367 = sphi %s23, %s23
          %s368 = sphi [#allocation7], [#allocation7]
        $region171: #{tpu_custom_call.1} parent=167 // loop_header_branch
          %365 = sbr.rel (%p363) target = $region175
        $region172: #{tpu_custom_call.1} parent=167 // loop_body
          %v369 = vld [vmem:[%s367] sm:$0xff]
          %370 = vst [vmem:[%s368] sm:$0xff] %v369
          %v371 = vld [vmem:[%s367 + $0x8] sm:$0xff]
          %372 = vst [vmem:[%s368 + $0x8] sm:$0xff] %v371
          %v373 = vld [vmem:[%s367 + $0x10] sm:$0xff]
          %374 = vst [vmem:[%s368 + $0x10] sm:$0xff] %v373
          %v375 = vld [vmem:[%s367 + $0x18] sm:$0xff]
          %376 = vst [vmem:[%s368 + $0x18] sm:$0xff] %v375
          %v377 = vld [vmem:[%s367 + $0x20] sm:$0xff]
          %378 = vst [vmem:[%s368 + $0x20] sm:$0xff] %v377
          %v379 = vld [vmem:[%s367 + $0x28] sm:$0xff]
          %380 = vst [vmem:[%s368 + $0x28] sm:$0xff] %v379
          %v381 = vld [vmem:[%s367 + $0x30] sm:$0xff]
          %382 = vst [vmem:[%s368 + $0x30] sm:$0xff] %v381
          %v383 = vld [vmem:[%s367 + $0x38] sm:$0xff]
          %384 = vst [vmem:[%s368 + $0x38] sm:$0xff] %v383
          %v385 = vld [vmem:[%s367 + $0x40] sm:$0xff]
          %386 = vst [vmem:[%s368 + $0x40] sm:$0xff] %v385
          %v387 = vld [vmem:[%s367 + $0x48] sm:$0xff]
          %388 = vst [vmem:[%s368 + $0x48] sm:$0xff] %v387
          %v389 = vld [vmem:[%s367 + $0x50] sm:$0xff]
          %390 = vst [vmem:[%s368 + $0x50] sm:$0xff] %v389
          %v391 = vld [vmem:[%s367 + $0x58] sm:$0xff]
          %392 = vst [vmem:[%s368 + $0x58] sm:$0xff] %v391
          %v393 = vld [vmem:[%s367 + $0x60] sm:$0xff]
          %394 = vst [vmem:[%s368 + $0x60] sm:$0xff] %v393
          %v395 = vld [vmem:[%s367 + $0x68] sm:$0xff]
          %396 = vst [vmem:[%s368 + $0x68] sm:$0xff] %v395
          %v397 = vld [vmem:[%s367 + $0x70] sm:$0xff]
          %398 = vst [vmem:[%s368 + $0x70] sm:$0xff] %v397
          %v399 = vld [vmem:[%s367 + $0x78] sm:$0xff]
          %400 = vst [vmem:[%s368 + $0x78] sm:$0xff] %v399
        $region173: #{tpu_custom_call.1} parent=167 // loop_footer
          %s366 = sadd.s32 1, %s362
        $region174: #{tpu_custom_call.1} parent=167 // loop_footer_branch
          %361 = sbr.rel target = $region170
        $region175: #{tpu_custom_call.1} parent=167 // loop_exit
          _
      $region168: #{tpu_custom_call.1} parent=152 // pred_fallthru
        _
      %p401 = pneg %p357
      // Predicated region
      $region176: #{tpu_custom_call.1} parent=152 // pred_check
        _
      $region177: #{tpu_custom_call.1} parent=152 // pred_check_branch
        %403 = sbr.rel (%p357) target = $region179
      $region178: #{tpu_custom_call.1} parent=152 // pred_region
        %s404 = sand.u32 128, 7
      $region179: #{tpu_custom_call.1} parent=152 // pred_fallthru
        _
    $region153: #{tpu_custom_call.1} parent=1 // pred_fallthru
      _
    // Predicated region
    $region154: #{tpu_custom_call.1} parent=1 // pred_check
      %p341 = pneg %p337
    $region155: #{tpu_custom_call.1} parent=1 // pred_check_branch
      %343 = sbr.rel (%p341) target = $region157
    $region156: #{tpu_custom_call.1} parent=1 // pred_region
      %s344 = sshll.u32 1, 128
      %s345 = ssub.s32 %s344, 1
      loop: start=0, step=1, limit=1
      $region158: #{tpu_custom_call.1} parent=156 // loop_pre_header
        _
      $region159: #{tpu_custom_call.1} parent=156 // loop_header
        %s347 = sphi 0, %s351
        %p348 = scmp.ge.s32.totalorder %s347, 1
        %s352 = sphi %s23, %s23
        %s353 = sphi [#allocation7], [#allocation7]
      $region160: #{tpu_custom_call.1} parent=156 // loop_header_branch
        %350 = sbr.rel (%p348) target = $region164
      $region161: #{tpu_custom_call.1} parent=156 // loop_body
        %v354 = vld [vmem:[%s352] sm:%s345]
        %355 = vst [vmem:[%s353] sm:%s345] %v354
      $region162: #{tpu_custom_call.1} parent=156 // loop_footer
        %s351 = sadd.s32 1, %s347
      $region163: #{tpu_custom_call.1} parent=156 // loop_footer_branch
        %346 = sbr.rel target = $region159
      $region164: #{tpu_custom_call.1} parent=156 // loop_exit
        _
    $region157: #{tpu_custom_call.1} parent=1 // pred_fallthru
      _
    // Predicated region
    $region180: #{tpu_custom_call.1} parent=1 // pred_check
      _
    $region181: #{tpu_custom_call.1} parent=1 // pred_check_branch
      %407 = sbr.rel (0) target = $region183
    $region182: #{tpu_custom_call.1} parent=1 // pred_region
      %408 = vsyncadd %s335, 2048
    $region183: #{tpu_custom_call.1} parent=1 // pred_fallthru
      _
    %s409 = scalar_lea.sflag [#allocation13], 5
    %p411 = scmp.lt.u32.totalorder 64, 8
    %p412 = pneg %p411
    // Predicated region
    $region184: #{tpu_custom_call.1} parent=1 // pred_check
      _
    $region185: #{tpu_custom_call.1} parent=1 // pred_check_branch
      %414 = sbr.rel (%p411) target = $region187
    $region186: #{tpu_custom_call.1} parent=1 // pred_region
      %s430 = sand.u32 64, 7
      %p431 = scmp.eq.s32.totalorder %s430, 0
      // Predicated region
      $region199: #{tpu_custom_call.1} parent=186 // pred_check
        %p432 = pneg %p431
      $region200: #{tpu_custom_call.1} parent=186 // pred_check_branch
        %434 = sbr.rel (%p432) target = $region202
      $region201: #{tpu_custom_call.1} parent=186 // pred_region
        loop: start=0, step=1, limit=1
        $region203: #{tpu_custom_call.1} parent=201 // loop_pre_header
          _
        $region204: #{tpu_custom_call.1} parent=201 // loop_header
          %s436 = sphi 0, %s440
          %p437 = scmp.ge.s32.totalorder %s436, 1
          %s441 = sphi %s25, %s25
          %s442 = sphi [#allocation8], [#allocation8]
        $region205: #{tpu_custom_call.1} parent=201 // loop_header_branch
          %439 = sbr.rel (%p437) target = $region209
        $region206: #{tpu_custom_call.1} parent=201 // loop_body
          %v443 = vld [vmem:[%s441] sm:$0xff]
          %444 = vst [vmem:[%s442] sm:$0xff] %v443
          %v445 = vld [vmem:[%s441 + $0x8] sm:$0xff]
          %446 = vst [vmem:[%s442 + $0x8] sm:$0xff] %v445
          %v447 = vld [vmem:[%s441 + $0x10] sm:$0xff]
          %448 = vst [vmem:[%s442 + $0x10] sm:$0xff] %v447
          %v449 = vld [vmem:[%s441 + $0x18] sm:$0xff]
          %450 = vst [vmem:[%s442 + $0x18] sm:$0xff] %v449
          %v451 = vld [vmem:[%s441 + $0x20] sm:$0xff]
          %452 = vst [vmem:[%s442 + $0x20] sm:$0xff] %v451
          %v453 = vld [vmem:[%s441 + $0x28] sm:$0xff]
          %454 = vst [vmem:[%s442 + $0x28] sm:$0xff] %v453
          %v455 = vld [vmem:[%s441 + $0x30] sm:$0xff]
          %456 = vst [vmem:[%s442 + $0x30] sm:$0xff] %v455
          %v457 = vld [vmem:[%s441 + $0x38] sm:$0xff]
          %458 = vst [vmem:[%s442 + $0x38] sm:$0xff] %v457
        $region207: #{tpu_custom_call.1} parent=201 // loop_footer
          %s440 = sadd.s32 1, %s436
        $region208: #{tpu_custom_call.1} parent=201 // loop_footer_branch
          %435 = sbr.rel target = $region204
        $region209: #{tpu_custom_call.1} parent=201 // loop_exit
          _
      $region202: #{tpu_custom_call.1} parent=186 // pred_fallthru
        _
      %p459 = pneg %p431
      // Predicated region
      $region210: #{tpu_custom_call.1} parent=186 // pred_check
        _
      $region211: #{tpu_custom_call.1} parent=186 // pred_check_branch
        %461 = sbr.rel (%p431) target = $region213
      $region212: #{tpu_custom_call.1} parent=186 // pred_region
        %s462 = sand.u32 64, 7
      $region213: #{tpu_custom_call.1} parent=186 // pred_fallthru
        _
    $region187: #{tpu_custom_call.1} parent=1 // pred_fallthru
      _
    // Predicated region
    $region188: #{tpu_custom_call.1} parent=1 // pred_check
      %p415 = pneg %p411
    $region189: #{tpu_custom_call.1} parent=1 // pred_check_branch
      %417 = sbr.rel (%p415) target = $region191
    $region190: #{tpu_custom_call.1} parent=1 // pred_region
      %s418 = sshll.u32 1, 64
      %s419 = ssub.s32 %s418, 1
      loop: start=0, step=1, limit=1
      $region192: #{tpu_custom_call.1} parent=190 // loop_pre_header
        _
      $region193: #{tpu_custom_call.1} parent=190 // loop_header
        %s421 = sphi 0, %s425
        %p422 = scmp.ge.s32.totalorder %s421, 1
        %s426 = sphi %s25, %s25
        %s427 = sphi [#allocation8], [#allocation8]
      $region194: #{tpu_custom_call.1} parent=190 // loop_header_branch
        %424 = sbr.rel (%p422) target = $region198
      $region195: #{tpu_custom_call.1} parent=190 // loop_body
        %v428 = vld [vmem:[%s426] sm:%s419]
        %429 = vst [vmem:[%s427] sm:%s419] %v428
      $region196: #{tpu_custom_call.1} parent=190 // loop_footer
        %s425 = sadd.s32 1, %s421
      $region197: #{tpu_custom_call.1} parent=190 // loop_footer_branch
        %420 = sbr.rel target = $region193
      $region198: #{tpu_custom_call.1} parent=190 // loop_exit
        _
    $region191: #{tpu_custom_call.1} parent=1 // pred_fallthru
      _
    // Predicated region
    $region214: #{tpu_custom_call.1} parent=1 // pred_check
      _
    $region215: #{tpu_custom_call.1} parent=1 // pred_check_branch
      %465 = sbr.rel (0) target = $region217
    $region216: #{tpu_custom_call.1} parent=1 // pred_region
      %466 = vsyncadd %s409, 1024
    $region217: #{tpu_custom_call.1} parent=1 // pred_fallthru
      _
    %s467 = scalar_lea.sflag [#allocation13], 6
    %p469 = scmp.lt.u32.totalorder 32, 8
    %p470 = pneg %p469
    // Predicated region
    $region218: #{tpu_custom_call.1} parent=1 // pred_check
      _
    $region219: #{tpu_custom_call.1} parent=1 // pred_check_branch
      %472 = sbr.rel (%p469) target = $region221
    $region220: #{tpu_custom_call.1} parent=1 // pred_region
      %s488 = sand.u32 32, 7
      %p489 = scmp.eq.s32.totalorder %s488, 0
      // Predicated region
      $region233: #{tpu_custom_call.1} parent=220 // pred_check
        %p490 = pneg %p489
      $region234: #{tpu_custom_call.1} parent=220 // pred_check_branch
        %492 = sbr.rel (%p490) target = $region236
      $region235: #{tpu_custom_call.1} parent=220 // pred_region
        loop: start=0, step=1, limit=1
        $region237: #{tpu_custom_call.1} parent=235 // loop_pre_header
          _
        $region238: #{tpu_custom_call.1} parent=235 // loop_header
          %s494 = sphi 0, %s498
          %p495 = scmp.ge.s32.totalorder %s494, 1
          %s499 = sphi %s27, %s27
          %s500 = sphi [#allocation9], [#allocation9]
        $region239: #{tpu_custom_call.1} parent=235 // loop_header_branch
          %497 = sbr.rel (%p495) target = $region243
        $region240: #{tpu_custom_call.1} parent=235 // loop_body
          %v501 = vld [vmem:[%s499] sm:$0xff]
          %502 = vst [vmem:[%s500] sm:$0xff] %v501
          %v503 = vld [vmem:[%s499 + $0x8] sm:$0xff]
          %504 = vst [vmem:[%s500 + $0x8] sm:$0xff] %v503
          %v505 = vld [vmem:[%s499 + $0x10] sm:$0xff]
          %506 = vst [vmem:[%s500 + $0x10] sm:$0xff] %v505
          %v507 = vld [vmem:[%s499 + $0x18] sm:$0xff]
          %508 = vst [vmem:[%s500 + $0x18] sm:$0xff] %v507
        $region241: #{tpu_custom_call.1} parent=235 // loop_footer
          %s498 = sadd.s32 1, %s494
        $region242: #{tpu_custom_call.1} parent=235 // loop_footer_branch
          %493 = sbr.rel target = $region238
        $region243: #{tpu_custom_call.1} parent=235 // loop_exit
          _
      $region236: #{tpu_custom_call.1} parent=220 // pred_fallthru
        _
      %p509 = pneg %p489
      // Predicated region
      $region244: #{tpu_custom_call.1} parent=220 // pred_check
        _
      $region245: #{tpu_custom_call.1} parent=220 // pred_check_branch
        %511 = sbr.rel (%p489) target = $region247
      $region246: #{tpu_custom_call.1} parent=220 // pred_region
        %s512 = sand.u32 32, 7
      $region247: #{tpu_custom_call.1} parent=220 // pred_fallthru
        _
    $region221: #{tpu_custom_call.1} parent=1 // pred_fallthru
      _
    // Predicated region
    $region222: #{tpu_custom_call.1} parent=1 // pred_check
      %p473 = pneg %p469
    $region223: #{tpu_custom_call.1} parent=1 // pred_check_branch
      %475 = sbr.rel (%p473) target = $region225
    $region224: #{tpu_custom_call.1} parent=1 // pred_region
      %s476 = sshll.u32 1, 32
      %s477 = ssub.s32 %s476, 1
      loop: start=0, step=1, limit=1
      $region226: #{tpu_custom_call.1} parent=224 // loop_pre_header
        _
      $region227: #{tpu_custom_call.1} parent=224 // loop_header
        %s479 = sphi 0, %s483
        %p480 = scmp.ge.s32.totalorder %s479, 1
        %s484 = sphi %s27, %s27
        %s485 = sphi [#allocation9], [#allocation9]
      $region228: #{tpu_custom_call.1} parent=224 // loop_header_branch
        %482 = sbr.rel (%p480) target = $region232
      $region229: #{tpu_custom_call.1} parent=224 // loop_body
        %v486 = vld [vmem:[%s484] sm:%s477]
        %487 = vst [vmem:[%s485] sm:%s477] %v486
      $region230: #{tpu_custom_call.1} parent=224 // loop_footer
        %s483 = sadd.s32 1, %s479
      $region231: #{tpu_custom_call.1} parent=224 // loop_footer_branch
        %478 = sbr.rel target = $region227
      $region232: #{tpu_custom_call.1} parent=224 // loop_exit
        _
    $region225: #{tpu_custom_call.1} parent=1 // pred_fallthru
      _
    // Predicated region
    $region248: #{tpu_custom_call.1} parent=1 // pred_check
      _
    $region249: #{tpu_custom_call.1} parent=1 // pred_check_branch
      %515 = sbr.rel (0) target = $region251
    $region250: #{tpu_custom_call.1} parent=1 // pred_region
      %516 = vsyncadd %s467, 512
    $region251: #{tpu_custom_call.1} parent=1 // pred_fallthru
      _
    %s517 = scalar_lea.sflag [#allocation13], 7
    %p519 = scmp.lt.u32.totalorder 16, 8
    %p520 = pneg %p519
    // Predicated region
    $region252: #{tpu_custom_call.1} parent=1 // pred_check
      _
    $region253: #{tpu_custom_call.1} parent=1 // pred_check_branch
      %522 = sbr.rel (%p519) target = $region255
    $region254: #{tpu_custom_call.1} parent=1 // pred_region
      %s538 = sand.u32 16, 7
      %p539 = scmp.eq.s32.totalorder %s538, 0
      // Predicated region
      $region267: #{tpu_custom_call.1} parent=254 // pred_check
        %p540 = pneg %p539
      $region268: #{tpu_custom_call.1} parent=254 // pred_check_branch
        %542 = sbr.rel (%p540) target = $region270
      $region269: #{tpu_custom_call.1} parent=254 // pred_region
        loop: start=0, step=1, limit=1
        $region271: #{tpu_custom_call.1} parent=269 // loop_pre_header
          _
        $region272: #{tpu_custom_call.1} parent=269 // loop_header
          %s544 = sphi 0, %s548
          %p545 = scmp.ge.s32.totalorder %s544, 1
          %s549 = sphi %s29, %s29
          %s550 = sphi [#allocation10], [#allocation10]
        $region273: #{tpu_custom_call.1} parent=269 // loop_header_branch
          %547 = sbr.rel (%p545) target = $region277
        $region274: #{tpu_custom_call.1} parent=269 // loop_body
          %v551 = vld [vmem:[%s549] sm:$0xff]
          %552 = vst [vmem:[%s550] sm:$0xff] %v551
          %v553 = vld [vmem:[%s549 + $0x8] sm:$0xff]
          %554 = vst [vmem:[%s550 + $0x8] sm:$0xff] %v553
        $region275: #{tpu_custom_call.1} parent=269 // loop_footer
          %s548 = sadd.s32 1, %s544
        $region276: #{tpu_custom_call.1} parent=269 // loop_footer_branch
          %543 = sbr.rel target = $region272
        $region277: #{tpu_custom_call.1} parent=269 // loop_exit
          _
      $region270: #{tpu_custom_call.1} parent=254 // pred_fallthru
        _
      %p555 = pneg %p539
      // Predicated region
      $region278: #{tpu_custom_call.1} parent=254 // pred_check
        _
      $region279: #{tpu_custom_call.1} parent=254 // pred_check_branch
        %557 = sbr.rel (%p539) target = $region281
      $region280: #{tpu_custom_call.1} parent=254 // pred_region
        %s558 = sand.u32 16, 7
      $region281: #{tpu_custom_call.1} parent=254 // pred_fallthru
        _
    $region255: #{tpu_custom_call.1} parent=1 // pred_fallthru
      _
    // Predicated region
    $region256: #{tpu_custom_call.1} parent=1 // pred_check
      %p523 = pneg %p519
    $region257: #{tpu_custom_call.1} parent=1 // pred_check_branch
      %525 = sbr.rel (%p523) target = $region259
    $region258: #{tpu_custom_call.1} parent=1 // pred_region
      %s526 = sshll.u32 1, 16
      %s527 = ssub.s32 %s526, 1
      loop: start=0, step=1, limit=1
      $region260: #{tpu_custom_call.1} parent=258 // loop_pre_header
        _
      $region261: #{tpu_custom_call.1} parent=258 // loop_header
        %s529 = sphi 0, %s533
        %p530 = scmp.ge.s32.totalorder %s529, 1
        %s534 = sphi %s29, %s29
        %s535 = sphi [#allocation10], [#allocation10]
      $region262: #{tpu_custom_call.1} parent=258 // loop_header_branch
        %532 = sbr.rel (%p530) target = $region266
      $region263: #{tpu_custom_call.1} parent=258 // loop_body
        %v536 = vld [vmem:[%s534] sm:%s527]
        %537 = vst [vmem:[%s535] sm:%s527] %v536
      $region264: #{tpu_custom_call.1} parent=258 // loop_footer
        %s533 = sadd.s32 1, %s529
      $region265: #{tpu_custom_call.1} parent=258 // loop_footer_branch
        %528 = sbr.rel target = $region261
      $region266: #{tpu_custom_call.1} parent=258 // loop_exit
        _
    $region259: #{tpu_custom_call.1} parent=1 // pred_fallthru
      _
    // Predicated region
    $region282: #{tpu_custom_call.1} parent=1 // pred_check
      _
    $region283: #{tpu_custom_call.1} parent=1 // pred_check_branch
      %561 = sbr.rel (0) target = $region285
    $region284: #{tpu_custom_call.1} parent=1 // pred_region
      %562 = vsyncadd %s517, 256
    $region285: #{tpu_custom_call.1} parent=1 // pred_fallthru
      _
    %s563 = scalar_lea.sflag [#allocation13], 8
    %p565 = scmp.lt.u32.totalorder 8, 8
    %p566 = pneg %p565
    // Predicated region
    $region286: #{tpu_custom_call.1} parent=1 // pred_check
      _
    $region287: #{tpu_custom_call.1} parent=1 // pred_check_branch
      %568 = sbr.rel (%p565) target = $region289
    $region288: #{tpu_custom_call.1} parent=1 // pred_region
      %s584 = sand.u32 8, 7
      %p585 = scmp.eq.s32.totalorder %s584, 0
      // Predicated region
      $region301: #{tpu_custom_call.1} parent=288 // pred_check
        %p586 = pneg %p585
      $region302: #{tpu_custom_call.1} parent=288 // pred_check_branch
        %588 = sbr.rel (%p586) target = $region304
      $region303: #{tpu_custom_call.1} parent=288 // pred_region
        loop: start=0, step=1, limit=1
        $region305: #{tpu_custom_call.1} parent=303 // loop_pre_header
          _
        $region306: #{tpu_custom_call.1} parent=303 // loop_header
          %s590 = sphi 0, %s594
          %p591 = scmp.ge.s32.totalorder %s590, 1
          %s595 = sphi %s31, %s31
          %s596 = sphi [#allocation11], [#allocation11]
        $region307: #{tpu_custom_call.1} parent=303 // loop_header_branch
          %593 = sbr.rel (%p591) target = $region311
        $region308: #{tpu_custom_call.1} parent=303 // loop_body
          %v597 = vld [vmem:[%s595] sm:$0xff]
          %598 = vst [vmem:[%s596] sm:$0xff] %v597
        $region309: #{tpu_custom_call.1} parent=303 // loop_footer
          %s594 = sadd.s32 1, %s590
        $region310: #{tpu_custom_call.1} parent=303 // loop_footer_branch
          %589 = sbr.rel target = $region306
        $region311: #{tpu_custom_call.1} parent=303 // loop_exit
          _
      $region304: #{tpu_custom_call.1} parent=288 // pred_fallthru
        _
      %p599 = pneg %p585
      // Predicated region
      $region312: #{tpu_custom_call.1} parent=288 // pred_check
        _
      $region313: #{tpu_custom_call.1} parent=288 // pred_check_branch
        %601 = sbr.rel (%p585) target = $region315
      $region314: #{tpu_custom_call.1} parent=288 // pred_region
        %s602 = sand.u32 8, 7
      $region315: #{tpu_custom_call.1} parent=288 // pred_fallthru
        _
    $region289: #{tpu_custom_call.1} parent=1 // pred_fallthru
      _
    // Predicated region
    $region290: #{tpu_custom_call.1} parent=1 // pred_check
      %p569 = pneg %p565
    $region291: #{tpu_custom_call.1} parent=1 // pred_check_branch
      %571 = sbr.rel (%p569) target = $region293
    $region292: #{tpu_custom_call.1} parent=1 // pred_region
      %s572 = sshll.u32 1, 8
      %s573 = ssub.s32 %s572, 1
      loop: start=0, step=1, limit=1
      $region294: #{tpu_custom_call.1} parent=292 // loop_pre_header
        _
      $region295: #{tpu_custom_call.1} parent=292 // loop_header
        %s575 = sphi 0, %s579
        %p576 = scmp.ge.s32.totalorder %s575, 1
        %s580 = sphi %s31, %s31
        %s581 = sphi [#allocation11], [#allocation11]
      $region296: #{tpu_custom_call.1} parent=292 // loop_header_branch
        %578 = sbr.rel (%p576) target = $region300
      $region297: #{tpu_custom_call.1} parent=292 // loop_body
        %v582 = vld [vmem:[%s580] sm:%s573]
        %583 = vst [vmem:[%s581] sm:%s573] %v582
      $region298: #{tpu_custom_call.1} parent=292 // loop_footer
        %s579 = sadd.s32 1, %s575
      $region299: #{tpu_custom_call.1} parent=292 // loop_footer_branch
        %574 = sbr.rel target = $region295
      $region300: #{tpu_custom_call.1} parent=292 // loop_exit
        _
    $region293: #{tpu_custom_call.1} parent=1 // pred_fallthru
      _
    // Predicated region
    $region316: #{tpu_custom_call.1} parent=1 // pred_check
      _
    $region317: #{tpu_custom_call.1} parent=1 // pred_check_branch
      %605 = sbr.rel (0) target = $region319
    $region318: #{tpu_custom_call.1} parent=1 // pred_region
      %606 = vsyncadd %s563, 128
    $region319: #{tpu_custom_call.1} parent=1 // pred_fallthru
      _
    %s607 = scalar_lea.sflag [#allocation13], 9
    // Predicated region
    $region320: #{tpu_custom_call.1} parent=1 // pred_check
      _
    $region321: #{tpu_custom_call.1} parent=1 // pred_check_branch
      %609 = sbr.rel target = $region323
    $region322: #{tpu_custom_call.1} parent=1 // pred_region
      %610 = sst [smem:[#allocation46]] [#allocation60]
      %611 = sst [smem:[#allocation47]] [#allocation59]
    $region323: #{tpu_custom_call.1} parent=1 // pred_fallthru
      _
    %613 = shalt.err (0)
    %s615 = sshll.u32 [#allocation12], 4
    %s616 = int_to_ptr.vmem [resolvable:$true] %s615
    %618 = dma.hbm_to_vmem [thread:$0]  %s33, 64, %s616, %s607
    %v619 = vld [vmem:[%s1] sm:$0xff]
    %v620 = vld [vmem:[%s1 + $0x8] sm:$0xff]
    %v621 = vld [vmem:[%s1 + $0x10] sm:$0xff]
    %v622 = vld [vmem:[%s1 + $0x18] sm:$0xff]
    %v623 = vld [vmem:[%s1 + $0x20] sm:$0xff]
    %v624 = vld [vmem:[%s1 + $0x28] sm:$0xff]
    %v625 = vld [vmem:[%s1 + $0x30] sm:$0xff]
    %v626 = vld [vmem:[%s1 + $0x38] sm:$0xff]
    %v627 = vld [vmem:[%s1 + $0x40] sm:$0xff]
    %v628 = vld [vmem:[%s1 + $0x48] sm:$0xff]
    %v629 = vld [vmem:[%s1 + $0x50] sm:$0xff]
    %v630 = vld [vmem:[%s1 + $0x58] sm:$0xff]
    %v631 = vld [vmem:[#allocation14] sm:$0xff]
    %v632 = vld [vmem:[#allocation19] sm:$0xf]
    %v634 = vlaneseq
    %v635 = vshrl.u32 %v634, 7
    %v636 = vsub.s32 0, %v635
    %v637 = vrot.slane %v632, %v636
    %v638 = vlaneseq
    %v639 = vshrl.u32 %v638, 7
    %v640 = vsub.s32 1, %v639
    %v641 = vrot.slane %v632, %v640
    %v642 = vlaneseq
    %v643 = vshrl.u32 %v642, 7
    %v644 = vsub.s32 2, %v643
    %v645 = vrot.slane %v632, %v644
    %v646 = vlaneseq
    %v647 = vshrl.u32 %v646, 7
    %v648 = vsub.s32 3, %v647
    %v649 = vrot.slane %v632, %v648
    %v655 = vcombine.high %v631, %v631
    %v657 = vunpack.c.l.s4 1983009808
    %v658 = vunpack.c.0.s8 %v657
    %v659 = vlaneseq
    %v660 = vshrl.u32 %v659, 7
    %v661 = vsub.s32 %v658, %v660
    %v662 = vrot.slane %v631, %v661
    %v664 = vunpack.c.l.s4 1983009808
    %v665 = vunpack.c.0.s8 %v664
    %v666 = vlaneseq
    %v667 = vshrl.u32 %v666, 7
    %v668 = vsub.s32 %v665, %v667
    %v669 = vrot.slane %v655, %v668
    %v670 = vcombine.high %v662, %v662
    %v671 = vcombine.high %v669, %v669
    %vm672 = vcmask 15360
    %v674 = vsel %vm672, %v619, 0
    %v677 = vsel %vm672, %v620, 0
    %v680 = vsel %vm672, %v621, 0
    %v683 = vsel %vm672, %v622, 0
    %v686 = vsel %vm672, %v623, 0
    %v689 = vsel %vm672, %v624, 0
    %v692 = vsel %vm672, %v625, 0
    %v695 = vsel %vm672, %v626, 0
    %v698 = vsel %vm672, %v627, 0
    %v701 = vsel %vm672, %v628, 0
    %v704 = vsel %vm672, %v629, 0
    %v707 = vsel %vm672, %v630, 0
    %vm709 = vcmask 1041408
    %v710 = vsel %vm709, %v662, 0
    %v712 = vsel %vm709, %v670, 0
    %v714 = vsel %vm709, %v669, 0
    %v716 = vsel %vm709, %v671, 0
    %718 = vmatprep.subr.mxu0 0.0
    %719 = vmatpush1.msra.mxu0 0.0
    %720 = vmatprep.subr.mxu0 0.0
    %721 = vmatpush1.msra.mxu0 0.0
    %722 = vmatprep.subr.mxu0 0.0
    %723 = vmatpush1.msra.mxu0 0.0
    %724 = vmatprep.subr.mxu0 0.0
    %725 = vmatpush1.msra.mxu0 0.0
    %726 = vmatprep.subr.mxu0 0.0
    %727 = vmatpush1.msra.mxu0 0.0
    %728 = vmatprep.subr.mxu0 0.0
    %729 = vmatpush1.msra.mxu0 0.0
    %730 = vmatprep.subr.mxu0 0.0
    %731 = vmatpush1.msra.mxu0 0.0
    %732 = vmatprep.subr.mxu0 0.0
    %733 = vmatpush1.msra.mxu0 0.0
    %734 = vmatprep.subr.mxu0 0.0
    %735 = vmatpush1.msra.mxu0 0.0
    %736 = vmatprep.subr.mxu0 0.0
    %737 = vmatpush1.msra.mxu0 0.0
    %738 = vmatprep.subr.mxu0 0.0
    %739 = vmatpush1.msra.mxu0 0.0
    %740 = vmatprep.subr.mxu0 0.0
    %741 = vmatpush1.msra.mxu0 0.0
    %742 = vmatprep.subr.mxu0 0.0
    %743 = vmatpush1.msra.mxu0 0.0
    %744 = vmatprep.subr.mxu0 0.0
    %745 = vmatpush1.msra.mxu0 0.0
    %746 = vmatprep.subr.mxu0 0.0
    %747 = vmatpush1.msra.mxu0 0.0
    %748 = vmatprep.subr.mxu0 %v712
    %749 = vmatpush1.msra.mxu0 %v710
    %750 = vmatprep.subr.mxu0 0.0
    %751 = vmatpush2.msra.mxu0 0.0
    %752 = vmatprep.subr.mxu0 0.0
    %753 = vmatpush2.msra.mxu0 0.0
    %754 = vmatprep.subr.mxu0 0.0
    %755 = vmatpush2.msra.mxu0 0.0
    %756 = vmatprep.subr.mxu0 0.0
    %757 = vmatpush2.msra.mxu0 0.0
    %758 = vmatprep.subr.mxu0 0.0
    %759 = vmatpush2.msra.mxu0 0.0
    %760 = vmatprep.subr.mxu0 0.0
    %761 = vmatpush2.msra.mxu0 0.0
    %762 = vmatprep.subr.mxu0 0.0
    %763 = vmatpush2.msra.mxu0 0.0
    %764 = vmatprep.subr.mxu0 0.0
    %765 = vmatpush2.msra.mxu0 0.0
    %766 = vmatprep.subr.mxu0 0.0
    %767 = vmatpush2.msra.mxu0 0.0
    %768 = vmatprep.subr.mxu0 0.0
    %769 = vmatpush2.msra.mxu0 0.0
    %770 = vmatprep.subr.mxu0 0.0
    %771 = vmatpush2.msra.mxu0 0.0
    %772 = vmatprep.subr.mxu0 0.0
    %773 = vmatpush2.msra.mxu0 0.0
    %774 = vmatprep.subr.mxu0 0.0
    %775 = vmatpush2.msra.mxu0 0.0
    %776 = vmatprep.subr.mxu0 0.0
    %777 = vmatpush2.msra.mxu0 0.0
    %778 = vmatprep.subr.mxu0 0.0
    %779 = vmatpush2.msra.mxu0 0.0
    %780 = vmatprep.subr.mxu0 0.0
    %781 = vmatpush2.msra.mxu0 0.0
    %782 = vmatprep.mubr.f32.mxu0 0.0
    %783 = vmatmul.mubr.f32.gmra.mxu0 %v674
    %v784 = vpop.f32.mrf.mxu0
    %v785 = vadd.f32 %v637, %v784
    %v786 = vpop.f32.mrf.mxu0
    %v787 = vadd.f32 %v641, %v786
    %788 = vmatprep.mubr.f32.mxu0 0.0
    %789 = vmatmul.mubr.f32.gmra.mxu0 %v677
    %v790 = vpop.f32.mrf.mxu0
    %v791 = vadd.f32 %v637, %v790
    %v792 = vpop.f32.mrf.mxu0
    %v793 = vadd.f32 %v641, %v792
    %794 = vmatprep.mubr.f32.mxu0 0.0
    %795 = vmatmul.mubr.f32.gmra.mxu0 %v680
    %v796 = vpop.f32.mrf.mxu0
    %v797 = vadd.f32 %v637, %v796
    %v798 = vpop.f32.mrf.mxu0
    %v799 = vadd.f32 %v641, %v798
    %800 = vmatprep.mubr.f32.mxu0 0.0
    %801 = vmatmul.mubr.f32.gmra.mxu0 %v683
    %v802 = vpop.f32.mrf.mxu0
    %v803 = vadd.f32 %v637, %v802
    %v804 = vpop.f32.mrf.mxu0
    %v805 = vadd.f32 %v641, %v804
    %806 = vmatprep.mubr.f32.mxu0 0.0
    %807 = vmatmul.mubr.f32.gmra.mxu0 %v686
    %v808 = vpop.f32.mrf.mxu0
    %v809 = vadd.f32 %v637, %v808
    %v810 = vpop.f32.mrf.mxu0
    %v811 = vadd.f32 %v641, %v810
    %812 = vmatprep.mubr.f32.mxu0 0.0
    %813 = vmatmul.mubr.f32.gmra.mxu0 %v689
    %v814 = vpop.f32.mrf.mxu0
    %v815 = vadd.f32 %v637, %v814
    %v816 = vpop.f32.mrf.mxu0
    %v817 = vadd.f32 %v641, %v816
    %818 = vmatprep.mubr.f32.mxu0 0.0
    %819 = vmatmul.mubr.f32.gmra.mxu0 %v692
    %v820 = vpop.f32.mrf.mxu0
    %v821 = vadd.f32 %v637, %v820
    %v822 = vpop.f32.mrf.mxu0
    %v823 = vadd.f32 %v641, %v822
    %824 = vmatprep.mubr.f32.mxu0 0.0
    %825 = vmatmul.mubr.f32.gmra.mxu0 %v695
    %v826 = vpop.f32.mrf.mxu0
    %v827 = vadd.f32 %v637, %v826
    %v828 = vpop.f32.mrf.mxu0
    %v829 = vadd.f32 %v641, %v828
    %830 = vmatprep.mubr.f32.mxu0 0.0
    %831 = vmatmul.mubr.f32.gmra.mxu0 %v698
    %v832 = vpop.f32.mrf.mxu0
    %v833 = vadd.f32 %v637, %v832
    %v834 = vpop.f32.mrf.mxu0
    %v835 = vadd.f32 %v641, %v834
    %836 = vmatprep.mubr.f32.mxu0 0.0
    %837 = vmatmul.mubr.f32.gmra.mxu0 %v701
    %v838 = vpop.f32.mrf.mxu0
    %v839 = vadd.f32 %v637, %v838
    %v840 = vpop.f32.mrf.mxu0
    %v841 = vadd.f32 %v641, %v840
    %842 = vmatprep.mubr.f32.mxu0 0.0
    %843 = vmatmul.mubr.f32.gmra.mxu0 %v704
    %v844 = vpop.f32.mrf.mxu0
    %v845 = vadd.f32 %v637, %v844
    %v846 = vpop.f32.mrf.mxu0
    %v847 = vadd.f32 %v641, %v846
    %848 = vmatprep.mubr.f32.mxu0 0.0
    %849 = vmatmul.mubr.f32.gmra.mxu0 %v707
    %v850 = vpop.f32.mrf.mxu0
    %v851 = vadd.f32 %v637, %v850
    %v852 = vpop.f32.mrf.mxu0
    %v853 = vadd.f32 %v641, %v852
    %854 = vdwg.mxu0
    %855 = vmatprep.subr.mxu0 0.0
    %856 = vmatpush1.msra.mxu0 0.0
    %857 = vmatprep.subr.mxu0 0.0
    %858 = vmatpush1.msra.mxu0 0.0
    %859 = vmatprep.subr.mxu0 0.0
    %860 = vmatpush1.msra.mxu0 0.0
    %861 = vmatprep.subr.mxu0 0.0
    %862 = vmatpush1.msra.mxu0 0.0
    %863 = vmatprep.subr.mxu0 0.0
    %864 = vmatpush1.msra.mxu0 0.0
    %865 = vmatprep.subr.mxu0 0.0
    %866 = vmatpush1.msra.mxu0 0.0
    %867 = vmatprep.subr.mxu0 0.0
    %868 = vmatpush1.msra.mxu0 0.0
    %869 = vmatprep.subr.mxu0 0.0
    %870 = vmatpush1.msra.mxu0 0.0
    %871 = vmatprep.subr.mxu0 0.0
    %872 = vmatpush1.msra.mxu0 0.0
    %873 = vmatprep.subr.mxu0 0.0
    %874 = vmatpush1.msra.mxu0 0.0
    %875 = vmatprep.subr.mxu0 0.0
    %876 = vmatpush1.msra.mxu0 0.0
    %877 = vmatprep.subr.mxu0 0.0
    %878 = vmatpush1.msra.mxu0 0.0
    %879 = vmatprep.subr.mxu0 0.0
    %880 = vmatpush1.msra.mxu0 0.0
    %881 = vmatprep.subr.mxu0 0.0
    %882 = vmatpush1.msra.mxu0 0.0
    %883 = vmatprep.subr.mxu0 0.0
    %884 = vmatpush1.msra.mxu0 0.0
    %885 = vmatprep.subr.mxu0 %v716
    %886 = vmatpush1.msra.mxu0 %v714
    %887 = vmatprep.subr.mxu0 0.0
    %888 = vmatpush2.msra.mxu0 0.0
    %889 = vmatprep.subr.mxu0 0.0
    %890 = vmatpush2.msra.mxu0 0.0
    %891 = vmatprep.subr.mxu0 0.0
    %892 = vmatpush2.msra.mxu0 0.0
    %893 = vmatprep.subr.mxu0 0.0
    %894 = vmatpush2.msra.mxu0 0.0
    %895 = vmatprep.subr.mxu0 0.0
    %896 = vmatpush2.msra.mxu0 0.0
    %897 = vmatprep.subr.mxu0 0.0
    %898 = vmatpush2.msra.mxu0 0.0
    %899 = vmatprep.subr.mxu0 0.0
    %900 = vmatpush2.msra.mxu0 0.0
    %901 = vmatprep.subr.mxu0 0.0
    %902 = vmatpush2.msra.mxu0 0.0
    %903 = vmatprep.subr.mxu0 0.0
    %904 = vmatpush2.msra.mxu0 0.0
    %905 = vmatprep.subr.mxu0 0.0
    %906 = vmatpush2.msra.mxu0 0.0
    %907 = vmatprep.subr.mxu0 0.0
    %908 = vmatpush2.msra.mxu0 0.0
    %909 = vmatprep.subr.mxu0 0.0
    %910 = vmatpush2.msra.mxu0 0.0
    %911 = vmatprep.subr.mxu0 0.0
    %912 = vmatpush2.msra.mxu0 0.0
    %913 = vmatprep.subr.mxu0 0.0
    %914 = vmatpush2.msra.mxu0 0.0
    %915 = vmatprep.subr.mxu0 0.0
    %916 = vmatpush2.msra.mxu0 0.0
    %917 = vmatprep.subr.mxu0 0.0
    %918 = vmatpush2.msra.mxu0 0.0
    %919 = vmatprep.mubr.f32.mxu0 0.0
    %920 = vmatmul.mubr.f32.gmra.mxu0 %v674
    %v921 = vpop.f32.mrf.mxu0
    %v922 = vadd.f32 %v645, %v921
    %v923 = vpop.f32.mrf.mxu0
    %v924 = vadd.f32 %v649, %v923
    %925 = vmatprep.mubr.f32.mxu0 0.0
    %926 = vmatmul.mubr.f32.gmra.mxu0 %v677
    %v927 = vpop.f32.mrf.mxu0
    %v928 = vadd.f32 %v645, %v927
    %v929 = vpop.f32.mrf.mxu0
    %v930 = vadd.f32 %v649, %v929
    %931 = vmatprep.mubr.f32.mxu0 0.0
    %932 = vmatmul.mubr.f32.gmra.mxu0 %v680
    %v933 = vpop.f32.mrf.mxu0
    %v934 = vadd.f32 %v645, %v933
    %v935 = vpop.f32.mrf.mxu0
    %v936 = vadd.f32 %v649, %v935
    %937 = vmatprep.mubr.f32.mxu0 0.0
    %938 = vmatmul.mubr.f32.gmra.mxu0 %v683
    %v939 = vpop.f32.mrf.mxu0
    %v940 = vadd.f32 %v645, %v939
    %v941 = vpop.f32.mrf.mxu0
    %v942 = vadd.f32 %v649, %v941
    %943 = vmatprep.mubr.f32.mxu0 0.0
    %944 = vmatmul.mubr.f32.gmra.mxu0 %v686
    %v945 = vpop.f32.mrf.mxu0
    %v946 = vadd.f32 %v645, %v945
    %v947 = vpop.f32.mrf.mxu0
    %v948 = vadd.f32 %v649, %v947
    %949 = vmatprep.mubr.f32.mxu0 0.0
    %950 = vmatmul.mubr.f32.gmra.mxu0 %v689
    %v951 = vpop.f32.mrf.mxu0
    %v952 = vadd.f32 %v645, %v951
    %v953 = vpop.f32.mrf.mxu0
    %v954 = vadd.f32 %v649, %v953
    %955 = vmatprep.mubr.f32.mxu0 0.0
    %956 = vmatmul.mubr.f32.gmra.mxu0 %v692
    %v957 = vpop.f32.mrf.mxu0
    %v958 = vadd.f32 %v645, %v957
    %v959 = vpop.f32.mrf.mxu0
    %v960 = vadd.f32 %v649, %v959
    %961 = vmatprep.mubr.f32.mxu0 0.0
    %962 = vmatmul.mubr.f32.gmra.mxu0 %v695
    %v963 = vpop.f32.mrf.mxu0
    %v964 = vadd.f32 %v645, %v963
    %v965 = vpop.f32.mrf.mxu0
    %v966 = vadd.f32 %v649, %v965
    %967 = vmatprep.mubr.f32.mxu0 0.0
    %968 = vmatmul.mubr.f32.gmra.mxu0 %v698
    %v969 = vpop.f32.mrf.mxu0
    %v970 = vadd.f32 %v645, %v969
    %v971 = vpop.f32.mrf.mxu0
    %v972 = vadd.f32 %v649, %v971
    %973 = vmatprep.mubr.f32.mxu0 0.0
    %974 = vmatmul.mubr.f32.gmra.mxu0 %v701
    %v975 = vpop.f32.mrf.mxu0
    %v976 = vadd.f32 %v645, %v975
    %v977 = vpop.f32.mrf.mxu0
    %v978 = vadd.f32 %v649, %v977
    %979 = vmatprep.mubr.f32.mxu0 0.0
    %980 = vmatmul.mubr.f32.gmra.mxu0 %v704
    %v981 = vpop.f32.mrf.mxu0
    %v982 = vadd.f32 %v645, %v981
    %v983 = vpop.f32.mrf.mxu0
    %v984 = vadd.f32 %v649, %v983
    %985 = vmatprep.mubr.f32.mxu0 0.0
    %986 = vmatmul.mubr.f32.gmra.mxu0 %v707
    %v987 = vpop.f32.mrf.mxu0
    %v988 = vadd.f32 %v645, %v987
    %v989 = vpop.f32.mrf.mxu0
    %v990 = vadd.f32 %v649, %v989
    %991 = vdwg.mxu0
    %992 = vst [vmem:[#allocation2] sm:$0xff] %v785
    %993 = vst [vmem:[#allocation2 + $0x8] sm:$0xff] %v787
    %994 = vst [vmem:[#allocation2 + $0x10] sm:$0xff] %v922
    %995 = vst [vmem:[#allocation2 + $0x18] sm:$0xff] %v924
    %996 = vst [vmem:[#allocation2 + $0x20] sm:$0xff] %v791
    %997 = vst [vmem:[#allocation2 + $0x28] sm:$0xff] %v793
    %998 = vst [vmem:[#allocation2 + $0x30] sm:$0xff] %v928
    %999 = vst [vmem:[#allocation2 + $0x38] sm:$0xff] %v930
    %1000 = vst [vmem:[#allocation2 + $0x40] sm:$0xff] %v797
    %1001 = vst [vmem:[#allocation2 + $0x48] sm:$0xff] %v799
    %1002 = vst [vmem:[#allocation2 + $0x50] sm:$0xff] %v934
    %1003 = vst [vmem:[#allocation2 + $0x58] sm:$0xff] %v936
    %1004 = vst [vmem:[#allocation2 + $0x60] sm:$0xff] %v803
    %1005 = vst [vmem:[#allocation2 + $0x68] sm:$0xff] %v805
    %1006 = vst [vmem:[#allocation2 + $0x70] sm:$0xff] %v940
    %1007 = vst [vmem:[#allocation2 + $0x78] sm:$0xff] %v942
    %1008 = vst [vmem:[#allocation2 + $0x80] sm:$0xff] %v809
    %1009 = vst [vmem:[#allocation2 + $0x88] sm:$0xff] %v811
    %1010 = vst [vmem:[#allocation2 + $0x90] sm:$0xff] %v946
    %1011 = vst [vmem:[#allocation2 + $0x98] sm:$0xff] %v948
    %1012 = vst [vmem:[#allocation2 + $0xa0] sm:$0xff] %v815
    %1013 = vst [vmem:[#allocation2 + $0xa8] sm:$0xff] %v817
    %1014 = vst [vmem:[#allocation2 + $0xb0] sm:$0xff] %v952
    %1015 = vst [vmem:[#allocation2 + $0xb8] sm:$0xff] %v954
    %1016 = vst [vmem:[#allocation2 + $0xc0] sm:$0xff] %v821
    %1017 = vst [vmem:[#allocation2 + $0xc8] sm:$0xff] %v823
    %1018 = vst [vmem:[#allocation2 + $0xd0] sm:$0xff] %v958
    %1019 = vst [vmem:[#allocation2 + $0xd8] sm:$0xff] %v960
    %1020 = vst [vmem:[#allocation2 + $0xe0] sm:$0xff] %v827
    %1021 = vst [vmem:[#allocation2 + $0xe8] sm:$0xff] %v829
    %1022 = vst [vmem:[#allocation2 + $0xf0] sm:$0xff] %v964
    %1023 = vst [vmem:[#allocation2 + $0xf8] sm:$0xff] %v966
    %1024 = vst [vmem:[#allocation2 + $0x100] sm:$0xff] %v833
    %1025 = vst [vmem:[#allocation2 + $0x108] sm:$0xff] %v835
    %1026 = vst [vmem:[#allocation2 + $0x110] sm:$0xff] %v970
    %1027 = vst [vmem:[#allocation2 + $0x118] sm:$0xff] %v972
    %1028 = vst [vmem:[#allocation2 + $0x120] sm:$0xff] %v839
    %1029 = vst [vmem:[#allocation2 + $0x128] sm:$0xff] %v841
    %1030 = vst [vmem:[#allocation2 + $0x130] sm:$0xff] %v976
    %1031 = vst [vmem:[#allocation2 + $0x138] sm:$0xff] %v978
    %1032 = vst [vmem:[#allocation2 + $0x140] sm:$0xff] %v845
    %1033 = vst [vmem:[#allocation2 + $0x148] sm:$0xff] %v847
    %1034 = vst [vmem:[#allocation2 + $0x150] sm:$0xff] %v982
    %1035 = vst [vmem:[#allocation2 + $0x158] sm:$0xff] %v984
    %1036 = vst [vmem:[#allocation2 + $0x160] sm:$0xff] %v851
    %1037 = vst [vmem:[#allocation2 + $0x168] sm:$0xff] %v853
    %1038 = vst [vmem:[#allocation2 + $0x170] sm:$0xff] %v988
    %1039 = vst [vmem:[#allocation2 + $0x178] sm:$0xff] %v990
    %v1040 = vld [vmem:[#allocation17] sm:$0xff]
    %v1041 = vld [vmem:[#allocation17 + $0x8] sm:$0xff]
    %v1042 = vld [vmem:[#allocation17 + $0x10] sm:$0xff]
    %v1043 = vld [vmem:[#allocation17 + $0x18] sm:$0xff]
    %v1044 = vld [vmem:[#allocation17 + $0x20] sm:$0xff]
    %v1045 = vld [vmem:[#allocation17 + $0x28] sm:$0xff]
    %v1046 = vld [vmem:[#allocation17 + $0x30] sm:$0xff]
    %v1047 = vld [vmem:[#allocation17 + $0x38] sm:$0xff]
    %v1048 = vld [vmem:[#allocation17 + $0x40] sm:$0xff]
    %v1049 = vld [vmem:[#allocation17 + $0x48] sm:$0xff]
    %v1050 = vld [vmem:[#allocation17 + $0x50] sm:$0xff]
    %v1051 = vld [vmem:[#allocation17 + $0x58] sm:$0xff]
    %v1052 = vld [vmem:[#allocation17 + $0x60] sm:$0xff]
    %v1053 = vld [vmem:[#allocation17 + $0x68] sm:$0xff]
    %v1054 = vld [vmem:[#allocation17 + $0x70] sm:$0xff]
    %v1055 = vld [vmem:[#allocation17 + $0x78] sm:$0xff]
    %v1056 = vld [vmem:[#allocation17 + $0x80] sm:$0xff]
    %v1057 = vld [vmem:[#allocation17 + $0x88] sm:$0xff]
    %v1058 = vld [vmem:[#allocation17 + $0x90] sm:$0xff]
    %v1059 = vld [vmem:[#allocation17 + $0x98] sm:$0xff]
    %v1060 = vld [vmem:[#allocation17 + $0xa0] sm:$0xff]
    %v1061 = vld [vmem:[#allocation17 + $0xa8] sm:$0xff]
    %v1062 = vld [vmem:[#allocation17 + $0xb0] sm:$0xff]
    %v1063 = vld [vmem:[#allocation17 + $0xb8] sm:$0xff]
    %v1064 = vld [vmem:[#allocation17 + $0xc0] sm:$0xff]
    %v1065 = vld [vmem:[#allocation17 + $0xc8] sm:$0xff]
    %v1066 = vld [vmem:[#allocation17 + $0xd0] sm:$0xff]
    %v1067 = vld [vmem:[#allocation17 + $0xd8] sm:$0xff]
    %v1068 = vld [vmem:[#allocation17 + $0xe0] sm:$0xff]
    %v1069 = vld [vmem:[#allocation17 + $0xe8] sm:$0xff]
    %v1070 = vld [vmem:[#allocation17 + $0xf0] sm:$0xff]
    %v1071 = vld [vmem:[#allocation17 + $0xf8] sm:$0xff]
    %v1072 = vld [vmem:[#allocation17 + $0x100] sm:$0xff]
    %v1073 = vld [vmem:[#allocation17 + $0x108] sm:$0xff]
    %v1074 = vld [vmem:[#allocation17 + $0x110] sm:$0xff]
    %v1075 = vld [vmem:[#allocation17 + $0x118] sm:$0xff]
    %v1076 = vld [vmem:[#allocation17 + $0x120] sm:$0xff]
    %v1077 = vld [vmem:[#allocation17 + $0x128] sm:$0xff]
    %v1078 = vld [vmem:[#allocation17 + $0x130] sm:$0xff]
    %v1079 = vld [vmem:[#allocation17 + $0x138] sm:$0xff]
    %v1080 = vld [vmem:[#allocation17 + $0x140] sm:$0xff]
    %v1081 = vld [vmem:[#allocation17 + $0x148] sm:$0xff]
    %v1082 = vld [vmem:[#allocation17 + $0x150] sm:$0xff]
    %v1083 = vld [vmem:[#allocation17 + $0x158] sm:$0xff]
    %v1084 = vld [vmem:[#allocation17 + $0x160] sm:$0xff]
    %v1085 = vld [vmem:[#allocation17 + $0x168] sm:$0xff]
    %v1086 = vld [vmem:[#allocation17 + $0x170] sm:$0xff]
    %v1087 = vld [vmem:[#allocation17 + $0x178] sm:$0xff]
    %v1088 = vld [vmem:[#allocation17 + $0x180] sm:$0xff]
    %v1089 = vld [vmem:[#allocation17 + $0x188] sm:$0xff]
    %v1090 = vld [vmem:[#allocation17 + $0x190] sm:$0xff]
    %v1091 = vld [vmem:[#allocation17 + $0x198] sm:$0xff]
    %v1092 = vld [vmem:[#allocation17 + $0x1a0] sm:$0xff]
    %v1093 = vld [vmem:[#allocation17 + $0x1a8] sm:$0xff]
    %v1094 = vld [vmem:[#allocation17 + $0x1b0] sm:$0xff]
    %v1095 = vld [vmem:[#allocation17 + $0x1b8] sm:$0xff]
    %v1096 = vld [vmem:[#allocation17 + $0x1c0] sm:$0xff]
    %v1097 = vld [vmem:[#allocation17 + $0x1c8] sm:$0xff]
    %v1098 = vld [vmem:[#allocation17 + $0x1d0] sm:$0xff]
    %v1099 = vld [vmem:[#allocation17 + $0x1d8] sm:$0xff]
    %v1100 = vld [vmem:[#allocation17 + $0x1e0] sm:$0xff]
    %v1101 = vld [vmem:[#allocation17 + $0x1e8] sm:$0xff]
    %v1102 = vld [vmem:[#allocation17 + $0x1f0] sm:$0xff]
    %v1103 = vld [vmem:[#allocation17 + $0x1f8] sm:$0xff]
    %v1104 = vld [vmem:[#allocation20] sm:$0xff]
    %v1105 = vld [vmem:[#allocation22] sm:$0xff]
    %v1106 = vlaneseq
    %v1107 = vand.u32 %v1106, 127
    %vm1108 = vcmp.ge.s32.totalorder %v1107, 64
    %v1109 = vld [vmem:[#allocation2] sm:$0xff]
    %v1110 = vld [vmem:[#allocation2 + $0x8] sm:$0xff]
    %v1111 = vld [vmem:[#allocation2 + $0x10] sm:$0xff]
    %v1112 = vld [vmem:[#allocation2 + $0x18] sm:$0xff]
    %1113 = vmatprep.subr.mxu0 %v1101
    %1114 = vmatpush1.msra.mxu0 %v1100
    %1115 = vmatprep.subr.mxu0 %v1097
    %1116 = vmatpush1.msra.mxu0 %v1096
    %1117 = vmatprep.subr.mxu0 %v1093
    %1118 = vmatpush1.msra.mxu0 %v1092
    %1119 = vmatprep.subr.mxu0 %v1089
    %1120 = vmatpush1.msra.mxu0 %v1088
    %1121 = vmatprep.subr.mxu0 %v1085
    %1122 = vmatpush1.msra.mxu0 %v1084
    %1123 = vmatprep.subr.mxu0 %v1081
    %1124 = vmatpush1.msra.mxu0 %v1080
    %1125 = vmatprep.subr.mxu0 %v1077
    %1126 = vmatpush1.msra.mxu0 %v1076
    %1127 = vmatprep.subr.mxu0 %v1073
    %1128 = vmatpush1.msra.mxu0 %v1072
    %1129 = vmatprep.subr.mxu0 %v1069
    %1130 = vmatpush1.msra.mxu0 %v1068
    %1131 = vmatprep.subr.mxu0 %v1065
    %1132 = vmatpush1.msra.mxu0 %v1064
    %1133 = vmatprep.subr.mxu0 %v1061
    %1134 = vmatpush1.msra.mxu0 %v1060
    %1135 = vmatprep.subr.mxu0 %v1057
    %1136 = vmatpush1.msra.mxu0 %v1056
    %1137 = vmatprep.subr.mxu0 %v1053
    %1138 = vmatpush1.msra.mxu0 %v1052
    %1139 = vmatprep.subr.mxu0 %v1049
    %1140 = vmatpush1.msra.mxu0 %v1048
    %1141 = vmatprep.subr.mxu0 %v1045
    %1142 = vmatpush1.msra.mxu0 %v1044
    %1143 = vmatprep.subr.mxu0 %v1041
    %1144 = vmatpush1.msra.mxu0 %v1040
    %1145 = vmatprep.subr.mxu0 0.0
    %1146 = vmatpush2.msra.mxu0 0.0
    %1147 = vmatprep.subr.mxu0 0.0
    %1148 = vmatpush2.msra.mxu0 0.0
    %1149 = vmatprep.subr.mxu0 0.0
    %1150 = vmatpush2.msra.mxu0 0.0
    %1151 = vmatprep.subr.mxu0 0.0
    %1152 = vmatpush2.msra.mxu0 0.0
    %1153 = vmatprep.subr.mxu0 0.0
    %1154 = vmatpush2.msra.mxu0 0.0
    %1155 = vmatprep.subr.mxu0 0.0
    %1156 = vmatpush2.msra.mxu0 0.0
    %1157 = vmatprep.subr.mxu0 0.0
    %1158 = vmatpush2.msra.mxu0 0.0
    %1159 = vmatprep.subr.mxu0 0.0
    %1160 = vmatpush2.msra.mxu0 0.0
    %1161 = vmatprep.subr.mxu0 0.0
    %1162 = vmatpush2.msra.mxu0 0.0
    %1163 = vmatprep.subr.mxu0 0.0
    %1164 = vmatpush2.msra.mxu0 0.0
    %1165 = vmatprep.subr.mxu0 0.0
    %1166 = vmatpush2.msra.mxu0 0.0
    %1167 = vmatprep.subr.mxu0 0.0
    %1168 = vmatpush2.msra.mxu0 0.0
    %1169 = vmatprep.subr.mxu0 0.0
    %1170 = vmatpush2.msra.mxu0 0.0
    %1171 = vmatprep.subr.mxu0 0.0
    %1172 = vmatpush2.msra.mxu0 0.0
    %1173 = vmatprep.subr.mxu0 0.0
    %1174 = vmatpush2.msra.mxu0 0.0
    %1175 = vmatprep.subr.mxu0 0.0
    %1176 = vmatpush2.msra.mxu0 0.0
    %1177 = vmatprep.mubr.f32.mxu0 0.0
    %1178 = vmatmul.mubr.f32.gmra.mxu0 %v1104
    %v1179 = vpop.f32.mrf.mxu0
    %v1180 = vadd.f32 0.0, %v1179
    %v1181 = vpop.f32.mrf.mxu0
    %v1182 = vadd.f32 0.0, %v1181
    %1183 = vdwg.mxu0
    %1184 = vmatprep.subr.mxu0 %v1103
    %1185 = vmatpush1.msra.mxu0 %v1102
    %1186 = vmatprep.subr.mxu0 %v1099
    %1187 = vmatpush1.msra.mxu0 %v1098
    %1188 = vmatprep.subr.mxu0 %v1095
    %1189 = vmatpush1.msra.mxu0 %v1094
    %1190 = vmatprep.subr.mxu0 %v1091
    %1191 = vmatpush1.msra.mxu0 %v1090
    %1192 = vmatprep.subr.mxu0 %v1087
    %1193 = vmatpush1.msra.mxu0 %v1086
    %1194 = vmatprep.subr.mxu0 %v1083
    %1195 = vmatpush1.msra.mxu0 %v1082
    %1196 = vmatprep.subr.mxu0 %v1079
    %1197 = vmatpush1.msra.mxu0 %v1078
    %1198 = vmatprep.subr.mxu0 %v1075
    %1199 = vmatpush1.msra.mxu0 %v1074
    %1200 = vmatprep.subr.mxu0 %v1071
    %1201 = vmatpush1.msra.mxu0 %v1070
    %1202 = vmatprep.subr.mxu0 %v1067
    %1203 = vmatpush1.msra.mxu0 %v1066
    %1204 = vmatprep.subr.mxu0 %v1063
    %1205 = vmatpush1.msra.mxu0 %v1062
    %1206 = vmatprep.subr.mxu0 %v1059
    %1207 = vmatpush1.msra.mxu0 %v1058
    %1208 = vmatprep.subr.mxu0 %v1055
    %1209 = vmatpush1.msra.mxu0 %v1054
    %1210 = vmatprep.subr.mxu0 %v1051
    %1211 = vmatpush1.msra.mxu0 %v1050
    %1212 = vmatprep.subr.mxu0 %v1047
    %1213 = vmatpush1.msra.mxu0 %v1046
    %1214 = vmatprep.subr.mxu0 %v1043
    %1215 = vmatpush1.msra.mxu0 %v1042
    %1216 = vmatprep.subr.mxu0 0.0
    %1217 = vmatpush2.msra.mxu0 0.0
    %1218 = vmatprep.subr.mxu0 0.0
    %1219 = vmatpush2.msra.mxu0 0.0
    %1220 = vmatprep.subr.mxu0 0.0
    %1221 = vmatpush2.msra.mxu0 0.0
    %1222 = vmatprep.subr.mxu0 0.0
    %1223 = vmatpush2.msra.mxu0 0.0
    %1224 = vmatprep.subr.mxu0 0.0
    %1225 = vmatpush2.msra.mxu0 0.0
    %1226 = vmatprep.subr.mxu0 0.0
    %1227 = vmatpush2.msra.mxu0 0.0
    %1228 = vmatprep.subr.mxu0 0.0
    %1229 = vmatpush2.msra.mxu0 0.0
    %1230 = vmatprep.subr.mxu0 0.0
    %1231 = vmatpush2.msra.mxu0 0.0
    %1232 = vmatprep.subr.mxu0 0.0
    %1233 = vmatpush2.msra.mxu0 0.0
    %1234 = vmatprep.subr.mxu0 0.0
    %1235 = vmatpush2.msra.mxu0 0.0
    %1236 = vmatprep.subr.mxu0 0.0
    %1237 = vmatpush2.msra.mxu0 0.0
    %1238 = vmatprep.subr.mxu0 0.0
    %1239 = vmatpush2.msra.mxu0 0.0
    %1240 = vmatprep.subr.mxu0 0.0
    %1241 = vmatpush2.msra.mxu0 0.0
    %1242 = vmatprep.subr.mxu0 0.0
    %1243 = vmatpush2.msra.mxu0 0.0
    %1244 = vmatprep.subr.mxu0 0.0
    %1245 = vmatpush2.msra.mxu0 0.0
    %1246 = vmatprep.subr.mxu0 0.0
    %1247 = vmatpush2.msra.mxu0 0.0
    %1248 = vmatprep.mubr.f32.mxu0 0.0
    %1249 = vmatmul.mubr.f32.gmra.mxu0 %v1104
    %v1250 = vpop.f32.mrf.mxu0
    %v1251 = vadd.f32 0.0, %v1250
    %v1252 = vpop.f32.mrf.mxu0
    %v1253 = vadd.f32 0.0, %v1252
    %1254 = vdwg.mxu0
    %v1255 = vadd.f32 %v1109, %v1180
    %v1256 = vadd.f32 %v1110, %v1182
    %v1257 = vadd.f32 %v1111, %v1251
    %v1258 = vadd.f32 %v1112, %v1253
    %v1259 = vxor.u32 %v1255, 2147483648
    %v1260 = vxor.u32 %v1256, 2147483648
    %v1261 = vxor.u32 %v1257, 2147483648
    %v1262 = vmul.f32 %v1259, 1.442695
    %v1263 = vpow.pop %v1262
    %v1264 = vmul.f32 %v1260, 1.442695
    %v1265 = vpow.pop %v1264
    %v1266 = vmul.f32 %v1261, 1.442695
    %v1267 = vpow.pop %v1266
    %v1268 = vadd.f32 %v1263, 1.0
    %v1269 = vadd.f32 %v1265, 1.0
    %v1270 = vadd.f32 %v1267, 1.0
    %v1271 = vrcp.pop %v1268
    %v1272 = vmul.f32 1.0, %v1271
    %v1273 = vrcp.pop %v1269
    %v1274 = vmul.f32 1.0, %v1273
    %v1275 = vrcp.pop %v1270
    %v1276 = vmul.f32 1.0, %v1275
    %v1277 = vtanh.pop %v1258
    %v1278 = vmul.f32 %v1274, %v1105
    %v1279 = vmul.f32 %v1272, %v1277
    %v1280 = vadd.f32 %v1278, %v1279
    %v1281 = vtanh.pop %v1280
    %v1282 = vmul.f32 %v1276, %v1281
    %v1283 = vsel %vm1108, %v1104, %v1282
    %v1284 = vsel %vm1108, %v1105, %v1280
    %v1285 = vld [vmem:[#allocation2 + $0x20] sm:$0xff]
    %v1286 = vld [vmem:[#allocation2 + $0x28] sm:$0xff]
    %v1287 = vld [vmem:[#allocation2 + $0x30] sm:$0xff]
    %v1288 = vld [vmem:[#allocation2 + $0x38] sm:$0xff]
    %1289 = vmatprep.subr.mxu0 %v1101
    %1290 = vmatpush1.msra.mxu0 %v1100
    %1291 = vmatprep.subr.mxu0 %v1097
    %1292 = vmatpush1.msra.mxu0 %v1096
    %1293 = vmatprep.subr.mxu0 %v1093
    %1294 = vmatpush1.msra.mxu0 %v1092
    %1295 = vmatprep.subr.mxu0 %v1089
    %1296 = vmatpush1.msra.mxu0 %v1088
    %1297 = vmatprep.subr.mxu0 %v1085
    %1298 = vmatpush1.msra.mxu0 %v1084
    %1299 = vmatprep.subr.mxu0 %v1081
    %1300 = vmatpush1.msra.mxu0 %v1080
    %1301 = vmatprep.subr.mxu0 %v1077
    %1302 = vmatpush1.msra.mxu0 %v1076
    %1303 = vmatprep.subr.mxu0 %v1073
    %1304 = vmatpush1.msra.mxu0 %v1072
    %1305 = vmatprep.subr.mxu0 %v1069
    %1306 = vmatpush1.msra.mxu0 %v1068
    %1307 = vmatprep.subr.mxu0 %v1065
    %1308 = vmatpush1.msra.mxu0 %v1064
    %1309 = vmatprep.subr.mxu0 %v1061
    %1310 = vmatpush1.msra.mxu0 %v1060
    %1311 = vmatprep.subr.mxu0 %v1057
    %1312 = vmatpush1.msra.mxu0 %v1056
    %1313 = vmatprep.subr.mxu0 %v1053
    %1314 = vmatpush1.msra.mxu0 %v1052
    %1315 = vmatprep.subr.mxu0 %v1049
    %1316 = vmatpush1.msra.mxu0 %v1048
    %1317 = vmatprep.subr.mxu0 %v1045
    %1318 = vmatpush1.msra.mxu0 %v1044
    %1319 = vmatprep.subr.mxu0 %v1041
    %1320 = vmatpush1.msra.mxu0 %v1040
    %1321 = vmatprep.subr.mxu0 0.0
    %1322 = vmatpush2.msra.mxu0 0.0
    %1323 = vmatprep.subr.mxu0 0.0
    %1324 = vmatpush2.msra.mxu0 0.0
    %1325 = vmatprep.subr.mxu0 0.0
    %1326 = vmatpush2.msra.mxu0 0.0
    %1327 = vmatprep.subr.mxu0 0.0
    %1328 = vmatpush2.msra.mxu0 0.0
    %1329 = vmatprep.subr.mxu0 0.0
    %1330 = vmatpush2.msra.mxu0 0.0
    %1331 = vmatprep.subr.mxu0 0.0
    %1332 = vmatpush2.msra.mxu0 0.0
    %1333 = vmatprep.subr.mxu0 0.0
    %1334 = vmatpush2.msra.mxu0 0.0
    %1335 = vmatprep.subr.mxu0 0.0
    %1336 = vmatpush2.msra.mxu0 0.0
    %1337 = vmatprep.subr.mxu0 0.0
    %1338 = vmatpush2.msra.mxu0 0.0
    %1339 = vmatprep.subr.mxu0 0.0
    %1340 = vmatpush2.msra.mxu0 0.0
    %1341 = vmatprep.subr.mxu0 0.0
    %1342 = vmatpush2.msra.mxu0 0.0
    %1343 = vmatprep.subr.mxu0 0.0
    %1344 = vmatpush2.msra.mxu0 0.0
    %1345 = vmatprep.subr.mxu0 0.0
    %1346 = vmatpush2.msra.mxu0 0.0
    %1347 = vmatprep.subr.mxu0 0.0
    %1348 = vmatpush2.msra.mxu0 0.0
    %1349 = vmatprep.subr.mxu0 0.0
    %1350 = vmatpush2.msra.mxu0 0.0
    %1351 = vmatprep.subr.mxu0 0.0
    %1352 = vmatpush2.msra.mxu0 0.0
    %1353 = vmatprep.mubr.f32.mxu0 0.0
    %1354 = vmatmul.mubr.f32.gmra.mxu0 %v1283
    %v1355 = vpop.f32.mrf.mxu0
    %v1356 = vadd.f32 0.0, %v1355
    %v1357 = vpop.f32.mrf.mxu0
    %v1358 = vadd.f32 0.0, %v1357
    %1359 = vdwg.mxu0
    %1360 = vmatprep.subr.mxu0 %v1103
    %1361 = vmatpush1.msra.mxu0 %v1102
    %1362 = vmatprep.subr.mxu0 %v1099
    %1363 = vmatpush1.msra.mxu0 %v1098
    %1364 = vmatprep.subr.mxu0 %v1095
    %1365 = vmatpush1.msra.mxu0 %v1094
    %1366 = vmatprep.subr.mxu0 %v1091
    %1367 = vmatpush1.msra.mxu0 %v1090
    %1368 = vmatprep.subr.mxu0 %v1087
    %1369 = vmatpush1.msra.mxu0 %v1086
    %1370 = vmatprep.subr.mxu0 %v1083
    %1371 = vmatpush1.msra.mxu0 %v1082
    %1372 = vmatprep.subr.mxu0 %v1079
    %1373 = vmatpush1.msra.mxu0 %v1078
    %1374 = vmatprep.subr.mxu0 %v1075
    %1375 = vmatpush1.msra.mxu0 %v1074
    %1376 = vmatprep.subr.mxu0 %v1071
    %1377 = vmatpush1.msra.mxu0 %v1070
    %1378 = vmatprep.subr.mxu0 %v1067
    %1379 = vmatpush1.msra.mxu0 %v1066
    %1380 = vmatprep.subr.mxu0 %v1063
    %1381 = vmatpush1.msra.mxu0 %v1062
    %1382 = vmatprep.subr.mxu0 %v1059
    %1383 = vmatpush1.msra.mxu0 %v1058
    %1384 = vmatprep.subr.mxu0 %v1055
    %1385 = vmatpush1.msra.mxu0 %v1054
    %1386 = vmatprep.subr.mxu0 %v1051
    %1387 = vmatpush1.msra.mxu0 %v1050
    %1388 = vmatprep.subr.mxu0 %v1047
    %1389 = vmatpush1.msra.mxu0 %v1046
    %1390 = vmatprep.subr.mxu0 %v1043
    %1391 = vmatpush1.msra.mxu0 %v1042
    %1392 = vmatprep.subr.mxu0 0.0
    %1393 = vmatpush2.msra.mxu0 0.0
    %1394 = vmatprep.subr.mxu0 0.0
    %1395 = vmatpush2.msra.mxu0 0.0
    %1396 = vmatprep.subr.mxu0 0.0
    %1397 = vmatpush2.msra.mxu0 0.0
    %1398 = vmatprep.subr.mxu0 0.0
    %1399 = vmatpush2.msra.mxu0 0.0
    %1400 = vmatprep.subr.mxu0 0.0
    %1401 = vmatpush2.msra.mxu0 0.0
    %1402 = vmatprep.subr.mxu0 0.0
    %1403 = vmatpush2.msra.mxu0 0.0
    %1404 = vmatprep.subr.mxu0 0.0
    %1405 = vmatpush2.msra.mxu0 0.0
    %1406 = vmatprep.subr.mxu0 0.0
    %1407 = vmatpush2.msra.mxu0 0.0
    %1408 = vmatprep.subr.mxu0 0.0
    %1409 = vmatpush2.msra.mxu0 0.0
    %1410 = vmatprep.subr.mxu0 0.0
    %1411 = vmatpush2.msra.mxu0 0.0
    %1412 = vmatprep.subr.mxu0 0.0
    %1413 = vmatpush2.msra.mxu0 0.0
    %1414 = vmatprep.subr.mxu0 0.0
    %1415 = vmatpush2.msra.mxu0 0.0
    %1416 = vmatprep.subr.mxu0 0.0
    %1417 = vmatpush2.msra.mxu0 0.0
    %1418 = vmatprep.subr.mxu0 0.0
    %1419 = vmatpush2.msra.mxu0 0.0
    %1420 = vmatprep.subr.mxu0 0.0
    %1421 = vmatpush2.msra.mxu0 0.0
    %1422 = vmatprep.subr.mxu0 0.0
    %1423 = vmatpush2.msra.mxu0 0.0
    %1424 = vmatprep.mubr.f32.mxu0 0.0
    %1425 = vmatmul.mubr.f32.gmra.mxu0 %v1283
    %v1426 = vpop.f32.mrf.mxu0
    %v1427 = vadd.f32 0.0, %v1426
    %v1428 = vpop.f32.mrf.mxu0
    %v1429 = vadd.f32 0.0, %v1428
    %1430 = vdwg.mxu0
    %v1431 = vadd.f32 %v1285, %v1356
    %v1432 = vadd.f32 %v1286, %v1358
    %v1433 = vadd.f32 %v1287, %v1427
    %v1434 = vadd.f32 %v1288, %v1429
    %v1435 = vxor.u32 %v1431, 2147483648
    %v1436 = vxor.u32 %v1432, 2147483648
    %v1437 = vxor.u32 %v1433, 2147483648
    %v1438 = vmul.f32 %v1435, 1.442695
    %v1439 = vpow.pop %v1438
    %v1440 = vmul.f32 %v1436, 1.442695
    %v1441 = vpow.pop %v1440
    %v1442 = vmul.f32 %v1437, 1.442695
    %v1443 = vpow.pop %v1442
    %v1444 = vadd.f32 %v1439, 1.0
    %v1445 = vadd.f32 %v1441, 1.0
    %v1446 = vadd.f32 %v1443, 1.0
    %v1447 = vrcp.pop %v1444
    %v1448 = vmul.f32 1.0, %v1447
    %v1449 = vrcp.pop %v1445
    %v1450 = vmul.f32 1.0, %v1449
    %v1451 = vrcp.pop %v1446
    %v1452 = vmul.f32 1.0, %v1451
    %v1453 = vtanh.pop %v1434
    %v1454 = vmul.f32 %v1450, %v1284
    %v1455 = vmul.f32 %v1448, %v1453
    %v1456 = vadd.f32 %v1454, %v1455
    %v1457 = vtanh.pop %v1456
    %v1458 = vmul.f32 %v1452, %v1457
    %v1459 = vsel %vm1108, %v1104, %v1458
    %v1460 = vsel %vm1108, %v1105, %v1456
    %v1461 = vld [vmem:[#allocation2 + $0x40] sm:$0xff]
    %v1462 = vld [vmem:[#allocation2 + $0x48] sm:$0xff]
    %v1463 = vld [vmem:[#allocation2 + $0x50] sm:$0xff]
    %v1464 = vld [vmem:[#allocation2 + $0x58] sm:$0xff]
    %1465 = vmatprep.subr.mxu0 %v1101
    %1466 = vmatpush1.msra.mxu0 %v1100
    %1467 = vmatprep.subr.mxu0 %v1097
    %1468 = vmatpush1.msra.mxu0 %v1096
    %1469 = vmatprep.subr.mxu0 %v1093
    %1470 = vmatpush1.msra.mxu0 %v1092
    %1471 = vmatprep.subr.mxu0 %v1089
    %1472 = vmatpush1.msra.mxu0 %v1088
    %1473 = vmatprep.subr.mxu0 %v1085
    %1474 = vmatpush1.msra.mxu0 %v1084
    %1475 = vmatprep.subr.mxu0 %v1081
    %1476 = vmatpush1.msra.mxu0 %v1080
    %1477 = vmatprep.subr.mxu0 %v1077
    %1478 = vmatpush1.msra.mxu0 %v1076
    %1479 = vmatprep.subr.mxu0 %v1073
    %1480 = vmatpush1.msra.mxu0 %v1072
    %1481 = vmatprep.subr.mxu0 %v1069
    %1482 = vmatpush1.msra.mxu0 %v1068
    %1483 = vmatprep.subr.mxu0 %v1065
    %1484 = vmatpush1.msra.mxu0 %v1064
    %1485 = vmatprep.subr.mxu0 %v1061
    %1486 = vmatpush1.msra.mxu0 %v1060
    %1487 = vmatprep.subr.mxu0 %v1057
    %1488 = vmatpush1.msra.mxu0 %v1056
    %1489 = vmatprep.subr.mxu0 %v1053
    %1490 = vmatpush1.msra.mxu0 %v1052
    %1491 = vmatprep.subr.mxu0 %v1049
    %1492 = vmatpush1.msra.mxu0 %v1048
    %1493 = vmatprep.subr.mxu0 %v1045
    %1494 = vmatpush1.msra.mxu0 %v1044
    %1495 = vmatprep.subr.mxu0 %v1041
    %1496 = vmatpush1.msra.mxu0 %v1040
    %1497 = vmatprep.subr.mxu0 0.0
    %1498 = vmatpush2.msra.mxu0 0.0
    %1499 = vmatprep.subr.mxu0 0.0
    %1500 = vmatpush2.msra.mxu0 0.0
    %1501 = vmatprep.subr.mxu0 0.0
    %1502 = vmatpush2.msra.mxu0 0.0
    %1503 = vmatprep.subr.mxu0 0.0
    %1504 = vmatpush2.msra.mxu0 0.0
    %1505 = vmatprep.subr.mxu0 0.0
    %1506 = vmatpush2.msra.mxu0 0.0
    %1507 = vmatprep.subr.mxu0 0.0
    %1508 = vmatpush2.msra.mxu0 0.0
    %1509 = vmatprep.subr.mxu0 0.0
    %1510 = vmatpush2.msra.mxu0 0.0
    %1511 = vmatprep.subr.mxu0 0.0
    %1512 = vmatpush2.msra.mxu0 0.0
    %1513 = vmatprep.subr.mxu0 0.0
    %1514 = vmatpush2.msra.mxu0 0.0
    %1515 = vmatprep.subr.mxu0 0.0
    %1516 = vmatpush2.msra.mxu0 0.0
    %1517 = vmatprep.subr.mxu0 0.0
    %1518 = vmatpush2.msra.mxu0 0.0
    %1519 = vmatprep.subr.mxu0 0.0
    %1520 = vmatpush2.msra.mxu0 0.0
    %1521 = vmatprep.subr.mxu0 0.0
    %1522 = vmatpush2.msra.mxu0 0.0
    %1523 = vmatprep.subr.mxu0 0.0
    %1524 = vmatpush2.msra.mxu0 0.0
    %1525 = vmatprep.subr.mxu0 0.0
    %1526 = vmatpush2.msra.mxu0 0.0
    %1527 = vmatprep.subr.mxu0 0.0
    %1528 = vmatpush2.msra.mxu0 0.0
    %1529 = vmatprep.mubr.f32.mxu0 0.0
    %1530 = vmatmul.mubr.f32.gmra.mxu0 %v1459
    %v1531 = vpop.f32.mrf.mxu0
    %v1532 = vadd.f32 0.0, %v1531
    %v1533 = vpop.f32.mrf.mxu0
    %v1534 = vadd.f32 0.0, %v1533
    %1535 = vdwg.mxu0
    %1536 = vmatprep.subr.mxu0 %v1103
    %1537 = vmatpush1.msra.mxu0 %v1102
    %1538 = vmatprep.subr.mxu0 %v1099
    %1539 = vmatpush1.msra.mxu0 %v1098
    %1540 = vmatprep.subr.mxu0 %v1095
    %1541 = vmatpush1.msra.mxu0 %v1094
    %1542 = vmatprep.subr.mxu0 %v1091
    %1543 = vmatpush1.msra.mxu0 %v1090
    %1544 = vmatprep.subr.mxu0 %v1087
    %1545 = vmatpush1.msra.mxu0 %v1086
    %1546 = vmatprep.subr.mxu0 %v1083
    %1547 = vmatpush1.msra.mxu0 %v1082
    %1548 = vmatprep.subr.mxu0 %v1079
    %1549 = vmatpush1.msra.mxu0 %v1078
    %1550 = vmatprep.subr.mxu0 %v1075
    %1551 = vmatpush1.msra.mxu0 %v1074
    %1552 = vmatprep.subr.mxu0 %v1071
    %1553 = vmatpush1.msra.mxu0 %v1070
    %1554 = vmatprep.subr.mxu0 %v1067
    %1555 = vmatpush1.msra.mxu0 %v1066
    %1556 = vmatprep.subr.mxu0 %v1063
    %1557 = vmatpush1.msra.mxu0 %v1062
    %1558 = vmatprep.subr.mxu0 %v1059
    %1559 = vmatpush1.msra.mxu0 %v1058
    %1560 = vmatprep.subr.mxu0 %v1055
    %1561 = vmatpush1.msra.mxu0 %v1054
    %1562 = vmatprep.subr.mxu0 %v1051
    %1563 = vmatpush1.msra.mxu0 %v1050
    %1564 = vmatprep.subr.mxu0 %v1047
    %1565 = vmatpush1.msra.mxu0 %v1046
    %1566 = vmatprep.subr.mxu0 %v1043
    %1567 = vmatpush1.msra.mxu0 %v1042
    %1568 = vmatprep.subr.mxu0 0.0
    %1569 = vmatpush2.msra.mxu0 0.0
    %1570 = vmatprep.subr.mxu0 0.0
    %1571 = vmatpush2.msra.mxu0 0.0
    %1572 = vmatprep.subr.mxu0 0.0
    %1573 = vmatpush2.msra.mxu0 0.0
    %1574 = vmatprep.subr.mxu0 0.0
    %1575 = vmatpush2.msra.mxu0 0.0
    %1576 = vmatprep.subr.mxu0 0.0
    %1577 = vmatpush2.msra.mxu0 0.0
    %1578 = vmatprep.subr.mxu0 0.0
    %1579 = vmatpush2.msra.mxu0 0.0
    %1580 = vmatprep.subr.mxu0 0.0
    %1581 = vmatpush2.msra.mxu0 0.0
    %1582 = vmatprep.subr.mxu0 0.0
    %1583 = vmatpush2.msra.mxu0 0.0
    %1584 = vmatprep.subr.mxu0 0.0
    %1585 = vmatpush2.msra.mxu0 0.0
    %1586 = vmatprep.subr.mxu0 0.0
    %1587 = vmatpush2.msra.mxu0 0.0
    %1588 = vmatprep.subr.mxu0 0.0
    %1589 = vmatpush2.msra.mxu0 0.0
    %1590 = vmatprep.subr.mxu0 0.0
    %1591 = vmatpush2.msra.mxu0 0.0
    %1592 = vmatprep.subr.mxu0 0.0
    %1593 = vmatpush2.msra.mxu0 0.0
    %1594 = vmatprep.subr.mxu0 0.0
    %1595 = vmatpush2.msra.mxu0 0.0
    %1596 = vmatprep.subr.mxu0 0.0
    %1597 = vmatpush2.msra.mxu0 0.0
    %1598 = vmatprep.subr.mxu0 0.0
    %1599 = vmatpush2.msra.mxu0 0.0
    %1600 = vmatprep.mubr.f32.mxu0 0.0
    %1601 = vmatmul.mubr.f32.gmra.mxu0 %v1459
    %v1602 = vpop.f32.mrf.mxu0
    %v1603 = vadd.f32 0.0, %v1602
    %v1604 = vpop.f32.mrf.mxu0
    %v1605 = vadd.f32 0.0, %v1604
    %1606 = vdwg.mxu0
    %v1607 = vadd.f32 %v1461, %v1532
    %v1608 = vadd.f32 %v1462, %v1534
    %v1609 = vadd.f32 %v1463, %v1603
    %v1610 = vadd.f32 %v1464, %v1605
    %v1611 = vxor.u32 %v1607, 2147483648
    %v1612 = vxor.u32 %v1608, 2147483648
    %v1613 = vxor.u32 %v1609, 2147483648
    %v1614 = vmul.f32 %v1611, 1.442695
    %v1615 = vpow.pop %v1614
    %v1616 = vmul.f32 %v1612, 1.442695
    %v1617 = vpow.pop %v1616
    %v1618 = vmul.f32 %v1613, 1.442695
    %v1619 = vpow.pop %v1618
    %v1620 = vadd.f32 %v1615, 1.0
    %v1621 = vadd.f32 %v1617, 1.0
    %v1622 = vadd.f32 %v1619, 1.0
    %v1623 = vrcp.pop %v1620
    %v1624 = vmul.f32 1.0, %v1623
    %v1625 = vrcp.pop %v1621
    %v1626 = vmul.f32 1.0, %v1625
    %v1627 = vrcp.pop %v1622
    %v1628 = vmul.f32 1.0, %v1627
    %v1629 = vtanh.pop %v1610
    %v1630 = vmul.f32 %v1626, %v1460
    %v1631 = vmul.f32 %v1624, %v1629
    %v1632 = vadd.f32 %v1630, %v1631
    %v1633 = vtanh.pop %v1632
    %v1634 = vmul.f32 %v1628, %v1633
    %v1635 = vsel %vm1108, %v1104, %v1634
    %v1636 = vsel %vm1108, %v1105, %v1632
    %v1637 = vld [vmem:[#allocation2 + $0x60] sm:$0xff]
    %v1638 = vld [vmem:[#allocation2 + $0x68] sm:$0xff]
    %v1639 = vld [vmem:[#allocation2 + $0x70] sm:$0xff]
    %v1640 = vld [vmem:[#allocation2 + $0x78] sm:$0xff]
    %1641 = vmatprep.subr.mxu0 %v1101
    %1642 = vmatpush1.msra.mxu0 %v1100
    %1643 = vmatprep.subr.mxu0 %v1097
    %1644 = vmatpush1.msra.mxu0 %v1096
    %1645 = vmatprep.subr.mxu0 %v1093
    %1646 = vmatpush1.msra.mxu0 %v1092
    %1647 = vmatprep.subr.mxu0 %v1089
    %1648 = vmatpush1.msra.mxu0 %v1088
    %1649 = vmatprep.subr.mxu0 %v1085
    %1650 = vmatpush1.msra.mxu0 %v1084
    %1651 = vmatprep.subr.mxu0 %v1081
    %1652 = vmatpush1.msra.mxu0 %v1080
    %1653 = vmatprep.subr.mxu0 %v1077
    %1654 = vmatpush1.msra.mxu0 %v1076
    %1655 = vmatprep.subr.mxu0 %v1073
    %1656 = vmatpush1.msra.mxu0 %v1072
    %1657 = vmatprep.subr.mxu0 %v1069
    %1658 = vmatpush1.msra.mxu0 %v1068
    %1659 = vmatprep.subr.mxu0 %v1065
    %1660 = vmatpush1.msra.mxu0 %v1064
    %1661 = vmatprep.subr.mxu0 %v1061
    %1662 = vmatpush1.msra.mxu0 %v1060
    %1663 = vmatprep.subr.mxu0 %v1057
    %1664 = vmatpush1.msra.mxu0 %v1056
    %1665 = vmatprep.subr.mxu0 %v1053
    %1666 = vmatpush1.msra.mxu0 %v1052
    %1667 = vmatprep.subr.mxu0 %v1049
    %1668 = vmatpush1.msra.mxu0 %v1048
    %1669 = vmatprep.subr.mxu0 %v1045
    %1670 = vmatpush1.msra.mxu0 %v1044
    %1671 = vmatprep.subr.mxu0 %v1041
    %1672 = vmatpush1.msra.mxu0 %v1040
    %1673 = vmatprep.subr.mxu0 0.0
    %1674 = vmatpush2.msra.mxu0 0.0
    %1675 = vmatprep.subr.mxu0 0.0
    %1676 = vmatpush2.msra.mxu0 0.0
    %1677 = vmatprep.subr.mxu0 0.0
    %1678 = vmatpush2.msra.mxu0 0.0
    %1679 = vmatprep.subr.mxu0 0.0
    %1680 = vmatpush2.msra.mxu0 0.0
    %1681 = vmatprep.subr.mxu0 0.0
    %1682 = vmatpush2.msra.mxu0 0.0
    %1683 = vmatprep.subr.mxu0 0.0
    %1684 = vmatpush2.msra.mxu0 0.0
    %1685 = vmatprep.subr.mxu0 0.0
    %1686 = vmatpush2.msra.mxu0 0.0
    %1687 = vmatprep.subr.mxu0 0.0
    %1688 = vmatpush2.msra.mxu0 0.0
    %1689 = vmatprep.subr.mxu0 0.0
    %1690 = vmatpush2.msra.mxu0 0.0
    %1691 = vmatprep.subr.mxu0 0.0
    %1692 = vmatpush2.msra.mxu0 0.0
    %1693 = vmatprep.subr.mxu0 0.0
    %1694 = vmatpush2.msra.mxu0 0.0
    %1695 = vmatprep.subr.mxu0 0.0
    %1696 = vmatpush2.msra.mxu0 0.0
    %1697 = vmatprep.subr.mxu0 0.0
    %1698 = vmatpush2.msra.mxu0 0.0
    %1699 = vmatprep.subr.mxu0 0.0
    %1700 = vmatpush2.msra.mxu0 0.0
    %1701 = vmatprep.subr.mxu0 0.0
    %1702 = vmatpush2.msra.mxu0 0.0
    %1703 = vmatprep.subr.mxu0 0.0
    %1704 = vmatpush2.msra.mxu0 0.0
    %1705 = vmatprep.mubr.f32.mxu0 0.0
    %1706 = vmatmul.mubr.f32.gmra.mxu0 %v1635
    %v1707 = vpop.f32.mrf.mxu0
    %v1708 = vadd.f32 0.0, %v1707
    %v1709 = vpop.f32.mrf.mxu0
    %v1710 = vadd.f32 0.0, %v1709
    %1711 = vdwg.mxu0
    %1712 = vmatprep.subr.mxu0 %v1103
    %1713 = vmatpush1.msra.mxu0 %v1102
    %1714 = vmatprep.subr.mxu0 %v1099
    %1715 = vmatpush1.msra.mxu0 %v1098
    %1716 = vmatprep.subr.mxu0 %v1095
    %1717 = vmatpush1.msra.mxu0 %v1094
    %1718 = vmatprep.subr.mxu0 %v1091
    %1719 = vmatpush1.msra.mxu0 %v1090
    %1720 = vmatprep.subr.mxu0 %v1087
    %1721 = vmatpush1.msra.mxu0 %v1086
    %1722 = vmatprep.subr.mxu0 %v1083
    %1723 = vmatpush1.msra.mxu0 %v1082
    %1724 = vmatprep.subr.mxu0 %v1079
    %1725 = vmatpush1.msra.mxu0 %v1078
    %1726 = vmatprep.subr.mxu0 %v1075
    %1727 = vmatpush1.msra.mxu0 %v1074
    %1728 = vmatprep.subr.mxu0 %v1071
    %1729 = vmatpush1.msra.mxu0 %v1070
    %1730 = vmatprep.subr.mxu0 %v1067
    %1731 = vmatpush1.msra.mxu0 %v1066
    %1732 = vmatprep.subr.mxu0 %v1063
    %1733 = vmatpush1.msra.mxu0 %v1062
    %1734 = vmatprep.subr.mxu0 %v1059
    %1735 = vmatpush1.msra.mxu0 %v1058
    %1736 = vmatprep.subr.mxu0 %v1055
    %1737 = vmatpush1.msra.mxu0 %v1054
    %1738 = vmatprep.subr.mxu0 %v1051
    %1739 = vmatpush1.msra.mxu0 %v1050
    %1740 = vmatprep.subr.mxu0 %v1047
    %1741 = vmatpush1.msra.mxu0 %v1046
    %1742 = vmatprep.subr.mxu0 %v1043
    %1743 = vmatpush1.msra.mxu0 %v1042
    %1744 = vmatprep.subr.mxu0 0.0
    %1745 = vmatpush2.msra.mxu0 0.0
    %1746 = vmatprep.subr.mxu0 0.0
    %1747 = vmatpush2.msra.mxu0 0.0
    %1748 = vmatprep.subr.mxu0 0.0
    %1749 = vmatpush2.msra.mxu0 0.0
    %1750 = vmatprep.subr.mxu0 0.0
    %1751 = vmatpush2.msra.mxu0 0.0
    %1752 = vmatprep.subr.mxu0 0.0
    %1753 = vmatpush2.msra.mxu0 0.0
    %1754 = vmatprep.subr.mxu0 0.0
    %1755 = vmatpush2.msra.mxu0 0.0
    %1756 = vmatprep.subr.mxu0 0.0
    %1757 = vmatpush2.msra.mxu0 0.0
    %1758 = vmatprep.subr.mxu0 0.0
    %1759 = vmatpush2.msra.mxu0 0.0
    %1760 = vmatprep.subr.mxu0 0.0
    %1761 = vmatpush2.msra.mxu0 0.0
    %1762 = vmatprep.subr.mxu0 0.0
    %1763 = vmatpush2.msra.mxu0 0.0
    %1764 = vmatprep.subr.mxu0 0.0
    %1765 = vmatpush2.msra.mxu0 0.0
    %1766 = vmatprep.subr.mxu0 0.0
    %1767 = vmatpush2.msra.mxu0 0.0
    %1768 = vmatprep.subr.mxu0 0.0
    %1769 = vmatpush2.msra.mxu0 0.0
    %1770 = vmatprep.subr.mxu0 0.0
    %1771 = vmatpush2.msra.mxu0 0.0
    %1772 = vmatprep.subr.mxu0 0.0
    %1773 = vmatpush2.msra.mxu0 0.0
    %1774 = vmatprep.subr.mxu0 0.0
    %1775 = vmatpush2.msra.mxu0 0.0
    %1776 = vmatprep.mubr.f32.mxu0 0.0
    %1777 = vmatmul.mubr.f32.gmra.mxu0 %v1635
    %v1778 = vpop.f32.mrf.mxu0
    %v1779 = vadd.f32 0.0, %v1778
    %v1780 = vpop.f32.mrf.mxu0
    %v1781 = vadd.f32 0.0, %v1780
    %1782 = vdwg.mxu0
    %v1783 = vadd.f32 %v1637, %v1708
    %v1784 = vadd.f32 %v1638, %v1710
    %v1785 = vadd.f32 %v1639, %v1779
    %v1786 = vadd.f32 %v1640, %v1781
    %v1787 = vxor.u32 %v1783, 2147483648
    %v1788 = vxor.u32 %v1784, 2147483648
    %v1789 = vxor.u32 %v1785, 2147483648
    %v1790 = vmul.f32 %v1787, 1.442695
    %v1791 = vpow.pop %v1790
    %v1792 = vmul.f32 %v1788, 1.442695
    %v1793 = vpow.pop %v1792
    %v1794 = vmul.f32 %v1789, 1.442695
    %v1795 = vpow.pop %v1794
    %v1796 = vadd.f32 %v1791, 1.0
    %v1797 = vadd.f32 %v1793, 1.0
    %v1798 = vadd.f32 %v1795, 1.0
    %v1799 = vrcp.pop %v1796
    %v1800 = vmul.f32 1.0, %v1799
    %v1801 = vrcp.pop %v1797
    %v1802 = vmul.f32 1.0, %v1801
    %v1803 = vrcp.pop %v1798
    %v1804 = vmul.f32 1.0, %v1803
    %v1805 = vtanh.pop %v1786
    %v1806 = vmul.f32 %v1802, %v1636
    %v1807 = vmul.f32 %v1800, %v1805
    %v1808 = vadd.f32 %v1806, %v1807
    %v1809 = vtanh.pop %v1808
    %v1810 = vmul.f32 %v1804, %v1809
    %v1811 = vsel %vm1108, %v1104, %v1810
    %v1812 = vsel %vm1108, %v1105, %v1808
    %v1813 = vld [vmem:[#allocation2 + $0x80] sm:$0xff]
    %v1814 = vld [vmem:[#allocation2 + $0x88] sm:$0xff]
    %v1815 = vld [vmem:[#allocation2 + $0x90] sm:$0xff]
    %v1816 = vld [vmem:[#allocation2 + $0x98] sm:$0xff]
    %1817 = vmatprep.subr.mxu0 %v1101
    %1818 = vmatpush1.msra.mxu0 %v1100
    %1819 = vmatprep.subr.mxu0 %v1097
    %1820 = vmatpush1.msra.mxu0 %v1096
    %1821 = vmatprep.subr.mxu0 %v1093
    %1822 = vmatpush1.msra.mxu0 %v1092
    %1823 = vmatprep.subr.mxu0 %v1089
    %1824 = vmatpush1.msra.mxu0 %v1088
    %1825 = vmatprep.subr.mxu0 %v1085
    %1826 = vmatpush1.msra.mxu0 %v1084
    %1827 = vmatprep.subr.mxu0 %v1081
    %1828 = vmatpush1.msra.mxu0 %v1080
    %1829 = vmatprep.subr.mxu0 %v1077
    %1830 = vmatpush1.msra.mxu0 %v1076
    %1831 = vmatprep.subr.mxu0 %v1073
    %1832 = vmatpush1.msra.mxu0 %v1072
    %1833 = vmatprep.subr.mxu0 %v1069
    %1834 = vmatpush1.msra.mxu0 %v1068
    %1835 = vmatprep.subr.mxu0 %v1065
    %1836 = vmatpush1.msra.mxu0 %v1064
    %1837 = vmatprep.subr.mxu0 %v1061
    %1838 = vmatpush1.msra.mxu0 %v1060
    %1839 = vmatprep.subr.mxu0 %v1057
    %1840 = vmatpush1.msra.mxu0 %v1056
    %1841 = vmatprep.subr.mxu0 %v1053
    %1842 = vmatpush1.msra.mxu0 %v1052
    %1843 = vmatprep.subr.mxu0 %v1049
    %1844 = vmatpush1.msra.mxu0 %v1048
    %1845 = vmatprep.subr.mxu0 %v1045
    %1846 = vmatpush1.msra.mxu0 %v1044
    %1847 = vmatprep.subr.mxu0 %v1041
    %1848 = vmatpush1.msra.mxu0 %v1040
    %1849 = vmatprep.subr.mxu0 0.0
    %1850 = vmatpush2.msra.mxu0 0.0
    %1851 = vmatprep.subr.mxu0 0.0
    %1852 = vmatpush2.msra.mxu0 0.0
    %1853 = vmatprep.subr.mxu0 0.0
    %1854 = vmatpush2.msra.mxu0 0.0
    %1855 = vmatprep.subr.mxu0 0.0
    %1856 = vmatpush2.msra.mxu0 0.0
    %1857 = vmatprep.subr.mxu0 0.0
    %1858 = vmatpush2.msra.mxu0 0.0
    %1859 = vmatprep.subr.mxu0 0.0
    %1860 = vmatpush2.msra.mxu0 0.0
    %1861 = vmatprep.subr.mxu0 0.0
    %1862 = vmatpush2.msra.mxu0 0.0
    %1863 = vmatprep.subr.mxu0 0.0
    %1864 = vmatpush2.msra.mxu0 0.0
    %1865 = vmatprep.subr.mxu0 0.0
    %1866 = vmatpush2.msra.mxu0 0.0
    %1867 = vmatprep.subr.mxu0 0.0
    %1868 = vmatpush2.msra.mxu0 0.0
    %1869 = vmatprep.subr.mxu0 0.0
    %1870 = vmatpush2.msra.mxu0 0.0
    %1871 = vmatprep.subr.mxu0 0.0
    %1872 = vmatpush2.msra.mxu0 0.0
    %1873 = vmatprep.subr.mxu0 0.0
    %1874 = vmatpush2.msra.mxu0 0.0
    %1875 = vmatprep.subr.mxu0 0.0
    %1876 = vmatpush2.msra.mxu0 0.0
    %1877 = vmatprep.subr.mxu0 0.0
    %1878 = vmatpush2.msra.mxu0 0.0
    %1879 = vmatprep.subr.mxu0 0.0
    %1880 = vmatpush2.msra.mxu0 0.0
    %1881 = vmatprep.mubr.f32.mxu0 0.0
    %1882 = vmatmul.mubr.f32.gmra.mxu0 %v1811
    %v1883 = vpop.f32.mrf.mxu0
    %v1884 = vadd.f32 0.0, %v1883
    %v1885 = vpop.f32.mrf.mxu0
    %v1886 = vadd.f32 0.0, %v1885
    %1887 = vdwg.mxu0
    %1888 = vmatprep.subr.mxu0 %v1103
    %1889 = vmatpush1.msra.mxu0 %v1102
    %1890 = vmatprep.subr.mxu0 %v1099
    %1891 = vmatpush1.msra.mxu0 %v1098
    %1892 = vmatprep.subr.mxu0 %v1095
    %1893 = vmatpush1.msra.mxu0 %v1094
    %1894 = vmatprep.subr.mxu0 %v1091
    %1895 = vmatpush1.msra.mxu0 %v1090
    %1896 = vmatprep.subr.mxu0 %v1087
    %1897 = vmatpush1.msra.mxu0 %v1086
    %1898 = vmatprep.subr.mxu0 %v1083
    %1899 = vmatpush1.msra.mxu0 %v1082
    %1900 = vmatprep.subr.mxu0 %v1079
    %1901 = vmatpush1.msra.mxu0 %v1078
    %1902 = vmatprep.subr.mxu0 %v1075
    %1903 = vmatpush1.msra.mxu0 %v1074
    %1904 = vmatprep.subr.mxu0 %v1071
    %1905 = vmatpush1.msra.mxu0 %v1070
    %1906 = vmatprep.subr.mxu0 %v1067
    %1907 = vmatpush1.msra.mxu0 %v1066
    %1908 = vmatprep.subr.mxu0 %v1063
    %1909 = vmatpush1.msra.mxu0 %v1062
    %1910 = vmatprep.subr.mxu0 %v1059
    %1911 = vmatpush1.msra.mxu0 %v1058
    %1912 = vmatprep.subr.mxu0 %v1055
    %1913 = vmatpush1.msra.mxu0 %v1054
    %1914 = vmatprep.subr.mxu0 %v1051
    %1915 = vmatpush1.msra.mxu0 %v1050
    %1916 = vmatprep.subr.mxu0 %v1047
    %1917 = vmatpush1.msra.mxu0 %v1046
    %1918 = vmatprep.subr.mxu0 %v1043
    %1919 = vmatpush1.msra.mxu0 %v1042
    %1920 = vmatprep.subr.mxu0 0.0
    %1921 = vmatpush2.msra.mxu0 0.0
    %1922 = vmatprep.subr.mxu0 0.0
    %1923 = vmatpush2.msra.mxu0 0.0
    %1924 = vmatprep.subr.mxu0 0.0
    %1925 = vmatpush2.msra.mxu0 0.0
    %1926 = vmatprep.subr.mxu0 0.0
    %1927 = vmatpush2.msra.mxu0 0.0
    %1928 = vmatprep.subr.mxu0 0.0
    %1929 = vmatpush2.msra.mxu0 0.0
    %1930 = vmatprep.subr.mxu0 0.0
    %1931 = vmatpush2.msra.mxu0 0.0
    %1932 = vmatprep.subr.mxu0 0.0
    %1933 = vmatpush2.msra.mxu0 0.0
    %1934 = vmatprep.subr.mxu0 0.0
    %1935 = vmatpush2.msra.mxu0 0.0
    %1936 = vmatprep.subr.mxu0 0.0
    %1937 = vmatpush2.msra.mxu0 0.0
    %1938 = vmatprep.subr.mxu0 0.0
    %1939 = vmatpush2.msra.mxu0 0.0
    %1940 = vmatprep.subr.mxu0 0.0
    %1941 = vmatpush2.msra.mxu0 0.0
    %1942 = vmatprep.subr.mxu0 0.0
    %1943 = vmatpush2.msra.mxu0 0.0
    %1944 = vmatprep.subr.mxu0 0.0
    %1945 = vmatpush2.msra.mxu0 0.0
    %1946 = vmatprep.subr.mxu0 0.0
    %1947 = vmatpush2.msra.mxu0 0.0
    %1948 = vmatprep.subr.mxu0 0.0
    %1949 = vmatpush2.msra.mxu0 0.0
    %1950 = vmatprep.subr.mxu0 0.0
    %1951 = vmatpush2.msra.mxu0 0.0
    %1952 = vmatprep.mubr.f32.mxu0 0.0
    %1953 = vmatmul.mubr.f32.gmra.mxu0 %v1811
    %v1954 = vpop.f32.mrf.mxu0
    %v1955 = vadd.f32 0.0, %v1954
    %v1956 = vpop.f32.mrf.mxu0
    %v1957 = vadd.f32 0.0, %v1956
    %1958 = vdwg.mxu0
    %v1959 = vadd.f32 %v1813, %v1884
    %v1960 = vadd.f32 %v1814, %v1886
    %v1961 = vadd.f32 %v1815, %v1955
    %v1962 = vadd.f32 %v1816, %v1957
    %v1963 = vxor.u32 %v1959, 2147483648
    %v1964 = vxor.u32 %v1960, 2147483648
    %v1965 = vxor.u32 %v1961, 2147483648
    %v1966 = vmul.f32 %v1963, 1.442695
    %v1967 = vpow.pop %v1966
    %v1968 = vmul.f32 %v1964, 1.442695
    %v1969 = vpow.pop %v1968
    %v1970 = vmul.f32 %v1965, 1.442695
    %v1971 = vpow.pop %v1970
    %v1972 = vadd.f32 %v1967, 1.0
    %v1973 = vadd.f32 %v1969, 1.0
    %v1974 = vadd.f32 %v1971, 1.0
    %v1975 = vrcp.pop %v1972
    %v1976 = vmul.f32 1.0, %v1975
    %v1977 = vrcp.pop %v1973
    %v1978 = vmul.f32 1.0, %v1977
    %v1979 = vrcp.pop %v1974
    %v1980 = vmul.f32 1.0, %v1979
    %v1981 = vtanh.pop %v1962
    %v1982 = vmul.f32 %v1978, %v1812
    %v1983 = vmul.f32 %v1976, %v1981
    %v1984 = vadd.f32 %v1982, %v1983
    %v1985 = vtanh.pop %v1984
    %v1986 = vmul.f32 %v1980, %v1985
    %v1987 = vsel %vm1108, %v1104, %v1986
    %v1988 = vsel %vm1108, %v1105, %v1984
    %v1989 = vld [vmem:[#allocation2 + $0xa0] sm:$0xff]
    %v1990 = vld [vmem:[#allocation2 + $0xa8] sm:$0xff]
    %v1991 = vld [vmem:[#allocation2 + $0xb0] sm:$0xff]
    %v1992 = vld [vmem:[#allocation2 + $0xb8] sm:$0xff]
    %1993 = vmatprep.subr.mxu0 %v1101
    %1994 = vmatpush1.msra.mxu0 %v1100
    %1995 = vmatprep.subr.mxu0 %v1097
    %1996 = vmatpush1.msra.mxu0 %v1096
    %1997 = vmatprep.subr.mxu0 %v1093
    %1998 = vmatpush1.msra.mxu0 %v1092
    %1999 = vmatprep.subr.mxu0 %v1089
    %2000 = vmatpush1.msra.mxu0 %v1088
    %2001 = vmatprep.subr.mxu0 %v1085
    %2002 = vmatpush1.msra.mxu0 %v1084
    %2003 = vmatprep.subr.mxu0 %v1081
    %2004 = vmatpush1.msra.mxu0 %v1080
    %2005 = vmatprep.subr.mxu0 %v1077
    %2006 = vmatpush1.msra.mxu0 %v1076
    %2007 = vmatprep.subr.mxu0 %v1073
    %2008 = vmatpush1.msra.mxu0 %v1072
    %2009 = vmatprep.subr.mxu0 %v1069
    %2010 = vmatpush1.msra.mxu0 %v1068
    %2011 = vmatprep.subr.mxu0 %v1065
    %2012 = vmatpush1.msra.mxu0 %v1064
    %2013 = vmatprep.subr.mxu0 %v1061
    %2014 = vmatpush1.msra.mxu0 %v1060
    %2015 = vmatprep.subr.mxu0 %v1057
    %2016 = vmatpush1.msra.mxu0 %v1056
    %2017 = vmatprep.subr.mxu0 %v1053
    %2018 = vmatpush1.msra.mxu0 %v1052
    %2019 = vmatprep.subr.mxu0 %v1049
    %2020 = vmatpush1.msra.mxu0 %v1048
    %2021 = vmatprep.subr.mxu0 %v1045
    %2022 = vmatpush1.msra.mxu0 %v1044
    %2023 = vmatprep.subr.mxu0 %v1041
    %2024 = vmatpush1.msra.mxu0 %v1040
    %2025 = vmatprep.subr.mxu0 0.0
    %2026 = vmatpush2.msra.mxu0 0.0
    %2027 = vmatprep.subr.mxu0 0.0
    %2028 = vmatpush2.msra.mxu0 0.0
    %2029 = vmatprep.subr.mxu0 0.0
    %2030 = vmatpush2.msra.mxu0 0.0
    %2031 = vmatprep.subr.mxu0 0.0
    %2032 = vmatpush2.msra.mxu0 0.0
    %2033 = vmatprep.subr.mxu0 0.0
    %2034 = vmatpush2.msra.mxu0 0.0
    %2035 = vmatprep.subr.mxu0 0.0
    %2036 = vmatpush2.msra.mxu0 0.0
    %2037 = vmatprep.subr.mxu0 0.0
    %2038 = vmatpush2.msra.mxu0 0.0
    %2039 = vmatprep.subr.mxu0 0.0
    %2040 = vmatpush2.msra.mxu0 0.0
    %2041 = vmatprep.subr.mxu0 0.0
    %2042 = vmatpush2.msra.mxu0 0.0
    %2043 = vmatprep.subr.mxu0 0.0
    %2044 = vmatpush2.msra.mxu0 0.0
    %2045 = vmatprep.subr.mxu0 0.0
    %2046 = vmatpush2.msra.mxu0 0.0
    %2047 = vmatprep.subr.mxu0 0.0
    %2048 = vmatpush2.msra.mxu0 0.0
    %2049 = vmatprep.subr.mxu0 0.0
    %2050 = vmatpush2.msra.mxu0 0.0
    %2051 = vmatprep.subr.mxu0 0.0
    %2052 = vmatpush2.msra.mxu0 0.0
    %2053 = vmatprep.subr.mxu0 0.0
    %2054 = vmatpush2.msra.mxu0 0.0
    %2055 = vmatprep.subr.mxu0 0.0
    %2056 = vmatpush2.msra.mxu0 0.0
    %2057 = vmatprep.mubr.f32.mxu0 0.0
    %2058 = vmatmul.mubr.f32.gmra.mxu0 %v1987
    %v2059 = vpop.f32.mrf.mxu0
    %v2060 = vadd.f32 0.0, %v2059
    %v2061 = vpop.f32.mrf.mxu0
    %v2062 = vadd.f32 0.0, %v2061
    %2063 = vdwg.mxu0
    %2064 = vmatprep.subr.mxu0 %v1103
    %2065 = vmatpush1.msra.mxu0 %v1102
    %2066 = vmatprep.subr.mxu0 %v1099
    %2067 = vmatpush1.msra.mxu0 %v1098
    %2068 = vmatprep.subr.mxu0 %v1095
    %2069 = vmatpush1.msra.mxu0 %v1094
    %2070 = vmatprep.subr.mxu0 %v1091
    %2071 = vmatpush1.msra.mxu0 %v1090
    %2072 = vmatprep.subr.mxu0 %v1087
    %2073 = vmatpush1.msra.mxu0 %v1086
    %2074 = vmatprep.subr.mxu0 %v1083
    %2075 = vmatpush1.msra.mxu0 %v1082
    %2076 = vmatprep.subr.mxu0 %v1079
    %2077 = vmatpush1.msra.mxu0 %v1078
    %2078 = vmatprep.subr.mxu0 %v1075
    %2079 = vmatpush1.msra.mxu0 %v1074
    %2080 = vmatprep.subr.mxu0 %v1071
    %2081 = vmatpush1.msra.mxu0 %v1070
    %2082 = vmatprep.subr.mxu0 %v1067
    %2083 = vmatpush1.msra.mxu0 %v1066
    %2084 = vmatprep.subr.mxu0 %v1063
    %2085 = vmatpush1.msra.mxu0 %v1062
    %2086 = vmatprep.subr.mxu0 %v1059
    %2087 = vmatpush1.msra.mxu0 %v1058
    %2088 = vmatprep.subr.mxu0 %v1055
    %2089 = vmatpush1.msra.mxu0 %v1054
    %2090 = vmatprep.subr.mxu0 %v1051
    %2091 = vmatpush1.msra.mxu0 %v1050
    %2092 = vmatprep.subr.mxu0 %v1047
    %2093 = vmatpush1.msra.mxu0 %v1046
    %2094 = vmatprep.subr.mxu0 %v1043
    %2095 = vmatpush1.msra.mxu0 %v1042
    %2096 = vmatprep.subr.mxu0 0.0
    %2097 = vmatpush2.msra.mxu0 0.0
    %2098 = vmatprep.subr.mxu0 0.0
    %2099 = vmatpush2.msra.mxu0 0.0
    %2100 = vmatprep.subr.mxu0 0.0
    %2101 = vmatpush2.msra.mxu0 0.0
    %2102 = vmatprep.subr.mxu0 0.0
    %2103 = vmatpush2.msra.mxu0 0.0
    %2104 = vmatprep.subr.mxu0 0.0
    %2105 = vmatpush2.msra.mxu0 0.0
    %2106 = vmatprep.subr.mxu0 0.0
    %2107 = vmatpush2.msra.mxu0 0.0
    %2108 = vmatprep.subr.mxu0 0.0
    %2109 = vmatpush2.msra.mxu0 0.0
    %2110 = vmatprep.subr.mxu0 0.0
    %2111 = vmatpush2.msra.mxu0 0.0
    %2112 = vmatprep.subr.mxu0 0.0
    %2113 = vmatpush2.msra.mxu0 0.0
    %2114 = vmatprep.subr.mxu0 0.0
    %2115 = vmatpush2.msra.mxu0 0.0
    %2116 = vmatprep.subr.mxu0 0.0
    %2117 = vmatpush2.msra.mxu0 0.0
    %2118 = vmatprep.subr.mxu0 0.0
    %2119 = vmatpush2.msra.mxu0 0.0
    %2120 = vmatprep.subr.mxu0 0.0
    %2121 = vmatpush2.msra.mxu0 0.0
    %2122 = vmatprep.subr.mxu0 0.0
    %2123 = vmatpush2.msra.mxu0 0.0
    %2124 = vmatprep.subr.mxu0 0.0
    %2125 = vmatpush2.msra.mxu0 0.0
    %2126 = vmatprep.subr.mxu0 0.0
    %2127 = vmatpush2.msra.mxu0 0.0
    %2128 = vmatprep.mubr.f32.mxu0 0.0
    %2129 = vmatmul.mubr.f32.gmra.mxu0 %v1987
    %v2130 = vpop.f32.mrf.mxu0
    %v2131 = vadd.f32 0.0, %v2130
    %v2132 = vpop.f32.mrf.mxu0
    %v2133 = vadd.f32 0.0, %v2132
    %2134 = vdwg.mxu0
    %v2135 = vadd.f32 %v1989, %v2060
    %v2136 = vadd.f32 %v1990, %v2062
    %v2137 = vadd.f32 %v1991, %v2131
    %v2138 = vadd.f32 %v1992, %v2133
    %v2139 = vxor.u32 %v2135, 2147483648
    %v2140 = vxor.u32 %v2136, 2147483648
    %v2141 = vxor.u32 %v2137, 2147483648
    %v2142 = vmul.f32 %v2139, 1.442695
    %v2143 = vpow.pop %v2142
    %v2144 = vmul.f32 %v2140, 1.442695
    %v2145 = vpow.pop %v2144
    %v2146 = vmul.f32 %v2141, 1.442695
    %v2147 = vpow.pop %v2146
    %v2148 = vadd.f32 %v2143, 1.0
    %v2149 = vadd.f32 %v2145, 1.0
    %v2150 = vadd.f32 %v2147, 1.0
    %v2151 = vrcp.pop %v2148
    %v2152 = vmul.f32 1.0, %v2151
    %v2153 = vrcp.pop %v2149
    %v2154 = vmul.f32 1.0, %v2153
    %v2155 = vrcp.pop %v2150
    %v2156 = vmul.f32 1.0, %v2155
    %v2157 = vtanh.pop %v2138
    %v2158 = vmul.f32 %v2154, %v1988
    %v2159 = vmul.f32 %v2152, %v2157
    %v2160 = vadd.f32 %v2158, %v2159
    %v2161 = vtanh.pop %v2160
    %v2162 = vmul.f32 %v2156, %v2161
    %v2163 = vsel %vm1108, %v1104, %v2162
    %v2164 = vsel %vm1108, %v1105, %v2160
    %v2165 = vld [vmem:[#allocation2 + $0xc0] sm:$0xff]
    %v2166 = vld [vmem:[#allocation2 + $0xc8] sm:$0xff]
    %v2167 = vld [vmem:[#allocation2 + $0xd0] sm:$0xff]
    %v2168 = vld [vmem:[#allocation2 + $0xd8] sm:$0xff]
    %2169 = vmatprep.subr.mxu0 %v1101
    %2170 = vmatpush1.msra.mxu0 %v1100
    %2171 = vmatprep.subr.mxu0 %v1097
    %2172 = vmatpush1.msra.mxu0 %v1096
    %2173 = vmatprep.subr.mxu0 %v1093
    %2174 = vmatpush1.msra.mxu0 %v1092
    %2175 = vmatprep.subr.mxu0 %v1089
    %2176 = vmatpush1.msra.mxu0 %v1088
    %2177 = vmatprep.subr.mxu0 %v1085
    %2178 = vmatpush1.msra.mxu0 %v1084
    %2179 = vmatprep.subr.mxu0 %v1081
    %2180 = vmatpush1.msra.mxu0 %v1080
    %2181 = vmatprep.subr.mxu0 %v1077
    %2182 = vmatpush1.msra.mxu0 %v1076
    %2183 = vmatprep.subr.mxu0 %v1073
    %2184 = vmatpush1.msra.mxu0 %v1072
    %2185 = vmatprep.subr.mxu0 %v1069
    %2186 = vmatpush1.msra.mxu0 %v1068
    %2187 = vmatprep.subr.mxu0 %v1065
    %2188 = vmatpush1.msra.mxu0 %v1064
    %2189 = vmatprep.subr.mxu0 %v1061
    %2190 = vmatpush1.msra.mxu0 %v1060
    %2191 = vmatprep.subr.mxu0 %v1057
    %2192 = vmatpush1.msra.mxu0 %v1056
    %2193 = vmatprep.subr.mxu0 %v1053
    %2194 = vmatpush1.msra.mxu0 %v1052
    %2195 = vmatprep.subr.mxu0 %v1049
    %2196 = vmatpush1.msra.mxu0 %v1048
    %2197 = vmatprep.subr.mxu0 %v1045
    %2198 = vmatpush1.msra.mxu0 %v1044
    %2199 = vmatprep.subr.mxu0 %v1041
    %2200 = vmatpush1.msra.mxu0 %v1040
    %2201 = vmatprep.subr.mxu0 0.0
    %2202 = vmatpush2.msra.mxu0 0.0
    %2203 = vmatprep.subr.mxu0 0.0
    %2204 = vmatpush2.msra.mxu0 0.0
    %2205 = vmatprep.subr.mxu0 0.0
    %2206 = vmatpush2.msra.mxu0 0.0
    %2207 = vmatprep.subr.mxu0 0.0
    %2208 = vmatpush2.msra.mxu0 0.0
    %2209 = vmatprep.subr.mxu0 0.0
    %2210 = vmatpush2.msra.mxu0 0.0
    %2211 = vmatprep.subr.mxu0 0.0
    %2212 = vmatpush2.msra.mxu0 0.0
    %2213 = vmatprep.subr.mxu0 0.0
    %2214 = vmatpush2.msra.mxu0 0.0
    %2215 = vmatprep.subr.mxu0 0.0
    %2216 = vmatpush2.msra.mxu0 0.0
    %2217 = vmatprep.subr.mxu0 0.0
    %2218 = vmatpush2.msra.mxu0 0.0
    %2219 = vmatprep.subr.mxu0 0.0
    %2220 = vmatpush2.msra.mxu0 0.0
    %2221 = vmatprep.subr.mxu0 0.0
    %2222 = vmatpush2.msra.mxu0 0.0
    %2223 = vmatprep.subr.mxu0 0.0
    %2224 = vmatpush2.msra.mxu0 0.0
    %2225 = vmatprep.subr.mxu0 0.0
    %2226 = vmatpush2.msra.mxu0 0.0
    %2227 = vmatprep.subr.mxu0 0.0
    %2228 = vmatpush2.msra.mxu0 0.0
    %2229 = vmatprep.subr.mxu0 0.0
    %2230 = vmatpush2.msra.mxu0 0.0
    %2231 = vmatprep.subr.mxu0 0.0
    %2232 = vmatpush2.msra.mxu0 0.0
    %2233 = vmatprep.mubr.f32.mxu0 0.0
    %2234 = vmatmul.mubr.f32.gmra.mxu0 %v2163
    %v2235 = vpop.f32.mrf.mxu0
    %v2236 = vadd.f32 0.0, %v2235
    %v2237 = vpop.f32.mrf.mxu0
    %v2238 = vadd.f32 0.0, %v2237
    %2239 = vdwg.mxu0
    %2240 = vmatprep.subr.mxu0 %v1103
    %2241 = vmatpush1.msra.mxu0 %v1102
    %2242 = vmatprep.subr.mxu0 %v1099
    %2243 = vmatpush1.msra.mxu0 %v1098
    %2244 = vmatprep.subr.mxu0 %v1095
    %2245 = vmatpush1.msra.mxu0 %v1094
    %2246 = vmatprep.subr.mxu0 %v1091
    %2247 = vmatpush1.msra.mxu0 %v1090
    %2248 = vmatprep.subr.mxu0 %v1087
    %2249 = vmatpush1.msra.mxu0 %v1086
    %2250 = vmatprep.subr.mxu0 %v1083
    %2251 = vmatpush1.msra.mxu0 %v1082
    %2252 = vmatprep.subr.mxu0 %v1079
    %2253 = vmatpush1.msra.mxu0 %v1078
    %2254 = vmatprep.subr.mxu0 %v1075
    %2255 = vmatpush1.msra.mxu0 %v1074
    %2256 = vmatprep.subr.mxu0 %v1071
    %2257 = vmatpush1.msra.mxu0 %v1070
    %2258 = vmatprep.subr.mxu0 %v1067
    %2259 = vmatpush1.msra.mxu0 %v1066
    %2260 = vmatprep.subr.mxu0 %v1063
    %2261 = vmatpush1.msra.mxu0 %v1062
    %2262 = vmatprep.subr.mxu0 %v1059
    %2263 = vmatpush1.msra.mxu0 %v1058
    %2264 = vmatprep.subr.mxu0 %v1055
    %2265 = vmatpush1.msra.mxu0 %v1054
    %2266 = vmatprep.subr.mxu0 %v1051
    %2267 = vmatpush1.msra.mxu0 %v1050
    %2268 = vmatprep.subr.mxu0 %v1047
    %2269 = vmatpush1.msra.mxu0 %v1046
    %2270 = vmatprep.subr.mxu0 %v1043
    %2271 = vmatpush1.msra.mxu0 %v1042
    %2272 = vmatprep.subr.mxu0 0.0
    %2273 = vmatpush2.msra.mxu0 0.0
    %2274 = vmatprep.subr.mxu0 0.0
    %2275 = vmatpush2.msra.mxu0 0.0
    %2276 = vmatprep.subr.mxu0 0.0
    %2277 = vmatpush2.msra.mxu0 0.0
    %2278 = vmatprep.subr.mxu0 0.0
    %2279 = vmatpush2.msra.mxu0 0.0
    %2280 = vmatprep.subr.mxu0 0.0
    %2281 = vmatpush2.msra.mxu0 0.0
    %2282 = vmatprep.subr.mxu0 0.0
    %2283 = vmatpush2.msra.mxu0 0.0
    %2284 = vmatprep.subr.mxu0 0.0
    %2285 = vmatpush2.msra.mxu0 0.0
    %2286 = vmatprep.subr.mxu0 0.0
    %2287 = vmatpush2.msra.mxu0 0.0
    %2288 = vmatprep.subr.mxu0 0.0
    %2289 = vmatpush2.msra.mxu0 0.0
    %2290 = vmatprep.subr.mxu0 0.0
    %2291 = vmatpush2.msra.mxu0 0.0
    %2292 = vmatprep.subr.mxu0 0.0
    %2293 = vmatpush2.msra.mxu0 0.0
    %2294 = vmatprep.subr.mxu0 0.0
    %2295 = vmatpush2.msra.mxu0 0.0
    %2296 = vmatprep.subr.mxu0 0.0
    %2297 = vmatpush2.msra.mxu0 0.0
    %2298 = vmatprep.subr.mxu0 0.0
    %2299 = vmatpush2.msra.mxu0 0.0
    %2300 = vmatprep.subr.mxu0 0.0
    %2301 = vmatpush2.msra.mxu0 0.0
    %2302 = vmatprep.subr.mxu0 0.0
    %2303 = vmatpush2.msra.mxu0 0.0
    %2304 = vmatprep.mubr.f32.mxu0 0.0
    %2305 = vmatmul.mubr.f32.gmra.mxu0 %v2163
    %v2306 = vpop.f32.mrf.mxu0
    %v2307 = vadd.f32 0.0, %v2306
    %v2308 = vpop.f32.mrf.mxu0
    %v2309 = vadd.f32 0.0, %v2308
    %2310 = vdwg.mxu0
    %v2311 = vadd.f32 %v2165, %v2236
    %v2312 = vadd.f32 %v2166, %v2238
    %v2313 = vadd.f32 %v2167, %v2307
    %v2314 = vadd.f32 %v2168, %v2309
    %v2315 = vxor.u32 %v2311, 2147483648
    %v2316 = vxor.u32 %v2312, 2147483648
    %v2317 = vxor.u32 %v2313, 2147483648
    %v2318 = vmul.f32 %v2315, 1.442695
    %v2319 = vpow.pop %v2318
    %v2320 = vmul.f32 %v2316, 1.442695
    %v2321 = vpow.pop %v2320
    %v2322 = vmul.f32 %v2317, 1.442695
    %v2323 = vpow.pop %v2322
    %v2324 = vadd.f32 %v2319, 1.0
    %v2325 = vadd.f32 %v2321, 1.0
    %v2326 = vadd.f32 %v2323, 1.0
    %v2327 = vrcp.pop %v2324
    %v2328 = vmul.f32 1.0, %v2327
    %v2329 = vrcp.pop %v2325
    %v2330 = vmul.f32 1.0, %v2329
    %v2331 = vrcp.pop %v2326
    %v2332 = vmul.f32 1.0, %v2331
    %v2333 = vtanh.pop %v2314
    %v2334 = vmul.f32 %v2330, %v2164
    %v2335 = vmul.f32 %v2328, %v2333
    %v2336 = vadd.f32 %v2334, %v2335
    %v2337 = vtanh.pop %v2336
    %v2338 = vmul.f32 %v2332, %v2337
    %v2339 = vld [vmem:[#allocation2 + $0xe0] sm:$0xff]
    %v2340 = vld [vmem:[#allocation2 + $0xe8] sm:$0xff]
    %v2341 = vld [vmem:[#allocation2 + $0xf0] sm:$0xff]
    %v2342 = vld [vmem:[#allocation2 + $0xf8] sm:$0xff]
    %2343 = vmatprep.subr.mxu0 %v1101
    %2344 = vmatpush1.msra.mxu0 %v1100
    %2345 = vmatprep.subr.mxu0 %v1097
    %2346 = vmatpush1.msra.mxu0 %v1096
    %2347 = vmatprep.subr.mxu0 %v1093
    %2348 = vmatpush1.msra.mxu0 %v1092
    %2349 = vmatprep.subr.mxu0 %v1089
    %2350 = vmatpush1.msra.mxu0 %v1088
    %2351 = vmatprep.subr.mxu0 %v1085
    %2352 = vmatpush1.msra.mxu0 %v1084
    %2353 = vmatprep.subr.mxu0 %v1081
    %2354 = vmatpush1.msra.mxu0 %v1080
    %2355 = vmatprep.subr.mxu0 %v1077
    %2356 = vmatpush1.msra.mxu0 %v1076
    %2357 = vmatprep.subr.mxu0 %v1073
    %2358 = vmatpush1.msra.mxu0 %v1072
    %2359 = vmatprep.subr.mxu0 %v1069
    %2360 = vmatpush1.msra.mxu0 %v1068
    %2361 = vmatprep.subr.mxu0 %v1065
    %2362 = vmatpush1.msra.mxu0 %v1064
    %2363 = vmatprep.subr.mxu0 %v1061
    %2364 = vmatpush1.msra.mxu0 %v1060
    %2365 = vmatprep.subr.mxu0 %v1057
    %2366 = vmatpush1.msra.mxu0 %v1056
    %2367 = vmatprep.subr.mxu0 %v1053
    %2368 = vmatpush1.msra.mxu0 %v1052
    %2369 = vmatprep.subr.mxu0 %v1049
    %2370 = vmatpush1.msra.mxu0 %v1048
    %2371 = vmatprep.subr.mxu0 %v1045
    %2372 = vmatpush1.msra.mxu0 %v1044
    %2373 = vmatprep.subr.mxu0 %v1041
    %2374 = vmatpush1.msra.mxu0 %v1040
    %2375 = vmatprep.subr.mxu0 0.0
    %2376 = vmatpush2.msra.mxu0 0.0
    %2377 = vmatprep.subr.mxu0 0.0
    %2378 = vmatpush2.msra.mxu0 0.0
    %2379 = vmatprep.subr.mxu0 0.0
    %2380 = vmatpush2.msra.mxu0 0.0
    %2381 = vmatprep.subr.mxu0 0.0
    %2382 = vmatpush2.msra.mxu0 0.0
    %2383 = vmatprep.subr.mxu0 0.0
    %2384 = vmatpush2.msra.mxu0 0.0
    %2385 = vmatprep.subr.mxu0 0.0
    %2386 = vmatpush2.msra.mxu0 0.0
    %2387 = vmatprep.subr.mxu0 0.0
    %2388 = vmatpush2.msra.mxu0 0.0
    %2389 = vmatprep.subr.mxu0 0.0
    %2390 = vmatpush2.msra.mxu0 0.0
    %2391 = vmatprep.subr.mxu0 0.0
    %2392 = vmatpush2.msra.mxu0 0.0
    %2393 = vmatprep.subr.mxu0 0.0
    %2394 = vmatpush2.msra.mxu0 0.0
    %2395 = vmatprep.subr.mxu0 0.0
    %2396 = vmatpush2.msra.mxu0 0.0
    %2397 = vmatprep.subr.mxu0 0.0
    %2398 = vmatpush2.msra.mxu0 0.0
    %2399 = vmatprep.subr.mxu0 0.0
    %2400 = vmatpush2.msra.mxu0 0.0
    %2401 = vmatprep.subr.mxu0 0.0
    %2402 = vmatpush2.msra.mxu0 0.0
    %2403 = vmatprep.subr.mxu0 0.0
    %2404 = vmatpush2.msra.mxu0 0.0
    %2405 = vmatprep.subr.mxu0 0.0
    %2406 = vmatpush2.msra.mxu0 0.0
    %2407 = vmatprep.mubr.f32.mxu0 0.0
    %2408 = vmatmul.mubr.f32.gmra.mxu0 %v2338
    %v2409 = vpop.f32.mrf.mxu0
    %v2410 = vadd.f32 0.0, %v2409
    %v2411 = vpop.f32.mrf.mxu0
    %v2412 = vadd.f32 0.0, %v2411
    %2413 = vdwg.mxu0
    %2414 = vmatprep.subr.mxu0 %v1103
    %2415 = vmatpush1.msra.mxu0 %v1102
    %2416 = vmatprep.subr.mxu0 %v1099
    %2417 = vmatpush1.msra.mxu0 %v1098
    %2418 = vmatprep.subr.mxu0 %v1095
    %2419 = vmatpush1.msra.mxu0 %v1094
    %2420 = vmatprep.subr.mxu0 %v1091
    %2421 = vmatpush1.msra.mxu0 %v1090
    %2422 = vmatprep.subr.mxu0 %v1087
    %2423 = vmatpush1.msra.mxu0 %v1086
    %2424 = vmatprep.subr.mxu0 %v1083
    %2425 = vmatpush1.msra.mxu0 %v1082
    %2426 = vmatprep.subr.mxu0 %v1079
    %2427 = vmatpush1.msra.mxu0 %v1078
    %2428 = vmatprep.subr.mxu0 %v1075
    %2429 = vmatpush1.msra.mxu0 %v1074
    %2430 = vmatprep.subr.mxu0 %v1071
    %2431 = vmatpush1.msra.mxu0 %v1070
    %2432 = vmatprep.subr.mxu0 %v1067
    %2433 = vmatpush1.msra.mxu0 %v1066
    %2434 = vmatprep.subr.mxu0 %v1063
    %2435 = vmatpush1.msra.mxu0 %v1062
    %2436 = vmatprep.subr.mxu0 %v1059
    %2437 = vmatpush1.msra.mxu0 %v1058
    %2438 = vmatprep.subr.mxu0 %v1055
    %2439 = vmatpush1.msra.mxu0 %v1054
    %2440 = vmatprep.subr.mxu0 %v1051
    %2441 = vmatpush1.msra.mxu0 %v1050
    %2442 = vmatprep.subr.mxu0 %v1047
    %2443 = vmatpush1.msra.mxu0 %v1046
    %2444 = vmatprep.subr.mxu0 %v1043
    %2445 = vmatpush1.msra.mxu0 %v1042
    %2446 = vmatprep.subr.mxu0 0.0
    %2447 = vmatpush2.msra.mxu0 0.0
    %2448 = vmatprep.subr.mxu0 0.0
    %2449 = vmatpush2.msra.mxu0 0.0
    %2450 = vmatprep.subr.mxu0 0.0
    %2451 = vmatpush2.msra.mxu0 0.0
    %2452 = vmatprep.subr.mxu0 0.0
    %2453 = vmatpush2.msra.mxu0 0.0
    %2454 = vmatprep.subr.mxu0 0.0
    %2455 = vmatpush2.msra.mxu0 0.0
    %2456 = vmatprep.subr.mxu0 0.0
    %2457 = vmatpush2.msra.mxu0 0.0
    %2458 = vmatprep.subr.mxu0 0.0
    %2459 = vmatpush2.msra.mxu0 0.0
    %2460 = vmatprep.subr.mxu0 0.0
    %2461 = vmatpush2.msra.mxu0 0.0
    %2462 = vmatprep.subr.mxu0 0.0
    %2463 = vmatpush2.msra.mxu0 0.0
    %2464 = vmatprep.subr.mxu0 0.0
    %2465 = vmatpush2.msra.mxu0 0.0
    %2466 = vmatprep.subr.mxu0 0.0
    %2467 = vmatpush2.msra.mxu0 0.0
    %2468 = vmatprep.subr.mxu0 0.0
    %2469 = vmatpush2.msra.mxu0 0.0
    %2470 = vmatprep.subr.mxu0 0.0
    %2471 = vmatpush2.msra.mxu0 0.0
    %2472 = vmatprep.subr.mxu0 0.0
    %2473 = vmatpush2.msra.mxu0 0.0
    %2474 = vmatprep.subr.mxu0 0.0
    %2475 = vmatpush2.msra.mxu0 0.0
    %2476 = vmatprep.subr.mxu0 0.0
    %2477 = vmatpush2.msra.mxu0 0.0
    %2478 = vmatprep.mubr.f32.mxu0 0.0
    %2479 = vmatmul.mubr.f32.gmra.mxu0 %v2338
    %v2480 = vpop.f32.mrf.mxu0
    %v2481 = vadd.f32 0.0, %v2480
    %v2482 = vpop.f32.mrf.mxu0
    %v2483 = vadd.f32 0.0, %v2482
    %2484 = vdwg.mxu0
    %v2485 = vadd.f32 %v2339, %v2410
    %v2486 = vadd.f32 %v2340, %v2412
    %v2487 = vadd.f32 %v2341, %v2481
    %v2488 = vadd.f32 %v2342, %v2483
    %v2489 = vxor.u32 %v2485, 2147483648
    %v2490 = vxor.u32 %v2486, 2147483648
    %v2491 = vxor.u32 %v2487, 2147483648
    %v2492 = vmul.f32 %v2489, 1.442695
    %v2493 = vpow.pop %v2492
    %v2494 = vmul.f32 %v2490, 1.442695
    %v2495 = vpow.pop %v2494
    %v2496 = vmul.f32 %v2491, 1.442695
    %v2497 = vpow.pop %v2496
    %v2498 = vadd.f32 %v2493, 1.0
    %v2499 = vadd.f32 %v2495, 1.0
    %v2500 = vadd.f32 %v2497, 1.0
    %v2501 = vrcp.pop %v2498
    %v2502 = vmul.f32 1.0, %v2501
    %v2503 = vrcp.pop %v2499
    %v2504 = vmul.f32 1.0, %v2503
    %v2505 = vrcp.pop %v2500
    %v2506 = vmul.f32 1.0, %v2505
    %v2507 = vtanh.pop %v2488
    %v2508 = vmul.f32 %v2504, %v2336
    %v2509 = vmul.f32 %v2502, %v2507
    %v2510 = vadd.f32 %v2508, %v2509
    %v2511 = vtanh.pop %v2510
    %v2512 = vmul.f32 %v2506, %v2511
    %v2513 = vld [vmem:[#allocation2 + $0x100] sm:$0xff]
    %v2514 = vld [vmem:[#allocation2 + $0x108] sm:$0xff]
    %v2515 = vld [vmem:[#allocation2 + $0x110] sm:$0xff]
    %v2516 = vld [vmem:[#allocation2 + $0x118] sm:$0xff]
    %2517 = vmatprep.subr.mxu0 %v1101
    %2518 = vmatpush1.msra.mxu0 %v1100
    %2519 = vmatprep.subr.mxu0 %v1097
    %2520 = vmatpush1.msra.mxu0 %v1096
    %2521 = vmatprep.subr.mxu0 %v1093
    %2522 = vmatpush1.msra.mxu0 %v1092
    %2523 = vmatprep.subr.mxu0 %v1089
    %2524 = vmatpush1.msra.mxu0 %v1088
    %2525 = vmatprep.subr.mxu0 %v1085
    %2526 = vmatpush1.msra.mxu0 %v1084
    %2527 = vmatprep.subr.mxu0 %v1081
    %2528 = vmatpush1.msra.mxu0 %v1080
    %2529 = vmatprep.subr.mxu0 %v1077
    %2530 = vmatpush1.msra.mxu0 %v1076
    %2531 = vmatprep.subr.mxu0 %v1073
    %2532 = vmatpush1.msra.mxu0 %v1072
    %2533 = vmatprep.subr.mxu0 %v1069
    %2534 = vmatpush1.msra.mxu0 %v1068
    %2535 = vmatprep.subr.mxu0 %v1065
    %2536 = vmatpush1.msra.mxu0 %v1064
    %2537 = vmatprep.subr.mxu0 %v1061
    %2538 = vmatpush1.msra.mxu0 %v1060
    %2539 = vmatprep.subr.mxu0 %v1057
    %2540 = vmatpush1.msra.mxu0 %v1056
    %2541 = vmatprep.subr.mxu0 %v1053
    %2542 = vmatpush1.msra.mxu0 %v1052
    %2543 = vmatprep.subr.mxu0 %v1049
    %2544 = vmatpush1.msra.mxu0 %v1048
    %2545 = vmatprep.subr.mxu0 %v1045
    %2546 = vmatpush1.msra.mxu0 %v1044
    %2547 = vmatprep.subr.mxu0 %v1041
    %2548 = vmatpush1.msra.mxu0 %v1040
    %2549 = vmatprep.subr.mxu0 0.0
    %2550 = vmatpush2.msra.mxu0 0.0
    %2551 = vmatprep.subr.mxu0 0.0
    %2552 = vmatpush2.msra.mxu0 0.0
    %2553 = vmatprep.subr.mxu0 0.0
    %2554 = vmatpush2.msra.mxu0 0.0
    %2555 = vmatprep.subr.mxu0 0.0
    %2556 = vmatpush2.msra.mxu0 0.0
    %2557 = vmatprep.subr.mxu0 0.0
    %2558 = vmatpush2.msra.mxu0 0.0
    %2559 = vmatprep.subr.mxu0 0.0
    %2560 = vmatpush2.msra.mxu0 0.0
    %2561 = vmatprep.subr.mxu0 0.0
    %2562 = vmatpush2.msra.mxu0 0.0
    %2563 = vmatprep.subr.mxu0 0.0
    %2564 = vmatpush2.msra.mxu0 0.0
    %2565 = vmatprep.subr.mxu0 0.0
    %2566 = vmatpush2.msra.mxu0 0.0
    %2567 = vmatprep.subr.mxu0 0.0
    %2568 = vmatpush2.msra.mxu0 0.0
    %2569 = vmatprep.subr.mxu0 0.0
    %2570 = vmatpush2.msra.mxu0 0.0
    %2571 = vmatprep.subr.mxu0 0.0
    %2572 = vmatpush2.msra.mxu0 0.0
    %2573 = vmatprep.subr.mxu0 0.0
    %2574 = vmatpush2.msra.mxu0 0.0
    %2575 = vmatprep.subr.mxu0 0.0
    %2576 = vmatpush2.msra.mxu0 0.0
    %2577 = vmatprep.subr.mxu0 0.0
    %2578 = vmatpush2.msra.mxu0 0.0
    %2579 = vmatprep.subr.mxu0 0.0
    %2580 = vmatpush2.msra.mxu0 0.0
    %2581 = vmatprep.mubr.f32.mxu0 0.0
    %2582 = vmatmul.mubr.f32.gmra.mxu0 %v2512
    %v2583 = vpop.f32.mrf.mxu0
    %v2584 = vadd.f32 0.0, %v2583
    %v2585 = vpop.f32.mrf.mxu0
    %v2586 = vadd.f32 0.0, %v2585
    %2587 = vdwg.mxu0
    %2588 = vmatprep.subr.mxu0 %v1103
    %2589 = vmatpush1.msra.mxu0 %v1102
    %2590 = vmatprep.subr.mxu0 %v1099
    %2591 = vmatpush1.msra.mxu0 %v1098
    %2592 = vmatprep.subr.mxu0 %v1095
    %2593 = vmatpush1.msra.mxu0 %v1094
    %2594 = vmatprep.subr.mxu0 %v1091
    %2595 = vmatpush1.msra.mxu0 %v1090
    %2596 = vmatprep.subr.mxu0 %v1087
    %2597 = vmatpush1.msra.mxu0 %v1086
    %2598 = vmatprep.subr.mxu0 %v1083
    %2599 = vmatpush1.msra.mxu0 %v1082
    %2600 = vmatprep.subr.mxu0 %v1079
    %2601 = vmatpush1.msra.mxu0 %v1078
    %2602 = vmatprep.subr.mxu0 %v1075
    %2603 = vmatpush1.msra.mxu0 %v1074
    %2604 = vmatprep.subr.mxu0 %v1071
    %2605 = vmatpush1.msra.mxu0 %v1070
    %2606 = vmatprep.subr.mxu0 %v1067
    %2607 = vmatpush1.msra.mxu0 %v1066
    %2608 = vmatprep.subr.mxu0 %v1063
    %2609 = vmatpush1.msra.mxu0 %v1062
    %2610 = vmatprep.subr.mxu0 %v1059
    %2611 = vmatpush1.msra.mxu0 %v1058
    %2612 = vmatprep.subr.mxu0 %v1055
    %2613 = vmatpush1.msra.mxu0 %v1054
    %2614 = vmatprep.subr.mxu0 %v1051
    %2615 = vmatpush1.msra.mxu0 %v1050
    %2616 = vmatprep.subr.mxu0 %v1047
    %2617 = vmatpush1.msra.mxu0 %v1046
    %2618 = vmatprep.subr.mxu0 %v1043
    %2619 = vmatpush1.msra.mxu0 %v1042
    %2620 = vmatprep.subr.mxu0 0.0
    %2621 = vmatpush2.msra.mxu0 0.0
    %2622 = vmatprep.subr.mxu0 0.0
    %2623 = vmatpush2.msra.mxu0 0.0
    %2624 = vmatprep.subr.mxu0 0.0
    %2625 = vmatpush2.msra.mxu0 0.0
    %2626 = vmatprep.subr.mxu0 0.0
    %2627 = vmatpush2.msra.mxu0 0.0
    %2628 = vmatprep.subr.mxu0 0.0
    %2629 = vmatpush2.msra.mxu0 0.0
    %2630 = vmatprep.subr.mxu0 0.0
    %2631 = vmatpush2.msra.mxu0 0.0
    %2632 = vmatprep.subr.mxu0 0.0
    %2633 = vmatpush2.msra.mxu0 0.0
    %2634 = vmatprep.subr.mxu0 0.0
    %2635 = vmatpush2.msra.mxu0 0.0
    %2636 = vmatprep.subr.mxu0 0.0
    %2637 = vmatpush2.msra.mxu0 0.0
    %2638 = vmatprep.subr.mxu0 0.0
    %2639 = vmatpush2.msra.mxu0 0.0
    %2640 = vmatprep.subr.mxu0 0.0
    %2641 = vmatpush2.msra.mxu0 0.0
    %2642 = vmatprep.subr.mxu0 0.0
    %2643 = vmatpush2.msra.mxu0 0.0
    %2644 = vmatprep.subr.mxu0 0.0
    %2645 = vmatpush2.msra.mxu0 0.0
    %2646 = vmatprep.subr.mxu0 0.0
    %2647 = vmatpush2.msra.mxu0 0.0
    %2648 = vmatprep.subr.mxu0 0.0
    %2649 = vmatpush2.msra.mxu0 0.0
    %2650 = vmatprep.subr.mxu0 0.0
    %2651 = vmatpush2.msra.mxu0 0.0
    %2652 = vmatprep.mubr.f32.mxu0 0.0
    %2653 = vmatmul.mubr.f32.gmra.mxu0 %v2512
    %v2654 = vpop.f32.mrf.mxu0
    %v2655 = vadd.f32 0.0, %v2654
    %v2656 = vpop.f32.mrf.mxu0
    %v2657 = vadd.f32 0.0, %v2656
    %2658 = vdwg.mxu0
    %v2659 = vadd.f32 %v2513, %v2584
    %v2660 = vadd.f32 %v2514, %v2586
    %v2661 = vadd.f32 %v2515, %v2655
    %v2662 = vadd.f32 %v2516, %v2657
    %v2663 = vxor.u32 %v2659, 2147483648
    %v2664 = vxor.u32 %v2660, 2147483648
    %v2665 = vxor.u32 %v2661, 2147483648
    %v2666 = vmul.f32 %v2663, 1.442695
    %v2667 = vpow.pop %v2666
    %v2668 = vmul.f32 %v2664, 1.442695
    %v2669 = vpow.pop %v2668
    %v2670 = vmul.f32 %v2665, 1.442695
    %v2671 = vpow.pop %v2670
    %v2672 = vadd.f32 %v2667, 1.0
    %v2673 = vadd.f32 %v2669, 1.0
    %v2674 = vadd.f32 %v2671, 1.0
    %v2675 = vrcp.pop %v2672
    %v2676 = vmul.f32 1.0, %v2675
    %v2677 = vrcp.pop %v2673
    %v2678 = vmul.f32 1.0, %v2677
    %v2679 = vrcp.pop %v2674
    %v2680 = vmul.f32 1.0, %v2679
    %v2681 = vtanh.pop %v2662
    %v2682 = vmul.f32 %v2678, %v2510
    %v2683 = vmul.f32 %v2676, %v2681
    %v2684 = vadd.f32 %v2682, %v2683
    %v2685 = vtanh.pop %v2684
    %v2686 = vmul.f32 %v2680, %v2685
    %v2687 = vld [vmem:[#allocation2 + $0x120] sm:$0xff]
    %v2688 = vld [vmem:[#allocation2 + $0x128] sm:$0xff]
    %v2689 = vld [vmem:[#allocation2 + $0x130] sm:$0xff]
    %v2690 = vld [vmem:[#allocation2 + $0x138] sm:$0xff]
    %2691 = vmatprep.subr.mxu0 %v1101
    %2692 = vmatpush1.msra.mxu0 %v1100
    %2693 = vmatprep.subr.mxu0 %v1097
    %2694 = vmatpush1.msra.mxu0 %v1096
    %2695 = vmatprep.subr.mxu0 %v1093
    %2696 = vmatpush1.msra.mxu0 %v1092
    %2697 = vmatprep.subr.mxu0 %v1089
    %2698 = vmatpush1.msra.mxu0 %v1088
    %2699 = vmatprep.subr.mxu0 %v1085
    %2700 = vmatpush1.msra.mxu0 %v1084
    %2701 = vmatprep.subr.mxu0 %v1081
    %2702 = vmatpush1.msra.mxu0 %v1080
    %2703 = vmatprep.subr.mxu0 %v1077
    %2704 = vmatpush1.msra.mxu0 %v1076
    %2705 = vmatprep.subr.mxu0 %v1073
    %2706 = vmatpush1.msra.mxu0 %v1072
    %2707 = vmatprep.subr.mxu0 %v1069
    %2708 = vmatpush1.msra.mxu0 %v1068
    %2709 = vmatprep.subr.mxu0 %v1065
    %2710 = vmatpush1.msra.mxu0 %v1064
    %2711 = vmatprep.subr.mxu0 %v1061
    %2712 = vmatpush1.msra.mxu0 %v1060
    %2713 = vmatprep.subr.mxu0 %v1057
    %2714 = vmatpush1.msra.mxu0 %v1056
    %2715 = vmatprep.subr.mxu0 %v1053
    %2716 = vmatpush1.msra.mxu0 %v1052
    %2717 = vmatprep.subr.mxu0 %v1049
    %2718 = vmatpush1.msra.mxu0 %v1048
    %2719 = vmatprep.subr.mxu0 %v1045
    %2720 = vmatpush1.msra.mxu0 %v1044
    %2721 = vmatprep.subr.mxu0 %v1041
    %2722 = vmatpush1.msra.mxu0 %v1040
    %2723 = vmatprep.subr.mxu0 0.0
    %2724 = vmatpush2.msra.mxu0 0.0
    %2725 = vmatprep.subr.mxu0 0.0
    %2726 = vmatpush2.msra.mxu0 0.0
    %2727 = vmatprep.subr.mxu0 0.0
    %2728 = vmatpush2.msra.mxu0 0.0
    %2729 = vmatprep.subr.mxu0 0.0
    %2730 = vmatpush2.msra.mxu0 0.0
    %2731 = vmatprep.subr.mxu0 0.0
    %2732 = vmatpush2.msra.mxu0 0.0
    %2733 = vmatprep.subr.mxu0 0.0
    %2734 = vmatpush2.msra.mxu0 0.0
    %2735 = vmatprep.subr.mxu0 0.0
    %2736 = vmatpush2.msra.mxu0 0.0
    %2737 = vmatprep.subr.mxu0 0.0
    %2738 = vmatpush2.msra.mxu0 0.0
    %2739 = vmatprep.subr.mxu0 0.0
    %2740 = vmatpush2.msra.mxu0 0.0
    %2741 = vmatprep.subr.mxu0 0.0
    %2742 = vmatpush2.msra.mxu0 0.0
    %2743 = vmatprep.subr.mxu0 0.0
    %2744 = vmatpush2.msra.mxu0 0.0
    %2745 = vmatprep.subr.mxu0 0.0
    %2746 = vmatpush2.msra.mxu0 0.0
    %2747 = vmatprep.subr.mxu0 0.0
    %2748 = vmatpush2.msra.mxu0 0.0
    %2749 = vmatprep.subr.mxu0 0.0
    %2750 = vmatpush2.msra.mxu0 0.0
    %2751 = vmatprep.subr.mxu0 0.0
    %2752 = vmatpush2.msra.mxu0 0.0
    %2753 = vmatprep.subr.mxu0 0.0
    %2754 = vmatpush2.msra.mxu0 0.0
    %2755 = vmatprep.mubr.f32.mxu0 0.0
    %2756 = vmatmul.mubr.f32.gmra.mxu0 %v2686
    %v2757 = vpop.f32.mrf.mxu0
    %v2758 = vadd.f32 0.0, %v2757
    %v2759 = vpop.f32.mrf.mxu0
    %v2760 = vadd.f32 0.0, %v2759
    %2761 = vdwg.mxu0
    %2762 = vmatprep.subr.mxu0 %v1103
    %2763 = vmatpush1.msra.mxu0 %v1102
    %2764 = vmatprep.subr.mxu0 %v1099
    %2765 = vmatpush1.msra.mxu0 %v1098
    %2766 = vmatprep.subr.mxu0 %v1095
    %2767 = vmatpush1.msra.mxu0 %v1094
    %2768 = vmatprep.subr.mxu0 %v1091
    %2769 = vmatpush1.msra.mxu0 %v1090
    %2770 = vmatprep.subr.mxu0 %v1087
    %2771 = vmatpush1.msra.mxu0 %v1086
    %2772 = vmatprep.subr.mxu0 %v1083
    %2773 = vmatpush1.msra.mxu0 %v1082
    %2774 = vmatprep.subr.mxu0 %v1079
    %2775 = vmatpush1.msra.mxu0 %v1078
    %2776 = vmatprep.subr.mxu0 %v1075
    %2777 = vmatpush1.msra.mxu0 %v1074
    %2778 = vmatprep.subr.mxu0 %v1071
    %2779 = vmatpush1.msra.mxu0 %v1070
    %2780 = vmatprep.subr.mxu0 %v1067
    %2781 = vmatpush1.msra.mxu0 %v1066
    %2782 = vmatprep.subr.mxu0 %v1063
    %2783 = vmatpush1.msra.mxu0 %v1062
    %2784 = vmatprep.subr.mxu0 %v1059
    %2785 = vmatpush1.msra.mxu0 %v1058
    %2786 = vmatprep.subr.mxu0 %v1055
    %2787 = vmatpush1.msra.mxu0 %v1054
    %2788 = vmatprep.subr.mxu0 %v1051
    %2789 = vmatpush1.msra.mxu0 %v1050
    %2790 = vmatprep.subr.mxu0 %v1047
    %2791 = vmatpush1.msra.mxu0 %v1046
    %2792 = vmatprep.subr.mxu0 %v1043
    %2793 = vmatpush1.msra.mxu0 %v1042
    %2794 = vmatprep.subr.mxu0 0.0
    %2795 = vmatpush2.msra.mxu0 0.0
    %2796 = vmatprep.subr.mxu0 0.0
    %2797 = vmatpush2.msra.mxu0 0.0
    %2798 = vmatprep.subr.mxu0 0.0
    %2799 = vmatpush2.msra.mxu0 0.0
    %2800 = vmatprep.subr.mxu0 0.0
    %2801 = vmatpush2.msra.mxu0 0.0
    %2802 = vmatprep.subr.mxu0 0.0
    %2803 = vmatpush2.msra.mxu0 0.0
    %2804 = vmatprep.subr.mxu0 0.0
    %2805 = vmatpush2.msra.mxu0 0.0
    %2806 = vmatprep.subr.mxu0 0.0
    %2807 = vmatpush2.msra.mxu0 0.0
    %2808 = vmatprep.subr.mxu0 0.0
    %2809 = vmatpush2.msra.mxu0 0.0
    %2810 = vmatprep.subr.mxu0 0.0
    %2811 = vmatpush2.msra.mxu0 0.0
    %2812 = vmatprep.subr.mxu0 0.0
    %2813 = vmatpush2.msra.mxu0 0.0
    %2814 = vmatprep.subr.mxu0 0.0
    %2815 = vmatpush2.msra.mxu0 0.0
    %2816 = vmatprep.subr.mxu0 0.0
    %2817 = vmatpush2.msra.mxu0 0.0
    %2818 = vmatprep.subr.mxu0 0.0
    %2819 = vmatpush2.msra.mxu0 0.0
    %2820 = vmatprep.subr.mxu0 0.0
    %2821 = vmatpush2.msra.mxu0 0.0
    %2822 = vmatprep.subr.mxu0 0.0
    %2823 = vmatpush2.msra.mxu0 0.0
    %2824 = vmatprep.subr.mxu0 0.0
    %2825 = vmatpush2.msra.mxu0 0.0
    %2826 = vmatprep.mubr.f32.mxu0 0.0
    %2827 = vmatmul.mubr.f32.gmra.mxu0 %v2686
    %v2828 = vpop.f32.mrf.mxu0
    %v2829 = vadd.f32 0.0, %v2828
    %v2830 = vpop.f32.mrf.mxu0
    %v2831 = vadd.f32 0.0, %v2830
    %2832 = vdwg.mxu0
    %v2833 = vadd.f32 %v2687, %v2758
    %v2834 = vadd.f32 %v2688, %v2760
    %v2835 = vadd.f32 %v2689, %v2829
    %v2836 = vadd.f32 %v2690, %v2831
    %v2837 = vxor.u32 %v2833, 2147483648
    %v2838 = vxor.u32 %v2834, 2147483648
    %v2839 = vxor.u32 %v2835, 2147483648
    %v2840 = vmul.f32 %v2837, 1.442695
    %v2841 = vpow.pop %v2840
    %v2842 = vmul.f32 %v2838, 1.442695
    %v2843 = vpow.pop %v2842
    %v2844 = vmul.f32 %v2839, 1.442695
    %v2845 = vpow.pop %v2844
    %v2846 = vadd.f32 %v2841, 1.0
    %v2847 = vadd.f32 %v2843, 1.0
    %v2848 = vadd.f32 %v2845, 1.0
    %v2849 = vrcp.pop %v2846
    %v2850 = vmul.f32 1.0, %v2849
    %v2851 = vrcp.pop %v2847
    %v2852 = vmul.f32 1.0, %v2851
    %v2853 = vrcp.pop %v2848
    %v2854 = vmul.f32 1.0, %v2853
    %v2855 = vtanh.pop %v2836
    %v2856 = vmul.f32 %v2852, %v2684
    %v2857 = vmul.f32 %v2850, %v2855
    %v2858 = vadd.f32 %v2856, %v2857
    %v2859 = vtanh.pop %v2858
    %v2860 = vmul.f32 %v2854, %v2859
    %v2861 = vld [vmem:[#allocation2 + $0x140] sm:$0xff]
    %v2862 = vld [vmem:[#allocation2 + $0x148] sm:$0xff]
    %v2863 = vld [vmem:[#allocation2 + $0x150] sm:$0xff]
    %v2864 = vld [vmem:[#allocation2 + $0x158] sm:$0xff]
    %2865 = vmatprep.subr.mxu0 %v1101
    %2866 = vmatpush1.msra.mxu0 %v1100
    %2867 = vmatprep.subr.mxu0 %v1097
    %2868 = vmatpush1.msra.mxu0 %v1096
    %2869 = vmatprep.subr.mxu0 %v1093
    %2870 = vmatpush1.msra.mxu0 %v1092
    %2871 = vmatprep.subr.mxu0 %v1089
    %2872 = vmatpush1.msra.mxu0 %v1088
    %2873 = vmatprep.subr.mxu0 %v1085
    %2874 = vmatpush1.msra.mxu0 %v1084
    %2875 = vmatprep.subr.mxu0 %v1081
    %2876 = vmatpush1.msra.mxu0 %v1080
    %2877 = vmatprep.subr.mxu0 %v1077
    %2878 = vmatpush1.msra.mxu0 %v1076
    %2879 = vmatprep.subr.mxu0 %v1073
    %2880 = vmatpush1.msra.mxu0 %v1072
    %2881 = vmatprep.subr.mxu0 %v1069
    %2882 = vmatpush1.msra.mxu0 %v1068
    %2883 = vmatprep.subr.mxu0 %v1065
    %2884 = vmatpush1.msra.mxu0 %v1064
    %2885 = vmatprep.subr.mxu0 %v1061
    %2886 = vmatpush1.msra.mxu0 %v1060
    %2887 = vmatprep.subr.mxu0 %v1057
    %2888 = vmatpush1.msra.mxu0 %v1056
    %2889 = vmatprep.subr.mxu0 %v1053
    %2890 = vmatpush1.msra.mxu0 %v1052
    %2891 = vmatprep.subr.mxu0 %v1049
    %2892 = vmatpush1.msra.mxu0 %v1048
    %2893 = vmatprep.subr.mxu0 %v1045
    %2894 = vmatpush1.msra.mxu0 %v1044
    %2895 = vmatprep.subr.mxu0 %v1041
    %2896 = vmatpush1.msra.mxu0 %v1040
    %2897 = vmatprep.subr.mxu0 0.0
    %2898 = vmatpush2.msra.mxu0 0.0
    %2899 = vmatprep.subr.mxu0 0.0
    %2900 = vmatpush2.msra.mxu0 0.0
    %2901 = vmatprep.subr.mxu0 0.0
    %2902 = vmatpush2.msra.mxu0 0.0
    %2903 = vmatprep.subr.mxu0 0.0
    %2904 = vmatpush2.msra.mxu0 0.0
    %2905 = vmatprep.subr.mxu0 0.0
    %2906 = vmatpush2.msra.mxu0 0.0
    %2907 = vmatprep.subr.mxu0 0.0
    %2908 = vmatpush2.msra.mxu0 0.0
    %2909 = vmatprep.subr.mxu0 0.0
    %2910 = vmatpush2.msra.mxu0 0.0
    %2911 = vmatprep.subr.mxu0 0.0
    %2912 = vmatpush2.msra.mxu0 0.0
    %2913 = vmatprep.subr.mxu0 0.0
    %2914 = vmatpush2.msra.mxu0 0.0
    %2915 = vmatprep.subr.mxu0 0.0
    %2916 = vmatpush2.msra.mxu0 0.0
    %2917 = vmatprep.subr.mxu0 0.0
    %2918 = vmatpush2.msra.mxu0 0.0
    %2919 = vmatprep.subr.mxu0 0.0
    %2920 = vmatpush2.msra.mxu0 0.0
    %2921 = vmatprep.subr.mxu0 0.0
    %2922 = vmatpush2.msra.mxu0 0.0
    %2923 = vmatprep.subr.mxu0 0.0
    %2924 = vmatpush2.msra.mxu0 0.0
    %2925 = vmatprep.subr.mxu0 0.0
    %2926 = vmatpush2.msra.mxu0 0.0
    %2927 = vmatprep.subr.mxu0 0.0
    %2928 = vmatpush2.msra.mxu0 0.0
    %2929 = vmatprep.mubr.f32.mxu0 0.0
    %2930 = vmatmul.mubr.f32.gmra.mxu0 %v2860
    %v2931 = vpop.f32.mrf.mxu0
    %v2932 = vadd.f32 0.0, %v2931
    %v2933 = vpop.f32.mrf.mxu0
    %v2934 = vadd.f32 0.0, %v2933
    %2935 = vdwg.mxu0
    %2936 = vmatprep.subr.mxu0 %v1103
    %2937 = vmatpush1.msra.mxu0 %v1102
    %2938 = vmatprep.subr.mxu0 %v1099
    %2939 = vmatpush1.msra.mxu0 %v1098
    %2940 = vmatprep.subr.mxu0 %v1095
    %2941 = vmatpush1.msra.mxu0 %v1094
    %2942 = vmatprep.subr.mxu0 %v1091
    %2943 = vmatpush1.msra.mxu0 %v1090
    %2944 = vmatprep.subr.mxu0 %v1087
    %2945 = vmatpush1.msra.mxu0 %v1086
    %2946 = vmatprep.subr.mxu0 %v1083
    %2947 = vmatpush1.msra.mxu0 %v1082
    %2948 = vmatprep.subr.mxu0 %v1079
    %2949 = vmatpush1.msra.mxu0 %v1078
    %2950 = vmatprep.subr.mxu0 %v1075
    %2951 = vmatpush1.msra.mxu0 %v1074
    %2952 = vmatprep.subr.mxu0 %v1071
    %2953 = vmatpush1.msra.mxu0 %v1070
    %2954 = vmatprep.subr.mxu0 %v1067
    %2955 = vmatpush1.msra.mxu0 %v1066
    %2956 = vmatprep.subr.mxu0 %v1063
    %2957 = vmatpush1.msra.mxu0 %v1062
    %2958 = vmatprep.subr.mxu0 %v1059
    %2959 = vmatpush1.msra.mxu0 %v1058
    %2960 = vmatprep.subr.mxu0 %v1055
    %2961 = vmatpush1.msra.mxu0 %v1054
    %2962 = vmatprep.subr.mxu0 %v1051
    %2963 = vmatpush1.msra.mxu0 %v1050
    %2964 = vmatprep.subr.mxu0 %v1047
    %2965 = vmatpush1.msra.mxu0 %v1046
    %2966 = vmatprep.subr.mxu0 %v1043
    %2967 = vmatpush1.msra.mxu0 %v1042
    %2968 = vmatprep.subr.mxu0 0.0
    %2969 = vmatpush2.msra.mxu0 0.0
    %2970 = vmatprep.subr.mxu0 0.0
    %2971 = vmatpush2.msra.mxu0 0.0
    %2972 = vmatprep.subr.mxu0 0.0
    %2973 = vmatpush2.msra.mxu0 0.0
    %2974 = vmatprep.subr.mxu0 0.0
    %2975 = vmatpush2.msra.mxu0 0.0
    %2976 = vmatprep.subr.mxu0 0.0
    %2977 = vmatpush2.msra.mxu0 0.0
    %2978 = vmatprep.subr.mxu0 0.0
    %2979 = vmatpush2.msra.mxu0 0.0
    %2980 = vmatprep.subr.mxu0 0.0
    %2981 = vmatpush2.msra.mxu0 0.0
    %2982 = vmatprep.subr.mxu0 0.0
    %2983 = vmatpush2.msra.mxu0 0.0
    %2984 = vmatprep.subr.mxu0 0.0
    %2985 = vmatpush2.msra.mxu0 0.0
    %2986 = vmatprep.subr.mxu0 0.0
    %2987 = vmatpush2.msra.mxu0 0.0
    %2988 = vmatprep.subr.mxu0 0.0
    %2989 = vmatpush2.msra.mxu0 0.0
    %2990 = vmatprep.subr.mxu0 0.0
    %2991 = vmatpush2.msra.mxu0 0.0
    %2992 = vmatprep.subr.mxu0 0.0
    %2993 = vmatpush2.msra.mxu0 0.0
    %2994 = vmatprep.subr.mxu0 0.0
    %2995 = vmatpush2.msra.mxu0 0.0
    %2996 = vmatprep.subr.mxu0 0.0
    %2997 = vmatpush2.msra.mxu0 0.0
    %2998 = vmatprep.subr.mxu0 0.0
    %2999 = vmatpush2.msra.mxu0 0.0
    %3000 = vmatprep.mubr.f32.mxu0 0.0
    %3001 = vmatmul.mubr.f32.gmra.mxu0 %v2860
    %v3002 = vpop.f32.mrf.mxu0
    %v3003 = vadd.f32 0.0, %v3002
    %v3004 = vpop.f32.mrf.mxu0
    %v3005 = vadd.f32 0.0, %v3004
    %3006 = vdwg.mxu0
    %v3007 = vadd.f32 %v2861, %v2932
    %v3008 = vadd.f32 %v2862, %v2934
    %v3009 = vadd.f32 %v2863, %v3003
    %v3010 = vadd.f32 %v2864, %v3005
    %v3011 = vxor.u32 %v3007, 2147483648
    %v3012 = vxor.u32 %v3008, 2147483648
    %v3013 = vxor.u32 %v3009, 2147483648
    %v3014 = vmul.f32 %v3011, 1.442695
    %v3015 = vpow.pop %v3014
    %v3016 = vmul.f32 %v3012, 1.442695
    %v3017 = vpow.pop %v3016
    %v3018 = vmul.f32 %v3013, 1.442695
    %v3019 = vpow.pop %v3018
    %v3020 = vadd.f32 %v3015, 1.0
    %v3021 = vadd.f32 %v3017, 1.0
    %v3022 = vadd.f32 %v3019, 1.0
    %v3023 = vrcp.pop %v3020
    %v3024 = vmul.f32 1.0, %v3023
    %v3025 = vrcp.pop %v3021
    %v3026 = vmul.f32 1.0, %v3025
    %v3027 = vrcp.pop %v3022
    %v3028 = vmul.f32 1.0, %v3027
    %v3029 = vtanh.pop %v3010
    %v3030 = vmul.f32 %v3026, %v2858
    %v3031 = vmul.f32 %v3024, %v3029
    %v3032 = vadd.f32 %v3030, %v3031
    %v3033 = vtanh.pop %v3032
    %v3034 = vmul.f32 %v3028, %v3033
    %v3035 = vld [vmem:[#allocation2 + $0x160] sm:$0xff]
    %v3036 = vld [vmem:[#allocation2 + $0x168] sm:$0xff]
    %v3037 = vld [vmem:[#allocation2 + $0x170] sm:$0xff]
    %v3038 = vld [vmem:[#allocation2 + $0x178] sm:$0xff]
    %3039 = vmatprep.subr.mxu0 %v1101
    %3040 = vmatpush1.msra.mxu0 %v1100
    %3041 = vmatprep.subr.mxu0 %v1097
    %3042 = vmatpush1.msra.mxu0 %v1096
    %3043 = vmatprep.subr.mxu0 %v1093
    %3044 = vmatpush1.msra.mxu0 %v1092
    %3045 = vmatprep.subr.mxu0 %v1089
    %3046 = vmatpush1.msra.mxu0 %v1088
    %3047 = vmatprep.subr.mxu0 %v1085
    %3048 = vmatpush1.msra.mxu0 %v1084
    %3049 = vmatprep.subr.mxu0 %v1081
    %3050 = vmatpush1.msra.mxu0 %v1080
    %3051 = vmatprep.subr.mxu0 %v1077
    %3052 = vmatpush1.msra.mxu0 %v1076
    %3053 = vmatprep.subr.mxu0 %v1073
    %3054 = vmatpush1.msra.mxu0 %v1072
    %3055 = vmatprep.subr.mxu0 %v1069
    %3056 = vmatpush1.msra.mxu0 %v1068
    %3057 = vmatprep.subr.mxu0 %v1065
    %3058 = vmatpush1.msra.mxu0 %v1064
    %3059 = vmatprep.subr.mxu0 %v1061
    %3060 = vmatpush1.msra.mxu0 %v1060
    %3061 = vmatprep.subr.mxu0 %v1057
    %3062 = vmatpush1.msra.mxu0 %v1056
    %3063 = vmatprep.subr.mxu0 %v1053
    %3064 = vmatpush1.msra.mxu0 %v1052
    %3065 = vmatprep.subr.mxu0 %v1049
    %3066 = vmatpush1.msra.mxu0 %v1048
    %3067 = vmatprep.subr.mxu0 %v1045
    %3068 = vmatpush1.msra.mxu0 %v1044
    %3069 = vmatprep.subr.mxu0 %v1041
    %3070 = vmatpush1.msra.mxu0 %v1040
    %3071 = vmatprep.subr.mxu0 0.0
    %3072 = vmatpush2.msra.mxu0 0.0
    %3073 = vmatprep.subr.mxu0 0.0
    %3074 = vmatpush2.msra.mxu0 0.0
    %3075 = vmatprep.subr.mxu0 0.0
    %3076 = vmatpush2.msra.mxu0 0.0
    %3077 = vmatprep.subr.mxu0 0.0
    %3078 = vmatpush2.msra.mxu0 0.0
    %3079 = vmatprep.subr.mxu0 0.0
    %3080 = vmatpush2.msra.mxu0 0.0
    %3081 = vmatprep.subr.mxu0 0.0
    %3082 = vmatpush2.msra.mxu0 0.0
    %3083 = vmatprep.subr.mxu0 0.0
    %3084 = vmatpush2.msra.mxu0 0.0
    %3085 = vmatprep.subr.mxu0 0.0
    %3086 = vmatpush2.msra.mxu0 0.0
    %3087 = vmatprep.subr.mxu0 0.0
    %3088 = vmatpush2.msra.mxu0 0.0
    %3089 = vmatprep.subr.mxu0 0.0
    %3090 = vmatpush2.msra.mxu0 0.0
    %3091 = vmatprep.subr.mxu0 0.0
    %3092 = vmatpush2.msra.mxu0 0.0
    %3093 = vmatprep.subr.mxu0 0.0
    %3094 = vmatpush2.msra.mxu0 0.0
    %3095 = vmatprep.subr.mxu0 0.0
    %3096 = vmatpush2.msra.mxu0 0.0
    %3097 = vmatprep.subr.mxu0 0.0
    %3098 = vmatpush2.msra.mxu0 0.0
    %3099 = vmatprep.subr.mxu0 0.0
    %3100 = vmatpush2.msra.mxu0 0.0
    %3101 = vmatprep.subr.mxu0 0.0
    %3102 = vmatpush2.msra.mxu0 0.0
    %3103 = vmatprep.mubr.f32.mxu0 0.0
    %3104 = vmatmul.mubr.f32.gmra.mxu0 %v3034
    %v3105 = vpop.f32.mrf.mxu0
    %v3106 = vadd.f32 0.0, %v3105
    %v3107 = vpop.f32.mrf.mxu0
    %v3108 = vadd.f32 0.0, %v3107
    %3109 = vdwg.mxu0
    %3110 = vmatprep.subr.mxu0 %v1103
    %3111 = vmatpush1.msra.mxu0 %v1102
    %3112 = vmatprep.subr.mxu0 %v1099
    %3113 = vmatpush1.msra.mxu0 %v1098
    %3114 = vmatprep.subr.mxu0 %v1095
    %3115 = vmatpush1.msra.mxu0 %v1094
    %3116 = vmatprep.subr.mxu0 %v1091
    %3117 = vmatpush1.msra.mxu0 %v1090
    %3118 = vmatprep.subr.mxu0 %v1087
    %3119 = vmatpush1.msra.mxu0 %v1086
    %3120 = vmatprep.subr.mxu0 %v1083
    %3121 = vmatpush1.msra.mxu0 %v1082
    %3122 = vmatprep.subr.mxu0 %v1079
    %3123 = vmatpush1.msra.mxu0 %v1078
    %3124 = vmatprep.subr.mxu0 %v1075
    %3125 = vmatpush1.msra.mxu0 %v1074
    %3126 = vmatprep.subr.mxu0 %v1071
    %3127 = vmatpush1.msra.mxu0 %v1070
    %3128 = vmatprep.subr.mxu0 %v1067
    %3129 = vmatpush1.msra.mxu0 %v1066
    %3130 = vmatprep.subr.mxu0 %v1063
    %3131 = vmatpush1.msra.mxu0 %v1062
    %3132 = vmatprep.subr.mxu0 %v1059
    %3133 = vmatpush1.msra.mxu0 %v1058
    %3134 = vmatprep.subr.mxu0 %v1055
    %3135 = vmatpush1.msra.mxu0 %v1054
    %3136 = vmatprep.subr.mxu0 %v1051
    %3137 = vmatpush1.msra.mxu0 %v1050
    %3138 = vmatprep.subr.mxu0 %v1047
    %3139 = vmatpush1.msra.mxu0 %v1046
    %3140 = vmatprep.subr.mxu0 %v1043
    %3141 = vmatpush1.msra.mxu0 %v1042
    %3142 = vmatprep.subr.mxu0 0.0
    %3143 = vmatpush2.msra.mxu0 0.0
    %3144 = vmatprep.subr.mxu0 0.0
    %3145 = vmatpush2.msra.mxu0 0.0
    %3146 = vmatprep.subr.mxu0 0.0
    %3147 = vmatpush2.msra.mxu0 0.0
    %3148 = vmatprep.subr.mxu0 0.0
    %3149 = vmatpush2.msra.mxu0 0.0
    %3150 = vmatprep.subr.mxu0 0.0
    %3151 = vmatpush2.msra.mxu0 0.0
    %3152 = vmatprep.subr.mxu0 0.0
    %3153 = vmatpush2.msra.mxu0 0.0
    %3154 = vmatprep.subr.mxu0 0.0
    %3155 = vmatpush2.msra.mxu0 0.0
    %3156 = vmatprep.subr.mxu0 0.0
    %3157 = vmatpush2.msra.mxu0 0.0
    %3158 = vmatprep.subr.mxu0 0.0
    %3159 = vmatpush2.msra.mxu0 0.0
    %3160 = vmatprep.subr.mxu0 0.0
    %3161 = vmatpush2.msra.mxu0 0.0
    %3162 = vmatprep.subr.mxu0 0.0
    %3163 = vmatpush2.msra.mxu0 0.0
    %3164 = vmatprep.subr.mxu0 0.0
    %3165 = vmatpush2.msra.mxu0 0.0
    %3166 = vmatprep.subr.mxu0 0.0
    %3167 = vmatpush2.msra.mxu0 0.0
    %3168 = vmatprep.subr.mxu0 0.0
    %3169 = vmatpush2.msra.mxu0 0.0
    %3170 = vmatprep.subr.mxu0 0.0
    %3171 = vmatpush2.msra.mxu0 0.0
    %3172 = vmatprep.subr.mxu0 0.0
    %3173 = vmatpush2.msra.mxu0 0.0
    %3174 = vmatprep.mubr.f32.mxu0 0.0
    %3175 = vmatmul.mubr.f32.gmra.mxu0 %v3034
    %v3176 = vpop.f32.mrf.mxu0
    %v3177 = vadd.f32 0.0, %v3176
    %v3178 = vpop.f32.mrf.mxu0
    %v3179 = vadd.f32 0.0, %v3178
    %3180 = vdwg.mxu0
    %v3181 = vadd.f32 %v3035, %v3106
    %v3182 = vadd.f32 %v3036, %v3108
    %v3183 = vadd.f32 %v3037, %v3177
    %v3184 = vadd.f32 %v3038, %v3179
    %v3185 = vxor.u32 %v3181, 2147483648
    %v3186 = vxor.u32 %v3182, 2147483648
    %v3187 = vxor.u32 %v3183, 2147483648
    %v3188 = vmul.f32 %v3185, 1.442695
    %v3189 = vpow.pop %v3188
    %v3190 = vmul.f32 %v3186, 1.442695
    %v3191 = vpow.pop %v3190
    %v3192 = vmul.f32 %v3187, 1.442695
    %v3193 = vpow.pop %v3192
    %v3194 = vadd.f32 %v3189, 1.0
    %v3195 = vadd.f32 %v3191, 1.0
    %v3196 = vadd.f32 %v3193, 1.0
    %v3197 = vrcp.pop %v3194
    %v3198 = vmul.f32 1.0, %v3197
    %v3199 = vrcp.pop %v3195
    %v3200 = vmul.f32 1.0, %v3199
    %v3201 = vrcp.pop %v3196
    %v3202 = vmul.f32 1.0, %v3201
    %v3203 = vtanh.pop %v3184
    %v3204 = vmul.f32 %v3200, %v3032
    %v3205 = vmul.f32 %v3198, %v3203
    %v3206 = vadd.f32 %v3204, %v3205
    %v3207 = vtanh.pop %v3206
    %v3208 = vmul.f32 %v3202, %v3207
    %3209 = vst [vmem:[#allocation40] sm:$0xff] %v3208
    %3210 = vst [vmem:[#allocation41] sm:$0xff] %v3206
    %s3211 = smul.u32 8, 17
    %s3212 = smul.u32 %s3211, 8
    %s3213 = sshll.u32 %s3212, 4
    %3214 = dma.done [#allocation13], %s3213
    %s3215 = smul.u32 8, 128
    %s3216 = smul.u32 %s3215, 4
    %s3217 = sshll.u32 %s3216, 4
    %3218 = dma.done %s299, %s3217
    %s3219 = smul.u32 8, 64
    %s3220 = smul.u32 %s3219, 2
    %s3221 = sshll.u32 %s3220, 4
    %3222 = dma.done %s311, %s3221
    %s3223 = smul.u32 256, 1
    %s3224 = sshll.u32 %s3223, 4
    %3225 = dma.done %s323, %s3224
    %s3226 = smul.u32 128, 1
    %s3227 = sshll.u32 %s3226, 4
    %3228 = dma.done %s335, %s3227
    %s3229 = smul.u32 64, 1
    %s3230 = sshll.u32 %s3229, 4
    %3231 = dma.done %s409, %s3230
    %s3232 = smul.u32 32, 1
    %s3233 = sshll.u32 %s3232, 4
    %3234 = dma.done %s467, %s3233
    %s3235 = smul.u32 16, 1
    %s3236 = sshll.u32 %s3235, 4
    %3237 = dma.done %s517, %s3236
    %s3238 = smul.u32 8, 1
    %s3239 = sshll.u32 %s3238, 4
    %3240 = dma.done %s563, %s3239
    %s3241 = smul.u32 4, 1
    %s3242 = sshll.u32 %s3241, 4
    %3243 = dma.done %s607, %s3242
    %v3244 = vld [vmem:[#allocation3] sm:$0xff]
    %v3245 = vld [vmem:[#allocation3 + $0x8] sm:$0xff]
    %v3246 = vld [vmem:[#allocation3 + $0x10] sm:$0xff]
    %v3247 = vld [vmem:[#allocation3 + $0x18] sm:$0xff]
    %v3248 = vld [vmem:[#allocation3 + $0x20] sm:$0xff]
    %v3249 = vld [vmem:[#allocation3 + $0x28] sm:$0xff]
    %v3250 = vld [vmem:[#allocation3 + $0x30] sm:$0xff]
    %v3251 = vld [vmem:[#allocation3 + $0x38] sm:$0xff]
    %v3252 = vld [vmem:[#allocation3 + $0x40] sm:$0xff]
    %v3253 = vld [vmem:[#allocation3 + $0x48] sm:$0xff]
    %v3254 = vld [vmem:[#allocation3 + $0x50] sm:$0xff]
    %v3255 = vld [vmem:[#allocation3 + $0x58] sm:$0xff]
    %v3256 = vld [vmem:[#allocation3 + $0x60] sm:$0xff]
    %v3257 = vld [vmem:[#allocation3 + $0x68] sm:$0xff]
    %v3258 = vld [vmem:[#allocation3 + $0x70] sm:$0xff]
    %v3259 = vld [vmem:[#allocation3 + $0x78] sm:$0xff]
    %v3260 = vld [vmem:[#allocation3 + $0x80] sm:$0xff]
    %v3261 = vld [vmem:[#allocation3 + $0x88] sm:$0xff]
    %v3262 = vld [vmem:[#allocation3 + $0x90] sm:$0xff]
    %v3263 = vld [vmem:[#allocation3 + $0x98] sm:$0xff]
    %v3264 = vld [vmem:[#allocation3 + $0xa0] sm:$0xff]
    %v3265 = vld [vmem:[#allocation3 + $0xa8] sm:$0xff]
    %v3266 = vld [vmem:[#allocation3 + $0xb0] sm:$0xff]
    %v3267 = vld [vmem:[#allocation3 + $0xb8] sm:$0xff]
    %v3268 = vld [vmem:[#allocation3 + $0xc0] sm:$0xff]
    %v3269 = vld [vmem:[#allocation3 + $0xc8] sm:$0xff]
    %v3270 = vld [vmem:[#allocation3 + $0xd0] sm:$0xff]
    %v3271 = vld [vmem:[#allocation3 + $0xd8] sm:$0xff]
    %v3272 = vld [vmem:[#allocation3 + $0xe0] sm:$0xff]
    %v3273 = vld [vmem:[#allocation3 + $0xe8] sm:$0xff]
    %v3274 = vld [vmem:[#allocation3 + $0xf0] sm:$0xff]
    %v3275 = vld [vmem:[#allocation3 + $0xf8] sm:$0xff]
    %v3276 = vld [vmem:[#allocation3 + $0x100] sm:$0xff]
    %v3277 = vld [vmem:[#allocation3 + $0x108] sm:$0xff]
    %v3278 = vld [vmem:[#allocation3 + $0x110] sm:$0xff]
    %v3279 = vld [vmem:[#allocation3 + $0x118] sm:$0xff]
    %v3280 = vld [vmem:[#allocation3 + $0x120] sm:$0xff]
    %v3281 = vld [vmem:[#allocation3 + $0x128] sm:$0xff]
    %v3282 = vld [vmem:[#allocation3 + $0x130] sm:$0xff]
    %v3283 = vld [vmem:[#allocation3 + $0x138] sm:$0xff]
    %v3284 = vld [vmem:[#allocation3 + $0x140] sm:$0xff]
    %v3285 = vld [vmem:[#allocation3 + $0x148] sm:$0xff]
    %v3286 = vld [vmem:[#allocation3 + $0x150] sm:$0xff]
    %v3287 = vld [vmem:[#allocation3 + $0x158] sm:$0xff]
    %v3288 = vld [vmem:[#allocation3 + $0x160] sm:$0xff]
    %v3289 = vld [vmem:[#allocation3 + $0x168] sm:$0xff]
    %v3290 = vld [vmem:[#allocation3 + $0x170] sm:$0xff]
    %v3291 = vld [vmem:[#allocation3 + $0x178] sm:$0xff]
    %v3292 = vld [vmem:[#allocation3 + $0x180] sm:$0xff]
    %v3293 = vld [vmem:[#allocation3 + $0x188] sm:$0xff]
    %v3294 = vld [vmem:[#allocation3 + $0x190] sm:$0xff]
    %v3295 = vld [vmem:[#allocation3 + $0x198] sm:$0xff]
    %v3296 = vld [vmem:[#allocation3 + $0x1a0] sm:$0xff]
    %v3297 = vld [vmem:[#allocation3 + $0x1a8] sm:$0xff]
    %v3298 = vld [vmem:[#allocation3 + $0x1b0] sm:$0xff]
    %v3299 = vld [vmem:[#allocation3 + $0x1b8] sm:$0xff]
    %v3300 = vld [vmem:[#allocation3 + $0x1c0] sm:$0xff]
    %v3301 = vld [vmem:[#allocation3 + $0x1c8] sm:$0xff]
    %v3302 = vld [vmem:[#allocation3 + $0x1d0] sm:$0xff]
    %v3303 = vld [vmem:[#allocation3 + $0x1d8] sm:$0xff]
    %v3304 = vld [vmem:[#allocation3 + $0x1e0] sm:$0xff]
    %v3305 = vld [vmem:[#allocation3 + $0x1e8] sm:$0xff]
    %v3306 = vld [vmem:[#allocation3 + $0x1f0] sm:$0xff]
    %v3307 = vld [vmem:[#allocation3 + $0x1f8] sm:$0xff]
    %v3308 = vld [vmem:[#allocation3 + $0x200] sm:$0xff]
    %v3309 = vld [vmem:[#allocation3 + $0x208] sm:$0xff]
    %v3310 = vld [vmem:[#allocation3 + $0x210] sm:$0xff]
    %v3311 = vld [vmem:[#allocation3 + $0x218] sm:$0xff]
    %v3312 = vld [vmem:[#allocation3 + $0x220] sm:$0xff]
    %v3313 = vld [vmem:[#allocation3 + $0x228] sm:$0xff]
    %v3314 = vld [vmem:[#allocation3 + $0x230] sm:$0xff]
    %v3315 = vld [vmem:[#allocation3 + $0x238] sm:$0xff]
    %v3316 = vld [vmem:[#allocation3 + $0x240] sm:$0xff]
    %v3317 = vld [vmem:[#allocation3 + $0x248] sm:$0xff]
    %v3318 = vld [vmem:[#allocation3 + $0x250] sm:$0xff]
    %v3319 = vld [vmem:[#allocation3 + $0x258] sm:$0xff]
    %v3320 = vld [vmem:[#allocation3 + $0x260] sm:$0xff]
    %v3321 = vld [vmem:[#allocation3 + $0x268] sm:$0xff]
    %v3322 = vld [vmem:[#allocation3 + $0x270] sm:$0xff]
    %v3323 = vld [vmem:[#allocation3 + $0x278] sm:$0xff]
    %v3324 = vld [vmem:[#allocation3 + $0x280] sm:$0xff]
    %v3325 = vld [vmem:[#allocation3 + $0x288] sm:$0xff]
    %v3326 = vld [vmem:[#allocation3 + $0x290] sm:$0xff]
    %v3327 = vld [vmem:[#allocation3 + $0x298] sm:$0xff]
    %v3328 = vld [vmem:[#allocation3 + $0x2a0] sm:$0xff]
    %v3329 = vld [vmem:[#allocation3 + $0x2a8] sm:$0xff]
    %v3330 = vld [vmem:[#allocation3 + $0x2b0] sm:$0xff]
    %v3331 = vld [vmem:[#allocation3 + $0x2b8] sm:$0xff]
    %v3332 = vld [vmem:[#allocation3 + $0x2c0] sm:$0xff]
    %v3333 = vld [vmem:[#allocation3 + $0x2c8] sm:$0xff]
    %v3334 = vld [vmem:[#allocation3 + $0x2d0] sm:$0xff]
    %v3335 = vld [vmem:[#allocation3 + $0x2d8] sm:$0xff]
    %v3336 = vld [vmem:[#allocation3 + $0x2e0] sm:$0xff]
    %v3337 = vld [vmem:[#allocation3 + $0x2e8] sm:$0xff]
    %v3338 = vld [vmem:[#allocation3 + $0x2f0] sm:$0xff]
    %v3339 = vld [vmem:[#allocation3 + $0x2f8] sm:$0xff]
    %v3340 = vld [vmem:[#allocation3 + $0x300] sm:$0xff]
    %v3341 = vld [vmem:[#allocation3 + $0x308] sm:$0xff]
    %v3342 = vld [vmem:[#allocation3 + $0x310] sm:$0xff]
    %v3343 = vld [vmem:[#allocation3 + $0x318] sm:$0xff]
    %v3344 = vld [vmem:[#allocation3 + $0x320] sm:$0xff]
    %v3345 = vld [vmem:[#allocation3 + $0x328] sm:$0xff]
    %v3346 = vld [vmem:[#allocation3 + $0x330] sm:$0xff]
    %v3347 = vld [vmem:[#allocation3 + $0x338] sm:$0xff]
    %v3348 = vld [vmem:[#allocation3 + $0x340] sm:$0xff]
    %v3349 = vld [vmem:[#allocation3 + $0x348] sm:$0xff]
    %v3350 = vld [vmem:[#allocation3 + $0x350] sm:$0xff]
    %v3351 = vld [vmem:[#allocation3 + $0x358] sm:$0xff]
    %v3352 = vld [vmem:[#allocation3 + $0x360] sm:$0xff]
    %v3353 = vld [vmem:[#allocation3 + $0x368] sm:$0xff]
    %v3354 = vld [vmem:[#allocation3 + $0x370] sm:$0xff]
    %v3355 = vld [vmem:[#allocation3 + $0x378] sm:$0xff]
    %v3356 = vld [vmem:[#allocation3 + $0x380] sm:$0xff]
    %v3357 = vld [vmem:[#allocation3 + $0x388] sm:$0xff]
    %v3358 = vld [vmem:[#allocation3 + $0x390] sm:$0xff]
    %v3359 = vld [vmem:[#allocation3 + $0x398] sm:$0xff]
    %v3360 = vld [vmem:[#allocation3 + $0x3a0] sm:$0xff]
    %v3361 = vld [vmem:[#allocation3 + $0x3a8] sm:$0xff]
    %v3362 = vld [vmem:[#allocation3 + $0x3b0] sm:$0xff]
    %v3363 = vld [vmem:[#allocation3 + $0x3b8] sm:$0xff]
    %v3364 = vld [vmem:[#allocation3 + $0x3c0] sm:$0xff]
    %v3365 = vld [vmem:[#allocation3 + $0x3c8] sm:$0xff]
    %v3366 = vld [vmem:[#allocation3 + $0x3d0] sm:$0xff]
    %v3367 = vld [vmem:[#allocation3 + $0x3d8] sm:$0xff]
    %v3368 = vld [vmem:[#allocation3 + $0x3e0] sm:$0xff]
    %v3369 = vld [vmem:[#allocation3 + $0x3e8] sm:$0xff]
    %v3370 = vld [vmem:[#allocation3 + $0x3f0] sm:$0xff]
    %v3371 = vld [vmem:[#allocation3 + $0x3f8] sm:$0xff]
    %v3372 = vld [vmem:[#allocation23] sm:$0xff]
    %v3373 = vld [vmem:[#allocation3 + $0x400] sm:$0xff]
    %v3374 = vld [vmem:[#allocation3 + $0x408] sm:$0xff]
    %v3375 = vld [vmem:[#allocation3 + $0x410] sm:$0xff]
    %v3376 = vld [vmem:[#allocation3 + $0x418] sm:$0xff]
    %v3377 = vld [vmem:[#allocation3 + $0x420] sm:$0xff]
    %v3378 = vld [vmem:[#allocation3 + $0x428] sm:$0xff]
    %v3379 = vld [vmem:[#allocation3 + $0x430] sm:$0xff]
    %v3380 = vld [vmem:[#allocation3 + $0x438] sm:$0xff]
    %vm3381 = vcmask 64512
    %v3383 = vsel %vm3381, %v3372, 0
    %3385 = vmatprep.subr.mxu0 0.0
    %3386 = vmatpush1.msra.mxu0 0.0
    %3387 = vmatprep.subr.mxu0 0.0
    %3388 = vmatpush1.msra.mxu0 0.0
    %3389 = vmatprep.subr.mxu0 0.0
    %3390 = vmatpush1.msra.mxu0 0.0
    %3391 = vmatprep.subr.mxu0 0.0
    %3392 = vmatpush1.msra.mxu0 0.0
    %3393 = vmatprep.subr.mxu0 0.0
    %3394 = vmatpush1.msra.mxu0 0.0
    %3395 = vmatprep.subr.mxu0 0.0
    %3396 = vmatpush1.msra.mxu0 0.0
    %3397 = vmatprep.subr.mxu0 0.0
    %3398 = vmatpush1.msra.mxu0 0.0
    %3399 = vmatprep.subr.mxu0 0.0
    %3400 = vmatpush1.msra.mxu0 0.0
    %3401 = vmatprep.subr.mxu0 0.0
    %3402 = vmatpush1.msra.mxu0 0.0
    %3403 = vmatprep.subr.mxu0 0.0
    %3404 = vmatpush1.msra.mxu0 0.0
    %3405 = vmatprep.subr.mxu0 0.0
    %3406 = vmatpush1.msra.mxu0 0.0
    %3407 = vmatprep.subr.mxu0 0.0
    %3408 = vmatpush1.msra.mxu0 0.0
    %3409 = vmatprep.subr.mxu0 0.0
    %3410 = vmatpush1.msra.mxu0 0.0
    %3411 = vmatprep.subr.mxu0 0.0
    %3412 = vmatpush1.msra.mxu0 0.0
    %3413 = vmatprep.subr.mxu0 0.0
    %3414 = vmatpush1.msra.mxu0 0.0
    %3415 = vmatprep.subr.mxu0 %v3374
    %3416 = vmatpush1.msra.mxu0 %v3373
    %3417 = vmatprep.subr.mxu0 0.0
    %3418 = vmatpush2.msra.mxu0 0.0
    %3419 = vmatprep.subr.mxu0 0.0
    %3420 = vmatpush2.msra.mxu0 0.0
    %3421 = vmatprep.subr.mxu0 0.0
    %3422 = vmatpush2.msra.mxu0 0.0
    %3423 = vmatprep.subr.mxu0 0.0
    %3424 = vmatpush2.msra.mxu0 0.0
    %3425 = vmatprep.subr.mxu0 0.0
    %3426 = vmatpush2.msra.mxu0 0.0
    %3427 = vmatprep.subr.mxu0 0.0
    %3428 = vmatpush2.msra.mxu0 0.0
    %3429 = vmatprep.subr.mxu0 0.0
    %3430 = vmatpush2.msra.mxu0 0.0
    %3431 = vmatprep.subr.mxu0 0.0
    %3432 = vmatpush2.msra.mxu0 0.0
    %3433 = vmatprep.subr.mxu0 0.0
    %3434 = vmatpush2.msra.mxu0 0.0
    %3435 = vmatprep.subr.mxu0 0.0
    %3436 = vmatpush2.msra.mxu0 0.0
    %3437 = vmatprep.subr.mxu0 0.0
    %3438 = vmatpush2.msra.mxu0 0.0
    %3439 = vmatprep.subr.mxu0 0.0
    %3440 = vmatpush2.msra.mxu0 0.0
    %3441 = vmatprep.subr.mxu0 0.0
    %3442 = vmatpush2.msra.mxu0 0.0
    %3443 = vmatprep.subr.mxu0 0.0
    %3444 = vmatpush2.msra.mxu0 0.0
    %3445 = vmatprep.subr.mxu0 0.0
    %3446 = vmatpush2.msra.mxu0 0.0
    %3447 = vmatprep.subr.mxu0 0.0
    %3448 = vmatpush2.msra.mxu0 0.0
    %3449 = vmatprep.mubr.f32.mxu0 0.0
    %3450 = vmatmul.mubr.f32.gmra.mxu0 %v3383
    %v3451 = vpop.f32.mrf.mxu0
    %v3452 = vadd.f32 0.0, %v3451
    %v3453 = vpop.f32.mrf.mxu0
    %v3454 = vadd.f32 0.0, %v3453
    %3455 = vdwg.mxu0
    %3456 = vmatprep.subr.mxu0 0.0
    %3457 = vmatpush1.msra.mxu0 0.0
    %3458 = vmatprep.subr.mxu0 0.0
    %3459 = vmatpush1.msra.mxu0 0.0
    %3460 = vmatprep.subr.mxu0 0.0
    %3461 = vmatpush1.msra.mxu0 0.0
    %3462 = vmatprep.subr.mxu0 0.0
    %3463 = vmatpush1.msra.mxu0 0.0
    %3464 = vmatprep.subr.mxu0 0.0
    %3465 = vmatpush1.msra.mxu0 0.0
    %3466 = vmatprep.subr.mxu0 0.0
    %3467 = vmatpush1.msra.mxu0 0.0
    %3468 = vmatprep.subr.mxu0 0.0
    %3469 = vmatpush1.msra.mxu0 0.0
    %3470 = vmatprep.subr.mxu0 0.0
    %3471 = vmatpush1.msra.mxu0 0.0
    %3472 = vmatprep.subr.mxu0 0.0
    %3473 = vmatpush1.msra.mxu0 0.0
    %3474 = vmatprep.subr.mxu0 0.0
    %3475 = vmatpush1.msra.mxu0 0.0
    %3476 = vmatprep.subr.mxu0 0.0
    %3477 = vmatpush1.msra.mxu0 0.0
    %3478 = vmatprep.subr.mxu0 0.0
    %3479 = vmatpush1.msra.mxu0 0.0
    %3480 = vmatprep.subr.mxu0 0.0
    %3481 = vmatpush1.msra.mxu0 0.0
    %3482 = vmatprep.subr.mxu0 0.0
    %3483 = vmatpush1.msra.mxu0 0.0
    %3484 = vmatprep.subr.mxu0 0.0
    %3485 = vmatpush1.msra.mxu0 0.0
    %3486 = vmatprep.subr.mxu0 %v3376
    %3487 = vmatpush1.msra.mxu0 %v3375
    %3488 = vmatprep.subr.mxu0 0.0
    %3489 = vmatpush2.msra.mxu0 0.0
    %3490 = vmatprep.subr.mxu0 0.0
    %3491 = vmatpush2.msra.mxu0 0.0
    %3492 = vmatprep.subr.mxu0 0.0
    %3493 = vmatpush2.msra.mxu0 0.0
    %3494 = vmatprep.subr.mxu0 0.0
    %3495 = vmatpush2.msra.mxu0 0.0
    %3496 = vmatprep.subr.mxu0 0.0
    %3497 = vmatpush2.msra.mxu0 0.0
    %3498 = vmatprep.subr.mxu0 0.0
    %3499 = vmatpush2.msra.mxu0 0.0
    %3500 = vmatprep.subr.mxu0 0.0
    %3501 = vmatpush2.msra.mxu0 0.0
    %3502 = vmatprep.subr.mxu0 0.0
    %3503 = vmatpush2.msra.mxu0 0.0
    %3504 = vmatprep.subr.mxu0 0.0
    %3505 = vmatpush2.msra.mxu0 0.0
    %3506 = vmatprep.subr.mxu0 0.0
    %3507 = vmatpush2.msra.mxu0 0.0
    %3508 = vmatprep.subr.mxu0 0.0
    %3509 = vmatpush2.msra.mxu0 0.0
    %3510 = vmatprep.subr.mxu0 0.0
    %3511 = vmatpush2.msra.mxu0 0.0
    %3512 = vmatprep.subr.mxu0 0.0
    %3513 = vmatpush2.msra.mxu0 0.0
    %3514 = vmatprep.subr.mxu0 0.0
    %3515 = vmatpush2.msra.mxu0 0.0
    %3516 = vmatprep.subr.mxu0 0.0
    %3517 = vmatpush2.msra.mxu0 0.0
    %3518 = vmatprep.subr.mxu0 0.0
    %3519 = vmatpush2.msra.mxu0 0.0
    %3520 = vmatprep.mubr.f32.mxu0 0.0
    %3521 = vmatmul.mubr.f32.gmra.mxu0 %v3383
    %v3522 = vpop.f32.mrf.mxu0
    %v3523 = vadd.f32 0.0, %v3522
    %v3524 = vpop.f32.mrf.mxu0
    %v3525 = vadd.f32 0.0, %v3524
    %3526 = vdwg.mxu0
    %3527 = vmatprep.subr.mxu0 0.0
    %3528 = vmatpush1.msra.mxu0 0.0
    %3529 = vmatprep.subr.mxu0 0.0
    %3530 = vmatpush1.msra.mxu0 0.0
    %3531 = vmatprep.subr.mxu0 0.0
    %3532 = vmatpush1.msra.mxu0 0.0
    %3533 = vmatprep.subr.mxu0 0.0
    %3534 = vmatpush1.msra.mxu0 0.0
    %3535 = vmatprep.subr.mxu0 0.0
    %3536 = vmatpush1.msra.mxu0 0.0
    %3537 = vmatprep.subr.mxu0 0.0
    %3538 = vmatpush1.msra.mxu0 0.0
    %3539 = vmatprep.subr.mxu0 0.0
    %3540 = vmatpush1.msra.mxu0 0.0
    %3541 = vmatprep.subr.mxu0 0.0
    %3542 = vmatpush1.msra.mxu0 0.0
    %3543 = vmatprep.subr.mxu0 0.0
    %3544 = vmatpush1.msra.mxu0 0.0
    %3545 = vmatprep.subr.mxu0 0.0
    %3546 = vmatpush1.msra.mxu0 0.0
    %3547 = vmatprep.subr.mxu0 0.0
    %3548 = vmatpush1.msra.mxu0 0.0
    %3549 = vmatprep.subr.mxu0 0.0
    %3550 = vmatpush1.msra.mxu0 0.0
    %3551 = vmatprep.subr.mxu0 0.0
    %3552 = vmatpush1.msra.mxu0 0.0
    %3553 = vmatprep.subr.mxu0 0.0
    %3554 = vmatpush1.msra.mxu0 0.0
    %3555 = vmatprep.subr.mxu0 0.0
    %3556 = vmatpush1.msra.mxu0 0.0
    %3557 = vmatprep.subr.mxu0 %v3378
    %3558 = vmatpush1.msra.mxu0 %v3377
    %3559 = vmatprep.subr.mxu0 0.0
    %3560 = vmatpush2.msra.mxu0 0.0
    %3561 = vmatprep.subr.mxu0 0.0
    %3562 = vmatpush2.msra.mxu0 0.0
    %3563 = vmatprep.subr.mxu0 0.0
    %3564 = vmatpush2.msra.mxu0 0.0
    %3565 = vmatprep.subr.mxu0 0.0
    %3566 = vmatpush2.msra.mxu0 0.0
    %3567 = vmatprep.subr.mxu0 0.0
    %3568 = vmatpush2.msra.mxu0 0.0
    %3569 = vmatprep.subr.mxu0 0.0
    %3570 = vmatpush2.msra.mxu0 0.0
    %3571 = vmatprep.subr.mxu0 0.0
    %3572 = vmatpush2.msra.mxu0 0.0
    %3573 = vmatprep.subr.mxu0 0.0
    %3574 = vmatpush2.msra.mxu0 0.0
    %3575 = vmatprep.subr.mxu0 0.0
    %3576 = vmatpush2.msra.mxu0 0.0
    %3577 = vmatprep.subr.mxu0 0.0
    %3578 = vmatpush2.msra.mxu0 0.0
    %3579 = vmatprep.subr.mxu0 0.0
    %3580 = vmatpush2.msra.mxu0 0.0
    %3581 = vmatprep.subr.mxu0 0.0
    %3582 = vmatpush2.msra.mxu0 0.0
    %3583 = vmatprep.subr.mxu0 0.0
    %3584 = vmatpush2.msra.mxu0 0.0
    %3585 = vmatprep.subr.mxu0 0.0
    %3586 = vmatpush2.msra.mxu0 0.0
    %3587 = vmatprep.subr.mxu0 0.0
    %3588 = vmatpush2.msra.mxu0 0.0
    %3589 = vmatprep.subr.mxu0 0.0
    %3590 = vmatpush2.msra.mxu0 0.0
    %3591 = vmatprep.mubr.f32.mxu0 0.0
    %3592 = vmatmul.mubr.f32.gmra.mxu0 %v3383
    %v3593 = vpop.f32.mrf.mxu0
    %v3594 = vadd.f32 0.0, %v3593
    %v3595 = vpop.f32.mrf.mxu0
    %v3596 = vadd.f32 0.0, %v3595
    %3597 = vdwg.mxu0
    %3598 = vmatprep.subr.mxu0 0.0
    %3599 = vmatpush1.msra.mxu0 0.0
    %3600 = vmatprep.subr.mxu0 0.0
    %3601 = vmatpush1.msra.mxu0 0.0
    %3602 = vmatprep.subr.mxu0 0.0
    %3603 = vmatpush1.msra.mxu0 0.0
    %3604 = vmatprep.subr.mxu0 0.0
    %3605 = vmatpush1.msra.mxu0 0.0
    %3606 = vmatprep.subr.mxu0 0.0
    %3607 = vmatpush1.msra.mxu0 0.0
    %3608 = vmatprep.subr.mxu0 0.0
    %3609 = vmatpush1.msra.mxu0 0.0
    %3610 = vmatprep.subr.mxu0 0.0
    %3611 = vmatpush1.msra.mxu0 0.0
    %3612 = vmatprep.subr.mxu0 0.0
    %3613 = vmatpush1.msra.mxu0 0.0
    %3614 = vmatprep.subr.mxu0 0.0
    %3615 = vmatpush1.msra.mxu0 0.0
    %3616 = vmatprep.subr.mxu0 0.0
    %3617 = vmatpush1.msra.mxu0 0.0
    %3618 = vmatprep.subr.mxu0 0.0
    %3619 = vmatpush1.msra.mxu0 0.0
    %3620 = vmatprep.subr.mxu0 0.0
    %3621 = vmatpush1.msra.mxu0 0.0
    %3622 = vmatprep.subr.mxu0 0.0
    %3623 = vmatpush1.msra.mxu0 0.0
    %3624 = vmatprep.subr.mxu0 0.0
    %3625 = vmatpush1.msra.mxu0 0.0
    %3626 = vmatprep.subr.mxu0 0.0
    %3627 = vmatpush1.msra.mxu0 0.0
    %3628 = vmatprep.subr.mxu0 %v3380
    %3629 = vmatpush1.msra.mxu0 %v3379
    %3630 = vmatprep.subr.mxu0 0.0
    %3631 = vmatpush2.msra.mxu0 0.0
    %3632 = vmatprep.subr.mxu0 0.0
    %3633 = vmatpush2.msra.mxu0 0.0
    %3634 = vmatprep.subr.mxu0 0.0
    %3635 = vmatpush2.msra.mxu0 0.0
    %3636 = vmatprep.subr.mxu0 0.0
    %3637 = vmatpush2.msra.mxu0 0.0
    %3638 = vmatprep.subr.mxu0 0.0
    %3639 = vmatpush2.msra.mxu0 0.0
    %3640 = vmatprep.subr.mxu0 0.0
    %3641 = vmatpush2.msra.mxu0 0.0
    %3642 = vmatprep.subr.mxu0 0.0
    %3643 = vmatpush2.msra.mxu0 0.0
    %3644 = vmatprep.subr.mxu0 0.0
    %3645 = vmatpush2.msra.mxu0 0.0
    %3646 = vmatprep.subr.mxu0 0.0
    %3647 = vmatpush2.msra.mxu0 0.0
    %3648 = vmatprep.subr.mxu0 0.0
    %3649 = vmatpush2.msra.mxu0 0.0
    %3650 = vmatprep.subr.mxu0 0.0
    %3651 = vmatpush2.msra.mxu0 0.0
    %3652 = vmatprep.subr.mxu0 0.0
    %3653 = vmatpush2.msra.mxu0 0.0
    %3654 = vmatprep.subr.mxu0 0.0
    %3655 = vmatpush2.msra.mxu0 0.0
    %3656 = vmatprep.subr.mxu0 0.0
    %3657 = vmatpush2.msra.mxu0 0.0
    %3658 = vmatprep.subr.mxu0 0.0
    %3659 = vmatpush2.msra.mxu0 0.0
    %3660 = vmatprep.subr.mxu0 0.0
    %3661 = vmatpush2.msra.mxu0 0.0
    %3662 = vmatprep.mubr.f32.mxu0 0.0
    %3663 = vmatmul.mubr.f32.gmra.mxu0 %v3383
    %v3664 = vpop.f32.mrf.mxu0
    %v3665 = vadd.f32 0.0, %v3664
    %v3666 = vpop.f32.mrf.mxu0
    %v3667 = vadd.f32 0.0, %v3666
    %3668 = vdwg.mxu0
    %3669 = vmatprep.subr.mxu0 %v3365
    %3670 = vmatpush1.msra.mxu0 %v3364
    %3671 = vmatprep.subr.mxu0 %v3357
    %3672 = vmatpush1.msra.mxu0 %v3356
    %3673 = vmatprep.subr.mxu0 %v3349
    %3674 = vmatpush1.msra.mxu0 %v3348
    %3675 = vmatprep.subr.mxu0 %v3341
    %3676 = vmatpush1.msra.mxu0 %v3340
    %3677 = vmatprep.subr.mxu0 %v3333
    %3678 = vmatpush1.msra.mxu0 %v3332
    %3679 = vmatprep.subr.mxu0 %v3325
    %3680 = vmatpush1.msra.mxu0 %v3324
    %3681 = vmatprep.subr.mxu0 %v3317
    %3682 = vmatpush1.msra.mxu0 %v3316
    %3683 = vmatprep.subr.mxu0 %v3309
    %3684 = vmatpush1.msra.mxu0 %v3308
    %3685 = vmatprep.subr.mxu0 %v3301
    %3686 = vmatpush1.msra.mxu0 %v3300
    %3687 = vmatprep.subr.mxu0 %v3293
    %3688 = vmatpush1.msra.mxu0 %v3292
    %3689 = vmatprep.subr.mxu0 %v3285
    %3690 = vmatpush1.msra.mxu0 %v3284
    %3691 = vmatprep.subr.mxu0 %v3277
    %3692 = vmatpush1.msra.mxu0 %v3276
    %3693 = vmatprep.subr.mxu0 %v3269
    %3694 = vmatpush1.msra.mxu0 %v3268
    %3695 = vmatprep.subr.mxu0 %v3261
    %3696 = vmatpush1.msra.mxu0 %v3260
    %3697 = vmatprep.subr.mxu0 %v3253
    %3698 = vmatpush1.msra.mxu0 %v3252
    %3699 = vmatprep.subr.mxu0 %v3245
    %3700 = vmatpush1.msra.mxu0 %v3244
    %3701 = vmatprep.subr.mxu0 0.0
    %3702 = vmatpush2.msra.mxu0 0.0
    %3703 = vmatprep.subr.mxu0 0.0
    %3704 = vmatpush2.msra.mxu0 0.0
    %3705 = vmatprep.subr.mxu0 0.0
    %3706 = vmatpush2.msra.mxu0 0.0
    %3707 = vmatprep.subr.mxu0 0.0
    %3708 = vmatpush2.msra.mxu0 0.0
    %3709 = vmatprep.subr.mxu0 0.0
    %3710 = vmatpush2.msra.mxu0 0.0
    %3711 = vmatprep.subr.mxu0 0.0
    %3712 = vmatpush2.msra.mxu0 0.0
    %3713 = vmatprep.subr.mxu0 0.0
    %3714 = vmatpush2.msra.mxu0 0.0
    %3715 = vmatprep.subr.mxu0 0.0
    %3716 = vmatpush2.msra.mxu0 0.0
    %3717 = vmatprep.subr.mxu0 0.0
    %3718 = vmatpush2.msra.mxu0 0.0
    %3719 = vmatprep.subr.mxu0 0.0
    %3720 = vmatpush2.msra.mxu0 0.0
    %3721 = vmatprep.subr.mxu0 0.0
    %3722 = vmatpush2.msra.mxu0 0.0
    %3723 = vmatprep.subr.mxu0 0.0
    %3724 = vmatpush2.msra.mxu0 0.0
    %3725 = vmatprep.subr.mxu0 0.0
    %3726 = vmatpush2.msra.mxu0 0.0
    %3727 = vmatprep.subr.mxu0 0.0
    %3728 = vmatpush2.msra.mxu0 0.0
    %3729 = vmatprep.subr.mxu0 0.0
    %3730 = vmatpush2.msra.mxu0 0.0
    %3731 = vmatprep.subr.mxu0 0.0
    %3732 = vmatpush2.msra.mxu0 0.0
    %3733 = vmatprep.mubr.f32.mxu0 0.0
    %3734 = vmatmul.mubr.f32.gmra.mxu0 %v3208
    %v3735 = vpop.f32.mrf.mxu0
    %v3736 = vadd.f32 %v3452, %v3735
    %v3737 = vpop.f32.mrf.mxu0
    %v3738 = vadd.f32 %v3454, %v3737
    %3739 = vdwg.mxu0
    %3740 = vmatprep.subr.mxu0 %v3367
    %3741 = vmatpush1.msra.mxu0 %v3366
    %3742 = vmatprep.subr.mxu0 %v3359
    %3743 = vmatpush1.msra.mxu0 %v3358
    %3744 = vmatprep.subr.mxu0 %v3351
    %3745 = vmatpush1.msra.mxu0 %v3350
    %3746 = vmatprep.subr.mxu0 %v3343
    %3747 = vmatpush1.msra.mxu0 %v3342
    %3748 = vmatprep.subr.mxu0 %v3335
    %3749 = vmatpush1.msra.mxu0 %v3334
    %3750 = vmatprep.subr.mxu0 %v3327
    %3751 = vmatpush1.msra.mxu0 %v3326
    %3752 = vmatprep.subr.mxu0 %v3319
    %3753 = vmatpush1.msra.mxu0 %v3318
    %3754 = vmatprep.subr.mxu0 %v3311
    %3755 = vmatpush1.msra.mxu0 %v3310
    %3756 = vmatprep.subr.mxu0 %v3303
    %3757 = vmatpush1.msra.mxu0 %v3302
    %3758 = vmatprep.subr.mxu0 %v3295
    %3759 = vmatpush1.msra.mxu0 %v3294
    %3760 = vmatprep.subr.mxu0 %v3287
    %3761 = vmatpush1.msra.mxu0 %v3286
    %3762 = vmatprep.subr.mxu0 %v3279
    %3763 = vmatpush1.msra.mxu0 %v3278
    %3764 = vmatprep.subr.mxu0 %v3271
    %3765 = vmatpush1.msra.mxu0 %v3270
    %3766 = vmatprep.subr.mxu0 %v3263
    %3767 = vmatpush1.msra.mxu0 %v3262
    %3768 = vmatprep.subr.mxu0 %v3255
    %3769 = vmatpush1.msra.mxu0 %v3254
    %3770 = vmatprep.subr.mxu0 %v3247
    %3771 = vmatpush1.msra.mxu0 %v3246
    %3772 = vmatprep.subr.mxu0 0.0
    %3773 = vmatpush2.msra.mxu0 0.0
    %3774 = vmatprep.subr.mxu0 0.0
    %3775 = vmatpush2.msra.mxu0 0.0
    %3776 = vmatprep.subr.mxu0 0.0
    %3777 = vmatpush2.msra.mxu0 0.0
    %3778 = vmatprep.subr.mxu0 0.0
    %3779 = vmatpush2.msra.mxu0 0.0
    %3780 = vmatprep.subr.mxu0 0.0
    %3781 = vmatpush2.msra.mxu0 0.0
    %3782 = vmatprep.subr.mxu0 0.0
    %3783 = vmatpush2.msra.mxu0 0.0
    %3784 = vmatprep.subr.mxu0 0.0
    %3785 = vmatpush2.msra.mxu0 0.0
    %3786 = vmatprep.subr.mxu0 0.0
    %3787 = vmatpush2.msra.mxu0 0.0
    %3788 = vmatprep.subr.mxu0 0.0
    %3789 = vmatpush2.msra.mxu0 0.0
    %3790 = vmatprep.subr.mxu0 0.0
    %3791 = vmatpush2.msra.mxu0 0.0
    %3792 = vmatprep.subr.mxu0 0.0
    %3793 = vmatpush2.msra.mxu0 0.0
    %3794 = vmatprep.subr.mxu0 0.0
    %3795 = vmatpush2.msra.mxu0 0.0
    %3796 = vmatprep.subr.mxu0 0.0
    %3797 = vmatpush2.msra.mxu0 0.0
    %3798 = vmatprep.subr.mxu0 0.0
    %3799 = vmatpush2.msra.mxu0 0.0
    %3800 = vmatprep.subr.mxu0 0.0
    %3801 = vmatpush2.msra.mxu0 0.0
    %3802 = vmatprep.subr.mxu0 0.0
    %3803 = vmatpush2.msra.mxu0 0.0
    %3804 = vmatprep.mubr.f32.mxu0 0.0
    %3805 = vmatmul.mubr.f32.gmra.mxu0 %v3208
    %v3806 = vpop.f32.mrf.mxu0
    %v3807 = vadd.f32 %v3523, %v3806
    %v3808 = vpop.f32.mrf.mxu0
    %v3809 = vadd.f32 %v3525, %v3808
    %3810 = vdwg.mxu0
    %3811 = vmatprep.subr.mxu0 %v3369
    %3812 = vmatpush1.msra.mxu0 %v3368
    %3813 = vmatprep.subr.mxu0 %v3361
    %3814 = vmatpush1.msra.mxu0 %v3360
    %3815 = vmatprep.subr.mxu0 %v3353
    %3816 = vmatpush1.msra.mxu0 %v3352
    %3817 = vmatprep.subr.mxu0 %v3345
    %3818 = vmatpush1.msra.mxu0 %v3344
    %3819 = vmatprep.subr.mxu0 %v3337
    %3820 = vmatpush1.msra.mxu0 %v3336
    %3821 = vmatprep.subr.mxu0 %v3329
    %3822 = vmatpush1.msra.mxu0 %v3328
    %3823 = vmatprep.subr.mxu0 %v3321
    %3824 = vmatpush1.msra.mxu0 %v3320
    %3825 = vmatprep.subr.mxu0 %v3313
    %3826 = vmatpush1.msra.mxu0 %v3312
    %3827 = vmatprep.subr.mxu0 %v3305
    %3828 = vmatpush1.msra.mxu0 %v3304
    %3829 = vmatprep.subr.mxu0 %v3297
    %3830 = vmatpush1.msra.mxu0 %v3296
    %3831 = vmatprep.subr.mxu0 %v3289
    %3832 = vmatpush1.msra.mxu0 %v3288
    %3833 = vmatprep.subr.mxu0 %v3281
    %3834 = vmatpush1.msra.mxu0 %v3280
    %3835 = vmatprep.subr.mxu0 %v3273
    %3836 = vmatpush1.msra.mxu0 %v3272
    %3837 = vmatprep.subr.mxu0 %v3265
    %3838 = vmatpush1.msra.mxu0 %v3264
    %3839 = vmatprep.subr.mxu0 %v3257
    %3840 = vmatpush1.msra.mxu0 %v3256
    %3841 = vmatprep.subr.mxu0 %v3249
    %3842 = vmatpush1.msra.mxu0 %v3248
    %3843 = vmatprep.subr.mxu0 0.0
    %3844 = vmatpush2.msra.mxu0 0.0
    %3845 = vmatprep.subr.mxu0 0.0
    %3846 = vmatpush2.msra.mxu0 0.0
    %3847 = vmatprep.subr.mxu0 0.0
    %3848 = vmatpush2.msra.mxu0 0.0
    %3849 = vmatprep.subr.mxu0 0.0
    %3850 = vmatpush2.msra.mxu0 0.0
    %3851 = vmatprep.subr.mxu0 0.0
    %3852 = vmatpush2.msra.mxu0 0.0
    %3853 = vmatprep.subr.mxu0 0.0
    %3854 = vmatpush2.msra.mxu0 0.0
    %3855 = vmatprep.subr.mxu0 0.0
    %3856 = vmatpush2.msra.mxu0 0.0
    %3857 = vmatprep.subr.mxu0 0.0
    %3858 = vmatpush2.msra.mxu0 0.0
    %3859 = vmatprep.subr.mxu0 0.0
    %3860 = vmatpush2.msra.mxu0 0.0
    %3861 = vmatprep.subr.mxu0 0.0
    %3862 = vmatpush2.msra.mxu0 0.0
    %3863 = vmatprep.subr.mxu0 0.0
    %3864 = vmatpush2.msra.mxu0 0.0
    %3865 = vmatprep.subr.mxu0 0.0
    %3866 = vmatpush2.msra.mxu0 0.0
    %3867 = vmatprep.subr.mxu0 0.0
    %3868 = vmatpush2.msra.mxu0 0.0
    %3869 = vmatprep.subr.mxu0 0.0
    %3870 = vmatpush2.msra.mxu0 0.0
    %3871 = vmatprep.subr.mxu0 0.0
    %3872 = vmatpush2.msra.mxu0 0.0
    %3873 = vmatprep.subr.mxu0 0.0
    %3874 = vmatpush2.msra.mxu0 0.0
    %3875 = vmatprep.mubr.f32.mxu0 0.0
    %3876 = vmatmul.mubr.f32.gmra.mxu0 %v3208
    %v3877 = vpop.f32.mrf.mxu0
    %v3878 = vadd.f32 %v3594, %v3877
    %v3879 = vpop.f32.mrf.mxu0
    %v3880 = vadd.f32 %v3596, %v3879
    %3881 = vdwg.mxu0
    %3882 = vmatprep.subr.mxu0 %v3371
    %3883 = vmatpush1.msra.mxu0 %v3370
    %3884 = vmatprep.subr.mxu0 %v3363
    %3885 = vmatpush1.msra.mxu0 %v3362
    %3886 = vmatprep.subr.mxu0 %v3355
    %3887 = vmatpush1.msra.mxu0 %v3354
    %3888 = vmatprep.subr.mxu0 %v3347
    %3889 = vmatpush1.msra.mxu0 %v3346
    %3890 = vmatprep.subr.mxu0 %v3339
    %3891 = vmatpush1.msra.mxu0 %v3338
    %3892 = vmatprep.subr.mxu0 %v3331
    %3893 = vmatpush1.msra.mxu0 %v3330
    %3894 = vmatprep.subr.mxu0 %v3323
    %3895 = vmatpush1.msra.mxu0 %v3322
    %3896 = vmatprep.subr.mxu0 %v3315
    %3897 = vmatpush1.msra.mxu0 %v3314
    %3898 = vmatprep.subr.mxu0 %v3307
    %3899 = vmatpush1.msra.mxu0 %v3306
    %3900 = vmatprep.subr.mxu0 %v3299
    %3901 = vmatpush1.msra.mxu0 %v3298
    %3902 = vmatprep.subr.mxu0 %v3291
    %3903 = vmatpush1.msra.mxu0 %v3290
    %3904 = vmatprep.subr.mxu0 %v3283
    %3905 = vmatpush1.msra.mxu0 %v3282
    %3906 = vmatprep.subr.mxu0 %v3275
    %3907 = vmatpush1.msra.mxu0 %v3274
    %3908 = vmatprep.subr.mxu0 %v3267
    %3909 = vmatpush1.msra.mxu0 %v3266
    %3910 = vmatprep.subr.mxu0 %v3259
    %3911 = vmatpush1.msra.mxu0 %v3258
    %3912 = vmatprep.subr.mxu0 %v3251
    %3913 = vmatpush1.msra.mxu0 %v3250
    %3914 = vmatprep.subr.mxu0 0.0
    %3915 = vmatpush2.msra.mxu0 0.0
    %3916 = vmatprep.subr.mxu0 0.0
    %3917 = vmatpush2.msra.mxu0 0.0
    %3918 = vmatprep.subr.mxu0 0.0
    %3919 = vmatpush2.msra.mxu0 0.0
    %3920 = vmatprep.subr.mxu0 0.0
    %3921 = vmatpush2.msra.mxu0 0.0
    %3922 = vmatprep.subr.mxu0 0.0
    %3923 = vmatpush2.msra.mxu0 0.0
    %3924 = vmatprep.subr.mxu0 0.0
    %3925 = vmatpush2.msra.mxu0 0.0
    %3926 = vmatprep.subr.mxu0 0.0
    %3927 = vmatpush2.msra.mxu0 0.0
    %3928 = vmatprep.subr.mxu0 0.0
    %3929 = vmatpush2.msra.mxu0 0.0
    %3930 = vmatprep.subr.mxu0 0.0
    %3931 = vmatpush2.msra.mxu0 0.0
    %3932 = vmatprep.subr.mxu0 0.0
    %3933 = vmatpush2.msra.mxu0 0.0
    %3934 = vmatprep.subr.mxu0 0.0
    %3935 = vmatpush2.msra.mxu0 0.0
    %3936 = vmatprep.subr.mxu0 0.0
    %3937 = vmatpush2.msra.mxu0 0.0
    %3938 = vmatprep.subr.mxu0 0.0
    %3939 = vmatpush2.msra.mxu0 0.0
    %3940 = vmatprep.subr.mxu0 0.0
    %3941 = vmatpush2.msra.mxu0 0.0
    %3942 = vmatprep.subr.mxu0 0.0
    %3943 = vmatpush2.msra.mxu0 0.0
    %3944 = vmatprep.subr.mxu0 0.0
    %3945 = vmatpush2.msra.mxu0 0.0
    %3946 = vmatprep.mubr.f32.mxu0 0.0
    %3947 = vmatmul.mubr.f32.gmra.mxu0 %v3208
    %v3948 = vpop.f32.mrf.mxu0
    %v3949 = vadd.f32 %v3665, %v3948
    %v3950 = vpop.f32.mrf.mxu0
    %v3951 = vadd.f32 %v3667, %v3950
    %3952 = vdwg.mxu0
    %v3953 = vld [vmem:[#allocation25] sm:$0xff]
    %v3955 = vlaneseq
    %v3956 = vshrl.u32 %v3955, 7
    %v3957 = vsub.s32 0, %v3956
    %v3958 = vrot.slane %v3953, %v3957
    %v3959 = vlaneseq
    %v3960 = vshrl.u32 %v3959, 7
    %v3961 = vsub.s32 1, %v3960
    %v3962 = vrot.slane %v3953, %v3961
    %v3963 = vlaneseq
    %v3964 = vshrl.u32 %v3963, 7
    %v3965 = vsub.s32 2, %v3964
    %v3966 = vrot.slane %v3953, %v3965
    %v3967 = vlaneseq
    %v3968 = vshrl.u32 %v3967, 7
    %v3969 = vsub.s32 3, %v3968
    %v3970 = vrot.slane %v3953, %v3969
    %v3971 = vlaneseq
    %v3972 = vshrl.u32 %v3971, 7
    %v3973 = vsub.s32 4, %v3972
    %v3974 = vrot.slane %v3953, %v3973
    %v3975 = vlaneseq
    %v3976 = vshrl.u32 %v3975, 7
    %v3977 = vsub.s32 5, %v3976
    %v3978 = vrot.slane %v3953, %v3977
    %v3979 = vlaneseq
    %v3980 = vshrl.u32 %v3979, 7
    %v3981 = vsub.s32 6, %v3980
    %v3982 = vrot.slane %v3953, %v3981
    %v3983 = vlaneseq
    %v3984 = vshrl.u32 %v3983, 7
    %v3985 = vsub.s32 7, %v3984
    %v3986 = vrot.slane %v3953, %v3985
    %v3995 = vadd.f32 %v3736, %v3958
    %v3996 = vadd.f32 %v3738, %v3962
    %v3997 = vadd.f32 %v3807, %v3966
    %v3998 = vadd.f32 %v3809, %v3970
    %v3999 = vadd.f32 %v3878, %v3974
    %v4000 = vadd.f32 %v3880, %v3978
    %v4001 = vadd.f32 %v3949, %v3982
    %v4002 = vadd.f32 %v3951, %v3986
    %v4003 = vmax.f32 %v3995, 0.0
    %v4004 = vmax.f32 %v3996, 0.0
    %v4005 = vmax.f32 %v3997, 0.0
    %v4006 = vmax.f32 %v3998, 0.0
    %v4007 = vmax.f32 %v3999, 0.0
    %v4008 = vmax.f32 %v4000, 0.0
    %v4009 = vmax.f32 %v4001, 0.0
    %v4010 = vmax.f32 %v4002, 0.0
    %v4011 = vld [vmem:[#allocation4] sm:$0xff]
    %v4012 = vld [vmem:[#allocation4 + $0x8] sm:$0xff]
    %v4013 = vld [vmem:[#allocation4 + $0x10] sm:$0xff]
    %v4014 = vld [vmem:[#allocation4 + $0x18] sm:$0xff]
    %v4015 = vld [vmem:[#allocation4 + $0x20] sm:$0xff]
    %v4016 = vld [vmem:[#allocation4 + $0x28] sm:$0xff]
    %v4017 = vld [vmem:[#allocation4 + $0x30] sm:$0xff]
    %v4018 = vld [vmem:[#allocation4 + $0x38] sm:$0xff]
    %v4019 = vld [vmem:[#allocation4 + $0x40] sm:$0xff]
    %v4020 = vld [vmem:[#allocation4 + $0x48] sm:$0xff]
    %v4021 = vld [vmem:[#allocation4 + $0x50] sm:$0xff]
    %v4022 = vld [vmem:[#allocation4 + $0x58] sm:$0xff]
    %v4023 = vld [vmem:[#allocation4 + $0x60] sm:$0xff]
    %v4024 = vld [vmem:[#allocation4 + $0x68] sm:$0xff]
    %v4025 = vld [vmem:[#allocation4 + $0x70] sm:$0xff]
    %v4026 = vld [vmem:[#allocation4 + $0x78] sm:$0xff]
    %v4027 = vld [vmem:[#allocation4 + $0x80] sm:$0xff]
    %v4028 = vld [vmem:[#allocation4 + $0x88] sm:$0xff]
    %v4029 = vld [vmem:[#allocation4 + $0x90] sm:$0xff]
    %v4030 = vld [vmem:[#allocation4 + $0x98] sm:$0xff]
    %v4031 = vld [vmem:[#allocation4 + $0xa0] sm:$0xff]
    %v4032 = vld [vmem:[#allocation4 + $0xa8] sm:$0xff]
    %v4033 = vld [vmem:[#allocation4 + $0xb0] sm:$0xff]
    %v4034 = vld [vmem:[#allocation4 + $0xb8] sm:$0xff]
    %v4035 = vld [vmem:[#allocation4 + $0xc0] sm:$0xff]
    %v4036 = vld [vmem:[#allocation4 + $0xc8] sm:$0xff]
    %v4037 = vld [vmem:[#allocation4 + $0xd0] sm:$0xff]
    %v4038 = vld [vmem:[#allocation4 + $0xd8] sm:$0xff]
    %v4039 = vld [vmem:[#allocation4 + $0xe0] sm:$0xff]
    %v4040 = vld [vmem:[#allocation4 + $0xe8] sm:$0xff]
    %v4041 = vld [vmem:[#allocation4 + $0xf0] sm:$0xff]
    %v4042 = vld [vmem:[#allocation4 + $0xf8] sm:$0xff]
    %v4043 = vld [vmem:[#allocation4 + $0x100] sm:$0xff]
    %v4044 = vld [vmem:[#allocation4 + $0x108] sm:$0xff]
    %v4045 = vld [vmem:[#allocation4 + $0x110] sm:$0xff]
    %v4046 = vld [vmem:[#allocation4 + $0x118] sm:$0xff]
    %v4047 = vld [vmem:[#allocation4 + $0x120] sm:$0xff]
    %v4048 = vld [vmem:[#allocation4 + $0x128] sm:$0xff]
    %v4049 = vld [vmem:[#allocation4 + $0x130] sm:$0xff]
    %v4050 = vld [vmem:[#allocation4 + $0x138] sm:$0xff]
    %v4051 = vld [vmem:[#allocation4 + $0x140] sm:$0xff]
    %v4052 = vld [vmem:[#allocation4 + $0x148] sm:$0xff]
    %v4053 = vld [vmem:[#allocation4 + $0x150] sm:$0xff]
    %v4054 = vld [vmem:[#allocation4 + $0x158] sm:$0xff]
    %v4055 = vld [vmem:[#allocation4 + $0x160] sm:$0xff]
    %v4056 = vld [vmem:[#allocation4 + $0x168] sm:$0xff]
    %v4057 = vld [vmem:[#allocation4 + $0x170] sm:$0xff]
    %v4058 = vld [vmem:[#allocation4 + $0x178] sm:$0xff]
    %v4059 = vld [vmem:[#allocation4 + $0x180] sm:$0xff]
    %v4060 = vld [vmem:[#allocation4 + $0x188] sm:$0xff]
    %v4061 = vld [vmem:[#allocation4 + $0x190] sm:$0xff]
    %v4062 = vld [vmem:[#allocation4 + $0x198] sm:$0xff]
    %v4063 = vld [vmem:[#allocation4 + $0x1a0] sm:$0xff]
    %v4064 = vld [vmem:[#allocation4 + $0x1a8] sm:$0xff]
    %v4065 = vld [vmem:[#allocation4 + $0x1b0] sm:$0xff]
    %v4066 = vld [vmem:[#allocation4 + $0x1b8] sm:$0xff]
    %v4067 = vld [vmem:[#allocation4 + $0x1c0] sm:$0xff]
    %v4068 = vld [vmem:[#allocation4 + $0x1c8] sm:$0xff]
    %v4069 = vld [vmem:[#allocation4 + $0x1d0] sm:$0xff]
    %v4070 = vld [vmem:[#allocation4 + $0x1d8] sm:$0xff]
    %v4071 = vld [vmem:[#allocation4 + $0x1e0] sm:$0xff]
    %v4072 = vld [vmem:[#allocation4 + $0x1e8] sm:$0xff]
    %v4073 = vld [vmem:[#allocation4 + $0x1f0] sm:$0xff]
    %v4074 = vld [vmem:[#allocation4 + $0x1f8] sm:$0xff]
    %v4075 = vld [vmem:[#allocation4 + $0x200] sm:$0xff]
    %v4076 = vld [vmem:[#allocation4 + $0x208] sm:$0xff]
    %v4077 = vld [vmem:[#allocation4 + $0x210] sm:$0xff]
    %v4078 = vld [vmem:[#allocation4 + $0x218] sm:$0xff]
    %v4079 = vld [vmem:[#allocation4 + $0x220] sm:$0xff]
    %v4080 = vld [vmem:[#allocation4 + $0x228] sm:$0xff]
    %v4081 = vld [vmem:[#allocation4 + $0x230] sm:$0xff]
    %v4082 = vld [vmem:[#allocation4 + $0x238] sm:$0xff]
    %v4083 = vld [vmem:[#allocation4 + $0x240] sm:$0xff]
    %v4084 = vld [vmem:[#allocation4 + $0x248] sm:$0xff]
    %v4085 = vld [vmem:[#allocation4 + $0x250] sm:$0xff]
    %v4086 = vld [vmem:[#allocation4 + $0x258] sm:$0xff]
    %v4087 = vld [vmem:[#allocation4 + $0x260] sm:$0xff]
    %v4088 = vld [vmem:[#allocation4 + $0x268] sm:$0xff]
    %v4089 = vld [vmem:[#allocation4 + $0x270] sm:$0xff]
    %v4090 = vld [vmem:[#allocation4 + $0x278] sm:$0xff]
    %v4091 = vld [vmem:[#allocation4 + $0x280] sm:$0xff]
    %v4092 = vld [vmem:[#allocation4 + $0x288] sm:$0xff]
    %v4093 = vld [vmem:[#allocation4 + $0x290] sm:$0xff]
    %v4094 = vld [vmem:[#allocation4 + $0x298] sm:$0xff]
    %v4095 = vld [vmem:[#allocation4 + $0x2a0] sm:$0xff]
    %v4096 = vld [vmem:[#allocation4 + $0x2a8] sm:$0xff]
    %v4097 = vld [vmem:[#allocation4 + $0x2b0] sm:$0xff]
    %v4098 = vld [vmem:[#allocation4 + $0x2b8] sm:$0xff]
    %v4099 = vld [vmem:[#allocation4 + $0x2c0] sm:$0xff]
    %v4100 = vld [vmem:[#allocation4 + $0x2c8] sm:$0xff]
    %v4101 = vld [vmem:[#allocation4 + $0x2d0] sm:$0xff]
    %v4102 = vld [vmem:[#allocation4 + $0x2d8] sm:$0xff]
    %v4103 = vld [vmem:[#allocation4 + $0x2e0] sm:$0xff]
    %v4104 = vld [vmem:[#allocation4 + $0x2e8] sm:$0xff]
    %v4105 = vld [vmem:[#allocation4 + $0x2f0] sm:$0xff]
    %v4106 = vld [vmem:[#allocation4 + $0x2f8] sm:$0xff]
    %v4107 = vld [vmem:[#allocation4 + $0x300] sm:$0xff]
    %v4108 = vld [vmem:[#allocation4 + $0x308] sm:$0xff]
    %v4109 = vld [vmem:[#allocation4 + $0x310] sm:$0xff]
    %v4110 = vld [vmem:[#allocation4 + $0x318] sm:$0xff]
    %v4111 = vld [vmem:[#allocation4 + $0x320] sm:$0xff]
    %v4112 = vld [vmem:[#allocation4 + $0x328] sm:$0xff]
    %v4113 = vld [vmem:[#allocation4 + $0x330] sm:$0xff]
    %v4114 = vld [vmem:[#allocation4 + $0x338] sm:$0xff]
    %v4115 = vld [vmem:[#allocation4 + $0x340] sm:$0xff]
    %v4116 = vld [vmem:[#allocation4 + $0x348] sm:$0xff]
    %v4117 = vld [vmem:[#allocation4 + $0x350] sm:$0xff]
    %v4118 = vld [vmem:[#allocation4 + $0x358] sm:$0xff]
    %v4119 = vld [vmem:[#allocation4 + $0x360] sm:$0xff]
    %v4120 = vld [vmem:[#allocation4 + $0x368] sm:$0xff]
    %v4121 = vld [vmem:[#allocation4 + $0x370] sm:$0xff]
    %v4122 = vld [vmem:[#allocation4 + $0x378] sm:$0xff]
    %v4123 = vld [vmem:[#allocation4 + $0x380] sm:$0xff]
    %v4124 = vld [vmem:[#allocation4 + $0x388] sm:$0xff]
    %v4125 = vld [vmem:[#allocation4 + $0x390] sm:$0xff]
    %v4126 = vld [vmem:[#allocation4 + $0x398] sm:$0xff]
    %v4127 = vld [vmem:[#allocation4 + $0x3a0] sm:$0xff]
    %v4128 = vld [vmem:[#allocation4 + $0x3a8] sm:$0xff]
    %v4129 = vld [vmem:[#allocation4 + $0x3b0] sm:$0xff]
    %v4130 = vld [vmem:[#allocation4 + $0x3b8] sm:$0xff]
    %v4131 = vld [vmem:[#allocation4 + $0x3c0] sm:$0xff]
    %v4132 = vld [vmem:[#allocation4 + $0x3c8] sm:$0xff]
    %v4133 = vld [vmem:[#allocation4 + $0x3d0] sm:$0xff]
    %v4134 = vld [vmem:[#allocation4 + $0x3d8] sm:$0xff]
    %v4135 = vld [vmem:[#allocation4 + $0x3e0] sm:$0xff]
    %v4136 = vld [vmem:[#allocation4 + $0x3e8] sm:$0xff]
    %v4137 = vld [vmem:[#allocation4 + $0x3f0] sm:$0xff]
    %v4138 = vld [vmem:[#allocation4 + $0x3f8] sm:$0xff]
    %v4139 = vld [vmem:[#allocation4 + $0x400] sm:$0xff]
    %v4140 = vld [vmem:[#allocation4 + $0x408] sm:$0xff]
    %v4141 = vld [vmem:[#allocation4 + $0x410] sm:$0xff]
    %v4142 = vld [vmem:[#allocation4 + $0x418] sm:$0xff]
    %v4143 = vld [vmem:[#allocation4 + $0x420] sm:$0xff]
    %v4144 = vld [vmem:[#allocation4 + $0x428] sm:$0xff]
    %v4145 = vld [vmem:[#allocation4 + $0x430] sm:$0xff]
    %v4146 = vld [vmem:[#allocation4 + $0x438] sm:$0xff]
    %v4147 = vld [vmem:[#allocation4 + $0x440] sm:$0xff]
    %v4148 = vld [vmem:[#allocation4 + $0x448] sm:$0xff]
    %v4149 = vld [vmem:[#allocation4 + $0x450] sm:$0xff]
    %v4150 = vld [vmem:[#allocation4 + $0x458] sm:$0xff]
    %v4151 = vld [vmem:[#allocation4 + $0x460] sm:$0xff]
    %v4152 = vld [vmem:[#allocation4 + $0x468] sm:$0xff]
    %v4153 = vld [vmem:[#allocation4 + $0x470] sm:$0xff]
    %v4154 = vld [vmem:[#allocation4 + $0x478] sm:$0xff]
    %v4155 = vld [vmem:[#allocation4 + $0x480] sm:$0xff]
    %v4156 = vld [vmem:[#allocation4 + $0x488] sm:$0xff]
    %v4157 = vld [vmem:[#allocation4 + $0x490] sm:$0xff]
    %v4158 = vld [vmem:[#allocation4 + $0x498] sm:$0xff]
    %v4159 = vld [vmem:[#allocation4 + $0x4a0] sm:$0xff]
    %v4160 = vld [vmem:[#allocation4 + $0x4a8] sm:$0xff]
    %v4161 = vld [vmem:[#allocation4 + $0x4b0] sm:$0xff]
    %v4162 = vld [vmem:[#allocation4 + $0x4b8] sm:$0xff]
    %v4163 = vld [vmem:[#allocation4 + $0x4c0] sm:$0xff]
    %v4164 = vld [vmem:[#allocation4 + $0x4c8] sm:$0xff]
    %v4165 = vld [vmem:[#allocation4 + $0x4d0] sm:$0xff]
    %v4166 = vld [vmem:[#allocation4 + $0x4d8] sm:$0xff]
    %v4167 = vld [vmem:[#allocation4 + $0x4e0] sm:$0xff]
    %v4168 = vld [vmem:[#allocation4 + $0x4e8] sm:$0xff]
    %v4169 = vld [vmem:[#allocation4 + $0x4f0] sm:$0xff]
    %v4170 = vld [vmem:[#allocation4 + $0x4f8] sm:$0xff]
    %v4171 = vld [vmem:[#allocation4 + $0x500] sm:$0xff]
    %v4172 = vld [vmem:[#allocation4 + $0x508] sm:$0xff]
    %v4173 = vld [vmem:[#allocation4 + $0x510] sm:$0xff]
    %v4174 = vld [vmem:[#allocation4 + $0x518] sm:$0xff]
    %v4175 = vld [vmem:[#allocation4 + $0x520] sm:$0xff]
    %v4176 = vld [vmem:[#allocation4 + $0x528] sm:$0xff]
    %v4177 = vld [vmem:[#allocation4 + $0x530] sm:$0xff]
    %v4178 = vld [vmem:[#allocation4 + $0x538] sm:$0xff]
    %v4179 = vld [vmem:[#allocation4 + $0x540] sm:$0xff]
    %v4180 = vld [vmem:[#allocation4 + $0x548] sm:$0xff]
    %v4181 = vld [vmem:[#allocation4 + $0x550] sm:$0xff]
    %v4182 = vld [vmem:[#allocation4 + $0x558] sm:$0xff]
    %v4183 = vld [vmem:[#allocation4 + $0x560] sm:$0xff]
    %v4184 = vld [vmem:[#allocation4 + $0x568] sm:$0xff]
    %v4185 = vld [vmem:[#allocation4 + $0x570] sm:$0xff]
    %v4186 = vld [vmem:[#allocation4 + $0x578] sm:$0xff]
    %v4187 = vld [vmem:[#allocation4 + $0x580] sm:$0xff]
    %v4188 = vld [vmem:[#allocation4 + $0x588] sm:$0xff]
    %v4189 = vld [vmem:[#allocation4 + $0x590] sm:$0xff]
    %v4190 = vld [vmem:[#allocation4 + $0x598] sm:$0xff]
    %v4191 = vld [vmem:[#allocation4 + $0x5a0] sm:$0xff]
    %v4192 = vld [vmem:[#allocation4 + $0x5a8] sm:$0xff]
    %v4193 = vld [vmem:[#allocation4 + $0x5b0] sm:$0xff]
    %v4194 = vld [vmem:[#allocation4 + $0x5b8] sm:$0xff]
    %v4195 = vld [vmem:[#allocation4 + $0x5c0] sm:$0xff]
    %v4196 = vld [vmem:[#allocation4 + $0x5c8] sm:$0xff]
    %v4197 = vld [vmem:[#allocation4 + $0x5d0] sm:$0xff]
    %v4198 = vld [vmem:[#allocation4 + $0x5d8] sm:$0xff]
    %v4199 = vld [vmem:[#allocation4 + $0x5e0] sm:$0xff]
    %v4200 = vld [vmem:[#allocation4 + $0x5e8] sm:$0xff]
    %v4201 = vld [vmem:[#allocation4 + $0x5f0] sm:$0xff]
    %v4202 = vld [vmem:[#allocation4 + $0x5f8] sm:$0xff]
    %v4203 = vld [vmem:[#allocation4 + $0x600] sm:$0xff]
    %v4204 = vld [vmem:[#allocation4 + $0x608] sm:$0xff]
    %v4205 = vld [vmem:[#allocation4 + $0x610] sm:$0xff]
    %v4206 = vld [vmem:[#allocation4 + $0x618] sm:$0xff]
    %v4207 = vld [vmem:[#allocation4 + $0x620] sm:$0xff]
    %v4208 = vld [vmem:[#allocation4 + $0x628] sm:$0xff]
    %v4209 = vld [vmem:[#allocation4 + $0x630] sm:$0xff]
    %v4210 = vld [vmem:[#allocation4 + $0x638] sm:$0xff]
    %v4211 = vld [vmem:[#allocation4 + $0x640] sm:$0xff]
    %v4212 = vld [vmem:[#allocation4 + $0x648] sm:$0xff]
    %v4213 = vld [vmem:[#allocation4 + $0x650] sm:$0xff]
    %v4214 = vld [vmem:[#allocation4 + $0x658] sm:$0xff]
    %v4215 = vld [vmem:[#allocation4 + $0x660] sm:$0xff]
    %v4216 = vld [vmem:[#allocation4 + $0x668] sm:$0xff]
    %v4217 = vld [vmem:[#allocation4 + $0x670] sm:$0xff]
    %v4218 = vld [vmem:[#allocation4 + $0x678] sm:$0xff]
    %v4219 = vld [vmem:[#allocation4 + $0x680] sm:$0xff]
    %v4220 = vld [vmem:[#allocation4 + $0x688] sm:$0xff]
    %v4221 = vld [vmem:[#allocation4 + $0x690] sm:$0xff]
    %v4222 = vld [vmem:[#allocation4 + $0x698] sm:$0xff]
    %v4223 = vld [vmem:[#allocation4 + $0x6a0] sm:$0xff]
    %v4224 = vld [vmem:[#allocation4 + $0x6a8] sm:$0xff]
    %v4225 = vld [vmem:[#allocation4 + $0x6b0] sm:$0xff]
    %v4226 = vld [vmem:[#allocation4 + $0x6b8] sm:$0xff]
    %v4227 = vld [vmem:[#allocation4 + $0x6c0] sm:$0xff]
    %v4228 = vld [vmem:[#allocation4 + $0x6c8] sm:$0xff]
    %v4229 = vld [vmem:[#allocation4 + $0x6d0] sm:$0xff]
    %v4230 = vld [vmem:[#allocation4 + $0x6d8] sm:$0xff]
    %v4231 = vld [vmem:[#allocation4 + $0x6e0] sm:$0xff]
    %v4232 = vld [vmem:[#allocation4 + $0x6e8] sm:$0xff]
    %v4233 = vld [vmem:[#allocation4 + $0x6f0] sm:$0xff]
    %v4234 = vld [vmem:[#allocation4 + $0x6f8] sm:$0xff]
    %v4235 = vld [vmem:[#allocation4 + $0x700] sm:$0xff]
    %v4236 = vld [vmem:[#allocation4 + $0x708] sm:$0xff]
    %v4237 = vld [vmem:[#allocation4 + $0x710] sm:$0xff]
    %v4238 = vld [vmem:[#allocation4 + $0x718] sm:$0xff]
    %v4239 = vld [vmem:[#allocation4 + $0x720] sm:$0xff]
    %v4240 = vld [vmem:[#allocation4 + $0x728] sm:$0xff]
    %v4241 = vld [vmem:[#allocation4 + $0x730] sm:$0xff]
    %v4242 = vld [vmem:[#allocation4 + $0x738] sm:$0xff]
    %v4243 = vld [vmem:[#allocation4 + $0x740] sm:$0xff]
    %v4244 = vld [vmem:[#allocation4 + $0x748] sm:$0xff]
    %v4245 = vld [vmem:[#allocation4 + $0x750] sm:$0xff]
    %v4246 = vld [vmem:[#allocation4 + $0x758] sm:$0xff]
    %v4247 = vld [vmem:[#allocation4 + $0x760] sm:$0xff]
    %v4248 = vld [vmem:[#allocation4 + $0x768] sm:$0xff]
    %v4249 = vld [vmem:[#allocation4 + $0x770] sm:$0xff]
    %v4250 = vld [vmem:[#allocation4 + $0x778] sm:$0xff]
    %v4251 = vld [vmem:[#allocation4 + $0x780] sm:$0xff]
    %v4252 = vld [vmem:[#allocation4 + $0x788] sm:$0xff]
    %v4253 = vld [vmem:[#allocation4 + $0x790] sm:$0xff]
    %v4254 = vld [vmem:[#allocation4 + $0x798] sm:$0xff]
    %v4255 = vld [vmem:[#allocation4 + $0x7a0] sm:$0xff]
    %v4256 = vld [vmem:[#allocation4 + $0x7a8] sm:$0xff]
    %v4257 = vld [vmem:[#allocation4 + $0x7b0] sm:$0xff]
    %v4258 = vld [vmem:[#allocation4 + $0x7b8] sm:$0xff]
    %v4259 = vld [vmem:[#allocation4 + $0x7c0] sm:$0xff]
    %v4260 = vld [vmem:[#allocation4 + $0x7c8] sm:$0xff]
    %v4261 = vld [vmem:[#allocation4 + $0x7d0] sm:$0xff]
    %v4262 = vld [vmem:[#allocation4 + $0x7d8] sm:$0xff]
    %v4263 = vld [vmem:[#allocation4 + $0x7e0] sm:$0xff]
    %v4264 = vld [vmem:[#allocation4 + $0x7e8] sm:$0xff]
    %v4265 = vld [vmem:[#allocation4 + $0x7f0] sm:$0xff]
    %v4266 = vld [vmem:[#allocation4 + $0x7f8] sm:$0xff]
    %v4267 = vld [vmem:[#allocation4 + $0x800] sm:$0xff]
    %v4268 = vld [vmem:[#allocation4 + $0x808] sm:$0xff]
    %v4269 = vld [vmem:[#allocation4 + $0x810] sm:$0xff]
    %v4270 = vld [vmem:[#allocation4 + $0x818] sm:$0xff]
    %v4271 = vld [vmem:[#allocation4 + $0x820] sm:$0xff]
    %v4272 = vld [vmem:[#allocation4 + $0x828] sm:$0xff]
    %v4273 = vld [vmem:[#allocation4 + $0x830] sm:$0xff]
    %v4274 = vld [vmem:[#allocation4 + $0x838] sm:$0xff]
    %v4275 = vld [vmem:[#allocation4 + $0x840] sm:$0xff]
    %v4276 = vld [vmem:[#allocation4 + $0x848] sm:$0xff]
    %v4277 = vld [vmem:[#allocation4 + $0x850] sm:$0xff]
    %v4278 = vld [vmem:[#allocation4 + $0x858] sm:$0xff]
    %v4279 = vld [vmem:[#allocation4 + $0x860] sm:$0xff]
    %v4280 = vld [vmem:[#allocation4 + $0x868] sm:$0xff]
    %v4281 = vld [vmem:[#allocation4 + $0x870] sm:$0xff]
    %v4282 = vld [vmem:[#allocation4 + $0x878] sm:$0xff]
    %v4283 = vld [vmem:[#allocation4 + $0x880] sm:$0xff]
    %v4284 = vld [vmem:[#allocation4 + $0x888] sm:$0xff]
    %v4285 = vld [vmem:[#allocation4 + $0x890] sm:$0xff]
    %v4286 = vld [vmem:[#allocation4 + $0x898] sm:$0xff]
    %v4287 = vld [vmem:[#allocation4 + $0x8a0] sm:$0xff]
    %v4288 = vld [vmem:[#allocation4 + $0x8a8] sm:$0xff]
    %v4289 = vld [vmem:[#allocation4 + $0x8b0] sm:$0xff]
    %v4290 = vld [vmem:[#allocation4 + $0x8b8] sm:$0xff]
    %v4291 = vld [vmem:[#allocation4 + $0x8c0] sm:$0xff]
    %v4292 = vld [vmem:[#allocation4 + $0x8c8] sm:$0xff]
    %v4293 = vld [vmem:[#allocation4 + $0x8d0] sm:$0xff]
    %v4294 = vld [vmem:[#allocation4 + $0x8d8] sm:$0xff]
    %v4295 = vld [vmem:[#allocation4 + $0x8e0] sm:$0xff]
    %v4296 = vld [vmem:[#allocation4 + $0x8e8] sm:$0xff]
    %v4297 = vld [vmem:[#allocation4 + $0x8f0] sm:$0xff]
    %v4298 = vld [vmem:[#allocation4 + $0x8f8] sm:$0xff]
    %v4299 = vld [vmem:[#allocation4 + $0x900] sm:$0xff]
    %v4300 = vld [vmem:[#allocation4 + $0x908] sm:$0xff]
    %v4301 = vld [vmem:[#allocation4 + $0x910] sm:$0xff]
    %v4302 = vld [vmem:[#allocation4 + $0x918] sm:$0xff]
    %v4303 = vld [vmem:[#allocation4 + $0x920] sm:$0xff]
    %v4304 = vld [vmem:[#allocation4 + $0x928] sm:$0xff]
    %v4305 = vld [vmem:[#allocation4 + $0x930] sm:$0xff]
    %v4306 = vld [vmem:[#allocation4 + $0x938] sm:$0xff]
    %v4307 = vld [vmem:[#allocation4 + $0x940] sm:$0xff]
    %v4308 = vld [vmem:[#allocation4 + $0x948] sm:$0xff]
    %v4309 = vld [vmem:[#allocation4 + $0x950] sm:$0xff]
    %v4310 = vld [vmem:[#allocation4 + $0x958] sm:$0xff]
    %v4311 = vld [vmem:[#allocation4 + $0x960] sm:$0xff]
    %v4312 = vld [vmem:[#allocation4 + $0x968] sm:$0xff]
    %v4313 = vld [vmem:[#allocation4 + $0x970] sm:$0xff]
    %v4314 = vld [vmem:[#allocation4 + $0x978] sm:$0xff]
    %v4315 = vld [vmem:[#allocation4 + $0x980] sm:$0xff]
    %v4316 = vld [vmem:[#allocation4 + $0x988] sm:$0xff]
    %v4317 = vld [vmem:[#allocation4 + $0x990] sm:$0xff]
    %v4318 = vld [vmem:[#allocation4 + $0x998] sm:$0xff]
    %v4319 = vld [vmem:[#allocation4 + $0x9a0] sm:$0xff]
    %v4320 = vld [vmem:[#allocation4 + $0x9a8] sm:$0xff]
    %v4321 = vld [vmem:[#allocation4 + $0x9b0] sm:$0xff]
    %v4322 = vld [vmem:[#allocation4 + $0x9b8] sm:$0xff]
    %v4323 = vld [vmem:[#allocation4 + $0x9c0] sm:$0xff]
    %v4324 = vld [vmem:[#allocation4 + $0x9c8] sm:$0xff]
    %v4325 = vld [vmem:[#allocation4 + $0x9d0] sm:$0xff]
    %v4326 = vld [vmem:[#allocation4 + $0x9d8] sm:$0xff]
    %v4327 = vld [vmem:[#allocation4 + $0x9e0] sm:$0xff]
    %v4328 = vld [vmem:[#allocation4 + $0x9e8] sm:$0xff]
    %v4329 = vld [vmem:[#allocation4 + $0x9f0] sm:$0xff]
    %v4330 = vld [vmem:[#allocation4 + $0x9f8] sm:$0xff]
    %v4331 = vld [vmem:[#allocation4 + $0xa00] sm:$0xff]
    %v4332 = vld [vmem:[#allocation4 + $0xa08] sm:$0xff]
    %v4333 = vld [vmem:[#allocation4 + $0xa10] sm:$0xff]
    %v4334 = vld [vmem:[#allocation4 + $0xa18] sm:$0xff]
    %v4335 = vld [vmem:[#allocation4 + $0xa20] sm:$0xff]
    %v4336 = vld [vmem:[#allocation4 + $0xa28] sm:$0xff]
    %v4337 = vld [vmem:[#allocation4 + $0xa30] sm:$0xff]
    %v4338 = vld [vmem:[#allocation4 + $0xa38] sm:$0xff]
    %v4339 = vld [vmem:[#allocation4 + $0xa40] sm:$0xff]
    %v4340 = vld [vmem:[#allocation4 + $0xa48] sm:$0xff]
    %v4341 = vld [vmem:[#allocation4 + $0xa50] sm:$0xff]
    %v4342 = vld [vmem:[#allocation4 + $0xa58] sm:$0xff]
    %v4343 = vld [vmem:[#allocation4 + $0xa60] sm:$0xff]
    %v4344 = vld [vmem:[#allocation4 + $0xa68] sm:$0xff]
    %v4345 = vld [vmem:[#allocation4 + $0xa70] sm:$0xff]
    %v4346 = vld [vmem:[#allocation4 + $0xa78] sm:$0xff]
    %v4347 = vld [vmem:[#allocation4 + $0xa80] sm:$0xff]
    %v4348 = vld [vmem:[#allocation4 + $0xa88] sm:$0xff]
    %v4349 = vld [vmem:[#allocation4 + $0xa90] sm:$0xff]
    %v4350 = vld [vmem:[#allocation4 + $0xa98] sm:$0xff]
    %v4351 = vld [vmem:[#allocation4 + $0xaa0] sm:$0xff]
    %v4352 = vld [vmem:[#allocation4 + $0xaa8] sm:$0xff]
    %v4353 = vld [vmem:[#allocation4 + $0xab0] sm:$0xff]
    %v4354 = vld [vmem:[#allocation4 + $0xab8] sm:$0xff]
    %v4355 = vld [vmem:[#allocation4 + $0xac0] sm:$0xff]
    %v4356 = vld [vmem:[#allocation4 + $0xac8] sm:$0xff]
    %v4357 = vld [vmem:[#allocation4 + $0xad0] sm:$0xff]
    %v4358 = vld [vmem:[#allocation4 + $0xad8] sm:$0xff]
    %v4359 = vld [vmem:[#allocation4 + $0xae0] sm:$0xff]
    %v4360 = vld [vmem:[#allocation4 + $0xae8] sm:$0xff]
    %v4361 = vld [vmem:[#allocation4 + $0xaf0] sm:$0xff]
    %v4362 = vld [vmem:[#allocation4 + $0xaf8] sm:$0xff]
    %v4363 = vld [vmem:[#allocation4 + $0xb00] sm:$0xff]
    %v4364 = vld [vmem:[#allocation4 + $0xb08] sm:$0xff]
    %v4365 = vld [vmem:[#allocation4 + $0xb10] sm:$0xff]
    %v4366 = vld [vmem:[#allocation4 + $0xb18] sm:$0xff]
    %v4367 = vld [vmem:[#allocation4 + $0xb20] sm:$0xff]
    %v4368 = vld [vmem:[#allocation4 + $0xb28] sm:$0xff]
    %v4369 = vld [vmem:[#allocation4 + $0xb30] sm:$0xff]
    %v4370 = vld [vmem:[#allocation4 + $0xb38] sm:$0xff]
    %v4371 = vld [vmem:[#allocation4 + $0xb40] sm:$0xff]
    %v4372 = vld [vmem:[#allocation4 + $0xb48] sm:$0xff]
    %v4373 = vld [vmem:[#allocation4 + $0xb50] sm:$0xff]
    %v4374 = vld [vmem:[#allocation4 + $0xb58] sm:$0xff]
    %v4375 = vld [vmem:[#allocation4 + $0xb60] sm:$0xff]
    %v4376 = vld [vmem:[#allocation4 + $0xb68] sm:$0xff]
    %v4377 = vld [vmem:[#allocation4 + $0xb70] sm:$0xff]
    %v4378 = vld [vmem:[#allocation4 + $0xb78] sm:$0xff]
    %v4379 = vld [vmem:[#allocation4 + $0xb80] sm:$0xff]
    %v4380 = vld [vmem:[#allocation4 + $0xb88] sm:$0xff]
    %v4381 = vld [vmem:[#allocation4 + $0xb90] sm:$0xff]
    %v4382 = vld [vmem:[#allocation4 + $0xb98] sm:$0xff]
    %v4383 = vld [vmem:[#allocation4 + $0xba0] sm:$0xff]
    %v4384 = vld [vmem:[#allocation4 + $0xba8] sm:$0xff]
    %v4385 = vld [vmem:[#allocation4 + $0xbb0] sm:$0xff]
    %v4386 = vld [vmem:[#allocation4 + $0xbb8] sm:$0xff]
    %v4387 = vld [vmem:[#allocation4 + $0xbc0] sm:$0xff]
    %v4388 = vld [vmem:[#allocation4 + $0xbc8] sm:$0xff]
    %v4389 = vld [vmem:[#allocation4 + $0xbd0] sm:$0xff]
    %v4390 = vld [vmem:[#allocation4 + $0xbd8] sm:$0xff]
    %v4391 = vld [vmem:[#allocation4 + $0xbe0] sm:$0xff]
    %v4392 = vld [vmem:[#allocation4 + $0xbe8] sm:$0xff]
    %v4393 = vld [vmem:[#allocation4 + $0xbf0] sm:$0xff]
    %v4394 = vld [vmem:[#allocation4 + $0xbf8] sm:$0xff]
    %v4395 = vld [vmem:[#allocation4 + $0xc00] sm:$0xff]
    %v4396 = vld [vmem:[#allocation4 + $0xc08] sm:$0xff]
    %v4397 = vld [vmem:[#allocation4 + $0xc10] sm:$0xff]
    %v4398 = vld [vmem:[#allocation4 + $0xc18] sm:$0xff]
    %v4399 = vld [vmem:[#allocation4 + $0xc20] sm:$0xff]
    %v4400 = vld [vmem:[#allocation4 + $0xc28] sm:$0xff]
    %v4401 = vld [vmem:[#allocation4 + $0xc30] sm:$0xff]
    %v4402 = vld [vmem:[#allocation4 + $0xc38] sm:$0xff]
    %v4403 = vld [vmem:[#allocation4 + $0xc40] sm:$0xff]
    %v4404 = vld [vmem:[#allocation4 + $0xc48] sm:$0xff]
    %v4405 = vld [vmem:[#allocation4 + $0xc50] sm:$0xff]
    %v4406 = vld [vmem:[#allocation4 + $0xc58] sm:$0xff]
    %v4407 = vld [vmem:[#allocation4 + $0xc60] sm:$0xff]
    %v4408 = vld [vmem:[#allocation4 + $0xc68] sm:$0xff]
    %v4409 = vld [vmem:[#allocation4 + $0xc70] sm:$0xff]
    %v4410 = vld [vmem:[#allocation4 + $0xc78] sm:$0xff]
    %v4411 = vld [vmem:[#allocation4 + $0xc80] sm:$0xff]
    %v4412 = vld [vmem:[#allocation4 + $0xc88] sm:$0xff]
    %v4413 = vld [vmem:[#allocation4 + $0xc90] sm:$0xff]
    %v4414 = vld [vmem:[#allocation4 + $0xc98] sm:$0xff]
    %v4415 = vld [vmem:[#allocation4 + $0xca0] sm:$0xff]
    %v4416 = vld [vmem:[#allocation4 + $0xca8] sm:$0xff]
    %v4417 = vld [vmem:[#allocation4 + $0xcb0] sm:$0xff]
    %v4418 = vld [vmem:[#allocation4 + $0xcb8] sm:$0xff]
    %v4419 = vld [vmem:[#allocation4 + $0xcc0] sm:$0xff]
    %v4420 = vld [vmem:[#allocation4 + $0xcc8] sm:$0xff]
    %v4421 = vld [vmem:[#allocation4 + $0xcd0] sm:$0xff]
    %v4422 = vld [vmem:[#allocation4 + $0xcd8] sm:$0xff]
    %v4423 = vld [vmem:[#allocation4 + $0xce0] sm:$0xff]
    %v4424 = vld [vmem:[#allocation4 + $0xce8] sm:$0xff]
    %v4425 = vld [vmem:[#allocation4 + $0xcf0] sm:$0xff]
    %v4426 = vld [vmem:[#allocation4 + $0xcf8] sm:$0xff]
    %v4427 = vld [vmem:[#allocation4 + $0xd00] sm:$0xff]
    %v4428 = vld [vmem:[#allocation4 + $0xd08] sm:$0xff]
    %v4429 = vld [vmem:[#allocation4 + $0xd10] sm:$0xff]
    %v4430 = vld [vmem:[#allocation4 + $0xd18] sm:$0xff]
    %v4431 = vld [vmem:[#allocation4 + $0xd20] sm:$0xff]
    %v4432 = vld [vmem:[#allocation4 + $0xd28] sm:$0xff]
    %v4433 = vld [vmem:[#allocation4 + $0xd30] sm:$0xff]
    %v4434 = vld [vmem:[#allocation4 + $0xd38] sm:$0xff]
    %v4435 = vld [vmem:[#allocation4 + $0xd40] sm:$0xff]
    %v4436 = vld [vmem:[#allocation4 + $0xd48] sm:$0xff]
    %v4437 = vld [vmem:[#allocation4 + $0xd50] sm:$0xff]
    %v4438 = vld [vmem:[#allocation4 + $0xd58] sm:$0xff]
    %v4439 = vld [vmem:[#allocation4 + $0xd60] sm:$0xff]
    %v4440 = vld [vmem:[#allocation4 + $0xd68] sm:$0xff]
    %v4441 = vld [vmem:[#allocation4 + $0xd70] sm:$0xff]
    %v4442 = vld [vmem:[#allocation4 + $0xd78] sm:$0xff]
    %v4443 = vld [vmem:[#allocation4 + $0xd80] sm:$0xff]
    %v4444 = vld [vmem:[#allocation4 + $0xd88] sm:$0xff]
    %v4445 = vld [vmem:[#allocation4 + $0xd90] sm:$0xff]
    %v4446 = vld [vmem:[#allocation4 + $0xd98] sm:$0xff]
    %v4447 = vld [vmem:[#allocation4 + $0xda0] sm:$0xff]
    %v4448 = vld [vmem:[#allocation4 + $0xda8] sm:$0xff]
    %v4449 = vld [vmem:[#allocation4 + $0xdb0] sm:$0xff]
    %v4450 = vld [vmem:[#allocation4 + $0xdb8] sm:$0xff]
    %v4451 = vld [vmem:[#allocation4 + $0xdc0] sm:$0xff]
    %v4452 = vld [vmem:[#allocation4 + $0xdc8] sm:$0xff]
    %v4453 = vld [vmem:[#allocation4 + $0xdd0] sm:$0xff]
    %v4454 = vld [vmem:[#allocation4 + $0xdd8] sm:$0xff]
    %v4455 = vld [vmem:[#allocation4 + $0xde0] sm:$0xff]
    %v4456 = vld [vmem:[#allocation4 + $0xde8] sm:$0xff]
    %v4457 = vld [vmem:[#allocation4 + $0xdf0] sm:$0xff]
    %v4458 = vld [vmem:[#allocation4 + $0xdf8] sm:$0xff]
    %v4459 = vld [vmem:[#allocation4 + $0xe00] sm:$0xff]
    %v4460 = vld [vmem:[#allocation4 + $0xe08] sm:$0xff]
    %v4461 = vld [vmem:[#allocation4 + $0xe10] sm:$0xff]
    %v4462 = vld [vmem:[#allocation4 + $0xe18] sm:$0xff]
    %v4463 = vld [vmem:[#allocation4 + $0xe20] sm:$0xff]
    %v4464 = vld [vmem:[#allocation4 + $0xe28] sm:$0xff]
    %v4465 = vld [vmem:[#allocation4 + $0xe30] sm:$0xff]
    %v4466 = vld [vmem:[#allocation4 + $0xe38] sm:$0xff]
    %v4467 = vld [vmem:[#allocation4 + $0xe40] sm:$0xff]
    %v4468 = vld [vmem:[#allocation4 + $0xe48] sm:$0xff]
    %v4469 = vld [vmem:[#allocation4 + $0xe50] sm:$0xff]
    %v4470 = vld [vmem:[#allocation4 + $0xe58] sm:$0xff]
    %v4471 = vld [vmem:[#allocation4 + $0xe60] sm:$0xff]
    %v4472 = vld [vmem:[#allocation4 + $0xe68] sm:$0xff]
    %v4473 = vld [vmem:[#allocation4 + $0xe70] sm:$0xff]
    %v4474 = vld [vmem:[#allocation4 + $0xe78] sm:$0xff]
    %v4475 = vld [vmem:[#allocation4 + $0xe80] sm:$0xff]
    %v4476 = vld [vmem:[#allocation4 + $0xe88] sm:$0xff]
    %v4477 = vld [vmem:[#allocation4 + $0xe90] sm:$0xff]
    %v4478 = vld [vmem:[#allocation4 + $0xe98] sm:$0xff]
    %v4479 = vld [vmem:[#allocation4 + $0xea0] sm:$0xff]
    %v4480 = vld [vmem:[#allocation4 + $0xea8] sm:$0xff]
    %v4481 = vld [vmem:[#allocation4 + $0xeb0] sm:$0xff]
    %v4482 = vld [vmem:[#allocation4 + $0xeb8] sm:$0xff]
    %v4483 = vld [vmem:[#allocation4 + $0xec0] sm:$0xff]
    %v4484 = vld [vmem:[#allocation4 + $0xec8] sm:$0xff]
    %v4485 = vld [vmem:[#allocation4 + $0xed0] sm:$0xff]
    %v4486 = vld [vmem:[#allocation4 + $0xed8] sm:$0xff]
    %v4487 = vld [vmem:[#allocation4 + $0xee0] sm:$0xff]
    %v4488 = vld [vmem:[#allocation4 + $0xee8] sm:$0xff]
    %v4489 = vld [vmem:[#allocation4 + $0xef0] sm:$0xff]
    %v4490 = vld [vmem:[#allocation4 + $0xef8] sm:$0xff]
    %v4491 = vld [vmem:[#allocation4 + $0xf00] sm:$0xff]
    %v4492 = vld [vmem:[#allocation4 + $0xf08] sm:$0xff]
    %v4493 = vld [vmem:[#allocation4 + $0xf10] sm:$0xff]
    %v4494 = vld [vmem:[#allocation4 + $0xf18] sm:$0xff]
    %v4495 = vld [vmem:[#allocation4 + $0xf20] sm:$0xff]
    %v4496 = vld [vmem:[#allocation4 + $0xf28] sm:$0xff]
    %v4497 = vld [vmem:[#allocation4 + $0xf30] sm:$0xff]
    %v4498 = vld [vmem:[#allocation4 + $0xf38] sm:$0xff]
    %v4499 = vld [vmem:[#allocation4 + $0xf40] sm:$0xff]
    %v4500 = vld [vmem:[#allocation4 + $0xf48] sm:$0xff]
    %v4501 = vld [vmem:[#allocation4 + $0xf50] sm:$0xff]
    %v4502 = vld [vmem:[#allocation4 + $0xf58] sm:$0xff]
    %v4503 = vld [vmem:[#allocation4 + $0xf60] sm:$0xff]
    %v4504 = vld [vmem:[#allocation4 + $0xf68] sm:$0xff]
    %v4505 = vld [vmem:[#allocation4 + $0xf70] sm:$0xff]
    %v4506 = vld [vmem:[#allocation4 + $0xf78] sm:$0xff]
    %v4507 = vld [vmem:[#allocation4 + $0xf80] sm:$0xff]
    %v4508 = vld [vmem:[#allocation4 + $0xf88] sm:$0xff]
    %v4509 = vld [vmem:[#allocation4 + $0xf90] sm:$0xff]
    %v4510 = vld [vmem:[#allocation4 + $0xf98] sm:$0xff]
    %v4511 = vld [vmem:[#allocation4 + $0xfa0] sm:$0xff]
    %v4512 = vld [vmem:[#allocation4 + $0xfa8] sm:$0xff]
    %v4513 = vld [vmem:[#allocation4 + $0xfb0] sm:$0xff]
    %v4514 = vld [vmem:[#allocation4 + $0xfb8] sm:$0xff]
    %v4515 = vld [vmem:[#allocation4 + $0xfc0] sm:$0xff]
    %v4516 = vld [vmem:[#allocation4 + $0xfc8] sm:$0xff]
    %v4517 = vld [vmem:[#allocation4 + $0xfd0] sm:$0xff]
    %v4518 = vld [vmem:[#allocation4 + $0xfd8] sm:$0xff]
    %v4519 = vld [vmem:[#allocation4 + $0xfe0] sm:$0xff]
    %v4520 = vld [vmem:[#allocation4 + $0xfe8] sm:$0xff]
    %v4521 = vld [vmem:[#allocation4 + $0xff0] sm:$0xff]
    %v4522 = vld [vmem:[#allocation4 + $0xff8] sm:$0xff]
    %v4523 = vld [vmem:[#allocation26] sm:$0xf]
    %v4525 = vlaneseq
    %v4526 = vshrl.u32 %v4525, 7
    %v4527 = vsub.s32 0, %v4526
    %v4528 = vrot.slane %v4523, %v4527
    %v4529 = vlaneseq
    %v4530 = vshrl.u32 %v4529, 7
    %v4531 = vsub.s32 1, %v4530
    %v4532 = vrot.slane %v4523, %v4531
    %v4533 = vlaneseq
    %v4534 = vshrl.u32 %v4533, 7
    %v4535 = vsub.s32 2, %v4534
    %v4536 = vrot.slane %v4523, %v4535
    %v4537 = vlaneseq
    %v4538 = vshrl.u32 %v4537, 7
    %v4539 = vsub.s32 3, %v4538
    %v4540 = vrot.slane %v4523, %v4539
    %4545 = vmatprep.subr.mxu0 %v4072
    %4546 = vmatpush1.msra.mxu0 %v4071
    %4547 = vmatprep.subr.mxu0 %v4068
    %4548 = vmatpush1.msra.mxu0 %v4067
    %4549 = vmatprep.subr.mxu0 %v4064
    %4550 = vmatpush1.msra.mxu0 %v4063
    %4551 = vmatprep.subr.mxu0 %v4060
    %4552 = vmatpush1.msra.mxu0 %v4059
    %4553 = vmatprep.subr.mxu0 %v4056
    %4554 = vmatpush1.msra.mxu0 %v4055
    %4555 = vmatprep.subr.mxu0 %v4052
    %4556 = vmatpush1.msra.mxu0 %v4051
    %4557 = vmatprep.subr.mxu0 %v4048
    %4558 = vmatpush1.msra.mxu0 %v4047
    %4559 = vmatprep.subr.mxu0 %v4044
    %4560 = vmatpush1.msra.mxu0 %v4043
    %4561 = vmatprep.subr.mxu0 %v4040
    %4562 = vmatpush1.msra.mxu0 %v4039
    %4563 = vmatprep.subr.mxu0 %v4036
    %4564 = vmatpush1.msra.mxu0 %v4035
    %4565 = vmatprep.subr.mxu0 %v4032
    %4566 = vmatpush1.msra.mxu0 %v4031
    %4567 = vmatprep.subr.mxu0 %v4028
    %4568 = vmatpush1.msra.mxu0 %v4027
    %4569 = vmatprep.subr.mxu0 %v4024
    %4570 = vmatpush1.msra.mxu0 %v4023
    %4571 = vmatprep.subr.mxu0 %v4020
    %4572 = vmatpush1.msra.mxu0 %v4019
    %4573 = vmatprep.subr.mxu0 %v4016
    %4574 = vmatpush1.msra.mxu0 %v4015
    %4575 = vmatprep.subr.mxu0 %v4012
    %4576 = vmatpush1.msra.mxu0 %v4011
    %4577 = vmatprep.subr.mxu0 %v4136
    %4578 = vmatpush2.msra.mxu0 %v4135
    %4579 = vmatprep.subr.mxu0 %v4132
    %4580 = vmatpush2.msra.mxu0 %v4131
    %4581 = vmatprep.subr.mxu0 %v4128
    %4582 = vmatpush2.msra.mxu0 %v4127
    %4583 = vmatprep.subr.mxu0 %v4124
    %4584 = vmatpush2.msra.mxu0 %v4123
    %4585 = vmatprep.subr.mxu0 %v4120
    %4586 = vmatpush2.msra.mxu0 %v4119
    %4587 = vmatprep.subr.mxu0 %v4116
    %4588 = vmatpush2.msra.mxu0 %v4115
    %4589 = vmatprep.subr.mxu0 %v4112
    %4590 = vmatpush2.msra.mxu0 %v4111
    %4591 = vmatprep.subr.mxu0 %v4108
    %4592 = vmatpush2.msra.mxu0 %v4107
    %4593 = vmatprep.subr.mxu0 %v4104
    %4594 = vmatpush2.msra.mxu0 %v4103
    %4595 = vmatprep.subr.mxu0 %v4100
    %4596 = vmatpush2.msra.mxu0 %v4099
    %4597 = vmatprep.subr.mxu0 %v4096
    %4598 = vmatpush2.msra.mxu0 %v4095
    %4599 = vmatprep.subr.mxu0 %v4092
    %4600 = vmatpush2.msra.mxu0 %v4091
    %4601 = vmatprep.subr.mxu0 %v4088
    %4602 = vmatpush2.msra.mxu0 %v4087
    %4603 = vmatprep.subr.mxu0 %v4084
    %4604 = vmatpush2.msra.mxu0 %v4083
    %4605 = vmatprep.subr.mxu0 %v4080
    %4606 = vmatpush2.msra.mxu0 %v4079
    %4607 = vmatprep.subr.mxu0 %v4076
    %4608 = vmatpush2.msra.mxu0 %v4075
    %4609 = vmatprep.mubr.f32.mxu0 %v4004
    %4610 = vmatmul.mubr.f32.gmra.mxu0 %v4003
    %v4611 = vpop.f32.mrf.mxu0
    %v4612 = vadd.f32 %v4528, %v4611
    %v4613 = vpop.f32.mrf.mxu0
    %v4614 = vadd.f32 %v4532, %v4613
    %4615 = vdwg.mxu0
    %4616 = vmatprep.subr.mxu0 %v4200
    %4617 = vmatpush1.msra.mxu0 %v4199
    %4618 = vmatprep.subr.mxu0 %v4196
    %4619 = vmatpush1.msra.mxu0 %v4195
    %4620 = vmatprep.subr.mxu0 %v4192
    %4621 = vmatpush1.msra.mxu0 %v4191
    %4622 = vmatprep.subr.mxu0 %v4188
    %4623 = vmatpush1.msra.mxu0 %v4187
    %4624 = vmatprep.subr.mxu0 %v4184
    %4625 = vmatpush1.msra.mxu0 %v4183
    %4626 = vmatprep.subr.mxu0 %v4180
    %4627 = vmatpush1.msra.mxu0 %v4179
    %4628 = vmatprep.subr.mxu0 %v4176
    %4629 = vmatpush1.msra.mxu0 %v4175
    %4630 = vmatprep.subr.mxu0 %v4172
    %4631 = vmatpush1.msra.mxu0 %v4171
    %4632 = vmatprep.subr.mxu0 %v4168
    %4633 = vmatpush1.msra.mxu0 %v4167
    %4634 = vmatprep.subr.mxu0 %v4164
    %4635 = vmatpush1.msra.mxu0 %v4163
    %4636 = vmatprep.subr.mxu0 %v4160
    %4637 = vmatpush1.msra.mxu0 %v4159
    %4638 = vmatprep.subr.mxu0 %v4156
    %4639 = vmatpush1.msra.mxu0 %v4155
    %4640 = vmatprep.subr.mxu0 %v4152
    %4641 = vmatpush1.msra.mxu0 %v4151
    %4642 = vmatprep.subr.mxu0 %v4148
    %4643 = vmatpush1.msra.mxu0 %v4147
    %4644 = vmatprep.subr.mxu0 %v4144
    %4645 = vmatpush1.msra.mxu0 %v4143
    %4646 = vmatprep.subr.mxu0 %v4140
    %4647 = vmatpush1.msra.mxu0 %v4139
    %4648 = vmatprep.subr.mxu0 %v4264
    %4649 = vmatpush2.msra.mxu0 %v4263
    %4650 = vmatprep.subr.mxu0 %v4260
    %4651 = vmatpush2.msra.mxu0 %v4259
    %4652 = vmatprep.subr.mxu0 %v4256
    %4653 = vmatpush2.msra.mxu0 %v4255
    %4654 = vmatprep.subr.mxu0 %v4252
    %4655 = vmatpush2.msra.mxu0 %v4251
    %4656 = vmatprep.subr.mxu0 %v4248
    %4657 = vmatpush2.msra.mxu0 %v4247
    %4658 = vmatprep.subr.mxu0 %v4244
    %4659 = vmatpush2.msra.mxu0 %v4243
    %4660 = vmatprep.subr.mxu0 %v4240
    %4661 = vmatpush2.msra.mxu0 %v4239
    %4662 = vmatprep.subr.mxu0 %v4236
    %4663 = vmatpush2.msra.mxu0 %v4235
    %4664 = vmatprep.subr.mxu0 %v4232
    %4665 = vmatpush2.msra.mxu0 %v4231
    %4666 = vmatprep.subr.mxu0 %v4228
    %4667 = vmatpush2.msra.mxu0 %v4227
    %4668 = vmatprep.subr.mxu0 %v4224
    %4669 = vmatpush2.msra.mxu0 %v4223
    %4670 = vmatprep.subr.mxu0 %v4220
    %4671 = vmatpush2.msra.mxu0 %v4219
    %4672 = vmatprep.subr.mxu0 %v4216
    %4673 = vmatpush2.msra.mxu0 %v4215
    %4674 = vmatprep.subr.mxu0 %v4212
    %4675 = vmatpush2.msra.mxu0 %v4211
    %4676 = vmatprep.subr.mxu0 %v4208
    %4677 = vmatpush2.msra.mxu0 %v4207
    %4678 = vmatprep.subr.mxu0 %v4204
    %4679 = vmatpush2.msra.mxu0 %v4203
    %4680 = vmatprep.mubr.f32.mxu0 %v4006
    %4681 = vmatmul.mubr.f32.gmra.mxu0 %v4005
    %v4682 = vpop.f32.mrf.mxu0
    %v4683 = vadd.f32 %v4612, %v4682
    %v4684 = vpop.f32.mrf.mxu0
    %v4685 = vadd.f32 %v4614, %v4684
    %4686 = vdwg.mxu0
    %4687 = vmatprep.subr.mxu0 %v4328
    %4688 = vmatpush1.msra.mxu0 %v4327
    %4689 = vmatprep.subr.mxu0 %v4324
    %4690 = vmatpush1.msra.mxu0 %v4323
    %4691 = vmatprep.subr.mxu0 %v4320
    %4692 = vmatpush1.msra.mxu0 %v4319
    %4693 = vmatprep.subr.mxu0 %v4316
    %4694 = vmatpush1.msra.mxu0 %v4315
    %4695 = vmatprep.subr.mxu0 %v4312
    %4696 = vmatpush1.msra.mxu0 %v4311
    %4697 = vmatprep.subr.mxu0 %v4308
    %4698 = vmatpush1.msra.mxu0 %v4307
    %4699 = vmatprep.subr.mxu0 %v4304
    %4700 = vmatpush1.msra.mxu0 %v4303
    %4701 = vmatprep.subr.mxu0 %v4300
    %4702 = vmatpush1.msra.mxu0 %v4299
    %4703 = vmatprep.subr.mxu0 %v4296
    %4704 = vmatpush1.msra.mxu0 %v4295
    %4705 = vmatprep.subr.mxu0 %v4292
    %4706 = vmatpush1.msra.mxu0 %v4291
    %4707 = vmatprep.subr.mxu0 %v4288
    %4708 = vmatpush1.msra.mxu0 %v4287
    %4709 = vmatprep.subr.mxu0 %v4284
    %4710 = vmatpush1.msra.mxu0 %v4283
    %4711 = vmatprep.subr.mxu0 %v4280
    %4712 = vmatpush1.msra.mxu0 %v4279
    %4713 = vmatprep.subr.mxu0 %v4276
    %4714 = vmatpush1.msra.mxu0 %v4275
    %4715 = vmatprep.subr.mxu0 %v4272
    %4716 = vmatpush1.msra.mxu0 %v4271
    %4717 = vmatprep.subr.mxu0 %v4268
    %4718 = vmatpush1.msra.mxu0 %v4267
    %4719 = vmatprep.subr.mxu0 %v4392
    %4720 = vmatpush2.msra.mxu0 %v4391
    %4721 = vmatprep.subr.mxu0 %v4388
    %4722 = vmatpush2.msra.mxu0 %v4387
    %4723 = vmatprep.subr.mxu0 %v4384
    %4724 = vmatpush2.msra.mxu0 %v4383
    %4725 = vmatprep.subr.mxu0 %v4380
    %4726 = vmatpush2.msra.mxu0 %v4379
    %4727 = vmatprep.subr.mxu0 %v4376
    %4728 = vmatpush2.msra.mxu0 %v4375
    %4729 = vmatprep.subr.mxu0 %v4372
    %4730 = vmatpush2.msra.mxu0 %v4371
    %4731 = vmatprep.subr.mxu0 %v4368
    %4732 = vmatpush2.msra.mxu0 %v4367
    %4733 = vmatprep.subr.mxu0 %v4364
    %4734 = vmatpush2.msra.mxu0 %v4363
    %4735 = vmatprep.subr.mxu0 %v4360
    %4736 = vmatpush2.msra.mxu0 %v4359
    %4737 = vmatprep.subr.mxu0 %v4356
    %4738 = vmatpush2.msra.mxu0 %v4355
    %4739 = vmatprep.subr.mxu0 %v4352
    %4740 = vmatpush2.msra.mxu0 %v4351
    %4741 = vmatprep.subr.mxu0 %v4348
    %4742 = vmatpush2.msra.mxu0 %v4347
    %4743 = vmatprep.subr.mxu0 %v4344
    %4744 = vmatpush2.msra.mxu0 %v4343
    %4745 = vmatprep.subr.mxu0 %v4340
    %4746 = vmatpush2.msra.mxu0 %v4339
    %4747 = vmatprep.subr.mxu0 %v4336
    %4748 = vmatpush2.msra.mxu0 %v4335
    %4749 = vmatprep.subr.mxu0 %v4332
    %4750 = vmatpush2.msra.mxu0 %v4331
    %4751 = vmatprep.mubr.f32.mxu0 %v4008
    %4752 = vmatmul.mubr.f32.gmra.mxu0 %v4007
    %v4753 = vpop.f32.mrf.mxu0
    %v4754 = vadd.f32 %v4683, %v4753
    %v4755 = vpop.f32.mrf.mxu0
    %v4756 = vadd.f32 %v4685, %v4755
    %4757 = vdwg.mxu0
    %4758 = vmatprep.subr.mxu0 %v4456
    %4759 = vmatpush1.msra.mxu0 %v4455
    %4760 = vmatprep.subr.mxu0 %v4452
    %4761 = vmatpush1.msra.mxu0 %v4451
    %4762 = vmatprep.subr.mxu0 %v4448
    %4763 = vmatpush1.msra.mxu0 %v4447
    %4764 = vmatprep.subr.mxu0 %v4444
    %4765 = vmatpush1.msra.mxu0 %v4443
    %4766 = vmatprep.subr.mxu0 %v4440
    %4767 = vmatpush1.msra.mxu0 %v4439
    %4768 = vmatprep.subr.mxu0 %v4436
    %4769 = vmatpush1.msra.mxu0 %v4435
    %4770 = vmatprep.subr.mxu0 %v4432
    %4771 = vmatpush1.msra.mxu0 %v4431
    %4772 = vmatprep.subr.mxu0 %v4428
    %4773 = vmatpush1.msra.mxu0 %v4427
    %4774 = vmatprep.subr.mxu0 %v4424
    %4775 = vmatpush1.msra.mxu0 %v4423
    %4776 = vmatprep.subr.mxu0 %v4420
    %4777 = vmatpush1.msra.mxu0 %v4419
    %4778 = vmatprep.subr.mxu0 %v4416
    %4779 = vmatpush1.msra.mxu0 %v4415
    %4780 = vmatprep.subr.mxu0 %v4412
    %4781 = vmatpush1.msra.mxu0 %v4411
    %4782 = vmatprep.subr.mxu0 %v4408
    %4783 = vmatpush1.msra.mxu0 %v4407
    %4784 = vmatprep.subr.mxu0 %v4404
    %4785 = vmatpush1.msra.mxu0 %v4403
    %4786 = vmatprep.subr.mxu0 %v4400
    %4787 = vmatpush1.msra.mxu0 %v4399
    %4788 = vmatprep.subr.mxu0 %v4396
    %4789 = vmatpush1.msra.mxu0 %v4395
    %4790 = vmatprep.subr.mxu0 %v4520
    %4791 = vmatpush2.msra.mxu0 %v4519
    %4792 = vmatprep.subr.mxu0 %v4516
    %4793 = vmatpush2.msra.mxu0 %v4515
    %4794 = vmatprep.subr.mxu0 %v4512
    %4795 = vmatpush2.msra.mxu0 %v4511
    %4796 = vmatprep.subr.mxu0 %v4508
    %4797 = vmatpush2.msra.mxu0 %v4507
    %4798 = vmatprep.subr.mxu0 %v4504
    %4799 = vmatpush2.msra.mxu0 %v4503
    %4800 = vmatprep.subr.mxu0 %v4500
    %4801 = vmatpush2.msra.mxu0 %v4499
    %4802 = vmatprep.subr.mxu0 %v4496
    %4803 = vmatpush2.msra.mxu0 %v4495
    %4804 = vmatprep.subr.mxu0 %v4492
    %4805 = vmatpush2.msra.mxu0 %v4491
    %4806 = vmatprep.subr.mxu0 %v4488
    %4807 = vmatpush2.msra.mxu0 %v4487
    %4808 = vmatprep.subr.mxu0 %v4484
    %4809 = vmatpush2.msra.mxu0 %v4483
    %4810 = vmatprep.subr.mxu0 %v4480
    %4811 = vmatpush2.msra.mxu0 %v4479
    %4812 = vmatprep.subr.mxu0 %v4476
    %4813 = vmatpush2.msra.mxu0 %v4475
    %4814 = vmatprep.subr.mxu0 %v4472
    %4815 = vmatpush2.msra.mxu0 %v4471
    %4816 = vmatprep.subr.mxu0 %v4468
    %4817 = vmatpush2.msra.mxu0 %v4467
    %4818 = vmatprep.subr.mxu0 %v4464
    %4819 = vmatpush2.msra.mxu0 %v4463
    %4820 = vmatprep.subr.mxu0 %v4460
    %4821 = vmatpush2.msra.mxu0 %v4459
    %4822 = vmatprep.mubr.f32.mxu0 %v4010
    %4823 = vmatmul.mubr.f32.gmra.mxu0 %v4009
    %v4824 = vpop.f32.mrf.mxu0
    %v4825 = vadd.f32 %v4754, %v4824
    %v4826 = vpop.f32.mrf.mxu0
    %v4827 = vadd.f32 %v4756, %v4826
    %4828 = vdwg.mxu0
    %4829 = vmatprep.subr.mxu0 %v4074
    %4830 = vmatpush1.msra.mxu0 %v4073
    %4831 = vmatprep.subr.mxu0 %v4070
    %4832 = vmatpush1.msra.mxu0 %v4069
    %4833 = vmatprep.subr.mxu0 %v4066
    %4834 = vmatpush1.msra.mxu0 %v4065
    %4835 = vmatprep.subr.mxu0 %v4062
    %4836 = vmatpush1.msra.mxu0 %v4061
    %4837 = vmatprep.subr.mxu0 %v4058
    %4838 = vmatpush1.msra.mxu0 %v4057
    %4839 = vmatprep.subr.mxu0 %v4054
    %4840 = vmatpush1.msra.mxu0 %v4053
    %4841 = vmatprep.subr.mxu0 %v4050
    %4842 = vmatpush1.msra.mxu0 %v4049
    %4843 = vmatprep.subr.mxu0 %v4046
    %4844 = vmatpush1.msra.mxu0 %v4045
    %4845 = vmatprep.subr.mxu0 %v4042
    %4846 = vmatpush1.msra.mxu0 %v4041
    %4847 = vmatprep.subr.mxu0 %v4038
    %4848 = vmatpush1.msra.mxu0 %v4037
    %4849 = vmatprep.subr.mxu0 %v4034
    %4850 = vmatpush1.msra.mxu0 %v4033
    %4851 = vmatprep.subr.mxu0 %v4030
    %4852 = vmatpush1.msra.mxu0 %v4029
    %4853 = vmatprep.subr.mxu0 %v4026
    %4854 = vmatpush1.msra.mxu0 %v4025
    %4855 = vmatprep.subr.mxu0 %v4022
    %4856 = vmatpush1.msra.mxu0 %v4021
    %4857 = vmatprep.subr.mxu0 %v4018
    %4858 = vmatpush1.msra.mxu0 %v4017
    %4859 = vmatprep.subr.mxu0 %v4014
    %4860 = vmatpush1.msra.mxu0 %v4013
    %4861 = vmatprep.subr.mxu0 %v4138
    %4862 = vmatpush2.msra.mxu0 %v4137
    %4863 = vmatprep.subr.mxu0 %v4134
    %4864 = vmatpush2.msra.mxu0 %v4133
    %4865 = vmatprep.subr.mxu0 %v4130
    %4866 = vmatpush2.msra.mxu0 %v4129
    %4867 = vmatprep.subr.mxu0 %v4126
    %4868 = vmatpush2.msra.mxu0 %v4125
    %4869 = vmatprep.subr.mxu0 %v4122
    %4870 = vmatpush2.msra.mxu0 %v4121
    %4871 = vmatprep.subr.mxu0 %v4118
    %4872 = vmatpush2.msra.mxu0 %v4117
    %4873 = vmatprep.subr.mxu0 %v4114
    %4874 = vmatpush2.msra.mxu0 %v4113
    %4875 = vmatprep.subr.mxu0 %v4110
    %4876 = vmatpush2.msra.mxu0 %v4109
    %4877 = vmatprep.subr.mxu0 %v4106
    %4878 = vmatpush2.msra.mxu0 %v4105
    %4879 = vmatprep.subr.mxu0 %v4102
    %4880 = vmatpush2.msra.mxu0 %v4101
    %4881 = vmatprep.subr.mxu0 %v4098
    %4882 = vmatpush2.msra.mxu0 %v4097
    %4883 = vmatprep.subr.mxu0 %v4094
    %4884 = vmatpush2.msra.mxu0 %v4093
    %4885 = vmatprep.subr.mxu0 %v4090
    %4886 = vmatpush2.msra.mxu0 %v4089
    %4887 = vmatprep.subr.mxu0 %v4086
    %4888 = vmatpush2.msra.mxu0 %v4085
    %4889 = vmatprep.subr.mxu0 %v4082
    %4890 = vmatpush2.msra.mxu0 %v4081
    %4891 = vmatprep.subr.mxu0 %v4078
    %4892 = vmatpush2.msra.mxu0 %v4077
    %4893 = vmatprep.mubr.f32.mxu0 %v4004
    %4894 = vmatmul.mubr.f32.gmra.mxu0 %v4003
    %v4895 = vpop.f32.mrf.mxu0
    %v4896 = vadd.f32 %v4536, %v4895
    %v4897 = vpop.f32.mrf.mxu0
    %v4898 = vadd.f32 %v4540, %v4897
    %4899 = vdwg.mxu0
    %4900 = vmatprep.subr.mxu0 %v4202
    %4901 = vmatpush1.msra.mxu0 %v4201
    %4902 = vmatprep.subr.mxu0 %v4198
    %4903 = vmatpush1.msra.mxu0 %v4197
    %4904 = vmatprep.subr.mxu0 %v4194
    %4905 = vmatpush1.msra.mxu0 %v4193
    %4906 = vmatprep.subr.mxu0 %v4190
    %4907 = vmatpush1.msra.mxu0 %v4189
    %4908 = vmatprep.subr.mxu0 %v4186
    %4909 = vmatpush1.msra.mxu0 %v4185
    %4910 = vmatprep.subr.mxu0 %v4182
    %4911 = vmatpush1.msra.mxu0 %v4181
    %4912 = vmatprep.subr.mxu0 %v4178
    %4913 = vmatpush1.msra.mxu0 %v4177
    %4914 = vmatprep.subr.mxu0 %v4174
    %4915 = vmatpush1.msra.mxu0 %v4173
    %4916 = vmatprep.subr.mxu0 %v4170
    %4917 = vmatpush1.msra.mxu0 %v4169
    %4918 = vmatprep.subr.mxu0 %v4166
    %4919 = vmatpush1.msra.mxu0 %v4165
    %4920 = vmatprep.subr.mxu0 %v4162
    %4921 = vmatpush1.msra.mxu0 %v4161
    %4922 = vmatprep.subr.mxu0 %v4158
    %4923 = vmatpush1.msra.mxu0 %v4157
    %4924 = vmatprep.subr.mxu0 %v4154
    %4925 = vmatpush1.msra.mxu0 %v4153
    %4926 = vmatprep.subr.mxu0 %v4150
    %4927 = vmatpush1.msra.mxu0 %v4149
    %4928 = vmatprep.subr.mxu0 %v4146
    %4929 = vmatpush1.msra.mxu0 %v4145
    %4930 = vmatprep.subr.mxu0 %v4142
    %4931 = vmatpush1.msra.mxu0 %v4141
    %4932 = vmatprep.subr.mxu0 %v4266
    %4933 = vmatpush2.msra.mxu0 %v4265
    %4934 = vmatprep.subr.mxu0 %v4262
    %4935 = vmatpush2.msra.mxu0 %v4261
    %4936 = vmatprep.subr.mxu0 %v4258
    %4937 = vmatpush2.msra.mxu0 %v4257
    %4938 = vmatprep.subr.mxu0 %v4254
    %4939 = vmatpush2.msra.mxu0 %v4253
    %4940 = vmatprep.subr.mxu0 %v4250
    %4941 = vmatpush2.msra.mxu0 %v4249
    %4942 = vmatprep.subr.mxu0 %v4246
    %4943 = vmatpush2.msra.mxu0 %v4245
    %4944 = vmatprep.subr.mxu0 %v4242
    %4945 = vmatpush2.msra.mxu0 %v4241
    %4946 = vmatprep.subr.mxu0 %v4238
    %4947 = vmatpush2.msra.mxu0 %v4237
    %4948 = vmatprep.subr.mxu0 %v4234
    %4949 = vmatpush2.msra.mxu0 %v4233
    %4950 = vmatprep.subr.mxu0 %v4230
    %4951 = vmatpush2.msra.mxu0 %v4229
    %4952 = vmatprep.subr.mxu0 %v4226
    %4953 = vmatpush2.msra.mxu0 %v4225
    %4954 = vmatprep.subr.mxu0 %v4222
    %4955 = vmatpush2.msra.mxu0 %v4221
    %4956 = vmatprep.subr.mxu0 %v4218
    %4957 = vmatpush2.msra.mxu0 %v4217
    %4958 = vmatprep.subr.mxu0 %v4214
    %4959 = vmatpush2.msra.mxu0 %v4213
    %4960 = vmatprep.subr.mxu0 %v4210
    %4961 = vmatpush2.msra.mxu0 %v4209
    %4962 = vmatprep.subr.mxu0 %v4206
    %4963 = vmatpush2.msra.mxu0 %v4205
    %4964 = vmatprep.mubr.f32.mxu0 %v4006
    %4965 = vmatmul.mubr.f32.gmra.mxu0 %v4005
    %v4966 = vpop.f32.mrf.mxu0
    %v4967 = vadd.f32 %v4896, %v4966
    %v4968 = vpop.f32.mrf.mxu0
    %v4969 = vadd.f32 %v4898, %v4968
    %4970 = vdwg.mxu0
    %4971 = vmatprep.subr.mxu0 %v4330
    %4972 = vmatpush1.msra.mxu0 %v4329
    %4973 = vmatprep.subr.mxu0 %v4326
    %4974 = vmatpush1.msra.mxu0 %v4325
    %4975 = vmatprep.subr.mxu0 %v4322
    %4976 = vmatpush1.msra.mxu0 %v4321
    %4977 = vmatprep.subr.mxu0 %v4318
    %4978 = vmatpush1.msra.mxu0 %v4317
    %4979 = vmatprep.subr.mxu0 %v4314
    %4980 = vmatpush1.msra.mxu0 %v4313
    %4981 = vmatprep.subr.mxu0 %v4310
    %4982 = vmatpush1.msra.mxu0 %v4309
    %4983 = vmatprep.subr.mxu0 %v4306
    %4984 = vmatpush1.msra.mxu0 %v4305
    %4985 = vmatprep.subr.mxu0 %v4302
    %4986 = vmatpush1.msra.mxu0 %v4301
    %4987 = vmatprep.subr.mxu0 %v4298
    %4988 = vmatpush1.msra.mxu0 %v4297
    %4989 = vmatprep.subr.mxu0 %v4294
    %4990 = vmatpush1.msra.mxu0 %v4293
    %4991 = vmatprep.subr.mxu0 %v4290
    %4992 = vmatpush1.msra.mxu0 %v4289
    %4993 = vmatprep.subr.mxu0 %v4286
    %4994 = vmatpush1.msra.mxu0 %v4285
    %4995 = vmatprep.subr.mxu0 %v4282
    %4996 = vmatpush1.msra.mxu0 %v4281
    %4997 = vmatprep.subr.mxu0 %v4278
    %4998 = vmatpush1.msra.mxu0 %v4277
    %4999 = vmatprep.subr.mxu0 %v4274
    %5000 = vmatpush1.msra.mxu0 %v4273
    %5001 = vmatprep.subr.mxu0 %v4270
    %5002 = vmatpush1.msra.mxu0 %v4269
    %5003 = vmatprep.subr.mxu0 %v4394
    %5004 = vmatpush2.msra.mxu0 %v4393
    %5005 = vmatprep.subr.mxu0 %v4390
    %5006 = vmatpush2.msra.mxu0 %v4389
    %5007 = vmatprep.subr.mxu0 %v4386
    %5008 = vmatpush2.msra.mxu0 %v4385
    %5009 = vmatprep.subr.mxu0 %v4382
    %5010 = vmatpush2.msra.mxu0 %v4381
    %5011 = vmatprep.subr.mxu0 %v4378
    %5012 = vmatpush2.msra.mxu0 %v4377
    %5013 = vmatprep.subr.mxu0 %v4374
    %5014 = vmatpush2.msra.mxu0 %v4373
    %5015 = vmatprep.subr.mxu0 %v4370
    %5016 = vmatpush2.msra.mxu0 %v4369
    %5017 = vmatprep.subr.mxu0 %v4366
    %5018 = vmatpush2.msra.mxu0 %v4365
    %5019 = vmatprep.subr.mxu0 %v4362
    %5020 = vmatpush2.msra.mxu0 %v4361
    %5021 = vmatprep.subr.mxu0 %v4358
    %5022 = vmatpush2.msra.mxu0 %v4357
    %5023 = vmatprep.subr.mxu0 %v4354
    %5024 = vmatpush2.msra.mxu0 %v4353
    %5025 = vmatprep.subr.mxu0 %v4350
    %5026 = vmatpush2.msra.mxu0 %v4349
    %5027 = vmatprep.subr.mxu0 %v4346
    %5028 = vmatpush2.msra.mxu0 %v4345
    %5029 = vmatprep.subr.mxu0 %v4342
    %5030 = vmatpush2.msra.mxu0 %v4341
    %5031 = vmatprep.subr.mxu0 %v4338
    %5032 = vmatpush2.msra.mxu0 %v4337
    %5033 = vmatprep.subr.mxu0 %v4334
    %5034 = vmatpush2.msra.mxu0 %v4333
    %5035 = vmatprep.mubr.f32.mxu0 %v4008
    %5036 = vmatmul.mubr.f32.gmra.mxu0 %v4007
    %v5037 = vpop.f32.mrf.mxu0
    %v5038 = vadd.f32 %v4967, %v5037
    %v5039 = vpop.f32.mrf.mxu0
    %v5040 = vadd.f32 %v4969, %v5039
    %5041 = vdwg.mxu0
    %5042 = vmatprep.subr.mxu0 %v4458
    %5043 = vmatpush1.msra.mxu0 %v4457
    %5044 = vmatprep.subr.mxu0 %v4454
    %5045 = vmatpush1.msra.mxu0 %v4453
    %5046 = vmatprep.subr.mxu0 %v4450
    %5047 = vmatpush1.msra.mxu0 %v4449
    %5048 = vmatprep.subr.mxu0 %v4446
    %5049 = vmatpush1.msra.mxu0 %v4445
    %5050 = vmatprep.subr.mxu0 %v4442
    %5051 = vmatpush1.msra.mxu0 %v4441
    %5052 = vmatprep.subr.mxu0 %v4438
    %5053 = vmatpush1.msra.mxu0 %v4437
    %5054 = vmatprep.subr.mxu0 %v4434
    %5055 = vmatpush1.msra.mxu0 %v4433
    %5056 = vmatprep.subr.mxu0 %v4430
    %5057 = vmatpush1.msra.mxu0 %v4429
    %5058 = vmatprep.subr.mxu0 %v4426
    %5059 = vmatpush1.msra.mxu0 %v4425
    %5060 = vmatprep.subr.mxu0 %v4422
    %5061 = vmatpush1.msra.mxu0 %v4421
    %5062 = vmatprep.subr.mxu0 %v4418
    %5063 = vmatpush1.msra.mxu0 %v4417
    %5064 = vmatprep.subr.mxu0 %v4414
    %5065 = vmatpush1.msra.mxu0 %v4413
    %5066 = vmatprep.subr.mxu0 %v4410
    %5067 = vmatpush1.msra.mxu0 %v4409
    %5068 = vmatprep.subr.mxu0 %v4406
    %5069 = vmatpush1.msra.mxu0 %v4405
    %5070 = vmatprep.subr.mxu0 %v4402
    %5071 = vmatpush1.msra.mxu0 %v4401
    %5072 = vmatprep.subr.mxu0 %v4398
    %5073 = vmatpush1.msra.mxu0 %v4397
    %5074 = vmatprep.subr.mxu0 %v4522
    %5075 = vmatpush2.msra.mxu0 %v4521
    %5076 = vmatprep.subr.mxu0 %v4518
    %5077 = vmatpush2.msra.mxu0 %v4517
    %5078 = vmatprep.subr.mxu0 %v4514
    %5079 = vmatpush2.msra.mxu0 %v4513
    %5080 = vmatprep.subr.mxu0 %v4510
    %5081 = vmatpush2.msra.mxu0 %v4509
    %5082 = vmatprep.subr.mxu0 %v4506
    %5083 = vmatpush2.msra.mxu0 %v4505
    %5084 = vmatprep.subr.mxu0 %v4502
    %5085 = vmatpush2.msra.mxu0 %v4501
    %5086 = vmatprep.subr.mxu0 %v4498
    %5087 = vmatpush2.msra.mxu0 %v4497
    %5088 = vmatprep.subr.mxu0 %v4494
    %5089 = vmatpush2.msra.mxu0 %v4493
    %5090 = vmatprep.subr.mxu0 %v4490
    %5091 = vmatpush2.msra.mxu0 %v4489
    %5092 = vmatprep.subr.mxu0 %v4486
    %5093 = vmatpush2.msra.mxu0 %v4485
    %5094 = vmatprep.subr.mxu0 %v4482
    %5095 = vmatpush2.msra.mxu0 %v4481
    %5096 = vmatprep.subr.mxu0 %v4478
    %5097 = vmatpush2.msra.mxu0 %v4477
    %5098 = vmatprep.subr.mxu0 %v4474
    %5099 = vmatpush2.msra.mxu0 %v4473
    %5100 = vmatprep.subr.mxu0 %v4470
    %5101 = vmatpush2.msra.mxu0 %v4469
    %5102 = vmatprep.subr.mxu0 %v4466
    %5103 = vmatpush2.msra.mxu0 %v4465
    %5104 = vmatprep.subr.mxu0 %v4462
    %5105 = vmatpush2.msra.mxu0 %v4461
    %5106 = vmatprep.mubr.f32.mxu0 %v4010
    %5107 = vmatmul.mubr.f32.gmra.mxu0 %v4009
    %v5108 = vpop.f32.mrf.mxu0
    %v5109 = vadd.f32 %v5038, %v5108
    %v5110 = vpop.f32.mrf.mxu0
    %v5111 = vadd.f32 %v5040, %v5110
    %5112 = vdwg.mxu0
    %v5113 = vmax.f32 %v4825, 0.0
    %v5114 = vmax.f32 %v4827, 0.0
    %v5115 = vmax.f32 %v5109, 0.0
    %v5116 = vmax.f32 %v5111, 0.0
    %v5117 = vld [vmem:[#allocation5] sm:$0xff]
    %v5118 = vld [vmem:[#allocation5 + $0x8] sm:$0xff]
    %v5119 = vld [vmem:[#allocation5 + $0x10] sm:$0xff]
    %v5120 = vld [vmem:[#allocation5 + $0x18] sm:$0xff]
    %v5121 = vld [vmem:[#allocation5 + $0x20] sm:$0xff]
    %v5122 = vld [vmem:[#allocation5 + $0x28] sm:$0xff]
    %v5123 = vld [vmem:[#allocation5 + $0x30] sm:$0xff]
    %v5124 = vld [vmem:[#allocation5 + $0x38] sm:$0xff]
    %v5125 = vld [vmem:[#allocation5 + $0x40] sm:$0xff]
    %v5126 = vld [vmem:[#allocation5 + $0x48] sm:$0xff]
    %v5127 = vld [vmem:[#allocation5 + $0x50] sm:$0xff]
    %v5128 = vld [vmem:[#allocation5 + $0x58] sm:$0xff]
    %v5129 = vld [vmem:[#allocation5 + $0x60] sm:$0xff]
    %v5130 = vld [vmem:[#allocation5 + $0x68] sm:$0xff]
    %v5131 = vld [vmem:[#allocation5 + $0x70] sm:$0xff]
    %v5132 = vld [vmem:[#allocation5 + $0x78] sm:$0xff]
    %v5133 = vld [vmem:[#allocation5 + $0x80] sm:$0xff]
    %v5134 = vld [vmem:[#allocation5 + $0x88] sm:$0xff]
    %v5135 = vld [vmem:[#allocation5 + $0x90] sm:$0xff]
    %v5136 = vld [vmem:[#allocation5 + $0x98] sm:$0xff]
    %v5137 = vld [vmem:[#allocation5 + $0xa0] sm:$0xff]
    %v5138 = vld [vmem:[#allocation5 + $0xa8] sm:$0xff]
    %v5139 = vld [vmem:[#allocation5 + $0xb0] sm:$0xff]
    %v5140 = vld [vmem:[#allocation5 + $0xb8] sm:$0xff]
    %v5141 = vld [vmem:[#allocation5 + $0xc0] sm:$0xff]
    %v5142 = vld [vmem:[#allocation5 + $0xc8] sm:$0xff]
    %v5143 = vld [vmem:[#allocation5 + $0xd0] sm:$0xff]
    %v5144 = vld [vmem:[#allocation5 + $0xd8] sm:$0xff]
    %v5145 = vld [vmem:[#allocation5 + $0xe0] sm:$0xff]
    %v5146 = vld [vmem:[#allocation5 + $0xe8] sm:$0xff]
    %v5147 = vld [vmem:[#allocation5 + $0xf0] sm:$0xff]
    %v5148 = vld [vmem:[#allocation5 + $0xf8] sm:$0xff]
    %v5149 = vld [vmem:[#allocation5 + $0x100] sm:$0xff]
    %v5150 = vld [vmem:[#allocation5 + $0x108] sm:$0xff]
    %v5151 = vld [vmem:[#allocation5 + $0x110] sm:$0xff]
    %v5152 = vld [vmem:[#allocation5 + $0x118] sm:$0xff]
    %v5153 = vld [vmem:[#allocation5 + $0x120] sm:$0xff]
    %v5154 = vld [vmem:[#allocation5 + $0x128] sm:$0xff]
    %v5155 = vld [vmem:[#allocation5 + $0x130] sm:$0xff]
    %v5156 = vld [vmem:[#allocation5 + $0x138] sm:$0xff]
    %v5157 = vld [vmem:[#allocation5 + $0x140] sm:$0xff]
    %v5158 = vld [vmem:[#allocation5 + $0x148] sm:$0xff]
    %v5159 = vld [vmem:[#allocation5 + $0x150] sm:$0xff]
    %v5160 = vld [vmem:[#allocation5 + $0x158] sm:$0xff]
    %v5161 = vld [vmem:[#allocation5 + $0x160] sm:$0xff]
    %v5162 = vld [vmem:[#allocation5 + $0x168] sm:$0xff]
    %v5163 = vld [vmem:[#allocation5 + $0x170] sm:$0xff]
    %v5164 = vld [vmem:[#allocation5 + $0x178] sm:$0xff]
    %v5165 = vld [vmem:[#allocation5 + $0x180] sm:$0xff]
    %v5166 = vld [vmem:[#allocation5 + $0x188] sm:$0xff]
    %v5167 = vld [vmem:[#allocation5 + $0x190] sm:$0xff]
    %v5168 = vld [vmem:[#allocation5 + $0x198] sm:$0xff]
    %v5169 = vld [vmem:[#allocation5 + $0x1a0] sm:$0xff]
    %v5170 = vld [vmem:[#allocation5 + $0x1a8] sm:$0xff]
    %v5171 = vld [vmem:[#allocation5 + $0x1b0] sm:$0xff]
    %v5172 = vld [vmem:[#allocation5 + $0x1b8] sm:$0xff]
    %v5173 = vld [vmem:[#allocation5 + $0x1c0] sm:$0xff]
    %v5174 = vld [vmem:[#allocation5 + $0x1c8] sm:$0xff]
    %v5175 = vld [vmem:[#allocation5 + $0x1d0] sm:$0xff]
    %v5176 = vld [vmem:[#allocation5 + $0x1d8] sm:$0xff]
    %v5177 = vld [vmem:[#allocation5 + $0x1e0] sm:$0xff]
    %v5178 = vld [vmem:[#allocation5 + $0x1e8] sm:$0xff]
    %v5179 = vld [vmem:[#allocation5 + $0x1f0] sm:$0xff]
    %v5180 = vld [vmem:[#allocation5 + $0x1f8] sm:$0xff]
    %v5181 = vld [vmem:[#allocation5 + $0x200] sm:$0xff]
    %v5182 = vld [vmem:[#allocation5 + $0x208] sm:$0xff]
    %v5183 = vld [vmem:[#allocation5 + $0x210] sm:$0xff]
    %v5184 = vld [vmem:[#allocation5 + $0x218] sm:$0xff]
    %v5185 = vld [vmem:[#allocation5 + $0x220] sm:$0xff]
    %v5186 = vld [vmem:[#allocation5 + $0x228] sm:$0xff]
    %v5187 = vld [vmem:[#allocation5 + $0x230] sm:$0xff]
    %v5188 = vld [vmem:[#allocation5 + $0x238] sm:$0xff]
    %v5189 = vld [vmem:[#allocation5 + $0x240] sm:$0xff]
    %v5190 = vld [vmem:[#allocation5 + $0x248] sm:$0xff]
    %v5191 = vld [vmem:[#allocation5 + $0x250] sm:$0xff]
    %v5192 = vld [vmem:[#allocation5 + $0x258] sm:$0xff]
    %v5193 = vld [vmem:[#allocation5 + $0x260] sm:$0xff]
    %v5194 = vld [vmem:[#allocation5 + $0x268] sm:$0xff]
    %v5195 = vld [vmem:[#allocation5 + $0x270] sm:$0xff]
    %v5196 = vld [vmem:[#allocation5 + $0x278] sm:$0xff]
    %v5197 = vld [vmem:[#allocation5 + $0x280] sm:$0xff]
    %v5198 = vld [vmem:[#allocation5 + $0x288] sm:$0xff]
    %v5199 = vld [vmem:[#allocation5 + $0x290] sm:$0xff]
    %v5200 = vld [vmem:[#allocation5 + $0x298] sm:$0xff]
    %v5201 = vld [vmem:[#allocation5 + $0x2a0] sm:$0xff]
    %v5202 = vld [vmem:[#allocation5 + $0x2a8] sm:$0xff]
    %v5203 = vld [vmem:[#allocation5 + $0x2b0] sm:$0xff]
    %v5204 = vld [vmem:[#allocation5 + $0x2b8] sm:$0xff]
    %v5205 = vld [vmem:[#allocation5 + $0x2c0] sm:$0xff]
    %v5206 = vld [vmem:[#allocation5 + $0x2c8] sm:$0xff]
    %v5207 = vld [vmem:[#allocation5 + $0x2d0] sm:$0xff]
    %v5208 = vld [vmem:[#allocation5 + $0x2d8] sm:$0xff]
    %v5209 = vld [vmem:[#allocation5 + $0x2e0] sm:$0xff]
    %v5210 = vld [vmem:[#allocation5 + $0x2e8] sm:$0xff]
    %v5211 = vld [vmem:[#allocation5 + $0x2f0] sm:$0xff]
    %v5212 = vld [vmem:[#allocation5 + $0x2f8] sm:$0xff]
    %v5213 = vld [vmem:[#allocation5 + $0x300] sm:$0xff]
    %v5214 = vld [vmem:[#allocation5 + $0x308] sm:$0xff]
    %v5215 = vld [vmem:[#allocation5 + $0x310] sm:$0xff]
    %v5216 = vld [vmem:[#allocation5 + $0x318] sm:$0xff]
    %v5217 = vld [vmem:[#allocation5 + $0x320] sm:$0xff]
    %v5218 = vld [vmem:[#allocation5 + $0x328] sm:$0xff]
    %v5219 = vld [vmem:[#allocation5 + $0x330] sm:$0xff]
    %v5220 = vld [vmem:[#allocation5 + $0x338] sm:$0xff]
    %v5221 = vld [vmem:[#allocation5 + $0x340] sm:$0xff]
    %v5222 = vld [vmem:[#allocation5 + $0x348] sm:$0xff]
    %v5223 = vld [vmem:[#allocation5 + $0x350] sm:$0xff]
    %v5224 = vld [vmem:[#allocation5 + $0x358] sm:$0xff]
    %v5225 = vld [vmem:[#allocation5 + $0x360] sm:$0xff]
    %v5226 = vld [vmem:[#allocation5 + $0x368] sm:$0xff]
    %v5227 = vld [vmem:[#allocation5 + $0x370] sm:$0xff]
    %v5228 = vld [vmem:[#allocation5 + $0x378] sm:$0xff]
    %v5229 = vld [vmem:[#allocation5 + $0x380] sm:$0xff]
    %v5230 = vld [vmem:[#allocation5 + $0x388] sm:$0xff]
    %v5231 = vld [vmem:[#allocation5 + $0x390] sm:$0xff]
    %v5232 = vld [vmem:[#allocation5 + $0x398] sm:$0xff]
    %v5233 = vld [vmem:[#allocation5 + $0x3a0] sm:$0xff]
    %v5234 = vld [vmem:[#allocation5 + $0x3a8] sm:$0xff]
    %v5235 = vld [vmem:[#allocation5 + $0x3b0] sm:$0xff]
    %v5236 = vld [vmem:[#allocation5 + $0x3b8] sm:$0xff]
    %v5237 = vld [vmem:[#allocation5 + $0x3c0] sm:$0xff]
    %v5238 = vld [vmem:[#allocation5 + $0x3c8] sm:$0xff]
    %v5239 = vld [vmem:[#allocation5 + $0x3d0] sm:$0xff]
    %v5240 = vld [vmem:[#allocation5 + $0x3d8] sm:$0xff]
    %v5241 = vld [vmem:[#allocation5 + $0x3e0] sm:$0xff]
    %v5242 = vld [vmem:[#allocation5 + $0x3e8] sm:$0xff]
    %v5243 = vld [vmem:[#allocation5 + $0x3f0] sm:$0xff]
    %v5244 = vld [vmem:[#allocation5 + $0x3f8] sm:$0xff]
    %v5245 = vld [vmem:[#allocation28] sm:$0x3]
    %v5247 = vlaneseq
    %v5248 = vshrl.u32 %v5247, 7
    %v5249 = vsub.s32 0, %v5248
    %v5250 = vrot.slane %v5245, %v5249
    %v5251 = vlaneseq
    %v5252 = vshrl.u32 %v5251, 7
    %v5253 = vsub.s32 1, %v5252
    %v5254 = vrot.slane %v5245, %v5253
    %5257 = vmatprep.subr.mxu0 %v5148
    %5258 = vmatpush1.msra.mxu0 %v5147
    %5259 = vmatprep.subr.mxu0 %v5146
    %5260 = vmatpush1.msra.mxu0 %v5145
    %5261 = vmatprep.subr.mxu0 %v5144
    %5262 = vmatpush1.msra.mxu0 %v5143
    %5263 = vmatprep.subr.mxu0 %v5142
    %5264 = vmatpush1.msra.mxu0 %v5141
    %5265 = vmatprep.subr.mxu0 %v5140
    %5266 = vmatpush1.msra.mxu0 %v5139
    %5267 = vmatprep.subr.mxu0 %v5138
    %5268 = vmatpush1.msra.mxu0 %v5137
    %5269 = vmatprep.subr.mxu0 %v5136
    %5270 = vmatpush1.msra.mxu0 %v5135
    %5271 = vmatprep.subr.mxu0 %v5134
    %5272 = vmatpush1.msra.mxu0 %v5133
    %5273 = vmatprep.subr.mxu0 %v5132
    %5274 = vmatpush1.msra.mxu0 %v5131
    %5275 = vmatprep.subr.mxu0 %v5130
    %5276 = vmatpush1.msra.mxu0 %v5129
    %5277 = vmatprep.subr.mxu0 %v5128
    %5278 = vmatpush1.msra.mxu0 %v5127
    %5279 = vmatprep.subr.mxu0 %v5126
    %5280 = vmatpush1.msra.mxu0 %v5125
    %5281 = vmatprep.subr.mxu0 %v5124
    %5282 = vmatpush1.msra.mxu0 %v5123
    %5283 = vmatprep.subr.mxu0 %v5122
    %5284 = vmatpush1.msra.mxu0 %v5121
    %5285 = vmatprep.subr.mxu0 %v5120
    %5286 = vmatpush1.msra.mxu0 %v5119
    %5287 = vmatprep.subr.mxu0 %v5118
    %5288 = vmatpush1.msra.mxu0 %v5117
    %5289 = vmatprep.subr.mxu0 %v5180
    %5290 = vmatpush2.msra.mxu0 %v5179
    %5291 = vmatprep.subr.mxu0 %v5178
    %5292 = vmatpush2.msra.mxu0 %v5177
    %5293 = vmatprep.subr.mxu0 %v5176
    %5294 = vmatpush2.msra.mxu0 %v5175
    %5295 = vmatprep.subr.mxu0 %v5174
    %5296 = vmatpush2.msra.mxu0 %v5173
    %5297 = vmatprep.subr.mxu0 %v5172
    %5298 = vmatpush2.msra.mxu0 %v5171
    %5299 = vmatprep.subr.mxu0 %v5170
    %5300 = vmatpush2.msra.mxu0 %v5169
    %5301 = vmatprep.subr.mxu0 %v5168
    %5302 = vmatpush2.msra.mxu0 %v5167
    %5303 = vmatprep.subr.mxu0 %v5166
    %5304 = vmatpush2.msra.mxu0 %v5165
    %5305 = vmatprep.subr.mxu0 %v5164
    %5306 = vmatpush2.msra.mxu0 %v5163
    %5307 = vmatprep.subr.mxu0 %v5162
    %5308 = vmatpush2.msra.mxu0 %v5161
    %5309 = vmatprep.subr.mxu0 %v5160
    %5310 = vmatpush2.msra.mxu0 %v5159
    %5311 = vmatprep.subr.mxu0 %v5158
    %5312 = vmatpush2.msra.mxu0 %v5157
    %5313 = vmatprep.subr.mxu0 %v5156
    %5314 = vmatpush2.msra.mxu0 %v5155
    %5315 = vmatprep.subr.mxu0 %v5154
    %5316 = vmatpush2.msra.mxu0 %v5153
    %5317 = vmatprep.subr.mxu0 %v5152
    %5318 = vmatpush2.msra.mxu0 %v5151
    %5319 = vmatprep.subr.mxu0 %v5150
    %5320 = vmatpush2.msra.mxu0 %v5149
    %5321 = vmatprep.mubr.f32.mxu0 %v5114
    %5322 = vmatmul.mubr.f32.gmra.mxu0 %v5113
    %v5323 = vpop.f32.mrf.mxu0
    %v5324 = vadd.f32 %v5250, %v5323
    %v5325 = vpop.f32.mrf.mxu0
    %v5326 = vadd.f32 %v5254, %v5325
    %5327 = vdwg.mxu0
    %5328 = vmatprep.subr.mxu0 %v5212
    %5329 = vmatpush1.msra.mxu0 %v5211
    %5330 = vmatprep.subr.mxu0 %v5210
    %5331 = vmatpush1.msra.mxu0 %v5209
    %5332 = vmatprep.subr.mxu0 %v5208
    %5333 = vmatpush1.msra.mxu0 %v5207
    %5334 = vmatprep.subr.mxu0 %v5206
    %5335 = vmatpush1.msra.mxu0 %v5205
    %5336 = vmatprep.subr.mxu0 %v5204
    %5337 = vmatpush1.msra.mxu0 %v5203
    %5338 = vmatprep.subr.mxu0 %v5202
    %5339 = vmatpush1.msra.mxu0 %v5201
    %5340 = vmatprep.subr.mxu0 %v5200
    %5341 = vmatpush1.msra.mxu0 %v5199
    %5342 = vmatprep.subr.mxu0 %v5198
    %5343 = vmatpush1.msra.mxu0 %v5197
    %5344 = vmatprep.subr.mxu0 %v5196
    %5345 = vmatpush1.msra.mxu0 %v5195
    %5346 = vmatprep.subr.mxu0 %v5194
    %5347 = vmatpush1.msra.mxu0 %v5193
    %5348 = vmatprep.subr.mxu0 %v5192
    %5349 = vmatpush1.msra.mxu0 %v5191
    %5350 = vmatprep.subr.mxu0 %v5190
    %5351 = vmatpush1.msra.mxu0 %v5189
    %5352 = vmatprep.subr.mxu0 %v5188
    %5353 = vmatpush1.msra.mxu0 %v5187
    %5354 = vmatprep.subr.mxu0 %v5186
    %5355 = vmatpush1.msra.mxu0 %v5185
    %5356 = vmatprep.subr.mxu0 %v5184
    %5357 = vmatpush1.msra.mxu0 %v5183
    %5358 = vmatprep.subr.mxu0 %v5182
    %5359 = vmatpush1.msra.mxu0 %v5181
    %5360 = vmatprep.subr.mxu0 %v5244
    %5361 = vmatpush2.msra.mxu0 %v5243
    %5362 = vmatprep.subr.mxu0 %v5242
    %5363 = vmatpush2.msra.mxu0 %v5241
    %5364 = vmatprep.subr.mxu0 %v5240
    %5365 = vmatpush2.msra.mxu0 %v5239
    %5366 = vmatprep.subr.mxu0 %v5238
    %5367 = vmatpush2.msra.mxu0 %v5237
    %5368 = vmatprep.subr.mxu0 %v5236
    %5369 = vmatpush2.msra.mxu0 %v5235
    %5370 = vmatprep.subr.mxu0 %v5234
    %5371 = vmatpush2.msra.mxu0 %v5233
    %5372 = vmatprep.subr.mxu0 %v5232
    %5373 = vmatpush2.msra.mxu0 %v5231
    %5374 = vmatprep.subr.mxu0 %v5230
    %5375 = vmatpush2.msra.mxu0 %v5229
    %5376 = vmatprep.subr.mxu0 %v5228
    %5377 = vmatpush2.msra.mxu0 %v5227
    %5378 = vmatprep.subr.mxu0 %v5226
    %5379 = vmatpush2.msra.mxu0 %v5225
    %5380 = vmatprep.subr.mxu0 %v5224
    %5381 = vmatpush2.msra.mxu0 %v5223
    %5382 = vmatprep.subr.mxu0 %v5222
    %5383 = vmatpush2.msra.mxu0 %v5221
    %5384 = vmatprep.subr.mxu0 %v5220
    %5385 = vmatpush2.msra.mxu0 %v5219
    %5386 = vmatprep.subr.mxu0 %v5218
    %5387 = vmatpush2.msra.mxu0 %v5217
    %5388 = vmatprep.subr.mxu0 %v5216
    %5389 = vmatpush2.msra.mxu0 %v5215
    %5390 = vmatprep.subr.mxu0 %v5214
    %5391 = vmatpush2.msra.mxu0 %v5213
    %5392 = vmatprep.mubr.f32.mxu0 %v5116
    %5393 = vmatmul.mubr.f32.gmra.mxu0 %v5115
    %v5394 = vpop.f32.mrf.mxu0
    %v5395 = vadd.f32 %v5324, %v5394
    %v5396 = vpop.f32.mrf.mxu0
    %v5397 = vadd.f32 %v5326, %v5396
    %5398 = vdwg.mxu0
    %v5399 = vmax.f32 %v5395, 0.0
    %v5400 = vmax.f32 %v5397, 0.0
    %v5401 = vld [vmem:[#allocation6] sm:$0xff]
    %v5402 = vld [vmem:[#allocation6 + $0x8] sm:$0xff]
    %v5403 = vld [vmem:[#allocation6 + $0x10] sm:$0xff]
    %v5404 = vld [vmem:[#allocation6 + $0x18] sm:$0xff]
    %v5405 = vld [vmem:[#allocation6 + $0x20] sm:$0xff]
    %v5406 = vld [vmem:[#allocation6 + $0x28] sm:$0xff]
    %v5407 = vld [vmem:[#allocation6 + $0x30] sm:$0xff]
    %v5408 = vld [vmem:[#allocation6 + $0x38] sm:$0xff]
    %v5409 = vld [vmem:[#allocation6 + $0x40] sm:$0xff]
    %v5410 = vld [vmem:[#allocation6 + $0x48] sm:$0xff]
    %v5411 = vld [vmem:[#allocation6 + $0x50] sm:$0xff]
    %v5412 = vld [vmem:[#allocation6 + $0x58] sm:$0xff]
    %v5413 = vld [vmem:[#allocation6 + $0x60] sm:$0xff]
    %v5414 = vld [vmem:[#allocation6 + $0x68] sm:$0xff]
    %v5415 = vld [vmem:[#allocation6 + $0x70] sm:$0xff]
    %v5416 = vld [vmem:[#allocation6 + $0x78] sm:$0xff]
    %v5417 = vld [vmem:[#allocation6 + $0x80] sm:$0xff]
    %v5418 = vld [vmem:[#allocation6 + $0x88] sm:$0xff]
    %v5419 = vld [vmem:[#allocation6 + $0x90] sm:$0xff]
    %v5420 = vld [vmem:[#allocation6 + $0x98] sm:$0xff]
    %v5421 = vld [vmem:[#allocation6 + $0xa0] sm:$0xff]
    %v5422 = vld [vmem:[#allocation6 + $0xa8] sm:$0xff]
    %v5423 = vld [vmem:[#allocation6 + $0xb0] sm:$0xff]
    %v5424 = vld [vmem:[#allocation6 + $0xb8] sm:$0xff]
    %v5425 = vld [vmem:[#allocation6 + $0xc0] sm:$0xff]
    %v5426 = vld [vmem:[#allocation6 + $0xc8] sm:$0xff]
    %v5427 = vld [vmem:[#allocation6 + $0xd0] sm:$0xff]
    %v5428 = vld [vmem:[#allocation6 + $0xd8] sm:$0xff]
    %v5429 = vld [vmem:[#allocation6 + $0xe0] sm:$0xff]
    %v5430 = vld [vmem:[#allocation6 + $0xe8] sm:$0xff]
    %v5431 = vld [vmem:[#allocation6 + $0xf0] sm:$0xff]
    %v5432 = vld [vmem:[#allocation6 + $0xf8] sm:$0xff]
    %v5433 = vld [vmem:[#allocation29] sm:$0x1]
    %v5435 = vlaneseq
    %v5436 = vshrl.u32 %v5435, 7
    %v5437 = vsub.s32 0, %v5436
    %v5438 = vrot.slane %v5433, %v5437
    %5440 = vmatprep.subr.mxu0 0.0
    %5441 = vmatpush1.msra.mxu0 %v5416
    %5442 = vmatprep.subr.mxu0 0.0
    %5443 = vmatpush1.msra.mxu0 %v5415
    %5444 = vmatprep.subr.mxu0 0.0
    %5445 = vmatpush1.msra.mxu0 %v5414
    %5446 = vmatprep.subr.mxu0 0.0
    %5447 = vmatpush1.msra.mxu0 %v5413
    %5448 = vmatprep.subr.mxu0 0.0
    %5449 = vmatpush1.msra.mxu0 %v5412
    %5450 = vmatprep.subr.mxu0 0.0
    %5451 = vmatpush1.msra.mxu0 %v5411
    %5452 = vmatprep.subr.mxu0 0.0
    %5453 = vmatpush1.msra.mxu0 %v5410
    %5454 = vmatprep.subr.mxu0 0.0
    %5455 = vmatpush1.msra.mxu0 %v5409
    %5456 = vmatprep.subr.mxu0 0.0
    %5457 = vmatpush1.msra.mxu0 %v5408
    %5458 = vmatprep.subr.mxu0 0.0
    %5459 = vmatpush1.msra.mxu0 %v5407
    %5460 = vmatprep.subr.mxu0 0.0
    %5461 = vmatpush1.msra.mxu0 %v5406
    %5462 = vmatprep.subr.mxu0 0.0
    %5463 = vmatpush1.msra.mxu0 %v5405
    %5464 = vmatprep.subr.mxu0 0.0
    %5465 = vmatpush1.msra.mxu0 %v5404
    %5466 = vmatprep.subr.mxu0 0.0
    %5467 = vmatpush1.msra.mxu0 %v5403
    %5468 = vmatprep.subr.mxu0 0.0
    %5469 = vmatpush1.msra.mxu0 %v5402
    %5470 = vmatprep.subr.mxu0 0.0
    %5471 = vmatpush1.msra.mxu0 %v5401
    %5472 = vmatprep.subr.mxu0 0.0
    %5473 = vmatpush2.msra.mxu0 %v5432
    %5474 = vmatprep.subr.mxu0 0.0
    %5475 = vmatpush2.msra.mxu0 %v5431
    %5476 = vmatprep.subr.mxu0 0.0
    %5477 = vmatpush2.msra.mxu0 %v5430
    %5478 = vmatprep.subr.mxu0 0.0
    %5479 = vmatpush2.msra.mxu0 %v5429
    %5480 = vmatprep.subr.mxu0 0.0
    %5481 = vmatpush2.msra.mxu0 %v5428
    %5482 = vmatprep.subr.mxu0 0.0
    %5483 = vmatpush2.msra.mxu0 %v5427
    %5484 = vmatprep.subr.mxu0 0.0
    %5485 = vmatpush2.msra.mxu0 %v5426
    %5486 = vmatprep.subr.mxu0 0.0
    %5487 = vmatpush2.msra.mxu0 %v5425
    %5488 = vmatprep.subr.mxu0 0.0
    %5489 = vmatpush2.msra.mxu0 %v5424
    %5490 = vmatprep.subr.mxu0 0.0
    %5491 = vmatpush2.msra.mxu0 %v5423
    %5492 = vmatprep.subr.mxu0 0.0
    %5493 = vmatpush2.msra.mxu0 %v5422
    %5494 = vmatprep.subr.mxu0 0.0
    %5495 = vmatpush2.msra.mxu0 %v5421
    %5496 = vmatprep.subr.mxu0 0.0
    %5497 = vmatpush2.msra.mxu0 %v5420
    %5498 = vmatprep.subr.mxu0 0.0
    %5499 = vmatpush2.msra.mxu0 %v5419
    %5500 = vmatprep.subr.mxu0 0.0
    %5501 = vmatpush2.msra.mxu0 %v5418
    %5502 = vmatprep.subr.mxu0 0.0
    %5503 = vmatpush2.msra.mxu0 %v5417
    %5504 = vmatprep.mubr.f32.mxu0 %v5400
    %5505 = vmatmul.mubr.f32.gmra.mxu0 %v5399
    %v5506 = vpop.f32.mrf.mxu0
    %v5507 = vadd.f32 %v5438, %v5506
    %v5508 = vpop.f32.mrf.mxu0
    %5509 = vdwg.mxu0
    %v5510 = vmax.f32 %v5507, 0.0
    %v5511 = vld [vmem:[#allocation7] sm:$0xff]
    %v5512 = vld [vmem:[#allocation7 + $0x8] sm:$0xff]
    %v5513 = vld [vmem:[#allocation7 + $0x10] sm:$0xff]
    %v5514 = vld [vmem:[#allocation7 + $0x18] sm:$0xff]
    %v5515 = vld [vmem:[#allocation7 + $0x20] sm:$0xff]
    %v5516 = vld [vmem:[#allocation7 + $0x28] sm:$0xff]
    %v5517 = vld [vmem:[#allocation7 + $0x30] sm:$0xff]
    %v5518 = vld [vmem:[#allocation7 + $0x38] sm:$0xff]
    %v5519 = vld [vmem:[#allocation7 + $0x40] sm:$0xff]
    %v5520 = vld [vmem:[#allocation7 + $0x48] sm:$0xff]
    %v5521 = vld [vmem:[#allocation7 + $0x50] sm:$0xff]
    %v5522 = vld [vmem:[#allocation7 + $0x58] sm:$0xff]
    %v5523 = vld [vmem:[#allocation7 + $0x60] sm:$0xff]
    %v5524 = vld [vmem:[#allocation7 + $0x68] sm:$0xff]
    %v5525 = vld [vmem:[#allocation7 + $0x70] sm:$0xff]
    %v5526 = vld [vmem:[#allocation7 + $0x78] sm:$0xff]
    %v5527 = vld [vmem:[#allocation31] sm:$0x1]
    %v5529 = vlaneseq
    %v5530 = vshrl.u32 %v5529, 7
    %v5531 = vsub.s32 0, %v5530
    %v5532 = vrot.slane %v5527, %v5531
    %5534 = vmatprep.subr.mxu0 0.0
    %5535 = vmatpush1.msra.mxu0 %v5526
    %5536 = vmatprep.subr.mxu0 0.0
    %5537 = vmatpush1.msra.mxu0 %v5525
    %5538 = vmatprep.subr.mxu0 0.0
    %5539 = vmatpush1.msra.mxu0 %v5524
    %5540 = vmatprep.subr.mxu0 0.0
    %5541 = vmatpush1.msra.mxu0 %v5523
    %5542 = vmatprep.subr.mxu0 0.0
    %5543 = vmatpush1.msra.mxu0 %v5522
    %5544 = vmatprep.subr.mxu0 0.0
    %5545 = vmatpush1.msra.mxu0 %v5521
    %5546 = vmatprep.subr.mxu0 0.0
    %5547 = vmatpush1.msra.mxu0 %v5520
    %5548 = vmatprep.subr.mxu0 0.0
    %5549 = vmatpush1.msra.mxu0 %v5519
    %5550 = vmatprep.subr.mxu0 0.0
    %5551 = vmatpush1.msra.mxu0 %v5518
    %5552 = vmatprep.subr.mxu0 0.0
    %5553 = vmatpush1.msra.mxu0 %v5517
    %5554 = vmatprep.subr.mxu0 0.0
    %5555 = vmatpush1.msra.mxu0 %v5516
    %5556 = vmatprep.subr.mxu0 0.0
    %5557 = vmatpush1.msra.mxu0 %v5515
    %5558 = vmatprep.subr.mxu0 0.0
    %5559 = vmatpush1.msra.mxu0 %v5514
    %5560 = vmatprep.subr.mxu0 0.0
    %5561 = vmatpush1.msra.mxu0 %v5513
    %5562 = vmatprep.subr.mxu0 0.0
    %5563 = vmatpush1.msra.mxu0 %v5512
    %5564 = vmatprep.subr.mxu0 0.0
    %5565 = vmatpush1.msra.mxu0 %v5511
    %5566 = vmatprep.subr.mxu0 0.0
    %5567 = vmatpush2.msra.mxu0 0.0
    %5568 = vmatprep.subr.mxu0 0.0
    %5569 = vmatpush2.msra.mxu0 0.0
    %5570 = vmatprep.subr.mxu0 0.0
    %5571 = vmatpush2.msra.mxu0 0.0
    %5572 = vmatprep.subr.mxu0 0.0
    %5573 = vmatpush2.msra.mxu0 0.0
    %5574 = vmatprep.subr.mxu0 0.0
    %5575 = vmatpush2.msra.mxu0 0.0
    %5576 = vmatprep.subr.mxu0 0.0
    %5577 = vmatpush2.msra.mxu0 0.0
    %5578 = vmatprep.subr.mxu0 0.0
    %5579 = vmatpush2.msra.mxu0 0.0
    %5580 = vmatprep.subr.mxu0 0.0
    %5581 = vmatpush2.msra.mxu0 0.0
    %5582 = vmatprep.subr.mxu0 0.0
    %5583 = vmatpush2.msra.mxu0 0.0
    %5584 = vmatprep.subr.mxu0 0.0
    %5585 = vmatpush2.msra.mxu0 0.0
    %5586 = vmatprep.subr.mxu0 0.0
    %5587 = vmatpush2.msra.mxu0 0.0
    %5588 = vmatprep.subr.mxu0 0.0
    %5589 = vmatpush2.msra.mxu0 0.0
    %5590 = vmatprep.subr.mxu0 0.0
    %5591 = vmatpush2.msra.mxu0 0.0
    %5592 = vmatprep.subr.mxu0 0.0
    %5593 = vmatpush2.msra.mxu0 0.0
    %5594 = vmatprep.subr.mxu0 0.0
    %5595 = vmatpush2.msra.mxu0 0.0
    %5596 = vmatprep.subr.mxu0 0.0
    %5597 = vmatpush2.msra.mxu0 0.0
    %5598 = vmatprep.mubr.f32.mxu0 0.0
    %5599 = vmatmul.mubr.f32.gmra.mxu0 %v5510
    %v5600 = vpop.f32.mrf.mxu0
    %v5601 = vadd.f32 %v5532, %v5600
    %v5602 = vpop.f32.mrf.mxu0
    %5603 = vdwg.mxu0
    %v5604 = vmax.f32 %v5601, 0.0
    %v5605 = vld [vmem:[#allocation8] sm:$0xff]
    %v5606 = vld [vmem:[#allocation8 + $0x8] sm:$0xff]
    %v5607 = vld [vmem:[#allocation8 + $0x10] sm:$0xff]
    %v5608 = vld [vmem:[#allocation8 + $0x18] sm:$0xff]
    %v5609 = vld [vmem:[#allocation8 + $0x20] sm:$0xff]
    %v5610 = vld [vmem:[#allocation8 + $0x28] sm:$0xff]
    %v5611 = vld [vmem:[#allocation8 + $0x30] sm:$0xff]
    %v5612 = vld [vmem:[#allocation8 + $0x38] sm:$0xff]
    %v5613 = vld [vmem:[#allocation32] sm:$0x1]
    %v5615 = vlaneseq
    %v5616 = vshrl.u32 %v5615, 7
    %v5617 = vsub.s32 0, %v5616
    %v5618 = vrot.slane %v5613, %v5617
    %vm5620 = vcmask 523264
    %v5622 = vsel %vm5620, %v5604, 0
    %5624 = vmatprep.subr.mxu0 0.0
    %5625 = vmatpush1.msra.mxu0 0.0
    %5626 = vmatprep.subr.mxu0 0.0
    %5627 = vmatpush1.msra.mxu0 0.0
    %5628 = vmatprep.subr.mxu0 0.0
    %5629 = vmatpush1.msra.mxu0 0.0
    %5630 = vmatprep.subr.mxu0 0.0
    %5631 = vmatpush1.msra.mxu0 0.0
    %5632 = vmatprep.subr.mxu0 0.0
    %5633 = vmatpush1.msra.mxu0 0.0
    %5634 = vmatprep.subr.mxu0 0.0
    %5635 = vmatpush1.msra.mxu0 0.0
    %5636 = vmatprep.subr.mxu0 0.0
    %5637 = vmatpush1.msra.mxu0 0.0
    %5638 = vmatprep.subr.mxu0 0.0
    %5639 = vmatpush1.msra.mxu0 0.0
    %5640 = vmatprep.subr.mxu0 0.0
    %5641 = vmatpush1.msra.mxu0 %v5612
    %5642 = vmatprep.subr.mxu0 0.0
    %5643 = vmatpush1.msra.mxu0 %v5611
    %5644 = vmatprep.subr.mxu0 0.0
    %5645 = vmatpush1.msra.mxu0 %v5610
    %5646 = vmatprep.subr.mxu0 0.0
    %5647 = vmatpush1.msra.mxu0 %v5609
    %5648 = vmatprep.subr.mxu0 0.0
    %5649 = vmatpush1.msra.mxu0 %v5608
    %5650 = vmatprep.subr.mxu0 0.0
    %5651 = vmatpush1.msra.mxu0 %v5607
    %5652 = vmatprep.subr.mxu0 0.0
    %5653 = vmatpush1.msra.mxu0 %v5606
    %5654 = vmatprep.subr.mxu0 0.0
    %5655 = vmatpush1.msra.mxu0 %v5605
    %5656 = vmatprep.subr.mxu0 0.0
    %5657 = vmatpush2.msra.mxu0 0.0
    %5658 = vmatprep.subr.mxu0 0.0
    %5659 = vmatpush2.msra.mxu0 0.0
    %5660 = vmatprep.subr.mxu0 0.0
    %5661 = vmatpush2.msra.mxu0 0.0
    %5662 = vmatprep.subr.mxu0 0.0
    %5663 = vmatpush2.msra.mxu0 0.0
    %5664 = vmatprep.subr.mxu0 0.0
    %5665 = vmatpush2.msra.mxu0 0.0
    %5666 = vmatprep.subr.mxu0 0.0
    %5667 = vmatpush2.msra.mxu0 0.0
    %5668 = vmatprep.subr.mxu0 0.0
    %5669 = vmatpush2.msra.mxu0 0.0
    %5670 = vmatprep.subr.mxu0 0.0
    %5671 = vmatpush2.msra.mxu0 0.0
    %5672 = vmatprep.subr.mxu0 0.0
    %5673 = vmatpush2.msra.mxu0 0.0
    %5674 = vmatprep.subr.mxu0 0.0
    %5675 = vmatpush2.msra.mxu0 0.0
    %5676 = vmatprep.subr.mxu0 0.0
    %5677 = vmatpush2.msra.mxu0 0.0
    %5678 = vmatprep.subr.mxu0 0.0
    %5679 = vmatpush2.msra.mxu0 0.0
    %5680 = vmatprep.subr.mxu0 0.0
    %5681 = vmatpush2.msra.mxu0 0.0
    %5682 = vmatprep.subr.mxu0 0.0
    %5683 = vmatpush2.msra.mxu0 0.0
    %5684 = vmatprep.subr.mxu0 0.0
    %5685 = vmatpush2.msra.mxu0 0.0
    %5686 = vmatprep.subr.mxu0 0.0
    %5687 = vmatpush2.msra.mxu0 0.0
    %5688 = vmatprep.mubr.f32.mxu0 0.0
    %5689 = vmatmul.mubr.f32.gmra.mxu0 %v5622
    %v5690 = vpop.f32.mrf.mxu0
    %v5691 = vadd.f32 %v5618, %v5690
    %v5692 = vpop.f32.mrf.mxu0
    %5693 = vdwg.mxu0
    %v5694 = vmax.f32 %v5691, 0.0
    %v5695 = vld [vmem:[#allocation9] sm:$0xff]
    %v5696 = vld [vmem:[#allocation9 + $0x8] sm:$0xff]
    %v5697 = vld [vmem:[#allocation9 + $0x10] sm:$0xff]
    %v5698 = vld [vmem:[#allocation9 + $0x18] sm:$0xff]
    %v5699 = vld [vmem:[#allocation34] sm:$0x1]
    %v5701 = vlaneseq
    %v5702 = vshrl.u32 %v5701, 7
    %v5703 = vsub.s32 0, %v5702
    %v5704 = vrot.slane %v5699, %v5703
    %vm5706 = vcmask 261120
    %v5708 = vsel %vm5706, %v5694, 0
    %5710 = vmatprep.subr.mxu0 0.0
    %5711 = vmatpush1.msra.mxu0 0.0
    %5712 = vmatprep.subr.mxu0 0.0
    %5713 = vmatpush1.msra.mxu0 0.0
    %5714 = vmatprep.subr.mxu0 0.0
    %5715 = vmatpush1.msra.mxu0 0.0
    %5716 = vmatprep.subr.mxu0 0.0
    %5717 = vmatpush1.msra.mxu0 0.0
    %5718 = vmatprep.subr.mxu0 0.0
    %5719 = vmatpush1.msra.mxu0 0.0
    %5720 = vmatprep.subr.mxu0 0.0
    %5721 = vmatpush1.msra.mxu0 0.0
    %5722 = vmatprep.subr.mxu0 0.0
    %5723 = vmatpush1.msra.mxu0 0.0
    %5724 = vmatprep.subr.mxu0 0.0
    %5725 = vmatpush1.msra.mxu0 0.0
    %5726 = vmatprep.subr.mxu0 0.0
    %5727 = vmatpush1.msra.mxu0 0.0
    %5728 = vmatprep.subr.mxu0 0.0
    %5729 = vmatpush1.msra.mxu0 0.0
    %5730 = vmatprep.subr.mxu0 0.0
    %5731 = vmatpush1.msra.mxu0 0.0
    %5732 = vmatprep.subr.mxu0 0.0
    %5733 = vmatpush1.msra.mxu0 0.0
    %5734 = vmatprep.subr.mxu0 0.0
    %5735 = vmatpush1.msra.mxu0 %v5698
    %5736 = vmatprep.subr.mxu0 0.0
    %5737 = vmatpush1.msra.mxu0 %v5697
    %5738 = vmatprep.subr.mxu0 0.0
    %5739 = vmatpush1.msra.mxu0 %v5696
    %5740 = vmatprep.subr.mxu0 0.0
    %5741 = vmatpush1.msra.mxu0 %v5695
    %5742 = vmatprep.subr.mxu0 0.0
    %5743 = vmatpush2.msra.mxu0 0.0
    %5744 = vmatprep.subr.mxu0 0.0
    %5745 = vmatpush2.msra.mxu0 0.0
    %5746 = vmatprep.subr.mxu0 0.0
    %5747 = vmatpush2.msra.mxu0 0.0
    %5748 = vmatprep.subr.mxu0 0.0
    %5749 = vmatpush2.msra.mxu0 0.0
    %5750 = vmatprep.subr.mxu0 0.0
    %5751 = vmatpush2.msra.mxu0 0.0
    %5752 = vmatprep.subr.mxu0 0.0
    %5753 = vmatpush2.msra.mxu0 0.0
    %5754 = vmatprep.subr.mxu0 0.0
    %5755 = vmatpush2.msra.mxu0 0.0
    %5756 = vmatprep.subr.mxu0 0.0
    %5757 = vmatpush2.msra.mxu0 0.0
    %5758 = vmatprep.subr.mxu0 0.0
    %5759 = vmatpush2.msra.mxu0 0.0
    %5760 = vmatprep.subr.mxu0 0.0
    %5761 = vmatpush2.msra.mxu0 0.0
    %5762 = vmatprep.subr.mxu0 0.0
    %5763 = vmatpush2.msra.mxu0 0.0
    %5764 = vmatprep.subr.mxu0 0.0
    %5765 = vmatpush2.msra.mxu0 0.0
    %5766 = vmatprep.subr.mxu0 0.0
    %5767 = vmatpush2.msra.mxu0 0.0
    %5768 = vmatprep.subr.mxu0 0.0
    %5769 = vmatpush2.msra.mxu0 0.0
    %5770 = vmatprep.subr.mxu0 0.0
    %5771 = vmatpush2.msra.mxu0 0.0
    %5772 = vmatprep.subr.mxu0 0.0
    %5773 = vmatpush2.msra.mxu0 0.0
    %5774 = vmatprep.mubr.f32.mxu0 0.0
    %5775 = vmatmul.mubr.f32.gmra.mxu0 %v5708
    %v5776 = vpop.f32.mrf.mxu0
    %v5777 = vadd.f32 %v5704, %v5776
    %v5778 = vpop.f32.mrf.mxu0
    %5779 = vdwg.mxu0
    %v5780 = vmax.f32 %v5777, 0.0
    %v5781 = vld [vmem:[#allocation10] sm:$0xff]
    %v5782 = vld [vmem:[#allocation10 + $0x8] sm:$0xff]
    %v5783 = vld [vmem:[#allocation35] sm:$0x1]
    %v5785 = vlaneseq
    %v5786 = vshrl.u32 %v5785, 7
    %v5787 = vsub.s32 0, %v5786
    %v5788 = vrot.slane %v5783, %v5787
    %vm5790 = vcmask 130048
    %v5792 = vsel %vm5790, %v5780, 0
    %5794 = vmatprep.subr.mxu0 0.0
    %5795 = vmatpush1.msra.mxu0 0.0
    %5796 = vmatprep.subr.mxu0 0.0
    %5797 = vmatpush1.msra.mxu0 0.0
    %5798 = vmatprep.subr.mxu0 0.0
    %5799 = vmatpush1.msra.mxu0 0.0
    %5800 = vmatprep.subr.mxu0 0.0
    %5801 = vmatpush1.msra.mxu0 0.0
    %5802 = vmatprep.subr.mxu0 0.0
    %5803 = vmatpush1.msra.mxu0 0.0
    %5804 = vmatprep.subr.mxu0 0.0
    %5805 = vmatpush1.msra.mxu0 0.0
    %5806 = vmatprep.subr.mxu0 0.0
    %5807 = vmatpush1.msra.mxu0 0.0
    %5808 = vmatprep.subr.mxu0 0.0
    %5809 = vmatpush1.msra.mxu0 0.0
    %5810 = vmatprep.subr.mxu0 0.0
    %5811 = vmatpush1.msra.mxu0 0.0
    %5812 = vmatprep.subr.mxu0 0.0
    %5813 = vmatpush1.msra.mxu0 0.0
    %5814 = vmatprep.subr.mxu0 0.0
    %5815 = vmatpush1.msra.mxu0 0.0
    %5816 = vmatprep.subr.mxu0 0.0
    %5817 = vmatpush1.msra.mxu0 0.0
    %5818 = vmatprep.subr.mxu0 0.0
    %5819 = vmatpush1.msra.mxu0 0.0
    %5820 = vmatprep.subr.mxu0 0.0
    %5821 = vmatpush1.msra.mxu0 0.0
    %5822 = vmatprep.subr.mxu0 0.0
    %5823 = vmatpush1.msra.mxu0 %v5782
    %5824 = vmatprep.subr.mxu0 0.0
    %5825 = vmatpush1.msra.mxu0 %v5781
    %5826 = vmatprep.subr.mxu0 0.0
    %5827 = vmatpush2.msra.mxu0 0.0
    %5828 = vmatprep.subr.mxu0 0.0
    %5829 = vmatpush2.msra.mxu0 0.0
    %5830 = vmatprep.subr.mxu0 0.0
    %5831 = vmatpush2.msra.mxu0 0.0
    %5832 = vmatprep.subr.mxu0 0.0
    %5833 = vmatpush2.msra.mxu0 0.0
    %5834 = vmatprep.subr.mxu0 0.0
    %5835 = vmatpush2.msra.mxu0 0.0
    %5836 = vmatprep.subr.mxu0 0.0
    %5837 = vmatpush2.msra.mxu0 0.0
    %5838 = vmatprep.subr.mxu0 0.0
    %5839 = vmatpush2.msra.mxu0 0.0
    %5840 = vmatprep.subr.mxu0 0.0
    %5841 = vmatpush2.msra.mxu0 0.0
    %5842 = vmatprep.subr.mxu0 0.0
    %5843 = vmatpush2.msra.mxu0 0.0
    %5844 = vmatprep.subr.mxu0 0.0
    %5845 = vmatpush2.msra.mxu0 0.0
    %5846 = vmatprep.subr.mxu0 0.0
    %5847 = vmatpush2.msra.mxu0 0.0
    %5848 = vmatprep.subr.mxu0 0.0
    %5849 = vmatpush2.msra.mxu0 0.0
    %5850 = vmatprep.subr.mxu0 0.0
    %5851 = vmatpush2.msra.mxu0 0.0
    %5852 = vmatprep.subr.mxu0 0.0
    %5853 = vmatpush2.msra.mxu0 0.0
    %5854 = vmatprep.subr.mxu0 0.0
    %5855 = vmatpush2.msra.mxu0 0.0
    %5856 = vmatprep.subr.mxu0 0.0
    %5857 = vmatpush2.msra.mxu0 0.0
    %5858 = vmatprep.mubr.f32.mxu0 0.0
    %5859 = vmatmul.mubr.f32.gmra.mxu0 %v5792
    %v5860 = vpop.f32.mrf.mxu0
    %v5861 = vadd.f32 %v5788, %v5860
    %v5862 = vpop.f32.mrf.mxu0
    %5863 = vdwg.mxu0
    %v5864 = vmax.f32 %v5861, 0.0
    %v5865 = vld [vmem:[#allocation11] sm:$0xff]
    %v5866 = vld [vmem:[#allocation37] sm:$0x1]
    %v5868 = vlaneseq
    %v5869 = vshrl.u32 %v5868, 7
    %v5870 = vsub.s32 0, %v5869
    %v5871 = vrot.slane %v5866, %v5870
    %v5874 = vsel %vm3381, %v5864, 0
    %5876 = vmatprep.subr.mxu0 0.0
    %5877 = vmatpush1.msra.mxu0 0.0
    %5878 = vmatprep.subr.mxu0 0.0
    %5879 = vmatpush1.msra.mxu0 0.0
    %5880 = vmatprep.subr.mxu0 0.0
    %5881 = vmatpush1.msra.mxu0 0.0
    %5882 = vmatprep.subr.mxu0 0.0
    %5883 = vmatpush1.msra.mxu0 0.0
    %5884 = vmatprep.subr.mxu0 0.0
    %5885 = vmatpush1.msra.mxu0 0.0
    %5886 = vmatprep.subr.mxu0 0.0
    %5887 = vmatpush1.msra.mxu0 0.0
    %5888 = vmatprep.subr.mxu0 0.0
    %5889 = vmatpush1.msra.mxu0 0.0
    %5890 = vmatprep.subr.mxu0 0.0
    %5891 = vmatpush1.msra.mxu0 0.0
    %5892 = vmatprep.subr.mxu0 0.0
    %5893 = vmatpush1.msra.mxu0 0.0
    %5894 = vmatprep.subr.mxu0 0.0
    %5895 = vmatpush1.msra.mxu0 0.0
    %5896 = vmatprep.subr.mxu0 0.0
    %5897 = vmatpush1.msra.mxu0 0.0
    %5898 = vmatprep.subr.mxu0 0.0
    %5899 = vmatpush1.msra.mxu0 0.0
    %5900 = vmatprep.subr.mxu0 0.0
    %5901 = vmatpush1.msra.mxu0 0.0
    %5902 = vmatprep.subr.mxu0 0.0
    %5903 = vmatpush1.msra.mxu0 0.0
    %5904 = vmatprep.subr.mxu0 0.0
    %5905 = vmatpush1.msra.mxu0 0.0
    %5906 = vmatprep.subr.mxu0 0.0
    %5907 = vmatpush1.msra.mxu0 %v5865
    %5908 = vmatprep.subr.mxu0 0.0
    %5909 = vmatpush2.msra.mxu0 0.0
    %5910 = vmatprep.subr.mxu0 0.0
    %5911 = vmatpush2.msra.mxu0 0.0
    %5912 = vmatprep.subr.mxu0 0.0
    %5913 = vmatpush2.msra.mxu0 0.0
    %5914 = vmatprep.subr.mxu0 0.0
    %5915 = vmatpush2.msra.mxu0 0.0
    %5916 = vmatprep.subr.mxu0 0.0
    %5917 = vmatpush2.msra.mxu0 0.0
    %5918 = vmatprep.subr.mxu0 0.0
    %5919 = vmatpush2.msra.mxu0 0.0
    %5920 = vmatprep.subr.mxu0 0.0
    %5921 = vmatpush2.msra.mxu0 0.0
    %5922 = vmatprep.subr.mxu0 0.0
    %5923 = vmatpush2.msra.mxu0 0.0
    %5924 = vmatprep.subr.mxu0 0.0
    %5925 = vmatpush2.msra.mxu0 0.0
    %5926 = vmatprep.subr.mxu0 0.0
    %5927 = vmatpush2.msra.mxu0 0.0
    %5928 = vmatprep.subr.mxu0 0.0
    %5929 = vmatpush2.msra.mxu0 0.0
    %5930 = vmatprep.subr.mxu0 0.0
    %5931 = vmatpush2.msra.mxu0 0.0
    %5932 = vmatprep.subr.mxu0 0.0
    %5933 = vmatpush2.msra.mxu0 0.0
    %5934 = vmatprep.subr.mxu0 0.0
    %5935 = vmatpush2.msra.mxu0 0.0
    %5936 = vmatprep.subr.mxu0 0.0
    %5937 = vmatpush2.msra.mxu0 0.0
    %5938 = vmatprep.subr.mxu0 0.0
    %5939 = vmatpush2.msra.mxu0 0.0
    %5940 = vmatprep.mubr.f32.mxu0 0.0
    %5941 = vmatmul.mubr.f32.gmra.mxu0 %v5874
    %v5942 = vpop.f32.mrf.mxu0
    %v5943 = vadd.f32 %v5871, %v5942
    %v5944 = vpop.f32.mrf.mxu0
    %5945 = vdwg.mxu0
    %v5946 = vmax.f32 %v5943, 0.0
    %v5947 = vld [vmem:[#allocation12] sm:$0xf]
    %v5948 = vld [vmem:[#allocation38] sm:$0x1]
    %v5950 = vlaneseq
    %v5951 = vshrl.u32 %v5950, 7
    %v5952 = vsub.s32 0, %v5951
    %v5953 = vrot.slane %v5948, %v5952
    %vm5955 = vcmask 31744
    %v5957 = vsel %vm5955, %v5946, 0
    %vm5959 = vcmask 1043456
    %v5961 = vsel %vm5959, %v5947, 0
    %5963 = vmatprep.subr.mxu0 0.0
    %5964 = vmatpush1.msra.mxu0 0.0
    %5965 = vmatprep.subr.mxu0 0.0
    %5966 = vmatpush1.msra.mxu0 0.0
    %5967 = vmatprep.subr.mxu0 0.0
    %5968 = vmatpush1.msra.mxu0 0.0
    %5969 = vmatprep.subr.mxu0 0.0
    %5970 = vmatpush1.msra.mxu0 0.0
    %5971 = vmatprep.subr.mxu0 0.0
    %5972 = vmatpush1.msra.mxu0 0.0
    %5973 = vmatprep.subr.mxu0 0.0
    %5974 = vmatpush1.msra.mxu0 0.0
    %5975 = vmatprep.subr.mxu0 0.0
    %5976 = vmatpush1.msra.mxu0 0.0
    %5977 = vmatprep.subr.mxu0 0.0
    %5978 = vmatpush1.msra.mxu0 0.0
    %5979 = vmatprep.subr.mxu0 0.0
    %5980 = vmatpush1.msra.mxu0 0.0
    %5981 = vmatprep.subr.mxu0 0.0
    %5982 = vmatpush1.msra.mxu0 0.0
    %5983 = vmatprep.subr.mxu0 0.0
    %5984 = vmatpush1.msra.mxu0 0.0
    %5985 = vmatprep.subr.mxu0 0.0
    %5986 = vmatpush1.msra.mxu0 0.0
    %5987 = vmatprep.subr.mxu0 0.0
    %5988 = vmatpush1.msra.mxu0 0.0
    %5989 = vmatprep.subr.mxu0 0.0
    %5990 = vmatpush1.msra.mxu0 0.0
    %5991 = vmatprep.subr.mxu0 0.0
    %5992 = vmatpush1.msra.mxu0 0.0
    %5993 = vmatprep.subr.mxu0 0.0
    %5994 = vmatpush1.msra.mxu0 %v5961
    %5995 = vmatprep.subr.mxu0 0.0
    %5996 = vmatpush2.msra.mxu0 0.0
    %5997 = vmatprep.subr.mxu0 0.0
    %5998 = vmatpush2.msra.mxu0 0.0
    %5999 = vmatprep.subr.mxu0 0.0
    %6000 = vmatpush2.msra.mxu0 0.0
    %6001 = vmatprep.subr.mxu0 0.0
    %6002 = vmatpush2.msra.mxu0 0.0
    %6003 = vmatprep.subr.mxu0 0.0
    %6004 = vmatpush2.msra.mxu0 0.0
    %6005 = vmatprep.subr.mxu0 0.0
    %6006 = vmatpush2.msra.mxu0 0.0
    %6007 = vmatprep.subr.mxu0 0.0
    %6008 = vmatpush2.msra.mxu0 0.0
    %6009 = vmatprep.subr.mxu0 0.0
    %6010 = vmatpush2.msra.mxu0 0.0
    %6011 = vmatprep.subr.mxu0 0.0
    %6012 = vmatpush2.msra.mxu0 0.0
    %6013 = vmatprep.subr.mxu0 0.0
    %6014 = vmatpush2.msra.mxu0 0.0
    %6015 = vmatprep.subr.mxu0 0.0
    %6016 = vmatpush2.msra.mxu0 0.0
    %6017 = vmatprep.subr.mxu0 0.0
    %6018 = vmatpush2.msra.mxu0 0.0
    %6019 = vmatprep.subr.mxu0 0.0
    %6020 = vmatpush2.msra.mxu0 0.0
    %6021 = vmatprep.subr.mxu0 0.0
    %6022 = vmatpush2.msra.mxu0 0.0
    %6023 = vmatprep.subr.mxu0 0.0
    %6024 = vmatpush2.msra.mxu0 0.0
    %6025 = vmatprep.subr.mxu0 0.0
    %6026 = vmatpush2.msra.mxu0 0.0
    %6027 = vmatprep.mubr.f32.mxu0 0.0
    %6028 = vmatmul.mubr.f32.gmra.mxu0 %v5957
    %v6029 = vpop.f32.mrf.mxu0
    %v6030 = vadd.f32 %v5953, %v6029
    %v6031 = vpop.f32.mrf.mxu0
    %6032 = vdwg.mxu0
    %v6033 = vmax.f32 %v6030, 0.0
    %vm6034 = vcmask 48128
    %6035 = vst.msk [vmem:[#allocation43] sm:$0xff] %vm6034, %v6033
    // Predicated region
    $region324: #{tpu_custom_call.1} parent=1 // pred_check
      _
    $region325: #{tpu_custom_call.1} parent=1 // pred_check_branch
      %6037 = sbr.rel (0) target = $region327
    $region326: #{tpu_custom_call.1} parent=1 // pred_region
      %s6039 = ssub.s32 128, 128
      %6040 = vsyncadd [#allocation16], %s6039
      %s6042 = sshll.u32 [#allocation40], 4
      %s6043 = int_to_ptr.vmem [resolvable:$true] %s6042
      %6045 = dma.vmem_to_hbm [thread:$0]  %s6043, 128, %s55, [#allocation16]
    $region327: #{tpu_custom_call.1} parent=1 // pred_fallthru
      _
    // Predicated region
    $region328: #{tpu_custom_call.1} parent=1 // pred_check
      _
    $region329: #{tpu_custom_call.1} parent=1 // pred_check_branch
      %6047 = sbr.rel (0) target = $region331
    $region330: #{tpu_custom_call.1} parent=1 // pred_region
      %s6049 = ssub.s32 128, 128
      %6050 = vsyncadd [#allocation42], %s6049
      %s6052 = sshll.u32 [#allocation41], 4
      %s6053 = int_to_ptr.vmem [resolvable:$true] %s6052
      %6055 = dma.vmem_to_hbm [thread:$0]  %s6053, 128, %s57, [#allocation42]
    $region331: #{tpu_custom_call.1} parent=1 // pred_fallthru
      _
    // Predicated region
    $region332: #{tpu_custom_call.1} parent=1 // pred_check
      _
    $region333: #{tpu_custom_call.1} parent=1 // pred_check_branch
      %6057 = sbr.rel (0) target = $region335
    $region334: #{tpu_custom_call.1} parent=1 // pred_region
      %s6059 = ssub.s32 128, 128
      %6060 = vsyncadd [#allocation42], %s6059
      %s6062 = sshll.u32 [#allocation43], 4
      %s6063 = int_to_ptr.vmem [resolvable:$true] %s6062
      %6065 = dma.vmem_to_hbm [thread:$0]  %s6063, 128, %s59, [#allocation42]
    $region335: #{tpu_custom_call.1} parent=1 // pred_fallthru
      _
    // Predicated region
    $region336: #{tpu_custom_call.1} parent=1 // pred_check
      _
    $region337: #{tpu_custom_call.1} parent=1 // pred_check_branch
      %6067 = sbr.rel (0) target = $region339
    $region338: #{tpu_custom_call.1} parent=1 // pred_region
      %6068 = dma.done [#allocation16], 128
    $region339: #{tpu_custom_call.1} parent=1 // pred_fallthru
      _
    // Predicated region
    $region340: #{tpu_custom_call.1} parent=1 // pred_check
      _
    $region341: #{tpu_custom_call.1} parent=1 // pred_check_branch
      %6070 = sbr.rel (0) target = $region343
    $region342: #{tpu_custom_call.1} parent=1 // pred_region
      %6071 = dma.done [#allocation42], 128
    $region343: #{tpu_custom_call.1} parent=1 // pred_fallthru
      _
    // Predicated region
    $region344: #{tpu_custom_call.1} parent=1 // pred_check
      _
    $region345: #{tpu_custom_call.1} parent=1 // pred_check_branch
      %6073 = sbr.rel (0) target = $region347
    $region346: #{tpu_custom_call.1} parent=1 // pred_region
      %6074 = dma.done [#allocation42], 128
    $region347: #{tpu_custom_call.1} parent=1 // pred_fallthru
      _
    %6075 = vsyncpa [#allocation15], 1
    %6076 = vsyncpa [#allocation18], 1
    %6077 = vsyncpa [#allocation21], 1
    %6078 = vsyncpa [#allocation24], 1
    %6079 = vsyncpa [#allocation27], 1
    %6080 = vsyncpa [#allocation30], 1
    %6081 = vsyncpa [#allocation33], 1
    %6082 = vsyncpa [#allocation36], 1
    %6083 = vsyncpa [#allocation39], 1
    %6084 = vsyncpa [#allocation16], 1
    %6085 = vsyncpa [#allocation42], 1
  %6086 = vsyncmov [#allocation13]
  %s6087 = vpop.sfrf %6086
  %p6088 = scmp.eq.s32.totalorder %s6087, 0
  %p6089 = pneg %p6088
  %6091 = shalt.err (%p6089)
  %s6092 = scalar_lea.sflag [#allocation13], 1
  %6093 = vsyncmov %s6092
  %s6094 = vpop.sfrf %6093
  %p6095 = scmp.eq.s32.totalorder %s6094, 0
  %p6096 = pneg %p6095
  %6098 = shalt.err (%p6096)
  %s6099 = scalar_lea.sflag [#allocation13], 2
  %6100 = vsyncmov %s6099
  %s6101 = vpop.sfrf %6100
  %p6102 = scmp.eq.s32.totalorder %s6101, 0
  %p6103 = pneg %p6102
  %6105 = shalt.err (%p6103)
  %s6106 = scalar_lea.sflag [#allocation13], 3
  %6107 = vsyncmov %s6106
  %s6108 = vpop.sfrf %6107
  %p6109 = scmp.eq.s32.totalorder %s6108, 0
  %p6110 = pneg %p6109
  %6112 = shalt.err (%p6110)
  %s6113 = scalar_lea.sflag [#allocation13], 4
  %6114 = vsyncmov %s6113
  %s6115 = vpop.sfrf %6114
  %p6116 = scmp.eq.s32.totalorder %s6115, 0
  %p6117 = pneg %p6116
  %6119 = shalt.err (%p6117)
  %s6120 = scalar_lea.sflag [#allocation13], 5
  %6121 = vsyncmov %s6120
  %s6122 = vpop.sfrf %6121
  %p6123 = scmp.eq.s32.totalorder %s6122, 0
  %p6124 = pneg %p6123
  %6126 = shalt.err (%p6124)
  %s6127 = scalar_lea.sflag [#allocation13], 6
  %6128 = vsyncmov %s6127
  %s6129 = vpop.sfrf %6128
  %p6130 = scmp.eq.s32.totalorder %s6129, 0
  %p6131 = pneg %p6130
  %6133 = shalt.err (%p6131)
  %s6134 = scalar_lea.sflag [#allocation13], 7
  %6135 = vsyncmov %s6134
  %s6136 = vpop.sfrf %6135
  %p6137 = scmp.eq.s32.totalorder %s6136, 0
  %p6138 = pneg %p6137
  %6140 = shalt.err (%p6138)
  %s6141 = scalar_lea.sflag [#allocation13], 8
  %6142 = vsyncmov %s6141
  %s6143 = vpop.sfrf %6142
  %p6144 = scmp.eq.s32.totalorder %s6143, 0
  %p6145 = pneg %p6144
  %6147 = shalt.err (%p6145)
  %s6148 = scalar_lea.sflag [#allocation13], 9
  %6149 = vsyncmov %s6148
  %s6150 = vpop.sfrf %6149
  %p6151 = scmp.eq.s32.totalorder %s6150, 0
  %p6152 = pneg %p6151
  %6154 = shalt.err (%p6152)

</llo_original>
